<compile_context>
chip_gen: v6e
topology: v6e:2x2x1
jax: 0.10.0
libtpu: 0.0.40
codegen_flags: <defaults>
</compile_context>

<pallas_src>
import numpy as np
import jax
import jax.numpy as jnp
from jax.experimental import pallas as pl
from jax.experimental.pallas import tpu as pltpu

GAP = 8      # zero guard between batch samples on the lane axis (>= max conv pad 3)
LEFT = 8     # scratch staging left margin (>= max conv pad 3)
HP = 128     # per-direction LSTM hidden, padded 50 -> 128 (lane-aligned gate blocks)


def _round_up(v, m):
    return ((v + m - 1) // m) * m


# --------------------------------------------------------------------------
# The single fused kernel
# --------------------------------------------------------------------------
def _make_kernel(cfg):
    n_stage = cfg["n_stage"]
    chans = cfg["chans"]
    blocks = cfg["blocks"]
    Ws = cfg["Ws"]
    pool_cols = cfg["pool_cols"]
    offs3 = cfg["offs3"]
    B = cfg["B"]
    T = cfg["T"]
    CembP = cfg["CembP"]
    emb_row = cfg["emb_row"]
    NC = cfg["num_classes"]
    S = 2 * HP   # fwd+bwd fused hidden width (256)

    def kernel(x_ref, convw_ref, poolw_ref, masks_ref, wih_ref, whh_ref,
               fcw_ref, bias_ref, out_ref, scr_ref):
        # constant ones row (row 0) multiplies the bias column of every fused conv
        scr_ref[0:1, :] = jnp.ones((1, scr_ref.shape[1]), jnp.float32)

        def conv(act, r0, rows, cin, K, pad, W):
            # act: (cin, W) f32 with zero guard columns.  K shifted copies staged at
            # row bands k*cin; all taps + bias fused into one bf16 MXU matmul.
            for k in range(K):
                c0 = LEFT + pad - k
                scr_ref[1 + k * cin:1 + (k + 1) * cin, c0:c0 + W] = act
            z = scr_ref[0:1 + K * cin, LEFT:LEFT + W].astype(jnp.bfloat16)
            w = convw_ref[r0:r0 + rows, 0:1 + K * cin]
            return jnp.dot(w, z, preferred_element_type=jnp.float32)

        # ---- MPBD block stages (batch laid out along lanes) -----------------
        act = x_ref[...]                                      # (1, W0)
        for si in range(n_stage):
            W = Ws[si]
            co = chans[si + 1]
            mask = masks_ref[si:si + 1, 0:W] > 0.5            # (1, W) bool
            for bp in blocks[si]:
                ci = bp["ci"]
                # fused {b1c1(k3), b2c1(k5), downsample(k1)} -> one matmul
                y1 = conv(act, bp["m1_row"], bp["m1_rows"], ci, 5, 2, W)
                dsv = y1[2 * co:3 * co] if bp["ds"] else act
                y12 = jnp.where(mask, jnp.maximum(y1[0:2 * co], 0.0), 0.0)
                # fused {b1c2(k3), b2c2(k7)} on the stacked [y1; y2] input
                z12 = conv(y12, bp["m2_row"], 2 * co, 2 * co, 7, 3, W)
                z12 = jnp.maximum(z12, 0.0)
                act = jnp.where(mask, z12[0:co] + z12[co:2 * co] + dsv, 0.0)
            # AvgPool1d(3): block-diagonal 0/1 matrix, exact 1/3 scale in f32
            Wn = Ws[si + 1]
            P = poolw_ref[0:W, pool_cols[si]:pool_cols[si] + Wn]
            act = jnp.dot(act.astype(jnp.bfloat16), P,
                          preferred_element_type=jnp.float32) * (1.0 / 3.0)
        act = jnp.maximum(act, 0.0)                           # torch.relu after blocks

        # ---- Embedding Conv1d(k=3, stride=2, pad=1) + ReLU -------------------
        # computed at stride 1; stride-2 positions (even cols) selected below
        W3 = Ws[n_stage]
        emb = conv(act, emb_row, CembP, chans[-1], 3, 1, W3)
        emb = jnp.maximum(emb, 0.0)                           # (CembP, W3)
        emb_t = emb.T                                         # (W3, CembP) time-major

        rows_f = []
        for t in range(T):
            for b in range(B):
                r = offs3[b] + 2 * t
                rows_f.append(emb_t[r:r + 1, :])
        e_f = jnp.concatenate(rows_f, axis=0)                 # (T*B, CembP)  x[t]
        e_r = jnp.concatenate([e_f[(T - 1 - t) * B:(T - t) * B] for t in range(T)],
                              axis=0)                         # x[T-1-t]
        e2 = jnp.concatenate([e_f, e_r], axis=1).astype(jnp.bfloat16)  # (T*B, 2*CembP)

        # both directions' input projections + biases in one matmul
        gx_all = jnp.dot(e2, wih_ref[...], preferred_element_type=jnp.float32) \
            + bias_ref[0:1, :]

        # ---- fused bidirectional LSTM: block-diag recurrence, 1 matmul/step ---
        whh = whh_ref[...]
        h = jnp.zeros((B, S), jnp.float32)
        c = jnp.zeros((B, S), jnp.float32)
        outs_f = [None] * T
        outs_b = [None] * T
        for s in range(T):
            g = gx_all[s * B:(s + 1) * B] + jnp.dot(
                h.astype(jnp.bfloat16), whh, preferred_element_type=jnp.float32)
            gi = jax.nn.sigmoid(g[:, 0 * S:1 * S])
            gf = jax.nn.sigmoid(g[:, 1 * S:2 * S])
            gg = jnp.tanh(g[:, 2 * S:3 * S])
            go = jax.nn.sigmoid(g[:, 3 * S:4 * S])
            c = gf * c + gi * gg
            h = go * jnp.tanh(c)
            outs_f[s] = h[:, 0:HP]
            outs_b[T - 1 - s] = h[:, HP:S]

        # ---- (fwd + bwd)/2, flatten over time, fused FC head ------------------
        feat = jnp.concatenate([(outs_f[t] + outs_b[t]) * 0.5 for t in range(T)],
                               axis=1).astype(jnp.bfloat16)   # (B, T*HP)
        z = jnp.dot(feat, fcw_ref[0:T * HP, 0:256],
                    preferred_element_type=jnp.float32) + bias_ref[1:2, 0:256]
        z = jnp.maximum(z, 0.0).astype(jnp.bfloat16)
        z = jnp.dot(z, fcw_ref[T * HP:T * HP + 256, 0:128],
                    preferred_element_type=jnp.float32) + bias_ref[2:3, 0:128]
        z = jnp.maximum(z, 0.0).astype(jnp.bfloat16)
        o = jnp.dot(z, fcw_ref[T * HP + 256:T * HP + 384, 0:NC],
                    preferred_element_type=jnp.float32) + bias_ref[3:4, 0:NC]
        out_ref[...] = o

    return kernel


# --------------------------------------------------------------------------
# Host wrapper: single pallas_call, no grid, whole batch in one invocation
# --------------------------------------------------------------------------
def mpbdnet_forward(x, params):
    plan = params["plan"]
    chans = plan["chans"]
    n_stage = len(chans) - 1

    B, L = x.shape
    x = x.astype(jnp.float32)
    if L % 8 != 0:                      # same pad-to-multiple-of-8 as the PyTorch module
        x = jnp.pad(x, ((0, 0), (0, 8 - L % 8)))
    L0 = x.shape[1]

    Ls = [L0]
    for _ in range(n_stage):
        Ls.append(Ls[-1] // 3)
    T = Ls[-1] // 2
    assert T == plan["T"], "seq_len inconsistent with the packed fc1 weights"

    Ws, Offs = [], []
    for s in range(n_stage + 1):
        Ws.append(GAP + B * (Ls[s] + GAP))
        Offs.append([GAP + b * (Ls[s] + GAP) for b in range(B)])
    Ws[n_stage] = max(128, _round_up(Ws[n_stage], 128))   # transpose-friendly final width

    # batched input layout (1, W0): samples side by side with zero guard gaps
    x_pad = jnp.pad(x, ((0, 0), (0, GAP))).reshape(1, B * (L0 + GAP))
    x_layout = jnp.pad(x_pad, ((0, 0), (GAP, 0)))

    # guard masks and block-diagonal pooling matrices (host-built, numpy)
    maskw = _round_up(Ws[0], 128)
    masks = np.zeros((n_stage, maskw), np.float32)
    for s in range(n_stage):
        for o in Offs[s]:
            masks[s, o:o + Ls[s]] = 1.0

    pool_cols, ctot = [], 0
    for s in range(n_stage):
        pool_cols.append(ctot)
        ctot += _round_up(Ws[s + 1], 128)
    poolw = np.zeros((Ws[0], ctot), np.float32)
    for s in range(n_stage):
        for b in range(B):
            for t in range(Ls[s + 1]):
                for k in range(3):
                    poolw[Offs[s][b] + 3 * t + k,
                          pool_cols[s] + Offs[s + 1][b] + t] = 1.0

    scr_rows = _round_up(1 + 7 * 2 * chans[-1], 8)
    scr_cols = _round_up(LEFT + max(Ws) + 3, 128)

    cfg = dict(n_stage=n_stage, chans=chans, blocks=plan["blocks"], Ws=Ws,
               pool_cols=pool_cols, offs3=Offs[n_stage], B=B, T=T,
               CembP=plan["CembP"], emb_row=plan["emb_row"],
               num_classes=plan["num_classes"])
    kernel = _make_kernel(cfg)

    nc = plan["num_classes"]
    vmem = pltpu.MemorySpace.VMEM
    out = pl.pallas_call(
        kernel,
        out_shape=jax.ShapeDtypeStruct((B, nc), jnp.float32),
        in_specs=[pl.BlockSpec(memory_space=vmem)] * 8,
        out_specs=pl.BlockSpec(memory_space=vmem),
        scratch_shapes=[pltpu.VMEM((scr_rows, scr_cols), jnp.float32)],
    )(x_layout,
      params["convw"],
      jnp.asarray(poolw, jnp.bfloat16),
      jnp.asarray(masks, jnp.float32),
      params["wih2"], params["whh2"], params["fcw"], params["biases"])
    return out


# --------------------------------------------------------------------------
# Deterministic parameter init (PyTorch layouts), pre-packed for the kernel
# --------------------------------------------------------------------------
class KeyGen:
    def __init__(self, key):
        self.key = key

    def __call__(self):
        self.key, k = jax.random.split(self.key)
        return k


def init_params(key, num_classes=3, list_inplanes=(3, 6, 18), embedding_c=50,
                seq_len=216):
    kg = KeyGen(key)
    chans = [1] + list(list_inplanes)
    n_stage = len(chans) - 1

    def conv_w(co, ci, k):                     # kaiming_normal_, fan_out, relu; bias=0
        std = (2.0 / (co * k)) ** 0.5
        return np.asarray(jax.random.normal(kg(), (co, ci, k), jnp.float32)) * std

    def lin_w(of, inf):                        # kaiming_normal_, fan_in, relu; bias=0
        std = (2.0 / inf) ** 0.5
        return np.asarray(jax.random.normal(kg(), (of, inf), jnp.float32)) * std

    def lstm_w(H, inf):                        # nn.LSTM default uniform init
        bound = 1.0 / (H ** 0.5)
        u = lambda s: np.asarray(jax.random.uniform(kg(), s, jnp.float32, -bound, bound))
        return u((4 * H, inf)), u((4 * H, H)), u((4 * H,)), u((4 * H,))

    # ---- static plan: row offsets of the fused conv weights -----------------
    blocks, row = [], 0

    def alloc(r):
        nonlocal row
        r0 = row
        row += _round_up(r, 8)
        return r0

    for si in range(n_stage):
        stage = []
        for bi in range(3):
            ci = chans[si] if bi == 0 else chans[si + 1]
            co = chans[si + 1]
            ds = ci != co
            m1_rows = 2 * co + (co if ds else 0)
            stage.append(dict(ci=ci, co=co, ds=ds, m1_rows=m1_rows,
                              m1_row=alloc(m1_rows), m2_row=alloc(2 * co)))
        blocks.append(stage)
    CembP = _round_up(embedding_c, 8)
    emb_row = alloc(CembP)

    CONV_COLS = _round_up(1 + 7 * 2 * chans[-1], 128)
    convw = np.zeros((row, CONV_COLS), np.float32)

    for si in range(n_stage):
        co = chans[si + 1]
        for bi in range(3):
            bp = blocks[si][bi]
            ci = bp["ci"]
            r1, r2 = bp["m1_row"], bp["m2_row"]
            wa = conv_w(co, ci, 3)             # Block1 conv1 (k=3, pad=1)
            wb = conv_w(co, co, 3)             # Block1 conv2 (k=3, pad=1)
            wc = conv_w(co, ci, 5)             # Block2 conv1 (k=5, pad=2)
            wd = conv_w(co, co, 7)             # Block2 conv2 (k=7, pad=3)
            for k3 in range(3):                # b1c1 -> taps 1..3 of the 5-tap stage
                convw[r1:r1 + co, 1 + (k3 + 1) * ci:1 + (k3 + 1) * ci + ci] = wa[:, :, k3]
            for k5 in range(5):                # b2c1 -> taps 0..4
                convw[r1 + co:r1 + 2 * co, 1 + k5 * ci:1 + (k5 + 1) * ci] = wc[:, :, k5]
            if bp["ds"]:                       # downsample 1x1 conv merged at tap 2
                we = conv_w(co, ci, 1)
                convw[r1 + 2 * co:r1 + 3 * co, 1 + 2 * ci:1 + 3 * ci] = we[:, :, 0]
            ci2 = 2 * co                       # conv2 input = stacked [y1; y2]
            for k3 in range(3):                # b1c2 -> taps 2..4, channels 0:co
                convw[r2:r2 + co,
                      1 + (k3 + 2) * ci2:1 + (k3 + 2) * ci2 + co] = wb[:, :, k3]
            for k7 in range(7):                # b2c2 -> taps 0..6, channels co:2co
                convw[r2 + co:r2 + 2 * co,
                      1 + k7 * ci2 + co:1 + (k7 + 1) * ci2] = wd[:, :, k7]
            # conv biases are zero (torch init) -> bias column (col 0) stays 0

    w_emb = conv_w(embedding_c, chans[-1], 3)  # embedding conv (k=3), bias=0
    for k3 in range(3):
        convw[emb_row:emb_row + embedding_c,
              1 + k3 * chans[-1]:1 + (k3 + 1) * chans[-1]] = w_emb[:, :, k3]

    # ---- fused bidirectional LSTM (gate-major, hidden 50 padded to 128) -----
    H = embedding_c
    wih_f, whh_f, bih_f, bhh_f = lstm_w(H, H)      # self.rnn   (forward)
    wih_b, whh_b, bih_b, bhh_b = lstm_w(H, H)      # self.rnn2  (reverse)
    wih2 = np.zeros((2 * CembP, 8 * HP), np.float32)
    whh2 = np.zeros((2 * HP, 8 * HP), np.float32)
    biases = np.zeros((4, 8 * HP), np.float32)
    for G in range(4):                              # torch gate order i, f, g, o
        cf = G * 2 * HP
        cb = G * 2 * HP + HP
        wih2[0:H, cf:cf + H] = wih_f[G * H:(G + 1) * H, :].T
        wih2[CembP:CembP + H, cb:cb + H] = wih_b[G * H:(G + 1) * H, :].T
        whh2[0:H, cf:cf + H] = whh_f[G * H:(G + 1) * H, :].T
        whh2[HP:HP + H, cb:cb + H] = whh_b[G * H:(G + 1) * H, :].T
        biases[0, cf:cf + H] = bih_f[G * H:(G + 1) * H] + bhh_f[G * H:(G + 1) * H]
        biases[0, cb:cb + H] = bih_b[G * H:(G + 1) * H] + bhh_b[G * H:(G + 1) * H]

    # ---- FC head (fc1 packed per-timestep into one (T*128, 256) matmul) ------
    seq_after = seq_len
    for _ in range(n_stage):
        seq_after //= 3
    T = seq_after // 2
    fc1 = lin_w(256, T * H)
    fc2 = lin_w(128, 256)
    wo = lin_w(num_classes, 128)
    fcw = np.zeros((T * HP + 256 + 128, 256), np.float32)
    for t in range(T):
        fcw[t * HP:t * HP + H, 0:256] = fc1[:, t * H:(t + 1) * H].T
    fcw[T * HP:T * HP + 256, 0:128] = fc2.T
    fcw[T * HP + 256:T * HP + 384, 0:num_classes] = wo.T
    # fc / output biases are zero (torch init) -> biases rows 1..3 stay 0

    plan = dict(chans=chans, blocks=blocks, emb_row=emb_row, CembP=CembP,
                T=T, num_classes=num_classes)
    return dict(plan=plan,
                convw=jnp.asarray(convw, jnp.bfloat16),
                wih2=jnp.asarray(wih2, jnp.bfloat16),
                whh2=jnp.asarray(whh2, jnp.bfloat16),
                fcw=jnp.asarray(fcw, jnp.bfloat16),
                biases=jnp.asarray(biases, jnp.float32))


if __name__ == "__main__":
    key = jax.random.PRNGKey(0)
    pkey, xkey = jax.random.split(key)

    SEQ_LEN = 216           # 216 -> 72 -> 24 -> 8 after the 3 block stages; T = 4
    BATCH = 2
    NUM_CLASSES = 3

    params = init_params(pkey, num_classes=NUM_CLASSES, seq_len=SEQ_LEN)
    x = jax.random.normal(xkey, (BATCH, SEQ_LEN), dtype=jnp.float32)

    out = mpbdnet_forward(x, params)
    out = jax.block_until_ready(out)

    assert out.shape == (BATCH, NUM_CLASSES), out.shape
    assert bool(jnp.all(jnp.isfinite(out)))
    print("KERNEL_OK")
</pallas_src>

<mosaic_0001>
module attributes {stable_mosaic.version = 11 : i64} {
  func.func @kernel(%arg0: memref<1x456xf32, #tpu.memory_space<vmem>>, %arg1: memref<472x256xbf16, #tpu.memory_space<vmem>>, %arg2: memref<456x512xbf16, #tpu.memory_space<vmem>>, %arg3: memref<3x512xf32, #tpu.memory_space<vmem>>, %arg4: memref<112x1024xbf16, #tpu.memory_space<vmem>>, %arg5: memref<256x1024xbf16, #tpu.memory_space<vmem>>, %arg6: memref<896x256xbf16, #tpu.memory_space<vmem>>, %arg7: memref<4x1024xf32, #tpu.memory_space<vmem>>, %arg8: memref<2x3xf32, #tpu.memory_space<vmem>>, %arg9: memref<256x512xf32, #tpu.memory_space<vmem>>) attributes {dimension_semantics = [], scalar_prefetch = 0 : i64, scratch_operands = 1 : i64, tpu.core_type = #tpu.core_type<tc>} {
    %cst = arith.constant 1.000000e+00 : f32
    %0 = vector.broadcast %cst : f32 to vector<1x512xf32>
    %c0 = arith.constant 0 : index
    %c0_0 = arith.constant 0 : index
    %1 = vector.load %arg9[%c0, %c0_0] : memref<256x512xf32, #tpu.memory_space<vmem>>, vector<1x512xf32>
    tpu.vector_store %arg9[%c0, %c0_0], %0 {strides = array<i32>} : memref<256x512xf32, #tpu.memory_space<vmem>>, vector<1x512xf32>,
    %c0_1 = arith.constant 0 : index
    %c0_2 = arith.constant 0 : index
    %2 = vector.load %arg0[%c0_1, %c0_2] : memref<1x456xf32, #tpu.memory_space<vmem>>, vector<1x456xf32>
    %c0_3 = arith.constant 0 : index
    %c0_4 = arith.constant 0 : index
    %3 = vector.load %arg3[%c0_3, %c0_4] : memref<3x512xf32, #tpu.memory_space<vmem>>, vector<1x456xf32>
    %cst_5 = arith.constant 5.000000e-01 : f32
    %4 = vector.broadcast %cst_5 : f32 to vector<1x456xf32>
    %5 = arith.cmpf ogt, %3, %4 : vector<1x456xf32>
    %c1 = arith.constant 1 : index
    %c10 = arith.constant 10 : index
    %6 = vector.load %arg9[%c1, %c10] : memref<256x512xf32, #tpu.memory_space<vmem>>, vector<1x456xf32>
    tpu.vector_store %arg9[%c1, %c10], %2 {strides = array<i32>} : memref<256x512xf32, #tpu.memory_space<vmem>>, vector<1x456xf32>,
    %c2 = arith.constant 2 : index
    %c9 = arith.constant 9 : index
    %7 = vector.load %arg9[%c2, %c9] : memref<256x512xf32, #tpu.memory_space<vmem>>, vector<1x456xf32>
    tpu.vector_store %arg9[%c2, %c9], %2 {strides = array<i32>} : memref<256x512xf32, #tpu.memory_space<vmem>>, vector<1x456xf32>,
    %c3 = arith.constant 3 : index
    %c8 = arith.constant 8 : index
    %8 = vector.load %arg9[%c3, %c8] : memref<256x512xf32, #tpu.memory_space<vmem>>, vector<1x456xf32>
    tpu.vector_store %arg9[%c3, %c8], %2 {strides = array<i32>} : memref<256x512xf32, #tpu.memory_space<vmem>>, vector<1x456xf32>,
    %c4 = arith.constant 4 : index
    %c7 = arith.constant 7 : index
    %9 = vector.load %arg9[%c4, %c7] : memref<256x512xf32, #tpu.memory_space<vmem>>, vector<1x456xf32>
    tpu.vector_store %arg9[%c4, %c7], %2 {strides = array<i32>} : memref<256x512xf32, #tpu.memory_space<vmem>>, vector<1x456xf32>,
    %c5 = arith.constant 5 : index
    %c6 = arith.constant 6 : index
    %10 = vector.load %arg9[%c5, %c6] : memref<256x512xf32, #tpu.memory_space<vmem>>, vector<1x456xf32>
    tpu.vector_store %arg9[%c5, %c6], %2 {strides = array<i32>} : memref<256x512xf32, #tpu.memory_space<vmem>>, vector<1x456xf32>,
    %c0_6 = arith.constant 0 : index
    %c8_7 = arith.constant 8 : index
    %11 = vector.load %arg9[%c0_6, %c8_7] : memref<256x512xf32, #tpu.memory_space<vmem>>, vector<6x456xf32>
    %12 = arith.truncf %11 : vector<6x456xf32> to vector<6x456xbf16>
    %c0_8 = arith.constant 0 : index
    %c0_9 = arith.constant 0 : index
    %13 = vector.load %arg1[%c0_8, %c0_9] : memref<472x256xbf16, #tpu.memory_space<vmem>>, vector<9x6xbf16>
    %cst_10 = arith.constant dense<0.000000e+00> : vector<9x456xf32>
    %14 = tpu.matmul %13, %12, %cst_10 {dimension_numbers = #tpu.dot_dimension_numbers<[1], [0], [0], [1], [0, 0, 1, 1], [], []>} : vector<9x6xbf16>, vector<6x456xbf16>, vector<9x456xf32> -> vector<9x456xf32>
    %15 = vector.extract_strided_slice %14 {offsets = [6, 0], sizes = [3, 456], strides = [1, 1]} : vector<9x456xf32> to vector<3x456xf32>
    %16 = vector.extract_strided_slice %14 {offsets = [0, 0], sizes = [6, 456], strides = [1, 1]} : vector<9x456xf32> to vector<6x456xf32>
    %cst_11 = arith.constant 0.000000e+00 : f32
    %17 = vector.broadcast %cst_11 : f32 to vector<6x456xf32>
    %18 = arith.maximumf %16, %17 : vector<6x456xf32>
    %cst_12 = arith.constant 0.000000e+00 : f32
    %19 = vector.shape_cast %5 : vector<1x456xi1> to vector<1x456xi1>
    %20 = vector.broadcast %19 : vector<1x456xi1> to vector<6x456xi1>
    %21 = vector.broadcast %cst_12 : f32 to vector<6x456xf32>
    %22 = arith.select %20, %18, %21 : vector<6x456xi1>, vector<6x456xf32>
    %c1_13 = arith.constant 1 : index
    %c11 = arith.constant 11 : index
    %23 = vector.load %arg9[%c1_13, %c11] : memref<256x512xf32, #tpu.memory_space<vmem>>, vector<6x456xf32>
    tpu.vector_store %arg9[%c1_13, %c11], %22 {strides = array<i32>} : memref<256x512xf32, #tpu.memory_space<vmem>>, vector<6x456xf32>,
    %c7_14 = arith.constant 7 : index
    %c10_15 = arith.constant 10 : index
    %24 = vector.load %arg9[%c7_14, %c10_15] : memref<256x512xf32, #tpu.memory_space<vmem>>, vector<6x456xf32>
    tpu.vector_store %arg9[%c7_14, %c10_15], %22 {strides = array<i32>} : memref<256x512xf32, #tpu.memory_space<vmem>>, vector<6x456xf32>,
    %c13 = arith.constant 13 : index
    %c9_16 = arith.constant 9 : index
    %25 = vector.load %arg9[%c13, %c9_16] : memref<256x512xf32, #tpu.memory_space<vmem>>, vector<6x456xf32>
    tpu.vector_store %arg9[%c13, %c9_16], %22 {strides = array<i32>} : memref<256x512xf32, #tpu.memory_space<vmem>>, vector<6x456xf32>,
    %c19 = arith.constant 19 : index
    %c8_17 = arith.constant 8 : index
    %26 = vector.load %arg9[%c19, %c8_17] : memref<256x512xf32, #tpu.memory_space<vmem>>, vector<6x456xf32>
    tpu.vector_store %arg9[%c19, %c8_17], %22 {strides = array<i32>} : memref<256x512xf32, #tpu.memory_space<vmem>>, vector<6x456xf32>,
    %c25 = arith.constant 25 : index
    %c7_18 = arith.constant 7 : index
    %27 = vector.load %arg9[%c25, %c7_18] : memref<256x512xf32, #tpu.memory_space<vmem>>, vector<6x456xf32>
    tpu.vector_store %arg9[%c25, %c7_18], %22 {strides = array<i32>} : memref<256x512xf32, #tpu.memory_space<vmem>>, vector<6x456xf32>,
    %c31 = arith.constant 31 : index
    %c6_19 = arith.constant 6 : index
    %28 = vector.load %arg9[%c31, %c6_19] : memref<256x512xf32, #tpu.memory_space<vmem>>, vector<6x456xf32>
    tpu.vector_store %arg9[%c31, %c6_19], %22 {strides = array<i32>} : memref<256x512xf32, #tpu.memory_space<vmem>>, vector<6x456xf32>,
    %c37 = arith.constant 37 : index
    %c5_20 = arith.constant 5 : index
    %29 = vector.load %arg9[%c37, %c5_20] : memref<256x512xf32, #tpu.memory_space<vmem>>, vector<6x456xf32>
    tpu.vector_store %arg9[%c37, %c5_20], %22 {strides = array<i32>} : memref<256x512xf32, #tpu.memory_space<vmem>>, vector<6x456xf32>,
    %c0_21 = arith.constant 0 : index
    %c8_22 = arith.constant 8 : index
    %30 = vector.load %arg9[%c0_21, %c8_22] : memref<256x512xf32, #tpu.memory_space<vmem>>, vector<43x456xf32>
    %31 = arith.truncf %30 : vector<43x456xf32> to vector<43x456xbf16>
    %c16 = arith.constant 16 : index
    %c0_23 = arith.constant 0 : index
    %32 = vector.load %arg1[%c16, %c0_23] : memref<472x256xbf16, #tpu.memory_space<vmem>>, vector<6x43xbf16>
    %cst_24 = arith.constant dense<0.000000e+00> : vector<6x456xf32>
    %33 = tpu.matmul %32, %31, %cst_24 {dimension_numbers = #tpu.dot_dimension_numbers<[1], [0], [0], [1], [0, 0, 1, 1], [], []>} : vector<6x43xbf16>, vector<43x456xbf16>, vector<6x456xf32> -> vector<6x456xf32>
    %cst_25 = arith.constant 0.000000e+00 : f32
    %34 = vector.broadcast %cst_25 : f32 to vector<6x456xf32>
    %35 = arith.maximumf %33, %34 : vector<6x456xf32>
    %36 = vector.extract_strided_slice %35 {offsets = [0, 0], sizes = [3, 456], strides = [1, 1]} : vector<6x456xf32> to vector<3x456xf32>
    %37 = vector.extract_strided_slice %35 {offsets = [3, 0], sizes = [3, 456], strides = [1, 1]} : vector<6x456xf32> to vector<3x456xf32>
    %38 = arith.addf %36, %37 : vector<3x456xf32>
    %39 = arith.addf %38, %15 : vector<3x456xf32>
    %cst_26 = arith.constant 0.000000e+00 : f32
    %40 = vector.shape_cast %5 : vector<1x456xi1> to vector<1x456xi1>
    %41 = vector.broadcast %40 : vector<1x456xi1> to vector<3x456xi1>
    %42 = vector.broadcast %cst_26 : f32 to vector<3x456xf32>
    %43 = arith.select %41, %39, %42 : vector<3x456xi1>, vector<3x456xf32>
    %c1_27 = arith.constant 1 : index
    %c10_28 = arith.constant 10 : index
    %44 = vector.load %arg9[%c1_27, %c10_28] : memref<256x512xf32, #tpu.memory_space<vmem>>, vector<3x456xf32>
    tpu.vector_store %arg9[%c1_27, %c10_28], %43 {strides = array<i32>} : memref<256x512xf32, #tpu.memory_space<vmem>>, vector<3x456xf32>,
    %c4_29 = arith.constant 4 : index
    %c9_30 = arith.constant 9 : index
    %45 = vector.load %arg9[%c4_29, %c9_30] : memref<256x512xf32, #tpu.memory_space<vmem>>, vector<3x456xf32>
    tpu.vector_store %arg9[%c4_29, %c9_30], %43 {strides = array<i32>} : memref<256x512xf32, #tpu.memory_space<vmem>>, vector<3x456xf32>,
    %c7_31 = arith.constant 7 : index
    %c8_32 = arith.constant 8 : index
    %46 = vector.load %arg9[%c7_31, %c8_32] : memref<256x512xf32, #tpu.memory_space<vmem>>, vector<3x456xf32>
    tpu.vector_store %arg9[%c7_31, %c8_32], %43 {strides = array<i32>} : memref<256x512xf32, #tpu.memory_space<vmem>>, vector<3x456xf32>,
    %c10_33 = arith.constant 10 : index
    %c7_34 = arith.constant 7 : index
    %47 = vector.load %arg9[%c10_33, %c7_34] : memref<256x512xf32, #tpu.memory_space<vmem>>, vector<3x456xf32>
    tpu.vector_store %arg9[%c10_33, %c7_34], %43 {strides = array<i32>} : memref<256x512xf32, #tpu.memory_space<vmem>>, vector<3x456xf32>,
    %c13_35 = arith.constant 13 : index
    %c6_36 = arith.constant 6 : index
    %48 = vector.load %arg9[%c13_35, %c6_36] : memref<256x512xf32, #tpu.memory_space<vmem>>, vector<3x456xf32>
    tpu.vector_store %arg9[%c13_35, %c6_36], %43 {strides = array<i32>} : memref<256x512xf32, #tpu.memory_space<vmem>>, vector<3x456xf32>,
    %c0_37 = arith.constant 0 : index
    %c8_38 = arith.constant 8 : index
    %49 = vector.load %arg9[%c0_37, %c8_38] : memref<256x512xf32, #tpu.memory_space<vmem>>, vector<16x456xf32>
    %50 = arith.truncf %49 : vector<16x456xf32> to vector<16x456xbf16>
    %c24 = arith.constant 24 : index
    %c0_39 = arith.constant 0 : index
    %51 = vector.load %arg1[%c24, %c0_39] : memref<472x256xbf16, #tpu.memory_space<vmem>>, vector<6x16xbf16>
    %cst_40 = arith.constant dense<0.000000e+00> : vector<6x456xf32>
    %52 = tpu.matmul %51, %50, %cst_40 {dimension_numbers = #tpu.dot_dimension_numbers<[1], [0], [0], [1], [0, 0, 1, 1], [], []>} : vector<6x16xbf16>, vector<16x456xbf16>, vector<6x456xf32> -> vector<6x456xf32>
    %cst_41 = arith.constant 0.000000e+00 : f32
    %53 = vector.broadcast %cst_41 : f32 to vector<6x456xf32>
    %54 = arith.maximumf %52, %53 : vector<6x456xf32>
    %cst_42 = arith.constant 0.000000e+00 : f32
    %55 = vector.shape_cast %5 : vector<1x456xi1> to vector<1x456xi1>
    %56 = vector.broadcast %55 : vector<1x456xi1> to vector<6x456xi1>
    %57 = vector.broadcast %cst_42 : f32 to vector<6x456xf32>
    %58 = arith.select %56, %54, %57 : vector<6x456xi1>, vector<6x456xf32>
    %c1_43 = arith.constant 1 : index
    %c11_44 = arith.constant 11 : index
    %59 = vector.load %arg9[%c1_43, %c11_44] : memref<256x512xf32, #tpu.memory_space<vmem>>, vector<6x456xf32>
    tpu.vector_store %arg9[%c1_43, %c11_44], %58 {strides = array<i32>} : memref<256x512xf32, #tpu.memory_space<vmem>>, vector<6x456xf32>,
    %c7_45 = arith.constant 7 : index
    %c10_46 = arith.constant 10 : index
    %60 = vector.load %arg9[%c7_45, %c10_46] : memref<256x512xf32, #tpu.memory_space<vmem>>, vector<6x456xf32>
    tpu.vector_store %arg9[%c7_45, %c10_46], %58 {strides = array<i32>} : memref<256x512xf32, #tpu.memory_space<vmem>>, vector<6x456xf32>,
    %c13_47 = arith.constant 13 : index
    %c9_48 = arith.constant 9 : index
    %61 = vector.load %arg9[%c13_47, %c9_48] : memref<256x512xf32, #tpu.memory_space<vmem>>, vector<6x456xf32>
    tpu.vector_store %arg9[%c13_47, %c9_48], %58 {strides = array<i32>} : memref<256x512xf32, #tpu.memory_space<vmem>>, vector<6x456xf32>,
    %c19_49 = arith.constant 19 : index
    %c8_50 = arith.constant 8 : index
    %62 = vector.load %arg9[%c19_49, %c8_50] : memref<256x512xf32, #tpu.memory_space<vmem>>, vector<6x456xf32>
    tpu.vector_store %arg9[%c19_49, %c8_50], %58 {strides = array<i32>} : memref<256x512xf32, #tpu.memory_space<vmem>>, vector<6x456xf32>,
    %c25_51 = arith.constant 25 : index
    %c7_52 = arith.constant 7 : index
    %63 = vector.load %arg9[%c25_51, %c7_52] : memref<256x512xf32, #tpu.memory_space<vmem>>, vector<6x456xf32>
    tpu.vector_store %arg9[%c25_51, %c7_52], %58 {strides = array<i32>} : memref<256x512xf32, #tpu.memory_space<vmem>>, vector<6x456xf32>,
    %c31_53 = arith.constant 31 : index
    %c6_54 = arith.constant 6 : index
    %64 = vector.load %arg9[%c31_53, %c6_54] : memref<256x512xf32, #tpu.memory_space<vmem>>, vector<6x456xf32>
    tpu.vector_store %arg9[%c31_53, %c6_54], %58 {strides = array<i32>} : memref<256x512xf32, #tpu.memory_space<vmem>>, vector<6x456xf32>,
    %c37_55 = arith.constant 37 : index
    %c5_56 = arith.constant 5 : index
    %65 = vector.load %arg9[%c37_55, %c5_56] : memref<256x512xf32, #tpu.memory_space<vmem>>, vector<6x456xf32>
    tpu.vector_store %arg9[%c37_55, %c5_56], %58 {strides = array<i32>} : memref<256x512xf32, #tpu.memory_space<vmem>>, vector<6x456xf32>,
    %c0_57 = arith.constant 0 : index
    %c8_58 = arith.constant 8 : index
    %66 = vector.load %arg9[%c0_57, %c8_58] : memref<256x512xf32, #tpu.memory_space<vmem>>, vector<43x456xf32>
    %67 = arith.truncf %66 : vector<43x456xf32> to vector<43x456xbf16>
    %c32 = arith.constant 32 : index
    %c0_59 = arith.constant 0 : index
    %68 = vector.load %arg1[%c32, %c0_59] : memref<472x256xbf16, #tpu.memory_space<vmem>>, vector<6x43xbf16>
    %cst_60 = arith.constant dense<0.000000e+00> : vector<6x456xf32>
    %69 = tpu.matmul %68, %67, %cst_60 {dimension_numbers = #tpu.dot_dimension_numbers<[1], [0], [0], [1], [0, 0, 1, 1], [], []>} : vector<6x43xbf16>, vector<43x456xbf16>, vector<6x456xf32> -> vector<6x456xf32>
    %cst_61 = arith.constant 0.000000e+00 : f32
    %70 = vector.broadcast %cst_61 : f32 to vector<6x456xf32>
    %71 = arith.maximumf %69, %70 : vector<6x456xf32>
    %72 = vector.extract_strided_slice %71 {offsets = [0, 0], sizes = [3, 456], strides = [1, 1]} : vector<6x456xf32> to vector<3x456xf32>
    %73 = vector.extract_strided_slice %71 {offsets = [3, 0], sizes = [3, 456], strides = [1, 1]} : vector<6x456xf32> to vector<3x456xf32>
    %74 = arith.addf %72, %73 : vector<3x456xf32>
    %75 = arith.addf %74, %43 : vector<3x456xf32>
    %cst_62 = arith.constant 0.000000e+00 : f32
    %76 = vector.shape_cast %5 : vector<1x456xi1> to vector<1x456xi1>
    %77 = vector.broadcast %76 : vector<1x456xi1> to vector<3x456xi1>
    %78 = vector.broadcast %cst_62 : f32 to vector<3x456xf32>
    %79 = arith.select %77, %75, %78 : vector<3x456xi1>, vector<3x456xf32>
    %c1_63 = arith.constant 1 : index
    %c10_64 = arith.constant 10 : index
    %80 = vector.load %arg9[%c1_63, %c10_64] : memref<256x512xf32, #tpu.memory_space<vmem>>, vector<3x456xf32>
    tpu.vector_store %arg9[%c1_63, %c10_64], %79 {strides = array<i32>} : memref<256x512xf32, #tpu.memory_space<vmem>>, vector<3x456xf32>,
    %c4_65 = arith.constant 4 : index
    %c9_66 = arith.constant 9 : index
    %81 = vector.load %arg9[%c4_65, %c9_66] : memref<256x512xf32, #tpu.memory_space<vmem>>, vector<3x456xf32>
    tpu.vector_store %arg9[%c4_65, %c9_66], %79 {strides = array<i32>} : memref<256x512xf32, #tpu.memory_space<vmem>>, vector<3x456xf32>,
    %c7_67 = arith.constant 7 : index
    %c8_68 = arith.constant 8 : index
    %82 = vector.load %arg9[%c7_67, %c8_68] : memref<256x512xf32, #tpu.memory_space<vmem>>, vector<3x456xf32>
    tpu.vector_store %arg9[%c7_67, %c8_68], %79 {strides = array<i32>} : memref<256x512xf32, #tpu.memory_space<vmem>>, vector<3x456xf32>,
    %c10_69 = arith.constant 10 : index
    %c7_70 = arith.constant 7 : index
    %83 = vector.load %arg9[%c10_69, %c7_70] : memref<256x512xf32, #tpu.memory_space<vmem>>, vector<3x456xf32>
    tpu.vector_store %arg9[%c10_69, %c7_70], %79 {strides = array<i32>} : memref<256x512xf32, #tpu.memory_space<vmem>>, vector<3x456xf32>,
    %c13_71 = arith.constant 13 : index
    %c6_72 = arith.constant 6 : index
    %84 = vector.load %arg9[%c13_71, %c6_72] : memref<256x512xf32, #tpu.memory_space<vmem>>, vector<3x456xf32>
    tpu.vector_store %arg9[%c13_71, %c6_72], %79 {strides = array<i32>} : memref<256x512xf32, #tpu.memory_space<vmem>>, vector<3x456xf32>,
    %c0_73 = arith.constant 0 : index
    %c8_74 = arith.constant 8 : index
    %85 = vector.load %arg9[%c0_73, %c8_74] : memref<256x512xf32, #tpu.memory_space<vmem>>, vector<16x456xf32>
    %86 = arith.truncf %85 : vector<16x456xf32> to vector<16x456xbf16>
    %c40 = arith.constant 40 : index
    %c0_75 = arith.constant 0 : index
    %87 = vector.load %arg1[%c40, %c0_75] : memref<472x256xbf16, #tpu.memory_space<vmem>>, vector<6x16xbf16>
    %cst_76 = arith.constant dense<0.000000e+00> : vector<6x456xf32>
    %88 = tpu.matmul %87, %86, %cst_76 {dimension_numbers = #tpu.dot_dimension_numbers<[1], [0], [0], [1], [0, 0, 1, 1], [], []>} : vector<6x16xbf16>, vector<16x456xbf16>, vector<6x456xf32> -> vector<6x456xf32>
    %cst_77 = arith.constant 0.000000e+00 : f32
    %89 = vector.broadcast %cst_77 : f32 to vector<6x456xf32>
    %90 = arith.maximumf %88, %89 : vector<6x456xf32>
    %cst_78 = arith.constant 0.000000e+00 : f32
    %91 = vector.shape_cast %5 : vector<1x456xi1> to vector<1x456xi1>
    %92 = vector.broadcast %91 : vector<1x456xi1> to vector<6x456xi1>
    %93 = vector.broadcast %cst_78 : f32 to vector<6x456xf32>
    %94 = arith.select %92, %90, %93 : vector<6x456xi1>, vector<6x456xf32>
    %c1_79 = arith.constant 1 : index
    %c11_80 = arith.constant 11 : index
    %95 = vector.load %arg9[%c1_79, %c11_80] : memref<256x512xf32, #tpu.memory_space<vmem>>, vector<6x456xf32>
    tpu.vector_store %arg9[%c1_79, %c11_80], %94 {strides = array<i32>} : memref<256x512xf32, #tpu.memory_space<vmem>>, vector<6x456xf32>,
    %c7_81 = arith.constant 7 : index
    %c10_82 = arith.constant 10 : index
    %96 = vector.load %arg9[%c7_81, %c10_82] : memref<256x512xf32, #tpu.memory_space<vmem>>, vector<6x456xf32>
    tpu.vector_store %arg9[%c7_81, %c10_82], %94 {strides = array<i32>} : memref<256x512xf32, #tpu.memory_space<vmem>>, vector<6x456xf32>,
    %c13_83 = arith.constant 13 : index
    %c9_84 = arith.constant 9 : index
    %97 = vector.load %arg9[%c13_83, %c9_84] : memref<256x512xf32, #tpu.memory_space<vmem>>, vector<6x456xf32>
    tpu.vector_store %arg9[%c13_83, %c9_84], %94 {strides = array<i32>} : memref<256x512xf32, #tpu.memory_space<vmem>>, vector<6x456xf32>,
    %c19_85 = arith.constant 19 : index
    %c8_86 = arith.constant 8 : index
    %98 = vector.load %arg9[%c19_85, %c8_86] : memref<256x512xf32, #tpu.memory_space<vmem>>, vector<6x456xf32>
    tpu.vector_store %arg9[%c19_85, %c8_86], %94 {strides = array<i32>} : memref<256x512xf32, #tpu.memory_space<vmem>>, vector<6x456xf32>,
    %c25_87 = arith.constant 25 : index
    %c7_88 = arith.constant 7 : index
    %99 = vector.load %arg9[%c25_87, %c7_88] : memref<256x512xf32, #tpu.memory_space<vmem>>, vector<6x456xf32>
    tpu.vector_store %arg9[%c25_87, %c7_88], %94 {strides = array<i32>} : memref<256x512xf32, #tpu.memory_space<vmem>>, vector<6x456xf32>,
    %c31_89 = arith.constant 31 : index
    %c6_90 = arith.constant 6 : index
    %100 = vector.load %arg9[%c31_89, %c6_90] : memref<256x512xf32, #tpu.memory_space<vmem>>, vector<6x456xf32>
    tpu.vector_store %arg9[%c31_89, %c6_90], %94 {strides = array<i32>} : memref<256x512xf32, #tpu.memory_space<vmem>>, vector<6x456xf32>,
    %c37_91 = arith.constant 37 : index
    %c5_92 = arith.constant 5 : index
    %101 = vector.load %arg9[%c37_91, %c5_92] : memref<256x512xf32, #tpu.memory_space<vmem>>, vector<6x456xf32>
    tpu.vector_store %arg9[%c37_91, %c5_92], %94 {strides = array<i32>} : memref<256x512xf32, #tpu.memory_space<vmem>>, vector<6x456xf32>,
    %c0_93 = arith.constant 0 : index
    %c8_94 = arith.constant 8 : index
    %102 = vector.load %arg9[%c0_93, %c8_94] : memref<256x512xf32, #tpu.memory_space<vmem>>, vector<43x456xf32>
    %103 = arith.truncf %102 : vector<43x456xf32> to vector<43x456xbf16>
    %c48 = arith.constant 48 : index
    %c0_95 = arith.constant 0 : index
    %104 = vector.load %arg1[%c48, %c0_95] : memref<472x256xbf16, #tpu.memory_space<vmem>>, vector<6x43xbf16>
    %cst_96 = arith.constant dense<0.000000e+00> : vector<6x456xf32>
    %105 = tpu.matmul %104, %103, %cst_96 {dimension_numbers = #tpu.dot_dimension_numbers<[1], [0], [0], [1], [0, 0, 1, 1], [], []>} : vector<6x43xbf16>, vector<43x456xbf16>, vector<6x456xf32> -> vector<6x456xf32>
    %cst_97 = arith.constant 0.000000e+00 : f32
    %106 = vector.broadcast %cst_97 : f32 to vector<6x456xf32>
    %107 = arith.maximumf %105, %106 : vector<6x456xf32>
    %108 = vector.extract_strided_slice %107 {offsets = [0, 0], sizes = [3, 456], strides = [1, 1]} : vector<6x456xf32> to vector<3x456xf32>
    %109 = vector.extract_strided_slice %107 {offsets = [3, 0], sizes = [3, 456], strides = [1, 1]} : vector<6x456xf32> to vector<3x456xf32>
    %110 = arith.addf %108, %109 : vector<3x456xf32>
    %111 = arith.addf %110, %79 : vector<3x456xf32>
    %cst_98 = arith.constant 0.000000e+00 : f32
    %112 = vector.shape_cast %5 : vector<1x456xi1> to vector<1x456xi1>
    %113 = vector.broadcast %112 : vector<1x456xi1> to vector<3x456xi1>
    %114 = vector.broadcast %cst_98 : f32 to vector<3x456xf32>
    %115 = arith.select %113, %111, %114 : vector<3x456xi1>, vector<3x456xf32>
    %c0_99 = arith.constant 0 : index
    %c0_100 = arith.constant 0 : index
    %116 = vector.load %arg2[%c0_99, %c0_100] : memref<456x512xbf16, #tpu.memory_space<vmem>>, vector<456x168xbf16>
    %117 = arith.truncf %115 : vector<3x456xf32> to vector<3x456xbf16>
    %cst_101 = arith.constant dense<0.000000e+00> : vector<3x168xf32>
    %118 = tpu.matmul %117, %116, %cst_101 {dimension_numbers = #tpu.dot_dimension_numbers<[1], [0], [0], [1], [0, 0, 1, 1], [], []>} : vector<3x456xbf16>, vector<456x168xbf16>, vector<3x168xf32> -> vector<3x168xf32>
    %cst_102 = arith.constant 0.333333343 : f32
    %119 = vector.broadcast %cst_102 : f32 to vector<3x168xf32>
    %120 = arith.mulf %118, %119 : vector<3x168xf32>
    %c1_103 = arith.constant 1 : index
    %c0_104 = arith.constant 0 : index
    %121 = vector.load %arg3[%c1_103, %c0_104] : memref<3x512xf32, #tpu.memory_space<vmem>>, vector<1x168xf32>
    %cst_105 = arith.constant 5.000000e-01 : f32
    %122 = vector.broadcast %cst_105 : f32 to vector<1x168xf32>
    %123 = arith.cmpf ogt, %121, %122 : vector<1x168xf32>
    %c1_106 = arith.constant 1 : index
    %c10_107 = arith.constant 10 : index
    %124 = vector.load %arg9[%c1_106, %c10_107] : memref<256x512xf32, #tpu.memory_space<vmem>>, vector<3x168xf32>
    tpu.vector_store %arg9[%c1_106, %c10_107], %120 {strides = array<i32>} : memref<256x512xf32, #tpu.memory_space<vmem>>, vector<3x168xf32>,
    %c4_108 = arith.constant 4 : index
    %c9_109 = arith.constant 9 : index
    %125 = vector.load %arg9[%c4_108, %c9_109] : memref<256x512xf32, #tpu.memory_space<vmem>>, vector<3x168xf32>
    tpu.vector_store %arg9[%c4_108, %c9_109], %120 {strides = array<i32>} : memref<256x512xf32, #tpu.memory_space<vmem>>, vector<3x168xf32>,
    %c7_110 = arith.constant 7 : index
    %c8_111 = arith.constant 8 : index
    %126 = vector.load %arg9[%c7_110, %c8_111] : memref<256x512xf32, #tpu.memory_space<vmem>>, vector<3x168xf32>
    tpu.vector_store %arg9[%c7_110, %c8_111], %120 {strides = array<i32>} : memref<256x512xf32, #tpu.memory_space<vmem>>, vector<3x168xf32>,
    %c10_112 = arith.constant 10 : index
    %c7_113 = arith.constant 7 : index
    %127 = vector.load %arg9[%c10_112, %c7_113] : memref<256x512xf32, #tpu.memory_space<vmem>>, vector<3x168xf32>
    tpu.vector_store %arg9[%c10_112, %c7_113], %120 {strides = array<i32>} : memref<256x512xf32, #tpu.memory_space<vmem>>, vector<3x168xf32>,
    %c13_114 = arith.constant 13 : index
    %c6_115 = arith.constant 6 : index
    %128 = vector.load %arg9[%c13_114, %c6_115] : memref<256x512xf32, #tpu.memory_space<vmem>>, vector<3x168xf32>
    tpu.vector_store %arg9[%c13_114, %c6_115], %120 {strides = array<i32>} : memref<256x512xf32, #tpu.memory_space<vmem>>, vector<3x168xf32>,
    %c0_116 = arith.constant 0 : index
    %c8_117 = arith.constant 8 : index
    %129 = vector.load %arg9[%c0_116, %c8_117] : memref<256x512xf32, #tpu.memory_space<vmem>>, vector<16x168xf32>
    %130 = arith.truncf %129 : vector<16x168xf32> to vector<16x168xbf16>
    %c56 = arith.constant 56 : index
    %c0_118 = arith.constant 0 : index
    %131 = vector.load %arg1[%c56, %c0_118] : memref<472x256xbf16, #tpu.memory_space<vmem>>, vector<18x16xbf16>
    %cst_119 = arith.constant dense<0.000000e+00> : vector<18x168xf32>
    %132 = tpu.matmul %131, %130, %cst_119 {dimension_numbers = #tpu.dot_dimension_numbers<[1], [0], [0], [1], [0, 0, 1, 1], [], []>} : vector<18x16xbf16>, vector<16x168xbf16>, vector<18x168xf32> -> vector<18x168xf32>
    %133 = vector.extract_strided_slice %132 {offsets = [12, 0], sizes = [6, 168], strides = [1, 1]} : vector<18x168xf32> to vector<6x168xf32>
    %134 = vector.extract_strided_slice %132 {offsets = [0, 0], sizes = [12, 168], strides = [1, 1]} : vector<18x168xf32> to vector<12x168xf32>
    %cst_120 = arith.constant 0.000000e+00 : f32
    %135 = vector.broadcast %cst_120 : f32 to vector<12x168xf32>
    %136 = arith.maximumf %134, %135 : vector<12x168xf32>
    %cst_121 = arith.constant 0.000000e+00 : f32
    %137 = vector.shape_cast %123 : vector<1x168xi1> to vector<1x168xi1>
    %138 = vector.broadcast %137 : vector<1x168xi1> to vector<12x168xi1>
    %139 = vector.broadcast %cst_121 : f32 to vector<12x168xf32>
    %140 = arith.select %138, %136, %139 : vector<12x168xi1>, vector<12x168xf32>
    %c1_122 = arith.constant 1 : index
    %c11_123 = arith.constant 11 : index
    %141 = vector.load %arg9[%c1_122, %c11_123] : memref<256x512xf32, #tpu.memory_space<vmem>>, vector<12x168xf32>
    tpu.vector_store %arg9[%c1_122, %c11_123], %140 {strides = array<i32>} : memref<256x512xf32, #tpu.memory_space<vmem>>, vector<12x168xf32>,
    %c13_124 = arith.constant 13 : index
    %c10_125 = arith.constant 10 : index
    %142 = vector.load %arg9[%c13_124, %c10_125] : memref<256x512xf32, #tpu.memory_space<vmem>>, vector<12x168xf32>
    tpu.vector_store %arg9[%c13_124, %c10_125], %140 {strides = array<i32>} : memref<256x512xf32, #tpu.memory_space<vmem>>, vector<12x168xf32>,
    %c25_126 = arith.constant 25 : index
    %c9_127 = arith.constant 9 : index
    %143 = vector.load %arg9[%c25_126, %c9_127] : memref<256x512xf32, #tpu.memory_space<vmem>>, vector<12x168xf32>
    tpu.vector_store %arg9[%c25_126, %c9_127], %140 {strides = array<i32>} : memref<256x512xf32, #tpu.memory_space<vmem>>, vector<12x168xf32>,
    %c37_128 = arith.constant 37 : index
    %c8_129 = arith.constant 8 : index
    %144 = vector.load %arg9[%c37_128, %c8_129] : memref<256x512xf32, #tpu.memory_space<vmem>>, vector<12x168xf32>
    tpu.vector_store %arg9[%c37_128, %c8_129], %140 {strides = array<i32>} : memref<256x512xf32, #tpu.memory_space<vmem>>, vector<12x168xf32>,
    %c49 = arith.constant 49 : index
    %c7_130 = arith.constant 7 : index
    %145 = vector.load %arg9[%c49, %c7_130] : memref<256x512xf32, #tpu.memory_space<vmem>>, vector<12x168xf32>
    tpu.vector_store %arg9[%c49, %c7_130], %140 {strides = array<i32>} : memref<256x512xf32, #tpu.memory_space<vmem>>, vector<12x168xf32>,
    %c61 = arith.constant 61 : index
    %c6_131 = arith.constant 6 : index
    %146 = vector.load %arg9[%c61, %c6_131] : memref<256x512xf32, #tpu.memory_space<vmem>>, vector<12x168xf32>
    tpu.vector_store %arg9[%c61, %c6_131], %140 {strides = array<i32>} : memref<256x512xf32, #tpu.memory_space<vmem>>, vector<12x168xf32>,
    %c73 = arith.constant 73 : index
    %c5_132 = arith.constant 5 : index
    %147 = vector.load %arg9[%c73, %c5_132] : memref<256x512xf32, #tpu.memory_space<vmem>>, vector<12x168xf32>
    tpu.vector_store %arg9[%c73, %c5_132], %140 {strides = array<i32>} : memref<256x512xf32, #tpu.memory_space<vmem>>, vector<12x168xf32>,
    %c0_133 = arith.constant 0 : index
    %c8_134 = arith.constant 8 : index
    %148 = vector.load %arg9[%c0_133, %c8_134] : memref<256x512xf32, #tpu.memory_space<vmem>>, vector<85x168xf32>
    %149 = arith.truncf %148 : vector<85x168xf32> to vector<85x168xbf16>
    %c80 = arith.constant 80 : index
    %c0_135 = arith.constant 0 : index
    %150 = vector.load %arg1[%c80, %c0_135] : memref<472x256xbf16, #tpu.memory_space<vmem>>, vector<12x85xbf16>
    %cst_136 = arith.constant dense<0.000000e+00> : vector<12x168xf32>
    %151 = tpu.matmul %150, %149, %cst_136 {dimension_numbers = #tpu.dot_dimension_numbers<[1], [0], [0], [1], [0, 0, 1, 1], [], []>} : vector<12x85xbf16>, vector<85x168xbf16>, vector<12x168xf32> -> vector<12x168xf32>
    %cst_137 = arith.constant 0.000000e+00 : f32
    %152 = vector.broadcast %cst_137 : f32 to vector<12x168xf32>
    %153 = arith.maximumf %151, %152 : vector<12x168xf32>
    %154 = vector.extract_strided_slice %153 {offsets = [0, 0], sizes = [6, 168], strides = [1, 1]} : vector<12x168xf32> to vector<6x168xf32>
    %155 = vector.extract_strided_slice %153 {offsets = [6, 0], sizes = [6, 168], strides = [1, 1]} : vector<12x168xf32> to vector<6x168xf32>
    %156 = arith.addf %154, %155 : vector<6x168xf32>
    %157 = arith.addf %156, %133 : vector<6x168xf32>
    %cst_138 = arith.constant 0.000000e+00 : f32
    %158 = vector.shape_cast %123 : vector<1x168xi1> to vector<1x168xi1>
    %159 = vector.broadcast %158 : vector<1x168xi1> to vector<6x168xi1>
    %160 = vector.broadcast %cst_138 : f32 to vector<6x168xf32>
    %161 = arith.select %159, %157, %160 : vector<6x168xi1>, vector<6x168xf32>
    %c1_139 = arith.constant 1 : index
    %c10_140 = arith.constant 10 : index
    %162 = vector.load %arg9[%c1_139, %c10_140] : memref<256x512xf32, #tpu.memory_space<vmem>>, vector<6x168xf32>
    tpu.vector_store %arg9[%c1_139, %c10_140], %161 {strides = array<i32>} : memref<256x512xf32, #tpu.memory_space<vmem>>, vector<6x168xf32>,
    %c7_141 = arith.constant 7 : index
    %c9_142 = arith.constant 9 : index
    %163 = vector.load %arg9[%c7_141, %c9_142] : memref<256x512xf32, #tpu.memory_space<vmem>>, vector<6x168xf32>
    tpu.vector_store %arg9[%c7_141, %c9_142], %161 {strides = array<i32>} : memref<256x512xf32, #tpu.memory_space<vmem>>, vector<6x168xf32>,
    %c13_143 = arith.constant 13 : index
    %c8_144 = arith.constant 8 : index
    %164 = vector.load %arg9[%c13_143, %c8_144] : memref<256x512xf32, #tpu.memory_space<vmem>>, vector<6x168xf32>
    tpu.vector_store %arg9[%c13_143, %c8_144], %161 {strides = array<i32>} : memref<256x512xf32, #tpu.memory_space<vmem>>, vector<6x168xf32>,
    %c19_145 = arith.constant 19 : index
    %c7_146 = arith.constant 7 : index
    %165 = vector.load %arg9[%c19_145, %c7_146] : memref<256x512xf32, #tpu.memory_space<vmem>>, vector<6x168xf32>
    tpu.vector_store %arg9[%c19_145, %c7_146], %161 {strides = array<i32>} : memref<256x512xf32, #tpu.memory_space<vmem>>, vector<6x168xf32>,
    %c25_147 = arith.constant 25 : index
    %c6_148 = arith.constant 6 : index
    %166 = vector.load %arg9[%c25_147, %c6_148] : memref<256x512xf32, #tpu.memory_space<vmem>>, vector<6x168xf32>
    tpu.vector_store %arg9[%c25_147, %c6_148], %161 {strides = array<i32>} : memref<256x512xf32, #tpu.memory_space<vmem>>, vector<6x168xf32>,
    %c0_149 = arith.constant 0 : index
    %c8_150 = arith.constant 8 : index
    %167 = vector.load %arg9[%c0_149, %c8_150] : memref<256x512xf32, #tpu.memory_space<vmem>>, vector<31x168xf32>
    %168 = arith.truncf %167 : vector<31x168xf32> to vector<31x168xbf16>
    %c96 = arith.constant 96 : index
    %c0_151 = arith.constant 0 : index
    %169 = vector.load %arg1[%c96, %c0_151] : memref<472x256xbf16, #tpu.memory_space<vmem>>, vector<12x31xbf16>
    %cst_152 = arith.constant dense<0.000000e+00> : vector<12x168xf32>
    %170 = tpu.matmul %169, %168, %cst_152 {dimension_numbers = #tpu.dot_dimension_numbers<[1], [0], [0], [1], [0, 0, 1, 1], [], []>} : vector<12x31xbf16>, vector<31x168xbf16>, vector<12x168xf32> -> vector<12x168xf32>
    %cst_153 = arith.constant 0.000000e+00 : f32
    %171 = vector.broadcast %cst_153 : f32 to vector<12x168xf32>
    %172 = arith.maximumf %170, %171 : vector<12x168xf32>
    %cst_154 = arith.constant 0.000000e+00 : f32
    %173 = vector.shape_cast %123 : vector<1x168xi1> to vector<1x168xi1>
    %174 = vector.broadcast %173 : vector<1x168xi1> to vector<12x168xi1>
    %175 = vector.broadcast %cst_154 : f32 to vector<12x168xf32>
    %176 = arith.select %174, %172, %175 : vector<12x168xi1>, vector<12x168xf32>
    %c1_155 = arith.constant 1 : index
    %c11_156 = arith.constant 11 : index
    %177 = vector.load %arg9[%c1_155, %c11_156] : memref<256x512xf32, #tpu.memory_space<vmem>>, vector<12x168xf32>
    tpu.vector_store %arg9[%c1_155, %c11_156], %176 {strides = array<i32>} : memref<256x512xf32, #tpu.memory_space<vmem>>, vector<12x168xf32>,
    %c13_157 = arith.constant 13 : index
    %c10_158 = arith.constant 10 : index
    %178 = vector.load %arg9[%c13_157, %c10_158] : memref<256x512xf32, #tpu.memory_space<vmem>>, vector<12x168xf32>
    tpu.vector_store %arg9[%c13_157, %c10_158], %176 {strides = array<i32>} : memref<256x512xf32, #tpu.memory_space<vmem>>, vector<12x168xf32>,
    %c25_159 = arith.constant 25 : index
    %c9_160 = arith.constant 9 : index
    %179 = vector.load %arg9[%c25_159, %c9_160] : memref<256x512xf32, #tpu.memory_space<vmem>>, vector<12x168xf32>
    tpu.vector_store %arg9[%c25_159, %c9_160], %176 {strides = array<i32>} : memref<256x512xf32, #tpu.memory_space<vmem>>, vector<12x168xf32>,
    %c37_161 = arith.constant 37 : index
    %c8_162 = arith.constant 8 : index
    %180 = vector.load %arg9[%c37_161, %c8_162] : memref<256x512xf32, #tpu.memory_space<vmem>>, vector<12x168xf32>
    tpu.vector_store %arg9[%c37_161, %c8_162], %176 {strides = array<i32>} : memref<256x512xf32, #tpu.memory_space<vmem>>, vector<12x168xf32>,
    %c49_163 = arith.constant 49 : index
    %c7_164 = arith.constant 7 : index
    %181 = vector.load %arg9[%c49_163, %c7_164] : memref<256x512xf32, #tpu.memory_space<vmem>>, vector<12x168xf32>
    tpu.vector_store %arg9[%c49_163, %c7_164], %176 {strides = array<i32>} : memref<256x512xf32, #tpu.memory_space<vmem>>, vector<12x168xf32>,
    %c61_165 = arith.constant 61 : index
    %c6_166 = arith.constant 6 : index
    %182 = vector.load %arg9[%c61_165, %c6_166] : memref<256x512xf32, #tpu.memory_space<vmem>>, vector<12x168xf32>
    tpu.vector_store %arg9[%c61_165, %c6_166], %176 {strides = array<i32>} : memref<256x512xf32, #tpu.memory_space<vmem>>, vector<12x168xf32>,
    %c73_167 = arith.constant 73 : index
    %c5_168 = arith.constant 5 : index
    %183 = vector.load %arg9[%c73_167, %c5_168] : memref<256x512xf32, #tpu.memory_space<vmem>>, vector<12x168xf32>
    tpu.vector_store %arg9[%c73_167, %c5_168], %176 {strides = array<i32>} : memref<256x512xf32, #tpu.memory_space<vmem>>, vector<12x168xf32>,
    %c0_169 = arith.constant 0 : index
    %c8_170 = arith.constant 8 : index
    %184 = vector.load %arg9[%c0_169, %c8_170] : memref<256x512xf32, #tpu.memory_space<vmem>>, vector<85x168xf32>
    %185 = arith.truncf %184 : vector<85x168xf32> to vector<85x168xbf16>
    %c112 = arith.constant 112 : index
    %c0_171 = arith.constant 0 : index
    %186 = vector.load %arg1[%c112, %c0_171] : memref<472x256xbf16, #tpu.memory_space<vmem>>, vector<12x85xbf16>
    %cst_172 = arith.constant dense<0.000000e+00> : vector<12x168xf32>
    %187 = tpu.matmul %186, %185, %cst_172 {dimension_numbers = #tpu.dot_dimension_numbers<[1], [0], [0], [1], [0, 0, 1, 1], [], []>} : vector<12x85xbf16>, vector<85x168xbf16>, vector<12x168xf32> -> vector<12x168xf32>
    %cst_173 = arith.constant 0.000000e+00 : f32
    %188 = vector.broadcast %cst_173 : f32 to vector<12x168xf32>
    %189 = arith.maximumf %187, %188 : vector<12x168xf32>
    %190 = vector.extract_strided_slice %189 {offsets = [0, 0], sizes = [6, 168], strides = [1, 1]} : vector<12x168xf32> to vector<6x168xf32>
    %191 = vector.extract_strided_slice %189 {offsets = [6, 0], sizes = [6, 168], strides = [1, 1]} : vector<12x168xf32> to vector<6x168xf32>
    %192 = arith.addf %190, %191 : vector<6x168xf32>
    %193 = arith.addf %192, %161 : vector<6x168xf32>
    %cst_174 = arith.constant 0.000000e+00 : f32
    %194 = vector.shape_cast %123 : vector<1x168xi1> to vector<1x168xi1>
    %195 = vector.broadcast %194 : vector<1x168xi1> to vector<6x168xi1>
    %196 = vector.broadcast %cst_174 : f32 to vector<6x168xf32>
    %197 = arith.select %195, %193, %196 : vector<6x168xi1>, vector<6x168xf32>
    %c1_175 = arith.constant 1 : index
    %c10_176 = arith.constant 10 : index
    %198 = vector.load %arg9[%c1_175, %c10_176] : memref<256x512xf32, #tpu.memory_space<vmem>>, vector<6x168xf32>
    tpu.vector_store %arg9[%c1_175, %c10_176], %197 {strides = array<i32>} : memref<256x512xf32, #tpu.memory_space<vmem>>, vector<6x168xf32>,
    %c7_177 = arith.constant 7 : index
    %c9_178 = arith.constant 9 : index
    %199 = vector.load %arg9[%c7_177, %c9_178] : memref<256x512xf32, #tpu.memory_space<vmem>>, vector<6x168xf32>
    tpu.vector_store %arg9[%c7_177, %c9_178], %197 {strides = array<i32>} : memref<256x512xf32, #tpu.memory_space<vmem>>, vector<6x168xf32>,
    %c13_179 = arith.constant 13 : index
    %c8_180 = arith.constant 8 : index
    %200 = vector.load %arg9[%c13_179, %c8_180] : memref<256x512xf32, #tpu.memory_space<vmem>>, vector<6x168xf32>
    tpu.vector_store %arg9[%c13_179, %c8_180], %197 {strides = array<i32>} : memref<256x512xf32, #tpu.memory_space<vmem>>, vector<6x168xf32>,
    %c19_181 = arith.constant 19 : index
    %c7_182 = arith.constant 7 : index
    %201 = vector.load %arg9[%c19_181, %c7_182] : memref<256x512xf32, #tpu.memory_space<vmem>>, vector<6x168xf32>
    tpu.vector_store %arg9[%c19_181, %c7_182], %197 {strides = array<i32>} : memref<256x512xf32, #tpu.memory_space<vmem>>, vector<6x168xf32>,
    %c25_183 = arith.constant 25 : index
    %c6_184 = arith.constant 6 : index
    %202 = vector.load %arg9[%c25_183, %c6_184] : memref<256x512xf32, #tpu.memory_space<vmem>>, vector<6x168xf32>
    tpu.vector_store %arg9[%c25_183, %c6_184], %197 {strides = array<i32>} : memref<256x512xf32, #tpu.memory_space<vmem>>, vector<6x168xf32>,
    %c0_185 = arith.constant 0 : index
    %c8_186 = arith.constant 8 : index
    %203 = vector.load %arg9[%c0_185, %c8_186] : memref<256x512xf32, #tpu.memory_space<vmem>>, vector<31x168xf32>
    %204 = arith.truncf %203 : vector<31x168xf32> to vector<31x168xbf16>
    %c128 = arith.constant 128 : index
    %c0_187 = arith.constant 0 : index
    %205 = vector.load %arg1[%c128, %c0_187] : memref<472x256xbf16, #tpu.memory_space<vmem>>, vector<12x31xbf16>
    %cst_188 = arith.constant dense<0.000000e+00> : vector<12x168xf32>
    %206 = tpu.matmul %205, %204, %cst_188 {dimension_numbers = #tpu.dot_dimension_numbers<[1], [0], [0], [1], [0, 0, 1, 1], [], []>} : vector<12x31xbf16>, vector<31x168xbf16>, vector<12x168xf32> -> vector<12x168xf32>
    %cst_189 = arith.constant 0.000000e+00 : f32
    %207 = vector.broadcast %cst_189 : f32 to vector<12x168xf32>
    %208 = arith.maximumf %206, %207 : vector<12x168xf32>
    %cst_190 = arith.constant 0.000000e+00 : f32
    %209 = vector.shape_cast %123 : vector<1x168xi1> to vector<1x168xi1>
    %210 = vector.broadcast %209 : vector<1x168xi1> to vector<12x168xi1>
    %211 = vector.broadcast %cst_190 : f32 to vector<12x168xf32>
    %212 = arith.select %210, %208, %211 : vector<12x168xi1>, vector<12x168xf32>
    %c1_191 = arith.constant 1 : index
    %c11_192 = arith.constant 11 : index
    %213 = vector.load %arg9[%c1_191, %c11_192] : memref<256x512xf32, #tpu.memory_space<vmem>>, vector<12x168xf32>
    tpu.vector_store %arg9[%c1_191, %c11_192], %212 {strides = array<i32>} : memref<256x512xf32, #tpu.memory_space<vmem>>, vector<12x168xf32>,
    %c13_193 = arith.constant 13 : index
    %c10_194 = arith.constant 10 : index
    %214 = vector.load %arg9[%c13_193, %c10_194] : memref<256x512xf32, #tpu.memory_space<vmem>>, vector<12x168xf32>
    tpu.vector_store %arg9[%c13_193, %c10_194], %212 {strides = array<i32>} : memref<256x512xf32, #tpu.memory_space<vmem>>, vector<12x168xf32>,
    %c25_195 = arith.constant 25 : index
    %c9_196 = arith.constant 9 : index
    %215 = vector.load %arg9[%c25_195, %c9_196] : memref<256x512xf32, #tpu.memory_space<vmem>>, vector<12x168xf32>
    tpu.vector_store %arg9[%c25_195, %c9_196], %212 {strides = array<i32>} : memref<256x512xf32, #tpu.memory_space<vmem>>, vector<12x168xf32>,
    %c37_197 = arith.constant 37 : index
    %c8_198 = arith.constant 8 : index
    %216 = vector.load %arg9[%c37_197, %c8_198] : memref<256x512xf32, #tpu.memory_space<vmem>>, vector<12x168xf32>
    tpu.vector_store %arg9[%c37_197, %c8_198], %212 {strides = array<i32>} : memref<256x512xf32, #tpu.memory_space<vmem>>, vector<12x168xf32>,
    %c49_199 = arith.constant 49 : index
    %c7_200 = arith.constant 7 : index
    %217 = vector.load %arg9[%c49_199, %c7_200] : memref<256x512xf32, #tpu.memory_space<vmem>>, vector<12x168xf32>
    tpu.vector_store %arg9[%c49_199, %c7_200], %212 {strides = array<i32>} : memref<256x512xf32, #tpu.memory_space<vmem>>, vector<12x168xf32>,
    %c61_201 = arith.constant 61 : index
    %c6_202 = arith.constant 6 : index
    %218 = vector.load %arg9[%c61_201, %c6_202] : memref<256x512xf32, #tpu.memory_space<vmem>>, vector<12x168xf32>
    tpu.vector_store %arg9[%c61_201, %c6_202], %212 {strides = array<i32>} : memref<256x512xf32, #tpu.memory_space<vmem>>, vector<12x168xf32>,
    %c73_203 = arith.constant 73 : index
    %c5_204 = arith.constant 5 : index
    %219 = vector.load %arg9[%c73_203, %c5_204] : memref<256x512xf32, #tpu.memory_space<vmem>>, vector<12x168xf32>
    tpu.vector_store %arg9[%c73_203, %c5_204], %212 {strides = array<i32>} : memref<256x512xf32, #tpu.memory_space<vmem>>, vector<12x168xf32>,
    %c0_205 = arith.constant 0 : index
    %c8_206 = arith.constant 8 : index
    %220 = vector.load %arg9[%c0_205, %c8_206] : memref<256x512xf32, #tpu.memory_space<vmem>>, vector<85x168xf32>
    %221 = arith.truncf %220 : vector<85x168xf32> to vector<85x168xbf16>
    %c144 = arith.constant 144 : index
    %c0_207 = arith.constant 0 : index
    %222 = vector.load %arg1[%c144, %c0_207] : memref<472x256xbf16, #tpu.memory_space<vmem>>, vector<12x85xbf16>
    %cst_208 = arith.constant dense<0.000000e+00> : vector<12x168xf32>
    %223 = tpu.matmul %222, %221, %cst_208 {dimension_numbers = #tpu.dot_dimension_numbers<[1], [0], [0], [1], [0, 0, 1, 1], [], []>} : vector<12x85xbf16>, vector<85x168xbf16>, vector<12x168xf32> -> vector<12x168xf32>
    %cst_209 = arith.constant 0.000000e+00 : f32
    %224 = vector.broadcast %cst_209 : f32 to vector<12x168xf32>
    %225 = arith.maximumf %223, %224 : vector<12x168xf32>
    %226 = vector.extract_strided_slice %225 {offsets = [0, 0], sizes = [6, 168], strides = [1, 1]} : vector<12x168xf32> to vector<6x168xf32>
    %227 = vector.extract_strided_slice %225 {offsets = [6, 0], sizes = [6, 168], strides = [1, 1]} : vector<12x168xf32> to vector<6x168xf32>
    %228 = arith.addf %226, %227 : vector<6x168xf32>
    %229 = arith.addf %228, %197 : vector<6x168xf32>
    %cst_210 = arith.constant 0.000000e+00 : f32
    %230 = vector.shape_cast %123 : vector<1x168xi1> to vector<1x168xi1>
    %231 = vector.broadcast %230 : vector<1x168xi1> to vector<6x168xi1>
    %232 = vector.broadcast %cst_210 : f32 to vector<6x168xf32>
    %233 = arith.select %231, %229, %232 : vector<6x168xi1>, vector<6x168xf32>
    %c0_211 = arith.constant 0 : index
    %c256 = arith.constant 256 : index
    %234 = vector.load %arg2[%c0_211, %c256] : memref<456x512xbf16, #tpu.memory_space<vmem>>, vector<168x72xbf16>
    %235 = arith.truncf %233 : vector<6x168xf32> to vector<6x168xbf16>
    %cst_212 = arith.constant dense<0.000000e+00> : vector<6x72xf32>
    %236 = tpu.matmul %235, %234, %cst_212 {dimension_numbers = #tpu.dot_dimension_numbers<[1], [0], [0], [1], [0, 0, 1, 1], [], []>} : vector<6x168xbf16>, vector<168x72xbf16>, vector<6x72xf32> -> vector<6x72xf32>
    %cst_213 = arith.constant 0.333333343 : f32
    %237 = vector.broadcast %cst_213 : f32 to vector<6x72xf32>
    %238 = arith.mulf %236, %237 : vector<6x72xf32>
    %c2_214 = arith.constant 2 : index
    %c0_215 = arith.constant 0 : index
    %239 = vector.load %arg3[%c2_214, %c0_215] : memref<3x512xf32, #tpu.memory_space<vmem>>, vector<1x72xf32>
    %cst_216 = arith.constant 5.000000e-01 : f32
    %240 = vector.broadcast %cst_216 : f32 to vector<1x72xf32>
    %241 = arith.cmpf ogt, %239, %240 : vector<1x72xf32>
    %c1_217 = arith.constant 1 : index
    %c10_218 = arith.constant 10 : index
    %242 = vector.load %arg9[%c1_217, %c10_218] : memref<256x512xf32, #tpu.memory_space<vmem>>, vector<6x72xf32>
    tpu.vector_store %arg9[%c1_217, %c10_218], %238 {strides = array<i32>} : memref<256x512xf32, #tpu.memory_space<vmem>>, vector<6x72xf32>,
    %c7_219 = arith.constant 7 : index
    %c9_220 = arith.constant 9 : index
    %243 = vector.load %arg9[%c7_219, %c9_220] : memref<256x512xf32, #tpu.memory_space<vmem>>, vector<6x72xf32>
    tpu.vector_store %arg9[%c7_219, %c9_220], %238 {strides = array<i32>} : memref<256x512xf32, #tpu.memory_space<vmem>>, vector<6x72xf32>,
    %c13_221 = arith.constant 13 : index
    %c8_222 = arith.constant 8 : index
    %244 = vector.load %arg9[%c13_221, %c8_222] : memref<256x512xf32, #tpu.memory_space<vmem>>, vector<6x72xf32>
    tpu.vector_store %arg9[%c13_221, %c8_222], %238 {strides = array<i32>} : memref<256x512xf32, #tpu.memory_space<vmem>>, vector<6x72xf32>,
    %c19_223 = arith.constant 19 : index
    %c7_224 = arith.constant 7 : index
    %245 = vector.load %arg9[%c19_223, %c7_224] : memref<256x512xf32, #tpu.memory_space<vmem>>, vector<6x72xf32>
    tpu.vector_store %arg9[%c19_223, %c7_224], %238 {strides = array<i32>} : memref<256x512xf32, #tpu.memory_space<vmem>>, vector<6x72xf32>,
    %c25_225 = arith.constant 25 : index
    %c6_226 = arith.constant 6 : index
    %246 = vector.load %arg9[%c25_225, %c6_226] : memref<256x512xf32, #tpu.memory_space<vmem>>, vector<6x72xf32>
    tpu.vector_store %arg9[%c25_225, %c6_226], %238 {strides = array<i32>} : memref<256x512xf32, #tpu.memory_space<vmem>>, vector<6x72xf32>,
    %c0_227 = arith.constant 0 : index
    %c8_228 = arith.constant 8 : index
    %247 = vector.load %arg9[%c0_227, %c8_228] : memref<256x512xf32, #tpu.memory_space<vmem>>, vector<31x72xf32>
    %248 = arith.truncf %247 : vector<31x72xf32> to vector<31x72xbf16>
    %c160 = arith.constant 160 : index
    %c0_229 = arith.constant 0 : index
    %249 = vector.load %arg1[%c160, %c0_229] : memref<472x256xbf16, #tpu.memory_space<vmem>>, vector<54x31xbf16>
    %cst_230 = arith.constant dense<0.000000e+00> : vector<54x72xf32>
    %250 = tpu.matmul %249, %248, %cst_230 {dimension_numbers = #tpu.dot_dimension_numbers<[1], [0], [0], [1], [0, 0, 1, 1], [], []>} : vector<54x31xbf16>, vector<31x72xbf16>, vector<54x72xf32> -> vector<54x72xf32>
    %251 = vector.extract_strided_slice %250 {offsets = [36, 0], sizes = [18, 72], strides = [1, 1]} : vector<54x72xf32> to vector<18x72xf32>
    %252 = vector.extract_strided_slice %250 {offsets = [0, 0], sizes = [36, 72], strides = [1, 1]} : vector<54x72xf32> to vector<36x72xf32>
    %cst_231 = arith.constant 0.000000e+00 : f32
    %253 = vector.broadcast %cst_231 : f32 to vector<36x72xf32>
    %254 = arith.maximumf %252, %253 : vector<36x72xf32>
    %cst_232 = arith.constant 0.000000e+00 : f32
    %255 = vector.shape_cast %241 : vector<1x72xi1> to vector<1x72xi1>
    %256 = vector.broadcast %255 : vector<1x72xi1> to vector<36x72xi1>
    %257 = vector.broadcast %cst_232 : f32 to vector<36x72xf32>
    %258 = arith.select %256, %254, %257 : vector<36x72xi1>, vector<36x72xf32>
    %c1_233 = arith.constant 1 : index
    %c11_234 = arith.constant 11 : index
    %259 = vector.load %arg9[%c1_233, %c11_234] : memref<256x512xf32, #tpu.memory_space<vmem>>, vector<36x72xf32>
    tpu.vector_store %arg9[%c1_233, %c11_234], %258 {strides = array<i32>} : memref<256x512xf32, #tpu.memory_space<vmem>>, vector<36x72xf32>,
    %c37_235 = arith.constant 37 : index
    %c10_236 = arith.constant 10 : index
    %260 = vector.load %arg9[%c37_235, %c10_236] : memref<256x512xf32, #tpu.memory_space<vmem>>, vector<36x72xf32>
    tpu.vector_store %arg9[%c37_235, %c10_236], %258 {strides = array<i32>} : memref<256x512xf32, #tpu.memory_space<vmem>>, vector<36x72xf32>,
    %c73_237 = arith.constant 73 : index
    %c9_238 = arith.constant 9 : index
    %261 = vector.load %arg9[%c73_237, %c9_238] : memref<256x512xf32, #tpu.memory_space<vmem>>, vector<36x72xf32>
    tpu.vector_store %arg9[%c73_237, %c9_238], %258 {strides = array<i32>} : memref<256x512xf32, #tpu.memory_space<vmem>>, vector<36x72xf32>,
    %c109 = arith.constant 109 : index
    %c8_239 = arith.constant 8 : index
    %262 = vector.load %arg9[%c109, %c8_239] : memref<256x512xf32, #tpu.memory_space<vmem>>, vector<36x72xf32>
    tpu.vector_store %arg9[%c109, %c8_239], %258 {strides = array<i32>} : memref<256x512xf32, #tpu.memory_space<vmem>>, vector<36x72xf32>,
    %c145 = arith.constant 145 : index
    %c7_240 = arith.constant 7 : index
    %263 = vector.load %arg9[%c145, %c7_240] : memref<256x512xf32, #tpu.memory_space<vmem>>, vector<36x72xf32>
    tpu.vector_store %arg9[%c145, %c7_240], %258 {strides = array<i32>} : memref<256x512xf32, #tpu.memory_space<vmem>>, vector<36x72xf32>,
    %c181 = arith.constant 181 : index
    %c6_241 = arith.constant 6 : index
    %264 = vector.load %arg9[%c181, %c6_241] : memref<256x512xf32, #tpu.memory_space<vmem>>, vector<36x72xf32>
    tpu.vector_store %arg9[%c181, %c6_241], %258 {strides = array<i32>} : memref<256x512xf32, #tpu.memory_space<vmem>>, vector<36x72xf32>,
    %c217 = arith.constant 217 : index
    %c5_242 = arith.constant 5 : index
    %265 = vector.load %arg9[%c217, %c5_242] : memref<256x512xf32, #tpu.memory_space<vmem>>, vector<36x72xf32>
    tpu.vector_store %arg9[%c217, %c5_242], %258 {strides = array<i32>} : memref<256x512xf32, #tpu.memory_space<vmem>>, vector<36x72xf32>,
    %c0_243 = arith.constant 0 : index
    %c8_244 = arith.constant 8 : index
    %266 = vector.load %arg9[%c0_243, %c8_244] : memref<256x512xf32, #tpu.memory_space<vmem>>, vector<253x72xf32>
    %267 = arith.truncf %266 : vector<253x72xf32> to vector<253x72xbf16>
    %c216 = arith.constant 216 : index
    %c0_245 = arith.constant 0 : index
    %268 = vector.load %arg1[%c216, %c0_245] : memref<472x256xbf16, #tpu.memory_space<vmem>>, vector<36x253xbf16>
    %cst_246 = arith.constant dense<0.000000e+00> : vector<36x72xf32>
    %269 = tpu.matmul %268, %267, %cst_246 {dimension_numbers = #tpu.dot_dimension_numbers<[1], [0], [0], [1], [0, 0, 1, 1], [], []>} : vector<36x253xbf16>, vector<253x72xbf16>, vector<36x72xf32> -> vector<36x72xf32>
    %cst_247 = arith.constant 0.000000e+00 : f32
    %270 = vector.broadcast %cst_247 : f32 to vector<36x72xf32>
    %271 = arith.maximumf %269, %270 : vector<36x72xf32>
    %272 = vector.extract_strided_slice %271 {offsets = [0, 0], sizes = [18, 72], strides = [1, 1]} : vector<36x72xf32> to vector<18x72xf32>
    %273 = vector.extract_strided_slice %271 {offsets = [18, 0], sizes = [18, 72], strides = [1, 1]} : vector<36x72xf32> to vector<18x72xf32>
    %274 = arith.addf %272, %273 : vector<18x72xf32>
    %275 = arith.addf %274, %251 : vector<18x72xf32>
    %cst_248 = arith.constant 0.000000e+00 : f32
    %276 = vector.shape_cast %241 : vector<1x72xi1> to vector<1x72xi1>
    %277 = vector.broadcast %276 : vector<1x72xi1> to vector<18x72xi1>
    %278 = vector.broadcast %cst_248 : f32 to vector<18x72xf32>
    %279 = arith.select %277, %275, %278 : vector<18x72xi1>, vector<18x72xf32>
    %c1_249 = arith.constant 1 : index
    %c10_250 = arith.constant 10 : index
    %280 = vector.load %arg9[%c1_249, %c10_250] : memref<256x512xf32, #tpu.memory_space<vmem>>, vector<18x72xf32>
    tpu.vector_store %arg9[%c1_249, %c10_250], %279 {strides = array<i32>} : memref<256x512xf32, #tpu.memory_space<vmem>>, vector<18x72xf32>,
    %c19_251 = arith.constant 19 : index
    %c9_252 = arith.constant 9 : index
    %281 = vector.load %arg9[%c19_251, %c9_252] : memref<256x512xf32, #tpu.memory_space<vmem>>, vector<18x72xf32>
    tpu.vector_store %arg9[%c19_251, %c9_252], %279 {strides = array<i32>} : memref<256x512xf32, #tpu.memory_space<vmem>>, vector<18x72xf32>,
    %c37_253 = arith.constant 37 : index
    %c8_254 = arith.constant 8 : index
    %282 = vector.load %arg9[%c37_253, %c8_254] : memref<256x512xf32, #tpu.memory_space<vmem>>, vector<18x72xf32>
    tpu.vector_store %arg9[%c37_253, %c8_254], %279 {strides = array<i32>} : memref<256x512xf32, #tpu.memory_space<vmem>>, vector<18x72xf32>,
    %c55 = arith.constant 55 : index
    %c7_255 = arith.constant 7 : index
    %283 = vector.load %arg9[%c55, %c7_255] : memref<256x512xf32, #tpu.memory_space<vmem>>, vector<18x72xf32>
    tpu.vector_store %arg9[%c55, %c7_255], %279 {strides = array<i32>} : memref<256x512xf32, #tpu.memory_space<vmem>>, vector<18x72xf32>,
    %c73_256 = arith.constant 73 : index
    %c6_257 = arith.constant 6 : index
    %284 = vector.load %arg9[%c73_256, %c6_257] : memref<256x512xf32, #tpu.memory_space<vmem>>, vector<18x72xf32>
    tpu.vector_store %arg9[%c73_256, %c6_257], %279 {strides = array<i32>} : memref<256x512xf32, #tpu.memory_space<vmem>>, vector<18x72xf32>,
    %c0_258 = arith.constant 0 : index
    %c8_259 = arith.constant 8 : index
    %285 = vector.load %arg9[%c0_258, %c8_259] : memref<256x512xf32, #tpu.memory_space<vmem>>, vector<91x72xf32>
    %286 = arith.truncf %285 : vector<91x72xf32> to vector<91x72xbf16>
    %c256_260 = arith.constant 256 : index
    %c0_261 = arith.constant 0 : index
    %287 = vector.load %arg1[%c256_260, %c0_261] : memref<472x256xbf16, #tpu.memory_space<vmem>>, vector<36x91xbf16>
    %cst_262 = arith.constant dense<0.000000e+00> : vector<36x72xf32>
    %288 = tpu.matmul %287, %286, %cst_262 {dimension_numbers = #tpu.dot_dimension_numbers<[1], [0], [0], [1], [0, 0, 1, 1], [], []>} : vector<36x91xbf16>, vector<91x72xbf16>, vector<36x72xf32> -> vector<36x72xf32>
    %cst_263 = arith.constant 0.000000e+00 : f32
    %289 = vector.broadcast %cst_263 : f32 to vector<36x72xf32>
    %290 = arith.maximumf %288, %289 : vector<36x72xf32>
    %cst_264 = arith.constant 0.000000e+00 : f32
    %291 = vector.shape_cast %241 : vector<1x72xi1> to vector<1x72xi1>
    %292 = vector.broadcast %291 : vector<1x72xi1> to vector<36x72xi1>
    %293 = vector.broadcast %cst_264 : f32 to vector<36x72xf32>
    %294 = arith.select %292, %290, %293 : vector<36x72xi1>, vector<36x72xf32>
    %c1_265 = arith.constant 1 : index
    %c11_266 = arith.constant 11 : index
    %295 = vector.load %arg9[%c1_265, %c11_266] : memref<256x512xf32, #tpu.memory_space<vmem>>, vector<36x72xf32>
    tpu.vector_store %arg9[%c1_265, %c11_266], %294 {strides = array<i32>} : memref<256x512xf32, #tpu.memory_space<vmem>>, vector<36x72xf32>,
    %c37_267 = arith.constant 37 : index
    %c10_268 = arith.constant 10 : index
    %296 = vector.load %arg9[%c37_267, %c10_268] : memref<256x512xf32, #tpu.memory_space<vmem>>, vector<36x72xf32>
    tpu.vector_store %arg9[%c37_267, %c10_268], %294 {strides = array<i32>} : memref<256x512xf32, #tpu.memory_space<vmem>>, vector<36x72xf32>,
    %c73_269 = arith.constant 73 : index
    %c9_270 = arith.constant 9 : index
    %297 = vector.load %arg9[%c73_269, %c9_270] : memref<256x512xf32, #tpu.memory_space<vmem>>, vector<36x72xf32>
    tpu.vector_store %arg9[%c73_269, %c9_270], %294 {strides = array<i32>} : memref<256x512xf32, #tpu.memory_space<vmem>>, vector<36x72xf32>,
    %c109_271 = arith.constant 109 : index
    %c8_272 = arith.constant 8 : index
    %298 = vector.load %arg9[%c109_271, %c8_272] : memref<256x512xf32, #tpu.memory_space<vmem>>, vector<36x72xf32>
    tpu.vector_store %arg9[%c109_271, %c8_272], %294 {strides = array<i32>} : memref<256x512xf32, #tpu.memory_space<vmem>>, vector<36x72xf32>,
    %c145_273 = arith.constant 145 : index
    %c7_274 = arith.constant 7 : index
    %299 = vector.load %arg9[%c145_273, %c7_274] : memref<256x512xf32, #tpu.memory_space<vmem>>, vector<36x72xf32>
    tpu.vector_store %arg9[%c145_273, %c7_274], %294 {strides = array<i32>} : memref<256x512xf32, #tpu.memory_space<vmem>>, vector<36x72xf32>,
    %c181_275 = arith.constant 181 : index
    %c6_276 = arith.constant 6 : index
    %300 = vector.load %arg9[%c181_275, %c6_276] : memref<256x512xf32, #tpu.memory_space<vmem>>, vector<36x72xf32>
    tpu.vector_store %arg9[%c181_275, %c6_276], %294 {strides = array<i32>} : memref<256x512xf32, #tpu.memory_space<vmem>>, vector<36x72xf32>,
    %c217_277 = arith.constant 217 : index
    %c5_278 = arith.constant 5 : index
    %301 = vector.load %arg9[%c217_277, %c5_278] : memref<256x512xf32, #tpu.memory_space<vmem>>, vector<36x72xf32>
    tpu.vector_store %arg9[%c217_277, %c5_278], %294 {strides = array<i32>} : memref<256x512xf32, #tpu.memory_space<vmem>>, vector<36x72xf32>,
    %c0_279 = arith.constant 0 : index
    %c8_280 = arith.constant 8 : index
    %302 = vector.load %arg9[%c0_279, %c8_280] : memref<256x512xf32, #tpu.memory_space<vmem>>, vector<253x72xf32>
    %303 = arith.truncf %302 : vector<253x72xf32> to vector<253x72xbf16>
    %c296 = arith.constant 296 : index
    %c0_281 = arith.constant 0 : index
    %304 = vector.load %arg1[%c296, %c0_281] : memref<472x256xbf16, #tpu.memory_space<vmem>>, vector<36x253xbf16>
    %cst_282 = arith.constant dense<0.000000e+00> : vector<36x72xf32>
    %305 = tpu.matmul %304, %303, %cst_282 {dimension_numbers = #tpu.dot_dimension_numbers<[1], [0], [0], [1], [0, 0, 1, 1], [], []>} : vector<36x253xbf16>, vector<253x72xbf16>, vector<36x72xf32> -> vector<36x72xf32>
    %cst_283 = arith.constant 0.000000e+00 : f32
    %306 = vector.broadcast %cst_283 : f32 to vector<36x72xf32>
    %307 = arith.maximumf %305, %306 : vector<36x72xf32>
    %308 = vector.extract_strided_slice %307 {offsets = [0, 0], sizes = [18, 72], strides = [1, 1]} : vector<36x72xf32> to vector<18x72xf32>
    %309 = vector.extract_strided_slice %307 {offsets = [18, 0], sizes = [18, 72], strides = [1, 1]} : vector<36x72xf32> to vector<18x72xf32>
    %310 = arith.addf %308, %309 : vector<18x72xf32>
    %311 = arith.addf %310, %279 : vector<18x72xf32>
    %cst_284 = arith.constant 0.000000e+00 : f32
    %312 = vector.shape_cast %241 : vector<1x72xi1> to vector<1x72xi1>
    %313 = vector.broadcast %312 : vector<1x72xi1> to vector<18x72xi1>
    %314 = vector.broadcast %cst_284 : f32 to vector<18x72xf32>
    %315 = arith.select %313, %311, %314 : vector<18x72xi1>, vector<18x72xf32>
    %c1_285 = arith.constant 1 : index
    %c10_286 = arith.constant 10 : index
    %316 = vector.load %arg9[%c1_285, %c10_286] : memref<256x512xf32, #tpu.memory_space<vmem>>, vector<18x72xf32>
    tpu.vector_store %arg9[%c1_285, %c10_286], %315 {strides = array<i32>} : memref<256x512xf32, #tpu.memory_space<vmem>>, vector<18x72xf32>,
    %c19_287 = arith.constant 19 : index
    %c9_288 = arith.constant 9 : index
    %317 = vector.load %arg9[%c19_287, %c9_288] : memref<256x512xf32, #tpu.memory_space<vmem>>, vector<18x72xf32>
    tpu.vector_store %arg9[%c19_287, %c9_288], %315 {strides = array<i32>} : memref<256x512xf32, #tpu.memory_space<vmem>>, vector<18x72xf32>,
    %c37_289 = arith.constant 37 : index
    %c8_290 = arith.constant 8 : index
    %318 = vector.load %arg9[%c37_289, %c8_290] : memref<256x512xf32, #tpu.memory_space<vmem>>, vector<18x72xf32>
    tpu.vector_store %arg9[%c37_289, %c8_290], %315 {strides = array<i32>} : memref<256x512xf32, #tpu.memory_space<vmem>>, vector<18x72xf32>,
    %c55_291 = arith.constant 55 : index
    %c7_292 = arith.constant 7 : index
    %319 = vector.load %arg9[%c55_291, %c7_292] : memref<256x512xf32, #tpu.memory_space<vmem>>, vector<18x72xf32>
    tpu.vector_store %arg9[%c55_291, %c7_292], %315 {strides = array<i32>} : memref<256x512xf32, #tpu.memory_space<vmem>>, vector<18x72xf32>,
    %c73_293 = arith.constant 73 : index
    %c6_294 = arith.constant 6 : index
    %320 = vector.load %arg9[%c73_293, %c6_294] : memref<256x512xf32, #tpu.memory_space<vmem>>, vector<18x72xf32>
    tpu.vector_store %arg9[%c73_293, %c6_294], %315 {strides = array<i32>} : memref<256x512xf32, #tpu.memory_space<vmem>>, vector<18x72xf32>,
    %c0_295 = arith.constant 0 : index
    %c8_296 = arith.constant 8 : index
    %321 = vector.load %arg9[%c0_295, %c8_296] : memref<256x512xf32, #tpu.memory_space<vmem>>, vector<91x72xf32>
    %322 = arith.truncf %321 : vector<91x72xf32> to vector<91x72xbf16>
    %c336 = arith.constant 336 : index
    %c0_297 = arith.constant 0 : index
    %323 = vector.load %arg1[%c336, %c0_297] : memref<472x256xbf16, #tpu.memory_space<vmem>>, vector<36x91xbf16>
    %cst_298 = arith.constant dense<0.000000e+00> : vector<36x72xf32>
    %324 = tpu.matmul %323, %322, %cst_298 {dimension_numbers = #tpu.dot_dimension_numbers<[1], [0], [0], [1], [0, 0, 1, 1], [], []>} : vector<36x91xbf16>, vector<91x72xbf16>, vector<36x72xf32> -> vector<36x72xf32>
    %cst_299 = arith.constant 0.000000e+00 : f32
    %325 = vector.broadcast %cst_299 : f32 to vector<36x72xf32>
    %326 = arith.maximumf %324, %325 : vector<36x72xf32>
    %cst_300 = arith.constant 0.000000e+00 : f32
    %327 = vector.shape_cast %241 : vector<1x72xi1> to vector<1x72xi1>
    %328 = vector.broadcast %327 : vector<1x72xi1> to vector<36x72xi1>
    %329 = vector.broadcast %cst_300 : f32 to vector<36x72xf32>
    %330 = arith.select %328, %326, %329 : vector<36x72xi1>, vector<36x72xf32>
    %c1_301 = arith.constant 1 : index
    %c11_302 = arith.constant 11 : index
    %331 = vector.load %arg9[%c1_301, %c11_302] : memref<256x512xf32, #tpu.memory_space<vmem>>, vector<36x72xf32>
    tpu.vector_store %arg9[%c1_301, %c11_302], %330 {strides = array<i32>} : memref<256x512xf32, #tpu.memory_space<vmem>>, vector<36x72xf32>,
    %c37_303 = arith.constant 37 : index
    %c10_304 = arith.constant 10 : index
    %332 = vector.load %arg9[%c37_303, %c10_304] : memref<256x512xf32, #tpu.memory_space<vmem>>, vector<36x72xf32>
    tpu.vector_store %arg9[%c37_303, %c10_304], %330 {strides = array<i32>} : memref<256x512xf32, #tpu.memory_space<vmem>>, vector<36x72xf32>,
    %c73_305 = arith.constant 73 : index
    %c9_306 = arith.constant 9 : index
    %333 = vector.load %arg9[%c73_305, %c9_306] : memref<256x512xf32, #tpu.memory_space<vmem>>, vector<36x72xf32>
    tpu.vector_store %arg9[%c73_305, %c9_306], %330 {strides = array<i32>} : memref<256x512xf32, #tpu.memory_space<vmem>>, vector<36x72xf32>,
    %c109_307 = arith.constant 109 : index
    %c8_308 = arith.constant 8 : index
    %334 = vector.load %arg9[%c109_307, %c8_308] : memref<256x512xf32, #tpu.memory_space<vmem>>, vector<36x72xf32>
    tpu.vector_store %arg9[%c109_307, %c8_308], %330 {strides = array<i32>} : memref<256x512xf32, #tpu.memory_space<vmem>>, vector<36x72xf32>,
    %c145_309 = arith.constant 145 : index
    %c7_310 = arith.constant 7 : index
    %335 = vector.load %arg9[%c145_309, %c7_310] : memref<256x512xf32, #tpu.memory_space<vmem>>, vector<36x72xf32>
    tpu.vector_store %arg9[%c145_309, %c7_310], %330 {strides = array<i32>} : memref<256x512xf32, #tpu.memory_space<vmem>>, vector<36x72xf32>,
    %c181_311 = arith.constant 181 : index
    %c6_312 = arith.constant 6 : index
    %336 = vector.load %arg9[%c181_311, %c6_312] : memref<256x512xf32, #tpu.memory_space<vmem>>, vector<36x72xf32>
    tpu.vector_store %arg9[%c181_311, %c6_312], %330 {strides = array<i32>} : memref<256x512xf32, #tpu.memory_space<vmem>>, vector<36x72xf32>,
    %c217_313 = arith.constant 217 : index
    %c5_314 = arith.constant 5 : index
    %337 = vector.load %arg9[%c217_313, %c5_314] : memref<256x512xf32, #tpu.memory_space<vmem>>, vector<36x72xf32>
    tpu.vector_store %arg9[%c217_313, %c5_314], %330 {strides = array<i32>} : memref<256x512xf32, #tpu.memory_space<vmem>>, vector<36x72xf32>,
    %c0_315 = arith.constant 0 : index
    %c8_316 = arith.constant 8 : index
    %338 = vector.load %arg9[%c0_315, %c8_316] : memref<256x512xf32, #tpu.memory_space<vmem>>, vector<253x72xf32>
    %339 = arith.truncf %338 : vector<253x72xf32> to vector<253x72xbf16>
    %c376 = arith.constant 376 : index
    %c0_317 = arith.constant 0 : index
    %340 = vector.load %arg1[%c376, %c0_317] : memref<472x256xbf16, #tpu.memory_space<vmem>>, vector<36x253xbf16>
    %cst_318 = arith.constant dense<0.000000e+00> : vector<36x72xf32>
    %341 = tpu.matmul %340, %339, %cst_318 {dimension_numbers = #tpu.dot_dimension_numbers<[1], [0], [0], [1], [0, 0, 1, 1], [], []>} : vector<36x253xbf16>, vector<253x72xbf16>, vector<36x72xf32> -> vector<36x72xf32>
    %cst_319 = arith.constant 0.000000e+00 : f32
    %342 = vector.broadcast %cst_319 : f32 to vector<36x72xf32>
    %343 = arith.maximumf %341, %342 : vector<36x72xf32>
    %344 = vector.extract_strided_slice %343 {offsets = [0, 0], sizes = [18, 72], strides = [1, 1]} : vector<36x72xf32> to vector<18x72xf32>
    %345 = vector.extract_strided_slice %343 {offsets = [18, 0], sizes = [18, 72], strides = [1, 1]} : vector<36x72xf32> to vector<18x72xf32>
    %346 = arith.addf %344, %345 : vector<18x72xf32>
    %347 = arith.addf %346, %315 : vector<18x72xf32>
    %cst_320 = arith.constant 0.000000e+00 : f32
    %348 = vector.shape_cast %241 : vector<1x72xi1> to vector<1x72xi1>
    %349 = vector.broadcast %348 : vector<1x72xi1> to vector<18x72xi1>
    %350 = vector.broadcast %cst_320 : f32 to vector<18x72xf32>
    %351 = arith.select %349, %347, %350 : vector<18x72xi1>, vector<18x72xf32>
    %c0_321 = arith.constant 0 : index
    %c384 = arith.constant 384 : index
    %352 = vector.load %arg2[%c0_321, %c384] : memref<456x512xbf16, #tpu.memory_space<vmem>>, vector<72x128xbf16>
    %353 = arith.truncf %351 : vector<18x72xf32> to vector<18x72xbf16>
    %cst_322 = arith.constant dense<0.000000e+00> : vector<18x128xf32>
    %354 = tpu.matmul %353, %352, %cst_322 {dimension_numbers = #tpu.dot_dimension_numbers<[1], [0], [0], [1], [0, 0, 1, 1], [], []>} : vector<18x72xbf16>, vector<72x128xbf16>, vector<18x128xf32> -> vector<18x128xf32>
    %cst_323 = arith.constant 0.333333343 : f32
    %355 = vector.broadcast %cst_323 : f32 to vector<18x128xf32>
    %356 = arith.mulf %354, %355 : vector<18x128xf32>
    %cst_324 = arith.constant 0.000000e+00 : f32
    %357 = vector.broadcast %cst_324 : f32 to vector<18x128xf32>
    %358 = arith.maximumf %356, %357 : vector<18x128xf32>
    %c1_325 = arith.constant 1 : index
    %c9_326 = arith.constant 9 : index
    %359 = vector.load %arg9[%c1_325, %c9_326] : memref<256x512xf32, #tpu.memory_space<vmem>>, vector<18x128xf32>
    tpu.vector_store %arg9[%c1_325, %c9_326], %358 {strides = array<i32>} : memref<256x512xf32, #tpu.memory_space<vmem>>, vector<18x128xf32>,
    %c19_327 = arith.constant 19 : index
    %c8_328 = arith.constant 8 : index
    %360 = vector.load %arg9[%c19_327, %c8_328] : memref<256x512xf32, #tpu.memory_space<vmem>>, vector<18x128xf32>
    tpu.vector_store %arg9[%c19_327, %c8_328], %358 {strides = array<i32>} : memref<256x512xf32, #tpu.memory_space<vmem>>, vector<18x128xf32>,
    %c37_329 = arith.constant 37 : index
    %c7_330 = arith.constant 7 : index
    %361 = vector.load %arg9[%c37_329, %c7_330] : memref<256x512xf32, #tpu.memory_space<vmem>>, vector<18x128xf32>
    tpu.vector_store %arg9[%c37_329, %c7_330], %358 {strides = array<i32>} : memref<256x512xf32, #tpu.memory_space<vmem>>, vector<18x128xf32>,
    %c0_331 = arith.constant 0 : index
    %c8_332 = arith.constant 8 : index
    %362 = vector.load %arg9[%c0_331, %c8_332] : memref<256x512xf32, #tpu.memory_space<vmem>>, vector<55x128xf32>
    %363 = arith.truncf %362 : vector<55x128xf32> to vector<55x128xbf16>
    %c416 = arith.constant 416 : index
    %c0_333 = arith.constant 0 : index
    %364 = vector.load %arg1[%c416, %c0_333] : memref<472x256xbf16, #tpu.memory_space<vmem>>, vector<56x55xbf16>
    %cst_334 = arith.constant dense<0.000000e+00> : vector<56x128xf32>
    %365 = tpu.matmul %364, %363, %cst_334 {dimension_numbers = #tpu.dot_dimension_numbers<[1], [0], [0], [1], [0, 0, 1, 1], [], []>} : vector<56x55xbf16>, vector<55x128xbf16>, vector<56x128xf32> -> vector<56x128xf32>
    %cst_335 = arith.constant 0.000000e+00 : f32
    %366 = vector.broadcast %cst_335 : f32 to vector<56x128xf32>
    %367 = arith.maximumf %365, %366 : vector<56x128xf32>
    %368 = tpu.transpose %367, [1, 0] : vector<56x128xf32> -> vector<128x56xf32>
    %369 = vector.extract_strided_slice %368 {offsets = [8, 0], sizes = [1, 56], strides = [1, 1]} : vector<128x56xf32> to vector<1x56xf32>
    %370 = vector.extract_strided_slice %368 {offsets = [24, 0], sizes = [1, 56], strides = [1, 1]} : vector<128x56xf32> to vector<1x56xf32>
    %371 = vector.extract_strided_slice %368 {offsets = [10, 0], sizes = [1, 56], strides = [1, 1]} : vector<128x56xf32> to vector<1x56xf32>
    %372 = vector.extract_strided_slice %368 {offsets = [26, 0], sizes = [1, 56], strides = [1, 1]} : vector<128x56xf32> to vector<1x56xf32>
    %373 = vector.extract_strided_slice %368 {offsets = [12, 0], sizes = [1, 56], strides = [1, 1]} : vector<128x56xf32> to vector<1x56xf32>
    %374 = vector.extract_strided_slice %368 {offsets = [28, 0], sizes = [1, 56], strides = [1, 1]} : vector<128x56xf32> to vector<1x56xf32>
    %375 = vector.extract_strided_slice %368 {offsets = [14, 0], sizes = [1, 56], strides = [1, 1]} : vector<128x56xf32> to vector<1x56xf32>
    %376 = vector.extract_strided_slice %368 {offsets = [30, 0], sizes = [1, 56], strides = [1, 1]} : vector<128x56xf32> to vector<1x56xf32>
    %377 = tpu.concatenate %369, %370, %371, %372, %373, %374, %375, %376 in 0 : vector<1x56xf32>, vector<1x56xf32>, vector<1x56xf32>, vector<1x56xf32>, vector<1x56xf32>, vector<1x56xf32>, vector<1x56xf32>, vector<1x56xf32> -> vector<8x56xf32>
    %378 = vector.extract_strided_slice %377 {offsets = [6, 0], sizes = [2, 56], strides = [1, 1]} : vector<8x56xf32> to vector<2x56xf32>
    %379 = vector.extract_strided_slice %377 {offsets = [4, 0], sizes = [2, 56], strides = [1, 1]} : vector<8x56xf32> to vector<2x56xf32>
    %380 = vector.extract_strided_slice %377 {offsets = [2, 0], sizes = [2, 56], strides = [1, 1]} : vector<8x56xf32> to vector<2x56xf32>
    %381 = vector.extract_strided_slice %377 {offsets = [0, 0], sizes = [2, 56], strides = [1, 1]} : vector<8x56xf32> to vector<2x56xf32>
    %382 = tpu.concatenate %378, %379, %380, %381 in 0 : vector<2x56xf32>, vector<2x56xf32>, vector<2x56xf32>, vector<2x56xf32> -> vector<8x56xf32>
    %383 = tpu.concatenate %377, %382 in 1 : vector<8x56xf32>, vector<8x56xf32> -> vector<8x112xf32>
    %384 = arith.truncf %383 : vector<8x112xf32> to vector<8x112xbf16>
    %c0_336 = arith.constant 0 : index
    %c0_337 = arith.constant 0 : index
    %385 = vector.load %arg4[%c0_336, %c0_337] : memref<112x1024xbf16, #tpu.memory_space<vmem>>, vector<112x1024xbf16>
    %cst_338 = arith.constant dense<0.000000e+00> : vector<8x1024xf32>
    %386 = tpu.matmul %384, %385, %cst_338 {dimension_numbers = #tpu.dot_dimension_numbers<[1], [0], [0], [1], [0, 0, 1, 1], [], []>} : vector<8x112xbf16>, vector<112x1024xbf16>, vector<8x1024xf32> -> vector<8x1024xf32>
    %c0_339 = arith.constant 0 : index
    %c0_340 = arith.constant 0 : index
    %387 = vector.load %arg7[%c0_339, %c0_340] : memref<4x1024xf32, #tpu.memory_space<vmem>>, vector<1x1024xf32>
    %388 = vector.broadcast %387 : vector<1x1024xf32> to vector<8x1024xf32>
    %389 = arith.addf %386, %388 : vector<8x1024xf32>
    %c0_341 = arith.constant 0 : index
    %c0_342 = arith.constant 0 : index
    %390 = vector.load %arg5[%c0_341, %c0_342] : memref<256x1024xbf16, #tpu.memory_space<vmem>>, vector<256x1024xbf16>
    %cst_343 = arith.constant 0.000000e+00 : f32
    %391 = vector.broadcast %cst_343 : f32 to vector<2x256xf32>
    %cst_344 = arith.constant 0.000000e+00 : f32
    %392 = vector.broadcast %cst_344 : f32 to vector<2x256xf32>
    %393 = vector.extract_strided_slice %389 {offsets = [0, 0], sizes = [2, 1024], strides = [1, 1]} : vector<8x1024xf32> to vector<2x1024xf32>
    %394 = arith.truncf %391 : vector<2x256xf32> to vector<2x256xbf16>
    %cst_345 = arith.constant dense<0.000000e+00> : vector<2x1024xf32>
    %395 = tpu.matmul %394, %390, %cst_345 {dimension_numbers = #tpu.dot_dimension_numbers<[1], [0], [0], [1], [0, 0, 1, 1], [], []>} : vector<2x256xbf16>, vector<256x1024xbf16>, vector<2x1024xf32> -> vector<2x1024xf32>
    %396 = arith.addf %393, %395 : vector<2x1024xf32>
    %397 = vector.extract_strided_slice %396 {offsets = [0, 0], sizes = [2, 256], strides = [1, 1]} : vector<2x1024xf32> to vector<2x256xf32>
    %398 = arith.negf %397 : vector<2x256xf32>
    %399 = math.exp %398 : vector<2x256xf32>
    %cst_346 = arith.constant 1.000000e+00 : f32
    %400 = vector.broadcast %cst_346 : f32 to vector<2x256xf32>
    %401 = arith.addf %400, %399 : vector<2x256xf32>
    %402 = arith.divf %400, %401 : vector<2x256xf32>
    %403 = vector.extract_strided_slice %396 {offsets = [0, 256], sizes = [2, 256], strides = [1, 1]} : vector<2x1024xf32> to vector<2x256xf32>
    %404 = arith.negf %403 : vector<2x256xf32>
    %405 = math.exp %404 : vector<2x256xf32>
    %cst_347 = arith.constant 1.000000e+00 : f32
    %406 = vector.broadcast %cst_347 : f32 to vector<2x256xf32>
    %407 = arith.addf %406, %405 : vector<2x256xf32>
    %408 = arith.divf %406, %407 : vector<2x256xf32>
    %409 = vector.extract_strided_slice %396 {offsets = [0, 512], sizes = [2, 256], strides = [1, 1]} : vector<2x1024xf32> to vector<2x256xf32>
    %410 = math.tanh %409 : vector<2x256xf32>
    %411 = vector.extract_strided_slice %396 {offsets = [0, 768], sizes = [2, 256], strides = [1, 1]} : vector<2x1024xf32> to vector<2x256xf32>
    %412 = arith.negf %411 : vector<2x256xf32>
    %413 = math.exp %412 : vector<2x256xf32>
    %cst_348 = arith.constant 1.000000e+00 : f32
    %414 = vector.broadcast %cst_348 : f32 to vector<2x256xf32>
    %415 = arith.addf %414, %413 : vector<2x256xf32>
    %416 = arith.divf %414, %415 : vector<2x256xf32>
    %417 = arith.mulf %408, %392 : vector<2x256xf32>
    %418 = arith.mulf %402, %410 : vector<2x256xf32>
    %419 = arith.addf %417, %418 : vector<2x256xf32>
    %420 = math.tanh %419 : vector<2x256xf32>
    %421 = arith.mulf %416, %420 : vector<2x256xf32>
    %422 = vector.extract_strided_slice %421 {offsets = [0, 0], sizes = [2, 128], strides = [1, 1]} : vector<2x256xf32> to vector<2x128xf32>
    %423 = vector.extract_strided_slice %421 {offsets = [0, 128], sizes = [2, 128], strides = [1, 1]} : vector<2x256xf32> to vector<2x128xf32>
    %424 = vector.extract_strided_slice %389 {offsets = [2, 0], sizes = [2, 1024], strides = [1, 1]} : vector<8x1024xf32> to vector<2x1024xf32>
    %425 = arith.truncf %421 : vector<2x256xf32> to vector<2x256xbf16>
    %cst_349 = arith.constant dense<0.000000e+00> : vector<2x1024xf32>
    %426 = tpu.matmul %425, %390, %cst_349 {dimension_numbers = #tpu.dot_dimension_numbers<[1], [0], [0], [1], [0, 0, 1, 1], [], []>} : vector<2x256xbf16>, vector<256x1024xbf16>, vector<2x1024xf32> -> vector<2x1024xf32>
    %427 = arith.addf %424, %426 : vector<2x1024xf32>
    %428 = vector.extract_strided_slice %427 {offsets = [0, 0], sizes = [2, 256], strides = [1, 1]} : vector<2x1024xf32> to vector<2x256xf32>
    %429 = arith.negf %428 : vector<2x256xf32>
    %430 = math.exp %429 : vector<2x256xf32>
    %cst_350 = arith.constant 1.000000e+00 : f32
    %431 = vector.broadcast %cst_350 : f32 to vector<2x256xf32>
    %432 = arith.addf %431, %430 : vector<2x256xf32>
    %433 = arith.divf %431, %432 : vector<2x256xf32>
    %434 = vector.extract_strided_slice %427 {offsets = [0, 256], sizes = [2, 256], strides = [1, 1]} : vector<2x1024xf32> to vector<2x256xf32>
    %435 = arith.negf %434 : vector<2x256xf32>
    %436 = math.exp %435 : vector<2x256xf32>
    %cst_351 = arith.constant 1.000000e+00 : f32
    %437 = vector.broadcast %cst_351 : f32 to vector<2x256xf32>
    %438 = arith.addf %437, %436 : vector<2x256xf32>
    %439 = arith.divf %437, %438 : vector<2x256xf32>
    %440 = vector.extract_strided_slice %427 {offsets = [0, 512], sizes = [2, 256], strides = [1, 1]} : vector<2x1024xf32> to vector<2x256xf32>
    %441 = math.tanh %440 : vector<2x256xf32>
    %442 = vector.extract_strided_slice %427 {offsets = [0, 768], sizes = [2, 256], strides = [1, 1]} : vector<2x1024xf32> to vector<2x256xf32>
    %443 = arith.negf %442 : vector<2x256xf32>
    %444 = math.exp %443 : vector<2x256xf32>
    %cst_352 = arith.constant 1.000000e+00 : f32
    %445 = vector.broadcast %cst_352 : f32 to vector<2x256xf32>
    %446 = arith.addf %445, %444 : vector<2x256xf32>
    %447 = arith.divf %445, %446 : vector<2x256xf32>
    %448 = arith.mulf %439, %419 : vector<2x256xf32>
    %449 = arith.mulf %433, %441 : vector<2x256xf32>
    %450 = arith.addf %448, %449 : vector<2x256xf32>
    %451 = math.tanh %450 : vector<2x256xf32>
    %452 = arith.mulf %447, %451 : vector<2x256xf32>
    %453 = vector.extract_strided_slice %452 {offsets = [0, 0], sizes = [2, 128], strides = [1, 1]} : vector<2x256xf32> to vector<2x128xf32>
    %454 = vector.extract_strided_slice %452 {offsets = [0, 128], sizes = [2, 128], strides = [1, 1]} : vector<2x256xf32> to vector<2x128xf32>
    %455 = vector.extract_strided_slice %389 {offsets = [4, 0], sizes = [2, 1024], strides = [1, 1]} : vector<8x1024xf32> to vector<2x1024xf32>
    %456 = arith.truncf %452 : vector<2x256xf32> to vector<2x256xbf16>
    %cst_353 = arith.constant dense<0.000000e+00> : vector<2x1024xf32>
    %457 = tpu.matmul %456, %390, %cst_353 {dimension_numbers = #tpu.dot_dimension_numbers<[1], [0], [0], [1], [0, 0, 1, 1], [], []>} : vector<2x256xbf16>, vector<256x1024xbf16>, vector<2x1024xf32> -> vector<2x1024xf32>
    %458 = arith.addf %455, %457 : vector<2x1024xf32>
    %459 = vector.extract_strided_slice %458 {offsets = [0, 0], sizes = [2, 256], strides = [1, 1]} : vector<2x1024xf32> to vector<2x256xf32>
    %460 = arith.negf %459 : vector<2x256xf32>
    %461 = math.exp %460 : vector<2x256xf32>
    %cst_354 = arith.constant 1.000000e+00 : f32
    %462 = vector.broadcast %cst_354 : f32 to vector<2x256xf32>
    %463 = arith.addf %462, %461 : vector<2x256xf32>
    %464 = arith.divf %462, %463 : vector<2x256xf32>
    %465 = vector.extract_strided_slice %458 {offsets = [0, 256], sizes = [2, 256], strides = [1, 1]} : vector<2x1024xf32> to vector<2x256xf32>
    %466 = arith.negf %465 : vector<2x256xf32>
    %467 = math.exp %466 : vector<2x256xf32>
    %cst_355 = arith.constant 1.000000e+00 : f32
    %468 = vector.broadcast %cst_355 : f32 to vector<2x256xf32>
    %469 = arith.addf %468, %467 : vector<2x256xf32>
    %470 = arith.divf %468, %469 : vector<2x256xf32>
    %471 = vector.extract_strided_slice %458 {offsets = [0, 512], sizes = [2, 256], strides = [1, 1]} : vector<2x1024xf32> to vector<2x256xf32>
    %472 = math.tanh %471 : vector<2x256xf32>
    %473 = vector.extract_strided_slice %458 {offsets = [0, 768], sizes = [2, 256], strides = [1, 1]} : vector<2x1024xf32> to vector<2x256xf32>
    %474 = arith.negf %473 : vector<2x256xf32>
    %475 = math.exp %474 : vector<2x256xf32>
    %cst_356 = arith.constant 1.000000e+00 : f32
    %476 = vector.broadcast %cst_356 : f32 to vector<2x256xf32>
    %477 = arith.addf %476, %475 : vector<2x256xf32>
    %478 = arith.divf %476, %477 : vector<2x256xf32>
    %479 = arith.mulf %470, %450 : vector<2x256xf32>
    %480 = arith.mulf %464, %472 : vector<2x256xf32>
    %481 = arith.addf %479, %480 : vector<2x256xf32>
    %482 = math.tanh %481 : vector<2x256xf32>
    %483 = arith.mulf %478, %482 : vector<2x256xf32>
    %484 = vector.extract_strided_slice %483 {offsets = [0, 0], sizes = [2, 128], strides = [1, 1]} : vector<2x256xf32> to vector<2x128xf32>
    %485 = vector.extract_strided_slice %483 {offsets = [0, 128], sizes = [2, 128], strides = [1, 1]} : vector<2x256xf32> to vector<2x128xf32>
    %486 = vector.extract_strided_slice %389 {offsets = [6, 0], sizes = [2, 1024], strides = [1, 1]} : vector<8x1024xf32> to vector<2x1024xf32>
    %487 = arith.truncf %483 : vector<2x256xf32> to vector<2x256xbf16>
    %cst_357 = arith.constant dense<0.000000e+00> : vector<2x1024xf32>
    %488 = tpu.matmul %487, %390, %cst_357 {dimension_numbers = #tpu.dot_dimension_numbers<[1], [0], [0], [1], [0, 0, 1, 1], [], []>} : vector<2x256xbf16>, vector<256x1024xbf16>, vector<2x1024xf32> -> vector<2x1024xf32>
    %489 = arith.addf %486, %488 : vector<2x1024xf32>
    %490 = vector.extract_strided_slice %489 {offsets = [0, 0], sizes = [2, 256], strides = [1, 1]} : vector<2x1024xf32> to vector<2x256xf32>
    %491 = arith.negf %490 : vector<2x256xf32>
    %492 = math.exp %491 : vector<2x256xf32>
    %cst_358 = arith.constant 1.000000e+00 : f32
    %493 = vector.broadcast %cst_358 : f32 to vector<2x256xf32>
    %494 = arith.addf %493, %492 : vector<2x256xf32>
    %495 = arith.divf %493, %494 : vector<2x256xf32>
    %496 = vector.extract_strided_slice %489 {offsets = [0, 256], sizes = [2, 256], strides = [1, 1]} : vector<2x1024xf32> to vector<2x256xf32>
    %497 = arith.negf %496 : vector<2x256xf32>
    %498 = math.exp %497 : vector<2x256xf32>
    %cst_359 = arith.constant 1.000000e+00 : f32
    %499 = vector.broadcast %cst_359 : f32 to vector<2x256xf32>
    %500 = arith.addf %499, %498 : vector<2x256xf32>
    %501 = arith.divf %499, %500 : vector<2x256xf32>
    %502 = vector.extract_strided_slice %489 {offsets = [0, 512], sizes = [2, 256], strides = [1, 1]} : vector<2x1024xf32> to vector<2x256xf32>
    %503 = math.tanh %502 : vector<2x256xf32>
    %504 = vector.extract_strided_slice %489 {offsets = [0, 768], sizes = [2, 256], strides = [1, 1]} : vector<2x1024xf32> to vector<2x256xf32>
    %505 = arith.negf %504 : vector<2x256xf32>
    %506 = math.exp %505 : vector<2x256xf32>
    %cst_360 = arith.constant 1.000000e+00 : f32
    %507 = vector.broadcast %cst_360 : f32 to vector<2x256xf32>
    %508 = arith.addf %507, %506 : vector<2x256xf32>
    %509 = arith.divf %507, %508 : vector<2x256xf32>
    %510 = arith.mulf %501, %481 : vector<2x256xf32>
    %511 = arith.mulf %495, %503 : vector<2x256xf32>
    %512 = arith.addf %510, %511 : vector<2x256xf32>
    %513 = math.tanh %512 : vector<2x256xf32>
    %514 = arith.mulf %509, %513 : vector<2x256xf32>
    %515 = vector.extract_strided_slice %514 {offsets = [0, 0], sizes = [2, 128], strides = [1, 1]} : vector<2x256xf32> to vector<2x128xf32>
    %516 = vector.extract_strided_slice %514 {offsets = [0, 128], sizes = [2, 128], strides = [1, 1]} : vector<2x256xf32> to vector<2x128xf32>
    %517 = arith.addf %422, %516 : vector<2x128xf32>
    %cst_361 = arith.constant 5.000000e-01 : f32
    %518 = vector.broadcast %cst_361 : f32 to vector<2x128xf32>
    %519 = arith.mulf %517, %518 : vector<2x128xf32>
    %520 = arith.addf %453, %485 : vector<2x128xf32>
    %cst_362 = arith.constant 5.000000e-01 : f32
    %521 = vector.broadcast %cst_362 : f32 to vector<2x128xf32>
    %522 = arith.mulf %520, %521 : vector<2x128xf32>
    %523 = arith.addf %484, %454 : vector<2x128xf32>
    %cst_363 = arith.constant 5.000000e-01 : f32
    %524 = vector.broadcast %cst_363 : f32 to vector<2x128xf32>
    %525 = arith.mulf %523, %524 : vector<2x128xf32>
    %526 = arith.addf %515, %423 : vector<2x128xf32>
    %cst_364 = arith.constant 5.000000e-01 : f32
    %527 = vector.broadcast %cst_364 : f32 to vector<2x128xf32>
    %528 = arith.mulf %526, %527 : vector<2x128xf32>
    %529 = tpu.concatenate %519, %522, %525, %528 in 1 : vector<2x128xf32>, vector<2x128xf32>, vector<2x128xf32>, vector<2x128xf32> -> vector<2x512xf32>
    %530 = arith.truncf %529 : vector<2x512xf32> to vector<2x512xbf16>
    %c0_365 = arith.constant 0 : index
    %c0_366 = arith.constant 0 : index
    %531 = vector.load %arg6[%c0_365, %c0_366] : memref<896x256xbf16, #tpu.memory_space<vmem>>, vector<512x256xbf16>
    %cst_367 = arith.constant dense<0.000000e+00> : vector<2x256xf32>
    %532 = tpu.matmul %530, %531, %cst_367 {dimension_numbers = #tpu.dot_dimension_numbers<[1], [0], [0], [1], [0, 0, 1, 1], [], []>} : vector<2x512xbf16>, vector<512x256xbf16>, vector<2x256xf32> -> vector<2x256xf32>
    %c1_368 = arith.constant 1 : index
    %c0_369 = arith.constant 0 : index
    %533 = vector.load %arg7[%c1_368, %c0_369] : memref<4x1024xf32, #tpu.memory_space<vmem>>, vector<1x256xf32>
    %534 = vector.broadcast %533 : vector<1x256xf32> to vector<2x256xf32>
    %535 = arith.addf %532, %534 : vector<2x256xf32>
    %cst_370 = arith.constant 0.000000e+00 : f32
    %536 = vector.broadcast %cst_370 : f32 to vector<2x256xf32>
    %537 = arith.maximumf %535, %536 : vector<2x256xf32>
    %538 = arith.truncf %537 : vector<2x256xf32> to vector<2x256xbf16>
    %c512 = arith.constant 512 : index
    %c0_371 = arith.constant 0 : index
    %539 = vector.load %arg6[%c512, %c0_371] : memref<896x256xbf16, #tpu.memory_space<vmem>>, vector<256x128xbf16>
    %cst_372 = arith.constant dense<0.000000e+00> : vector<2x128xf32>
    %540 = tpu.matmul %538, %539, %cst_372 {dimension_numbers = #tpu.dot_dimension_numbers<[1], [0], [0], [1], [0, 0, 1, 1], [], []>} : vector<2x256xbf16>, vector<256x128xbf16>, vector<2x128xf32> -> vector<2x128xf32>
    %c2_373 = arith.constant 2 : index
    %c0_374 = arith.constant 0 : index
    %541 = vector.load %arg7[%c2_373, %c0_374] : memref<4x1024xf32, #tpu.memory_space<vmem>>, vector<1x128xf32>
    %542 = vector.broadcast %541 : vector<1x128xf32> to vector<2x128xf32>
    %543 = arith.addf %540, %542 : vector<2x128xf32>
    %cst_375 = arith.constant 0.000000e+00 : f32
    %544 = vector.broadcast %cst_375 : f32 to vector<2x128xf32>
    %545 = arith.maximumf %543, %544 : vector<2x128xf32>
    %546 = arith.truncf %545 : vector<2x128xf32> to vector<2x128xbf16>
    %c768 = arith.constant 768 : index
    %c0_376 = arith.constant 0 : index
    %547 = vector.load %arg6[%c768, %c0_376] : memref<896x256xbf16, #tpu.memory_space<vmem>>, vector<128x3xbf16>
    %cst_377 = arith.constant dense<0.000000e+00> : vector<2x3xf32>
    %548 = tpu.matmul %546, %547, %cst_377 {dimension_numbers = #tpu.dot_dimension_numbers<[1], [0], [0], [1], [0, 0, 1, 1], [], []>} : vector<2x128xbf16>, vector<128x3xbf16>, vector<2x3xf32> -> vector<2x3xf32>
    %c3_378 = arith.constant 3 : index
    %c0_379 = arith.constant 0 : index
    %549 = vector.load %arg7[%c3_378, %c0_379] : memref<4x1024xf32, #tpu.memory_space<vmem>>, vector<1x3xf32>
    %550 = vector.broadcast %549 : vector<1x3xf32> to vector<2x3xf32>
    %551 = arith.addf %548, %550 : vector<2x3xf32>
    %c0_380 = arith.constant 0 : index
    %c0_381 = arith.constant 0 : index
    %552 = vector.load %arg8[%c0_380, %c0_381] : memref<2x3xf32, #tpu.memory_space<vmem>>, vector<2x3xf32>
    tpu.vector_store %arg8[%c0_380, %c0_381], %551 {strides = array<i32>} : memref<2x3xf32, #tpu.memory_space<vmem>>, vector<2x3xf32>,
    return
  }
}

</mosaic_0001>

<llo_original>
// kernel: tpu_custom_call.1
$region0: #{tpu_custom_call.1}
  #allocation0 [shape = 'u32[]', space=smem, size = 0x4, offset = 0x4, fixed_abs, tag = 'smem constant byte address 0x4 - core index']
  #allocation1 [shape = 'u32[144,128]{1,0:T(1,128)}', space=vmem, size = 0x12000, scoped, tag = 'internal scratch']
  #allocation2 [shape = 'f32[256,512]{1,0:T(8,128)}', space=vmem, size = 0x80000, scoped, tag = 'scratch operand']
  %s0 = inlined_call_operand.hbm [shape: f32[1,456], index: 0, kind: input, shape index: {}]
  %s1 = inlined_call_operand.hbm [shape: bf16[472,256], index: 1, kind: input, shape index: {}]
  %s2 = inlined_call_operand.hbm [shape: bf16[456,512], index: 2, kind: input, shape index: {}]
  %s3 = inlined_call_operand.hbm [shape: f32[3,512], index: 3, kind: input, shape index: {}]
  %s4 = inlined_call_operand.hbm [shape: bf16[112,1024], index: 4, kind: input, shape index: {}]
  %s5 = inlined_call_operand.hbm [shape: bf16[256,1024], index: 5, kind: input, shape index: {}]
  %s6 = inlined_call_operand.hbm [shape: bf16[896,256], index: 6, kind: input, shape index: {}]
  %s7 = inlined_call_operand.hbm [shape: f32[4,1024], index: 7, kind: input, shape index: {}]
  %s8 = inlined_call_operand.hbm [shape: f32[2,3], index: 8, kind: output, shape index: {}]
  %s9 = sld [smem:[#allocation0]]
  $region74: #{tpu_custom_call.1} parent=0
    _
  %s11 = ssub.s32 1, %s9
  %s12 = scalar_select 0, %s11, %s9
  $region1: #{tpu_custom_call.1} parent=0
    #allocation3 [shape = 'u8[2048]{0}', space=vmem, size = 0x800, scoped, tag = 'input window, operand 0, single buffered']
    #allocation4 [shape = 's32[1]{0}', space=sflag, size = 0x4, scoped, tag = 'scoped memory for tpu_custom_call.1']
    #allocation5 [shape = 's32[1]{0}', space=sflag, size = 0x4, scoped, tag = 'scoped memory for tpu_custom_call.1']
    #allocation6 [shape = 'u8[241664]{0}', space=vmem, size = 0x3b000, scoped, tag = 'input window, operand 1, single buffered']
    #allocation7 [shape = 's32[1]{0}', space=sflag, size = 0x4, scoped, tag = 'scoped memory for tpu_custom_call.1']
    #allocation8 [shape = 'u8[466944]{0}', space=vmem, size = 0x72000, scoped, tag = 'input window, operand 2, single buffered']
    #allocation9 [shape = 'u8[8192]{0}', space=vmem, size = 0x2000, scoped, tag = 'input window, operand 3, single buffered']
    #allocation10 [shape = 's32[1]{0}', space=sflag, size = 0x4, scoped, tag = 'scoped memory for tpu_custom_call.1']
    #allocation11 [shape = 'u8[229376]{0}', space=vmem, size = 0x38000, scoped, tag = 'input window, operand 4, single buffered']
    #allocation12 [shape = 'u8[524288]{0}', space=vmem, size = 0x80000, scoped, tag = 'input window, operand 5, single buffered']
    #allocation13 [shape = 's32[1]{0}', space=sflag, size = 0x4, scoped, tag = 'scoped memory for tpu_custom_call.1']
    #allocation14 [shape = 'u8[458752]{0}', space=vmem, size = 0x70000, scoped, tag = 'input window, operand 6, single buffered']
    #allocation15 [shape = 'u8[16384]{0}', space=vmem, size = 0x4000, scoped, tag = 'input window, operand 7, single buffered']
    #allocation16 [shape = 's32[1]{0}', space=sflag, size = 0x4, scoped, tag = 'scoped memory for tpu_custom_call.1']
    #allocation17 [shape = 'u8[1024]{0}', space=vmem, size = 0x400, scoped, tag = 'output window, operand 0, single buffered']
    %13 = vsyncpa [#allocation4], 0
    %14 = vsyncpa [#allocation7], 0
    %15 = vsyncpa [#allocation10], 0
    %16 = vsyncpa [#allocation13], 0
    %17 = vsyncpa [#allocation16], 0
    %18 = vsyncpa [#allocation5], 0
    // Predicated region
    $region2: #{tpu_custom_call.1} parent=1 // pred_check
      _
    $region3: #{tpu_custom_call.1} parent=1 // pred_check_branch
      %20 = sbr.rel (0) target = $region5
    $region4: #{tpu_custom_call.1} parent=1 // pred_region
      %s22 = ssub.s32 64, 64
      %23 = vsyncadd [#allocation4], %s22
      %s25 = sshll.u32 [#allocation3], 4
      %s26 = int_to_ptr.vmem [resolvable:$true] %s25
      %28 = dma.hbm_to_vmem [thread:$0]  %s0, 64, %s26, [#allocation4]
    $region5: #{tpu_custom_call.1} parent=1 // pred_fallthru
      _
    // Predicated region
    $region6: #{tpu_custom_call.1} parent=1 // pred_check
      _
    $region7: #{tpu_custom_call.1} parent=1 // pred_check_branch
      %30 = sbr.rel (0) target = $region9
    $region8: #{tpu_custom_call.1} parent=1 // pred_region
      %s32 = ssub.s32 7552, 7552
      %33 = vsyncadd [#allocation7], %s32
      %s34 = sshll.u32 [#allocation6], 4
      %s35 = int_to_ptr.vmem [resolvable:$true] %s34
      %40 = dma.hbm_to_vmem [thread:$0]  %s1, 7552, %s35, [#allocation7], 128, 128, 8
    $region9: #{tpu_custom_call.1} parent=1 // pred_fallthru
      _
    // Predicated region
    $region10: #{tpu_custom_call.1} parent=1 // pred_check
      _
    $region11: #{tpu_custom_call.1} parent=1 // pred_check_branch
      %42 = sbr.rel (0) target = $region13
    $region12: #{tpu_custom_call.1} parent=1 // pred_region
      %s44 = ssub.s32 14592, 14592
      %45 = vsyncadd [#allocation7], %s44
      %s46 = sshll.u32 [#allocation8], 4
      %s47 = int_to_ptr.vmem [resolvable:$true] %s46
      %52 = dma.hbm_to_vmem [thread:$0]  %s2, 14592, %s47, [#allocation7], 256, 256, 16
    $region13: #{tpu_custom_call.1} parent=1 // pred_fallthru
      _
    // Predicated region
    $region14: #{tpu_custom_call.1} parent=1 // pred_check
      _
    $region15: #{tpu_custom_call.1} parent=1 // pred_check_branch
      %54 = sbr.rel (0) target = $region17
    $region16: #{tpu_custom_call.1} parent=1 // pred_region
      %s56 = ssub.s32 256, 256
      %57 = vsyncadd [#allocation10], %s56
      %s59 = sshll.u32 [#allocation9], 4
      %s60 = int_to_ptr.vmem [resolvable:$true] %s59
      %62 = dma.hbm_to_vmem [thread:$0]  %s3, 256, %s60, [#allocation10]
    $region17: #{tpu_custom_call.1} parent=1 // pred_fallthru
      _
    // Predicated region
    $region18: #{tpu_custom_call.1} parent=1 // pred_check
      _
    $region19: #{tpu_custom_call.1} parent=1 // pred_check_branch
      %64 = sbr.rel (0) target = $region21
    $region20: #{tpu_custom_call.1} parent=1 // pred_region
      %s66 = ssub.s32 7168, 7168
      %67 = vsyncadd [#allocation10], %s66
      %s68 = sshll.u32 [#allocation11], 4
      %s69 = int_to_ptr.vmem [resolvable:$true] %s68
      %74 = dma.hbm_to_vmem [thread:$0]  %s4, 7168, %s69, [#allocation10], 512, 512, 32
    $region21: #{tpu_custom_call.1} parent=1 // pred_fallthru
      _
    // Predicated region
    $region22: #{tpu_custom_call.1} parent=1 // pred_check
      _
    $region23: #{tpu_custom_call.1} parent=1 // pred_check_branch
      %76 = sbr.rel (0) target = $region25
    $region24: #{tpu_custom_call.1} parent=1 // pred_region
      %s78 = ssub.s32 16384, 16384
      %79 = vsyncadd [#allocation13], %s78
      %s80 = sshll.u32 [#allocation12], 4
      %s81 = int_to_ptr.vmem [resolvable:$true] %s80
      %86 = dma.hbm_to_vmem [thread:$0]  %s5, 16384, %s81, [#allocation13], 512, 512, 32
    $region25: #{tpu_custom_call.1} parent=1 // pred_fallthru
      _
    // Predicated region
    $region26: #{tpu_custom_call.1} parent=1 // pred_check
      _
    $region27: #{tpu_custom_call.1} parent=1 // pred_check_branch
      %88 = sbr.rel (0) target = $region29
    $region28: #{tpu_custom_call.1} parent=1 // pred_region
      %s90 = ssub.s32 14336, 14336
      %91 = vsyncadd [#allocation13], %s90
      %s92 = sshll.u32 [#allocation14], 4
      %s93 = int_to_ptr.vmem [resolvable:$true] %s92
      %98 = dma.hbm_to_vmem [thread:$0]  %s6, 14336, %s93, [#allocation13], 128, 128, 8
    $region29: #{tpu_custom_call.1} parent=1 // pred_fallthru
      _
    // Predicated region
    $region30: #{tpu_custom_call.1} parent=1 // pred_check
      _
    $region31: #{tpu_custom_call.1} parent=1 // pred_check_branch
      %100 = sbr.rel (0) target = $region33
    $region32: #{tpu_custom_call.1} parent=1 // pred_region
      %s102 = ssub.s32 512, 512
      %103 = vsyncadd [#allocation16], %s102
      %s105 = sshll.u32 [#allocation15], 4
      %s106 = int_to_ptr.vmem [resolvable:$true] %s105
      %108 = dma.hbm_to_vmem [thread:$0]  %s7, 512, %s106, [#allocation16]
    $region33: #{tpu_custom_call.1} parent=1 // pred_fallthru
      _
    // Predicated region
    $region34: #{tpu_custom_call.1} parent=1 // pred_check
      _
    $region35: #{tpu_custom_call.1} parent=1 // pred_check_branch
      %110 = sbr.rel (0) target = $region37
    $region36: #{tpu_custom_call.1} parent=1 // pred_region
      %111 = dma.done [#allocation4], 64
    $region37: #{tpu_custom_call.1} parent=1 // pred_fallthru
      _
    // Predicated region
    $region38: #{tpu_custom_call.1} parent=1 // pred_check
      _
    $region39: #{tpu_custom_call.1} parent=1 // pred_check_branch
      %113 = sbr.rel (0) target = $region41
    $region40: #{tpu_custom_call.1} parent=1 // pred_region
      %114 = dma.done [#allocation7], 7552
    $region41: #{tpu_custom_call.1} parent=1 // pred_fallthru
      _
    // Predicated region
    $region42: #{tpu_custom_call.1} parent=1 // pred_check
      _
    $region43: #{tpu_custom_call.1} parent=1 // pred_check_branch
      %116 = sbr.rel (0) target = $region45
    $region44: #{tpu_custom_call.1} parent=1 // pred_region
      %117 = dma.done [#allocation7], 14592
    $region45: #{tpu_custom_call.1} parent=1 // pred_fallthru
      _
    // Predicated region
    $region46: #{tpu_custom_call.1} parent=1 // pred_check
      _
    $region47: #{tpu_custom_call.1} parent=1 // pred_check_branch
      %119 = sbr.rel (0) target = $region49
    $region48: #{tpu_custom_call.1} parent=1 // pred_region
      %120 = dma.done [#allocation10], 256
    $region49: #{tpu_custom_call.1} parent=1 // pred_fallthru
      _
    // Predicated region
    $region50: #{tpu_custom_call.1} parent=1 // pred_check
      _
    $region51: #{tpu_custom_call.1} parent=1 // pred_check_branch
      %122 = sbr.rel (0) target = $region53
    $region52: #{tpu_custom_call.1} parent=1 // pred_region
      %123 = dma.done [#allocation10], 7168
    $region53: #{tpu_custom_call.1} parent=1 // pred_fallthru
      _
    // Predicated region
    $region54: #{tpu_custom_call.1} parent=1 // pred_check
      _
    $region55: #{tpu_custom_call.1} parent=1 // pred_check_branch
      %125 = sbr.rel (0) target = $region57
    $region56: #{tpu_custom_call.1} parent=1 // pred_region
      %126 = dma.done [#allocation13], 16384
    $region57: #{tpu_custom_call.1} parent=1 // pred_fallthru
      _
    // Predicated region
    $region58: #{tpu_custom_call.1} parent=1 // pred_check
      _
    $region59: #{tpu_custom_call.1} parent=1 // pred_check_branch
      %128 = sbr.rel (0) target = $region61
    $region60: #{tpu_custom_call.1} parent=1 // pred_region
      %129 = dma.done [#allocation13], 14336
    $region61: #{tpu_custom_call.1} parent=1 // pred_fallthru
      _
    // Predicated region
    $region62: #{tpu_custom_call.1} parent=1 // pred_check
      _
    $region63: #{tpu_custom_call.1} parent=1 // pred_check_branch
      %131 = sbr.rel (0) target = $region65
    $region64: #{tpu_custom_call.1} parent=1 // pred_region
      %132 = dma.done [#allocation16], 512
    $region65: #{tpu_custom_call.1} parent=1 // pred_fallthru
      _
    %v134 = vlaneseq
    %vm135 = vcmp.ge.s32.totalorder %v134, 0
    %vm136 = vcmp.lt.s32.totalorder %v134, 512
    %vm137 = vmand %vm135, %vm136
    %138 = vst.msk [vmem:[#allocation2] ss:$8 sm:$0xf] %vm137, 1.0
    %139 = vst.msk [vmem:[#allocation2] ss:$8 sm:$0x0] %vm137, 1.0
    %v140 = vld [vmem:[#allocation3] sm:$0xf]
    %v141 = vld [vmem:[#allocation9] ss:$4 sm:$0xf]
    %vm142 = vcmp.gt.f32.partialorder %v141, 0.5
    %144 = vrot.lane.b32.xlu0 %v140, 10
    %v145 = vpop.permute.xlu0 %144
    %v146 = vrot.slane %v145, 7
    %vm147 = vcmask 80896
    %v148 = vsel %vm147, %v146, %v145
    %vm150 = vcmp.ge.s32.totalorder %v134, 10
    %vm151 = vcmp.lt.s32.totalorder %v134, 466
    %vm152 = vmand %vm150, %vm151
    %s153 = scalar_lea.vmem [#allocation2], 1
    %154 = vst.msk [vmem:[%s153] ss:$8 sm:$0xf] %vm152, %v148
    %155 = vst.msk [vmem:[%s153] ss:$8 sm:$0x0] %vm152, %v148
    %156 = vrot.lane.b32.xlu0 %v140, 9
    %v157 = vpop.permute.xlu0 %156
    %v158 = vrot.slane %v157, 7
    %vm159 = vcmask 72704
    %v160 = vsel %vm159, %v158, %v157
    %vm162 = vcmp.ge.s32.totalorder %v134, 9
    %vm163 = vcmp.lt.s32.totalorder %v134, 465
    %vm164 = vmand %vm162, %vm163
    %s165 = scalar_lea.vmem [#allocation2], 2
    %166 = vst.msk [vmem:[%s165] ss:$8 sm:$0xf] %vm164, %v160
    %167 = vst.msk [vmem:[%s165] ss:$8 sm:$0x0] %vm164, %v160
    %168 = vrot.lane.b32.xlu0 %v140, 8
    %v169 = vpop.permute.xlu0 %168
    %v170 = vrot.slane %v169, 7
    %vm171 = vcmask 64512
    %v172 = vsel %vm171, %v170, %v169
    %vm174 = vcmp.ge.s32.totalorder %v134, 8
    %vm175 = vcmp.lt.s32.totalorder %v134, 464
    %vm176 = vmand %vm174, %vm175
    %s177 = scalar_lea.vmem [#allocation2], 3
    %178 = vst.msk [vmem:[%s177] ss:$8 sm:$0xf] %vm176, %v172
    %179 = vst.msk [vmem:[%s177] ss:$8 sm:$0x0] %vm176, %v172
    %180 = vrot.lane.b32.xlu0 %v140, 7
    %v181 = vpop.permute.xlu0 %180
    %v182 = vrot.slane %v181, 7
    %vm183 = vcmask 56320
    %v184 = vsel %vm183, %v182, %v181
    %vm186 = vcmp.ge.s32.totalorder %v134, 7
    %vm187 = vcmp.lt.s32.totalorder %v134, 463
    %vm188 = vmand %vm186, %vm187
    %s189 = scalar_lea.vmem [#allocation2], 4
    %190 = vst.msk [vmem:[%s189] ss:$8 sm:$0xf] %vm188, %v184
    %191 = vst.msk [vmem:[%s189] ss:$8 sm:$0x0] %vm188, %v184
    %192 = vrot.lane.b32.xlu0 %v140, 6
    %v193 = vpop.permute.xlu0 %192
    %v194 = vrot.slane %v193, 7
    %vm195 = vcmask 48128
    %v196 = vsel %vm195, %v194, %v193
    %vm198 = vcmp.ge.s32.totalorder %v134, 6
    %vm199 = vcmp.lt.s32.totalorder %v134, 462
    %vm200 = vmand %vm198, %vm199
    %s201 = scalar_lea.vmem [#allocation2], 5
    %202 = vst.msk [vmem:[%s201] ss:$8 sm:$0xf] %vm200, %v196
    %203 = vst.msk [vmem:[%s201] ss:$8 sm:$0x0] %vm200, %v196
    %v204 = vld [vmem:[#allocation2] sm:$0x3f]
    %v205 = vld [vmem:[#allocation2 + $0x8] sm:$0x3f]
    %v206 = vld [vmem:[#allocation2 + $0x10] sm:$0x3f]
    %v207 = vld [vmem:[#allocation2 + $0x18] sm:$0x3f]
    %v208 = vpack.c.bf16 %v204, %v204
    %v209 = vpack.c.bf16 %v205, %v205
    %v210 = vpack.c.bf16 %v206, %v206
    %v211 = vpack.c.bf16 %v207, %v207
    %v212 = vld [vmem:[#allocation6] sm:$0xf]
    %v213 = vld [vmem:[#allocation6 + $0x8] sm:$0x1]
    %v216 = vunpack.c.l.b16 %v212
    %v217 = vunpack.c.l.b16 %v213
    %v218 = vpack.c.b16 %v217, %v216
    %223 = vrot.lane.b32.xlu0 %v208, 120
    %v224 = vpop.permute.xlu0 %223
    %225 = vrot.lane.b32.xlu0 %v209, 120
    %v226 = vpop.permute.xlu0 %225
    %227 = vrot.lane.b32.xlu0 %v210, 120
    %v228 = vpop.permute.xlu0 %227
    %229 = vrot.lane.b32.xlu0 %v211, 120
    %v230 = vpop.permute.xlu0 %229
    %vm231 = vcmask 982016
    %v232 = vsel %vm231, %v224, %v226
    %v233 = vsel %vm231, %v226, %v228
    %v234 = vsel %vm231, %v228, %v230
    %v236 = vsel %vm195, %v218, 0
    %vm238 = vcmask 1042432
    %v240 = vsel %vm238, %v232, 0
    %v243 = vsel %vm238, %v233, 0
    %v246 = vsel %vm238, %v234, 0
    %v249 = vsel %vm238, %v230, 0
    %251 = vmatprep.subr.bf16.mxu0 0
    %252 = vmatpush1.bf16.msra.mxu0 0
    %253 = vmatprep.subr.bf16.mxu0 0
    %254 = vmatpush1.bf16.msra.mxu0 0
    %255 = vmatprep.subr.bf16.mxu0 0
    %256 = vmatpush1.bf16.msra.mxu0 0
    %257 = vmatprep.subr.bf16.mxu0 0
    %258 = vmatpush1.bf16.msra.mxu0 0
    %259 = vmatprep.subr.bf16.mxu0 0
    %260 = vmatpush1.bf16.msra.mxu0 0
    %261 = vmatprep.subr.bf16.mxu0 0
    %262 = vmatpush1.bf16.msra.mxu0 0
    %263 = vmatprep.subr.bf16.mxu0 0
    %264 = vmatpush1.bf16.msra.mxu0 0
    %265 = vmatprep.subr.bf16.mxu0 %v243
    %266 = vmatpush1.bf16.msra.mxu0 %v240
    %267 = vmatprep.subr.bf16.mxu0 0
    %268 = vmatpush2.bf16.msra.mxu0 0
    %269 = vmatprep.subr.bf16.mxu0 0
    %270 = vmatpush2.bf16.msra.mxu0 0
    %271 = vmatprep.subr.bf16.mxu0 0
    %272 = vmatpush2.bf16.msra.mxu0 0
    %273 = vmatprep.subr.bf16.mxu0 0
    %274 = vmatpush2.bf16.msra.mxu0 0
    %275 = vmatprep.subr.bf16.mxu0 0
    %276 = vmatpush2.bf16.msra.mxu0 0
    %277 = vmatprep.subr.bf16.mxu0 0
    %278 = vmatpush2.bf16.msra.mxu0 0
    %279 = vmatprep.subr.bf16.mxu0 0
    %280 = vmatpush2.bf16.msra.mxu0 0
    %281 = vmatprep.subr.bf16.mxu0 0
    %282 = vmatpush2.bf16.msra.mxu0 0
    %283 = vmatprep.mubr.bf16.mxu0 0
    %284 = vmatmul.mubr.bf16.gmra.mxu0 %v236
    %v285 = vpop.f32.mrf.mxu0
    %v286 = vadd.f32 0.0, %v285
    %v287 = vpop.f32.mrf.mxu0
    %v288 = vadd.f32 0.0, %v287
    %v289 = vpop.f32.mrf.mxu0
    %v290 = vadd.f32 0.0, %v289
    %v291 = vpop.f32.mrf.mxu0
    %v292 = vadd.f32 0.0, %v291
    %293 = vdwg.mxu0
    %294 = vmatprep.subr.bf16.mxu0 0
    %295 = vmatpush1.bf16.msra.mxu0 0
    %296 = vmatprep.subr.bf16.mxu0 0
    %297 = vmatpush1.bf16.msra.mxu0 0
    %298 = vmatprep.subr.bf16.mxu0 0
    %299 = vmatpush1.bf16.msra.mxu0 0
    %300 = vmatprep.subr.bf16.mxu0 0
    %301 = vmatpush1.bf16.msra.mxu0 0
    %302 = vmatprep.subr.bf16.mxu0 0
    %303 = vmatpush1.bf16.msra.mxu0 0
    %304 = vmatprep.subr.bf16.mxu0 0
    %305 = vmatpush1.bf16.msra.mxu0 0
    %306 = vmatprep.subr.bf16.mxu0 0
    %307 = vmatpush1.bf16.msra.mxu0 0
    %308 = vmatprep.subr.bf16.mxu0 %v249
    %309 = vmatpush1.bf16.msra.mxu0 %v246
    %310 = vmatprep.subr.bf16.mxu0 0
    %311 = vmatpush2.bf16.msra.mxu0 0
    %312 = vmatprep.subr.bf16.mxu0 0
    %313 = vmatpush2.bf16.msra.mxu0 0
    %314 = vmatprep.subr.bf16.mxu0 0
    %315 = vmatpush2.bf16.msra.mxu0 0
    %316 = vmatprep.subr.bf16.mxu0 0
    %317 = vmatpush2.bf16.msra.mxu0 0
    %318 = vmatprep.subr.bf16.mxu0 0
    %319 = vmatpush2.bf16.msra.mxu0 0
    %320 = vmatprep.subr.bf16.mxu0 0
    %321 = vmatpush2.bf16.msra.mxu0 0
    %322 = vmatprep.subr.bf16.mxu0 0
    %323 = vmatpush2.bf16.msra.mxu0 0
    %324 = vmatprep.subr.bf16.mxu0 0
    %325 = vmatpush2.bf16.msra.mxu0 0
    %326 = vmatprep.mubr.bf16.mxu0 0
    %327 = vmatmul.mubr.bf16.gmra.mxu0 %v236
    %v328 = vpop.f32.mrf.mxu0
    %v329 = vadd.f32 0.0, %v328
    %v330 = vpop.f32.mrf.mxu0
    %v331 = vadd.f32 0.0, %v330
    %v332 = vpop.f32.mrf.mxu0
    %v333 = vadd.f32 0.0, %v332
    %v334 = vpop.f32.mrf.mxu0
    %v335 = vadd.f32 0.0, %v334
    %336 = vdwg.mxu0
    %v337 = vmax.f32 %v286, 0.0
    %v338 = vmax.f32 %v288, 0.0
    %v339 = vmax.f32 %v329, 0.0
    %v340 = vmax.f32 %v331, 0.0
    %v341 = vsel %vm142, 1, 0
    %v342 = vlaneseq
    %v343 = vshrl.u32 %v342, 7
    %v344 = vsub.s32 0, %v343
    %v345 = vrot.slane %v341, %v344
    %v346 = vlaneseq
    %v347 = vshrl.u32 %v346, 7
    %v348 = vsub.s32 1, %v347
    %v349 = vrot.slane %v341, %v348
    %v350 = vlaneseq
    %v351 = vshrl.u32 %v350, 7
    %v352 = vsub.s32 2, %v351
    %v353 = vrot.slane %v341, %v352
    %v354 = vlaneseq
    %v355 = vshrl.u32 %v354, 7
    %v356 = vsub.s32 3, %v355
    %v357 = vrot.slane %v341, %v356
    %vm358 = vcmp.eq.s32.totalorder %v345, 1
    %vm359 = vcmp.eq.s32.totalorder %v349, 1
    %vm360 = vcmp.eq.s32.totalorder %v353, 1
    %vm361 = vcmp.eq.s32.totalorder %v357, 1
    %v362 = vsel %vm358, %v337, 0.0
    %v363 = vsel %vm359, %v338, 0.0
    %v364 = vsel %vm360, %v339, 0.0
    %v365 = vsel %vm361, %v340, 0.0
    %v370 = vrot.slane %v362, 7
    %v371 = vrot.slane %v363, 7
    %v372 = vrot.slane %v364, 7
    %v373 = vrot.slane %v365, 7
    %374 = vrot.lane.b32.xlu0 %v370, 11
    %v375 = vpop.permute.xlu0 %374
    %376 = vrot.lane.b32.xlu0 %v371, 11
    %v377 = vpop.permute.xlu0 %376
    %378 = vrot.lane.b32.xlu0 %v372, 11
    %v379 = vpop.permute.xlu0 %378
    %380 = vrot.lane.b32.xlu0 %v373, 11
    %v381 = vpop.permute.xlu0 %380
    %vm382 = vcmask 89088
    %v383 = vsel %vm382, %v375, %v377
    %v384 = vsel %vm382, %v377, %v379
    %v385 = vsel %vm382, %v379, %v381
    %vm390 = vcmask 1046617
    %391 = vst.msk [vmem:[#allocation2] sm:$0x7e] %vm390, %v375
    %392 = vst [vmem:[#allocation2 + $0x8] sm:$0x7e] %v383
    %393 = vst [vmem:[#allocation2 + $0x10] sm:$0x7e] %v384
    %vm394 = vcmask 677889
    %395 = vst.msk [vmem:[#allocation2 + $0x18] sm:$0x7e] %vm394, %v385
    %v396 = vrot.slane %v362, 1
    %v397 = vrot.slane %v363, 1
    %v398 = vrot.slane %v364, 1
    %v399 = vrot.slane %v365, 1
    %400 = vrot.lane.b32.xlu0 %v396, 10
    %v401 = vpop.permute.xlu0 %400
    %402 = vrot.lane.b32.xlu0 %v397, 10
    %v403 = vpop.permute.xlu0 %402
    %404 = vrot.lane.b32.xlu0 %v398, 10
    %v405 = vpop.permute.xlu0 %404
    %406 = vrot.lane.b32.xlu0 %v399, 10
    %v407 = vpop.permute.xlu0 %406
    %v408 = vsel %vm147, %v401, %v403
    %v409 = vsel %vm147, %v403, %v405
    %v410 = vsel %vm147, %v405, %v407
    %vm415 = vcmask 1047639
    %416 = vst.msk [vmem:[#allocation2] sm:$0x80] %vm415, %v401
    %417 = vst [vmem:[#allocation2 + $0x8] sm:$0x80] %v408
    %418 = vst [vmem:[#allocation2 + $0x10] sm:$0x80] %v409
    %vm419 = vcmask 670727
    %420 = vst.msk [vmem:[#allocation2 + $0x18] sm:$0x80] %vm419, %v410
    %vm421 = vcmask 1044560
    %422 = vst.msk [vmem:[#allocation2 + $0x20] sm:$0x1f] %vm421, %v401
    %423 = vst [vmem:[#allocation2 + $0x28] sm:$0x1f] %v408
    %424 = vst [vmem:[#allocation2 + $0x30] sm:$0x1f] %v409
    %vm425 = vcmask 667648
    %426 = vst.msk [vmem:[#allocation2 + $0x38] sm:$0x1f] %vm425, %v410
    %v427 = vrot.slane %v362, 3
    %v428 = vrot.slane %v363, 3
    %v429 = vrot.slane %v364, 3
    %v430 = vrot.slane %v365, 3
    %431 = vrot.lane.b32.xlu0 %v427, 9
    %v432 = vpop.permute.xlu0 %431
    %433 = vrot.lane.b32.xlu0 %v428, 9
    %v434 = vpop.permute.xlu0 %433
    %435 = vrot.lane.b32.xlu0 %v429, 9
    %v436 = vpop.permute.xlu0 %435
    %437 = vrot.lane.b32.xlu0 %v430, 9
    %v438 = vpop.permute.xlu0 %437
    %v439 = vsel %vm159, %v432, %v434
    %v440 = vsel %vm159, %v434, %v436
    %v441 = vsel %vm159, %v436, %v438
    %vm446 = vcmask 1047629
    %447 = vst.msk [vmem:[#allocation2 + $0x20] sm:$0xe0] %vm446, %v432
    %448 = vst [vmem:[#allocation2 + $0x28] sm:$0xe0] %v439
    %449 = vst [vmem:[#allocation2 + $0x30] sm:$0xe0] %v440
    %vm450 = vcmask 662533
    %451 = vst.msk [vmem:[#allocation2 + $0x38] sm:$0xe0] %vm450, %v441
    %vm452 = vcmask 1042504
    %453 = vst.msk [vmem:[#allocation2 + $0x40] sm:$0x7] %vm452, %v432
    %454 = vst [vmem:[#allocation2 + $0x48] sm:$0x7] %v439
    %455 = vst [vmem:[#allocation2 + $0x50] sm:$0x7] %v440
    %vm456 = vcmask 657408
    %457 = vst.msk [vmem:[#allocation2 + $0x58] sm:$0x7] %vm456, %v441
    %v458 = vrot.slane %v362, 5
    %v459 = vrot.slane %v363, 5
    %v460 = vrot.slane %v364, 5
    %v461 = vrot.slane %v365, 5
    %462 = vrot.lane.b32.xlu0 %v458, 8
    %v463 = vpop.permute.xlu0 %462
    %464 = vrot.lane.b32.xlu0 %v459, 8
    %v465 = vpop.permute.xlu0 %464
    %466 = vrot.lane.b32.xlu0 %v460, 8
    %v467 = vpop.permute.xlu0 %466
    %468 = vrot.lane.b32.xlu0 %v461, 8
    %v469 = vpop.permute.xlu0 %468
    %v470 = vsel %vm171, %v463, %v465
    %v471 = vsel %vm171, %v465, %v467
    %v472 = vsel %vm171, %v467, %v469
    %vm477 = vcmask 1047619
    %478 = vst.msk [vmem:[#allocation2 + $0x40] sm:$0xf8] %vm477, %v463
    %479 = vst [vmem:[#allocation2 + $0x48] sm:$0xf8] %v470
    %480 = vst [vmem:[#allocation2 + $0x50] sm:$0xf8] %v471
    %vm481 = vcmask 654339
    %482 = vst.msk [vmem:[#allocation2 + $0x58] sm:$0xf8] %vm481, %v472
    %vm483 = vcmask 1040448
    %484 = vst.msk [vmem:[#allocation2 + $0x60] sm:$0x1] %vm483, %v463
    %485 = vst [vmem:[#allocation2 + $0x68] sm:$0x1] %v470
    %486 = vst [vmem:[#allocation2 + $0x70] sm:$0x1] %v471
    %vm487 = vcmask 647168
    %488 = vst.msk [vmem:[#allocation2 + $0x78] sm:$0x1] %vm487, %v472
    %489 = vrot.lane.b32.xlu0 %v370, 7
    %v490 = vpop.permute.xlu0 %489
    %491 = vrot.lane.b32.xlu0 %v371, 7
    %v492 = vpop.permute.xlu0 %491
    %493 = vrot.lane.b32.xlu0 %v372, 7
    %v494 = vpop.permute.xlu0 %493
    %495 = vrot.lane.b32.xlu0 %v373, 7
    %v496 = vpop.permute.xlu0 %495
    %v497 = vsel %vm183, %v490, %v492
    %v498 = vsel %vm183, %v492, %v494
    %v499 = vsel %vm183, %v494, %v496
    %vm504 = vcmask 1046585
    %505 = vst.msk [vmem:[#allocation2 + $0x60] sm:$0x7e] %vm504, %v490
    %506 = vst [vmem:[#allocation2 + $0x68] sm:$0x7e] %v497
    %507 = vst [vmem:[#allocation2 + $0x70] sm:$0x7e] %v498
    %vm508 = vcmask 645121
    %509 = vst.msk [vmem:[#allocation2 + $0x78] sm:$0x7e] %vm508, %v499
    %510 = vrot.lane.b32.xlu0 %v396, 6
    %v511 = vpop.permute.xlu0 %510
    %512 = vrot.lane.b32.xlu0 %v397, 6
    %v513 = vpop.permute.xlu0 %512
    %514 = vrot.lane.b32.xlu0 %v398, 6
    %v515 = vpop.permute.xlu0 %514
    %516 = vrot.lane.b32.xlu0 %v399, 6
    %v517 = vpop.permute.xlu0 %516
    %v518 = vsel %vm195, %v511, %v513
    %v519 = vsel %vm195, %v513, %v515
    %v520 = vsel %vm195, %v515, %v517
    %vm525 = vcmask 1047607
    %526 = vst.msk [vmem:[#allocation2 + $0x60] sm:$0x80] %vm525, %v511
    %527 = vst [vmem:[#allocation2 + $0x68] sm:$0x80] %v518
    %528 = vst [vmem:[#allocation2 + $0x70] sm:$0x80] %v519
    %vm529 = vcmask 637959
    %530 = vst.msk [vmem:[#allocation2 + $0x78] sm:$0x80] %vm529, %v520
    %vm531 = vcmask 1044528
    %532 = vst.msk [vmem:[#allocation2 + $0x80] sm:$0x1f] %vm531, %v511
    %533 = vst [vmem:[#allocation2 + $0x88] sm:$0x1f] %v518
    %534 = vst [vmem:[#allocation2 + $0x90] sm:$0x1f] %v519
    %vm535 = vcmask 634880
    %536 = vst.msk [vmem:[#allocation2 + $0x98] sm:$0x1f] %vm535, %v520
    %537 = vrot.lane.b32.xlu0 %v427, 5
    %v538 = vpop.permute.xlu0 %537
    %539 = vrot.lane.b32.xlu0 %v428, 5
    %v540 = vpop.permute.xlu0 %539
    %541 = vrot.lane.b32.xlu0 %v429, 5
    %v542 = vpop.permute.xlu0 %541
    %543 = vrot.lane.b32.xlu0 %v430, 5
    %v544 = vpop.permute.xlu0 %543
    %vm545 = vcmask 39936
    %v546 = vsel %vm545, %v538, %v540
    %v547 = vsel %vm545, %v540, %v542
    %v548 = vsel %vm545, %v542, %v544
    %vm553 = vcmask 1047597
    %554 = vst.msk [vmem:[#allocation2 + $0x80] sm:$0xe0] %vm553, %v538
    %555 = vst [vmem:[#allocation2 + $0x88] sm:$0xe0] %v546
    %556 = vst [vmem:[#allocation2 + $0x90] sm:$0xe0] %v547
    %vm557 = vcmask 629765
    %558 = vst.msk [vmem:[#allocation2 + $0x98] sm:$0xe0] %vm557, %v548
    %vm559 = vcmask 1042472
    %560 = vst.msk [vmem:[#allocation2 + $0xa0] sm:$0x7] %vm559, %v538
    %561 = vst [vmem:[#allocation2 + $0xa8] sm:$0x7] %v546
    %562 = vst [vmem:[#allocation2 + $0xb0] sm:$0x7] %v547
    %vm563 = vcmask 624640
    %564 = vst.msk [vmem:[#allocation2 + $0xb8] sm:$0x7] %vm563, %v548
    %v565 = vld [vmem:[#allocation2] sm:$0xff]
    %v566 = vld [vmem:[#allocation2 + $0x8] sm:$0xff]
    %v567 = vld [vmem:[#allocation2 + $0x10] sm:$0xff]
    %v568 = vld [vmem:[#allocation2 + $0x18] sm:$0xff]
    %v569 = vld [vmem:[#allocation2 + $0x20] sm:$0xff]
    %v570 = vld [vmem:[#allocation2 + $0x28] sm:$0xff]
    %v571 = vld [vmem:[#allocation2 + $0x30] sm:$0xff]
    %v572 = vld [vmem:[#allocation2 + $0x38] sm:$0xff]
    %v573 = vld [vmem:[#allocation2 + $0x40] sm:$0xff]
    %v574 = vld [vmem:[#allocation2 + $0x48] sm:$0xff]
    %v575 = vld [vmem:[#allocation2 + $0x50] sm:$0xff]
    %v576 = vld [vmem:[#allocation2 + $0x58] sm:$0xff]
    %v577 = vld [vmem:[#allocation2 + $0x60] sm:$0xff]
    %v578 = vld [vmem:[#allocation2 + $0x68] sm:$0xff]
    %v579 = vld [vmem:[#allocation2 + $0x70] sm:$0xff]
    %v580 = vld [vmem:[#allocation2 + $0x78] sm:$0xff]
    %v581 = vld [vmem:[#allocation2 + $0x80] sm:$0xff]
    %v582 = vld [vmem:[#allocation2 + $0x88] sm:$0xff]
    %v583 = vld [vmem:[#allocation2 + $0x90] sm:$0xff]
    %v584 = vld [vmem:[#allocation2 + $0x98] sm:$0xff]
    %v585 = vld [vmem:[#allocation2 + $0xa0] sm:$0x7]
    %v586 = vld [vmem:[#allocation2 + $0xa8] sm:$0x7]
    %v587 = vld [vmem:[#allocation2 + $0xb0] sm:$0x7]
    %v588 = vld [vmem:[#allocation2 + $0xb8] sm:$0x7]
    %v589 = vpack.c.bf16 %v569, %v565
    %v590 = vpack.c.bf16 %v570, %v566
    %v591 = vpack.c.bf16 %v571, %v567
    %v592 = vpack.c.bf16 %v572, %v568
    %v593 = vpack.c.bf16 %v577, %v573
    %v594 = vpack.c.bf16 %v578, %v574
    %v595 = vpack.c.bf16 %v579, %v575
    %v596 = vpack.c.bf16 %v580, %v576
    %v597 = vpack.c.bf16 %v585, %v581
    %v598 = vpack.c.bf16 %v586, %v582
    %v599 = vpack.c.bf16 %v587, %v583
    %v600 = vpack.c.bf16 %v588, %v584
    %v601 = vld [vmem:[#allocation6 + $0x10] sm:$0x7]
    %614 = vrot.lane.b32.xlu0 %v589, 120
    %v615 = vpop.permute.xlu0 %614
    %616 = vrot.lane.b32.xlu0 %v590, 120
    %v617 = vpop.permute.xlu0 %616
    %618 = vrot.lane.b32.xlu0 %v591, 120
    %v619 = vpop.permute.xlu0 %618
    %620 = vrot.lane.b32.xlu0 %v592, 120
    %v621 = vpop.permute.xlu0 %620
    %622 = vrot.lane.b32.xlu0 %v593, 120
    %v623 = vpop.permute.xlu0 %622
    %624 = vrot.lane.b32.xlu0 %v594, 120
    %v625 = vpop.permute.xlu0 %624
    %626 = vrot.lane.b32.xlu0 %v595, 120
    %v627 = vpop.permute.xlu0 %626
    %628 = vrot.lane.b32.xlu0 %v596, 120
    %v629 = vpop.permute.xlu0 %628
    %630 = vrot.lane.b32.xlu0 %v597, 120
    %v631 = vpop.permute.xlu0 %630
    %632 = vrot.lane.b32.xlu0 %v598, 120
    %v633 = vpop.permute.xlu0 %632
    %634 = vrot.lane.b32.xlu0 %v599, 120
    %v635 = vpop.permute.xlu0 %634
    %636 = vrot.lane.b32.xlu0 %v600, 120
    %v637 = vpop.permute.xlu0 %636
    %v638 = vsel %vm231, %v615, %v617
    %v639 = vsel %vm231, %v617, %v619
    %v640 = vsel %vm231, %v619, %v621
    %v641 = vsel %vm231, %v623, %v625
    %v642 = vsel %vm231, %v625, %v627
    %v643 = vsel %vm231, %v627, %v629
    %v644 = vsel %vm231, %v631, %v633
    %v645 = vsel %vm231, %v633, %v635
    %v646 = vsel %vm231, %v635, %v637
    %vm655 = vcmask 351232
    %v657 = vsel %vm655, %v601, 0
    %vm659 = vcmask 1044480
    %vm660 = vcmask 1045504
    %v661 = vsel %vm659, 4294967295, 65535
    %v662 = vsel %vm660, %v661, 0
    %v664 = vand.u32 %v644, %v662
    %v667 = vand.u32 %v645, %v662
    %v670 = vand.u32 %v646, %v662
    %v673 = vand.u32 %v637, %v662
    %675 = vmatprep.subr.bf16.mxu0 0
    %676 = vmatpush1.bf16.msra.mxu0 0
    %677 = vmatprep.subr.bf16.mxu0 0
    %678 = vmatpush1.bf16.msra.mxu0 0
    %679 = vmatprep.subr.bf16.mxu0 0
    %680 = vmatpush1.bf16.msra.mxu0 0
    %681 = vmatprep.subr.bf16.mxu0 0
    %682 = vmatpush1.bf16.msra.mxu0 0
    %683 = vmatprep.subr.bf16.mxu0 0
    %684 = vmatpush1.bf16.msra.mxu0 0
    %685 = vmatprep.subr.bf16.mxu0 %v667
    %686 = vmatpush1.bf16.msra.mxu0 %v664
    %687 = vmatprep.subr.bf16.mxu0 %v642
    %688 = vmatpush1.bf16.msra.mxu0 %v641
    %689 = vmatprep.subr.bf16.mxu0 %v639
    %690 = vmatpush1.bf16.msra.mxu0 %v638
    %691 = vmatprep.subr.bf16.mxu0 0
    %692 = vmatpush2.bf16.msra.mxu0 0
    %693 = vmatprep.subr.bf16.mxu0 0
    %694 = vmatpush2.bf16.msra.mxu0 0
    %695 = vmatprep.subr.bf16.mxu0 0
    %696 = vmatpush2.bf16.msra.mxu0 0
    %697 = vmatprep.subr.bf16.mxu0 0
    %698 = vmatpush2.bf16.msra.mxu0 0
    %699 = vmatprep.subr.bf16.mxu0 0
    %700 = vmatpush2.bf16.msra.mxu0 0
    %701 = vmatprep.subr.bf16.mxu0 0
    %702 = vmatpush2.bf16.msra.mxu0 0
    %703 = vmatprep.subr.bf16.mxu0 0
    %704 = vmatpush2.bf16.msra.mxu0 0
    %705 = vmatprep.subr.bf16.mxu0 0
    %706 = vmatpush2.bf16.msra.mxu0 0
    %707 = vmatprep.mubr.bf16.mxu0 0
    %708 = vmatmul.mubr.bf16.gmra.mxu0 %v657
    %v709 = vpop.f32.mrf.mxu0
    %v710 = vadd.f32 0.0, %v709
    %v711 = vpop.f32.mrf.mxu0
    %v712 = vadd.f32 0.0, %v711
    %v713 = vpop.f32.mrf.mxu0
    %v714 = vpop.f32.mrf.mxu0
    %715 = vdwg.mxu0
    %716 = vmatprep.subr.bf16.mxu0 0
    %717 = vmatpush1.bf16.msra.mxu0 0
    %718 = vmatprep.subr.bf16.mxu0 0
    %719 = vmatpush1.bf16.msra.mxu0 0
    %720 = vmatprep.subr.bf16.mxu0 0
    %721 = vmatpush1.bf16.msra.mxu0 0
    %722 = vmatprep.subr.bf16.mxu0 0
    %723 = vmatpush1.bf16.msra.mxu0 0
    %724 = vmatprep.subr.bf16.mxu0 0
    %725 = vmatpush1.bf16.msra.mxu0 0
    %726 = vmatprep.subr.bf16.mxu0 %v673
    %727 = vmatpush1.bf16.msra.mxu0 %v670
    %728 = vmatprep.subr.bf16.mxu0 %v629
    %729 = vmatpush1.bf16.msra.mxu0 %v643
    %730 = vmatprep.subr.bf16.mxu0 %v621
    %731 = vmatpush1.bf16.msra.mxu0 %v640
    %732 = vmatprep.subr.bf16.mxu0 0
    %733 = vmatpush2.bf16.msra.mxu0 0
    %734 = vmatprep.subr.bf16.mxu0 0
    %735 = vmatpush2.bf16.msra.mxu0 0
    %736 = vmatprep.subr.bf16.mxu0 0
    %737 = vmatpush2.bf16.msra.mxu0 0
    %738 = vmatprep.subr.bf16.mxu0 0
    %739 = vmatpush2.bf16.msra.mxu0 0
    %740 = vmatprep.subr.bf16.mxu0 0
    %741 = vmatpush2.bf16.msra.mxu0 0
    %742 = vmatprep.subr.bf16.mxu0 0
    %743 = vmatpush2.bf16.msra.mxu0 0
    %744 = vmatprep.subr.bf16.mxu0 0
    %745 = vmatpush2.bf16.msra.mxu0 0
    %746 = vmatprep.subr.bf16.mxu0 0
    %747 = vmatpush2.bf16.msra.mxu0 0
    %748 = vmatprep.mubr.bf16.mxu0 0
    %749 = vmatmul.mubr.bf16.gmra.mxu0 %v657
    %v750 = vpop.f32.mrf.mxu0
    %v751 = vadd.f32 0.0, %v750
    %v752 = vpop.f32.mrf.mxu0
    %v753 = vadd.f32 0.0, %v752
    %v754 = vpop.f32.mrf.mxu0
    %v755 = vpop.f32.mrf.mxu0
    %756 = vdwg.mxu0
    %v757 = vmax.f32 %v710, 0.0
    %v758 = vmax.f32 %v712, 0.0
    %v759 = vmax.f32 %v751, 0.0
    %v760 = vmax.f32 %v753, 0.0
    %v765 = vrot.slane %v757, 3
    %v766 = vrot.slane %v758, 3
    %v767 = vrot.slane %v759, 3
    %v768 = vrot.slane %v760, 3
    %v773 = vadd.f32 %v757, %v765
    %v774 = vadd.f32 %v758, %v766
    %v775 = vadd.f32 %v759, %v767
    %v776 = vadd.f32 %v760, %v768
    %vm785 = vcmask 1041408
    %v786 = vrot.slane %v286, 6
    %v787 = vrot.slane %v290, 6
    %v788 = vsel %vm785, %v786, %v787
    %v789 = vrot.slane %v288, 6
    %v790 = vrot.slane %v292, 6
    %v791 = vsel %vm785, %v789, %v790
    %v792 = vrot.slane %v329, 6
    %v793 = vrot.slane %v333, 6
    %v794 = vsel %vm785, %v792, %v793
    %v795 = vrot.slane %v331, 6
    %v796 = vrot.slane %v335, 6
    %v797 = vsel %vm785, %v795, %v796
    %v802 = vadd.f32 %v773, %v788
    %v803 = vadd.f32 %v774, %v791
    %v804 = vadd.f32 %v775, %v794
    %v805 = vadd.f32 %v776, %v797
    %v806 = vsel %vm358, %v802, 0.0
    %v807 = vsel %vm359, %v803, 0.0
    %v808 = vsel %vm360, %v804, 0.0
    %v809 = vsel %vm361, %v805, 0.0
    %v814 = vrot.slane %v806, 7
    %v815 = vrot.slane %v807, 7
    %v816 = vrot.slane %v808, 7
    %v817 = vrot.slane %v809, 7
    %818 = vrot.lane.b32.xlu0 %v814, 10
    %v819 = vpop.permute.xlu0 %818
    %820 = vrot.lane.b32.xlu0 %v815, 10
    %v821 = vpop.permute.xlu0 %820
    %822 = vrot.lane.b32.xlu0 %v816, 10
    %v823 = vpop.permute.xlu0 %822
    %824 = vrot.lane.b32.xlu0 %v817, 10
    %v825 = vpop.permute.xlu0 %824
    %v826 = vsel %vm147, %v819, %v821
    %v827 = vsel %vm147, %v821, %v823
    %v828 = vsel %vm147, %v823, %v825
    %vm833 = vcmask 1043537
    %834 = vst.msk [vmem:[#allocation2] sm:$0xe] %vm833, %v819
    %835 = vst [vmem:[#allocation2 + $0x8] sm:$0xe] %v826
    %836 = vst [vmem:[#allocation2 + $0x10] sm:$0xe] %v827
    %vm837 = vcmask 666625
    %838 = vst.msk [vmem:[#allocation2 + $0x18] sm:$0xe] %vm837, %v828
    %v839 = vrot.slane %v806, 4
    %v840 = vrot.slane %v807, 4
    %v841 = vrot.slane %v808, 4
    %v842 = vrot.slane %v809, 4
    %843 = vrot.lane.b32.xlu0 %v839, 9
    %v844 = vpop.permute.xlu0 %843
    %845 = vrot.lane.b32.xlu0 %v840, 9
    %v846 = vpop.permute.xlu0 %845
    %847 = vrot.lane.b32.xlu0 %v841, 9
    %v848 = vpop.permute.xlu0 %847
    %849 = vrot.lane.b32.xlu0 %v842, 9
    %v850 = vpop.permute.xlu0 %849
    %v851 = vsel %vm159, %v844, %v846
    %v852 = vsel %vm159, %v846, %v848
    %v853 = vsel %vm159, %v848, %v850
    %vm858 = vcmask 1046604
    %859 = vst.msk [vmem:[#allocation2] sm:$0x70] %vm858, %v844
    %860 = vst [vmem:[#allocation2 + $0x8] sm:$0x70] %v851
    %861 = vst [vmem:[#allocation2 + $0x10] sm:$0x70] %v852
    %vm862 = vcmask 661508
    %863 = vst.msk [vmem:[#allocation2 + $0x18] sm:$0x70] %vm862, %v853
    %v864 = vrot.slane %v806, 1
    %v865 = vrot.slane %v807, 1
    %v866 = vrot.slane %v808, 1
    %v867 = vrot.slane %v809, 1
    %868 = vrot.lane.b32.xlu0 %v864, 8
    %v869 = vpop.permute.xlu0 %868
    %870 = vrot.lane.b32.xlu0 %v865, 8
    %v871 = vpop.permute.xlu0 %870
    %872 = vrot.lane.b32.xlu0 %v866, 8
    %v873 = vpop.permute.xlu0 %872
    %874 = vrot.lane.b32.xlu0 %v867, 8
    %v875 = vpop.permute.xlu0 %874
    %v876 = vsel %vm171, %v869, %v871
    %v877 = vsel %vm171, %v871, %v873
    %v878 = vsel %vm171, %v873, %v875
    %vm883 = vcmask 1047623
    %884 = vst.msk [vmem:[#allocation2] sm:$0x80] %vm883, %v869
    %885 = vst [vmem:[#allocation2 + $0x8] sm:$0x80] %v876
    %886 = vst [vmem:[#allocation2 + $0x10] sm:$0x80] %v877
    %vm887 = vcmask 654343
    %888 = vst.msk [vmem:[#allocation2 + $0x18] sm:$0x80] %vm887, %v878
    %vm889 = vcmask 1041472
    %890 = vst.msk [vmem:[#allocation2 + $0x20] sm:$0x3] %vm889, %v869
    %891 = vst [vmem:[#allocation2 + $0x28] sm:$0x3] %v876
    %892 = vst [vmem:[#allocation2 + $0x30] sm:$0x3] %v877
    %vm893 = vcmask 648192
    %894 = vst.msk [vmem:[#allocation2 + $0x38] sm:$0x3] %vm893, %v878
    %v895 = vrot.slane %v806, 6
    %v896 = vrot.slane %v807, 6
    %v897 = vrot.slane %v808, 6
    %v898 = vrot.slane %v809, 6
    %899 = vrot.lane.b32.xlu0 %v895, 7
    %v900 = vpop.permute.xlu0 %899
    %901 = vrot.lane.b32.xlu0 %v896, 7
    %v902 = vpop.permute.xlu0 %901
    %903 = vrot.lane.b32.xlu0 %v897, 7
    %v904 = vpop.permute.xlu0 %903
    %905 = vrot.lane.b32.xlu0 %v898, 7
    %v906 = vpop.permute.xlu0 %905
    %v907 = vsel %vm183, %v900, %v902
    %v908 = vsel %vm183, %v902, %v904
    %v909 = vsel %vm183, %v904, %v906
    %vm914 = vcmask 1044538
    %915 = vst.msk [vmem:[#allocation2 + $0x20] sm:$0x1c] %vm914, %v900
    %916 = vst [vmem:[#allocation2 + $0x28] sm:$0x1c] %v907
    %917 = vst [vmem:[#allocation2 + $0x30] sm:$0x1c] %v908
    %vm918 = vcmask 643074
    %919 = vst.msk [vmem:[#allocation2 + $0x38] sm:$0x1c] %vm918, %v909
    %v920 = vrot.slane %v806, 3
    %v921 = vrot.slane %v807, 3
    %v922 = vrot.slane %v808, 3
    %v923 = vrot.slane %v809, 3
    %924 = vrot.lane.b32.xlu0 %v920, 6
    %v925 = vpop.permute.xlu0 %924
    %926 = vrot.lane.b32.xlu0 %v921, 6
    %v927 = vpop.permute.xlu0 %926
    %928 = vrot.lane.b32.xlu0 %v922, 6
    %v929 = vpop.permute.xlu0 %928
    %930 = vrot.lane.b32.xlu0 %v923, 6
    %v931 = vpop.permute.xlu0 %930
    %v932 = vsel %vm195, %v925, %v927
    %v933 = vsel %vm195, %v927, %v929
    %v934 = vsel %vm195, %v929, %v931
    %vm939 = vcmask 1047605
    %940 = vst.msk [vmem:[#allocation2 + $0x20] sm:$0xe0] %vm939, %v925
    %941 = vst [vmem:[#allocation2 + $0x28] sm:$0xe0] %v932
    %942 = vst [vmem:[#allocation2 + $0x30] sm:$0xe0] %v933
    %vm943 = vcmask 637957
    %944 = vst.msk [vmem:[#allocation2 + $0x38] sm:$0xe0] %vm943, %v934
    %v945 = vld [vmem:[#allocation2] sm:$0xff]
    %v946 = vld [vmem:[#allocation2 + $0x8] sm:$0xff]
    %v947 = vld [vmem:[#allocation2 + $0x10] sm:$0xff]
    %v948 = vld [vmem:[#allocation2 + $0x18] sm:$0xff]
    %v949 = vld [vmem:[#allocation2 + $0x20] sm:$0xff]
    %v950 = vld [vmem:[#allocation2 + $0x28] sm:$0xff]
    %v951 = vld [vmem:[#allocation2 + $0x30] sm:$0xff]
    %v952 = vld [vmem:[#allocation2 + $0x38] sm:$0xff]
    %v953 = vpack.c.bf16 %v949, %v945
    %v954 = vpack.c.bf16 %v950, %v946
    %v955 = vpack.c.bf16 %v951, %v947
    %v956 = vpack.c.bf16 %v952, %v948
    %v957 = vld [vmem:[#allocation6 + $0x18] sm:$0x7]
    %962 = vrot.lane.b32.xlu0 %v953, 120
    %v963 = vpop.permute.xlu0 %962
    %964 = vrot.lane.b32.xlu0 %v954, 120
    %v965 = vpop.permute.xlu0 %964
    %966 = vrot.lane.b32.xlu0 %v955, 120
    %v967 = vpop.permute.xlu0 %966
    %968 = vrot.lane.b32.xlu0 %v956, 120
    %v969 = vpop.permute.xlu0 %968
    %v970 = vsel %vm231, %v963, %v965
    %v971 = vsel %vm231, %v965, %v967
    %v972 = vsel %vm231, %v967, %v969
    %vm977 = vcmask 130048
    %v979 = vsel %vm977, %v957, 0
    %981 = vmatprep.subr.bf16.mxu0 0
    %982 = vmatpush1.bf16.msra.mxu0 0
    %983 = vmatprep.subr.bf16.mxu0 0
    %984 = vmatpush1.bf16.msra.mxu0 0
    %985 = vmatprep.subr.bf16.mxu0 0
    %986 = vmatpush1.bf16.msra.mxu0 0
    %987 = vmatprep.subr.bf16.mxu0 0
    %988 = vmatpush1.bf16.msra.mxu0 0
    %989 = vmatprep.subr.bf16.mxu0 0
    %990 = vmatpush1.bf16.msra.mxu0 0
    %991 = vmatprep.subr.bf16.mxu0 0
    %992 = vmatpush1.bf16.msra.mxu0 0
    %993 = vmatprep.subr.bf16.mxu0 0
    %994 = vmatpush1.bf16.msra.mxu0 0
    %995 = vmatprep.subr.bf16.mxu0 %v971
    %996 = vmatpush1.bf16.msra.mxu0 %v970
    %997 = vmatprep.subr.bf16.mxu0 0
    %998 = vmatpush2.bf16.msra.mxu0 0
    %999 = vmatprep.subr.bf16.mxu0 0
    %1000 = vmatpush2.bf16.msra.mxu0 0
    %1001 = vmatprep.subr.bf16.mxu0 0
    %1002 = vmatpush2.bf16.msra.mxu0 0
    %1003 = vmatprep.subr.bf16.mxu0 0
    %1004 = vmatpush2.bf16.msra.mxu0 0
    %1005 = vmatprep.subr.bf16.mxu0 0
    %1006 = vmatpush2.bf16.msra.mxu0 0
    %1007 = vmatprep.subr.bf16.mxu0 0
    %1008 = vmatpush2.bf16.msra.mxu0 0
    %1009 = vmatprep.subr.bf16.mxu0 0
    %1010 = vmatpush2.bf16.msra.mxu0 0
    %1011 = vmatprep.subr.bf16.mxu0 0
    %1012 = vmatpush2.bf16.msra.mxu0 0
    %1013 = vmatprep.mubr.bf16.mxu0 0
    %1014 = vmatmul.mubr.bf16.gmra.mxu0 %v979
    %v1015 = vpop.f32.mrf.mxu0
    %v1016 = vadd.f32 0.0, %v1015
    %v1017 = vpop.f32.mrf.mxu0
    %v1018 = vadd.f32 0.0, %v1017
    %v1019 = vpop.f32.mrf.mxu0
    %v1020 = vpop.f32.mrf.mxu0
    %1021 = vdwg.mxu0
    %1022 = vmatprep.subr.bf16.mxu0 0
    %1023 = vmatpush1.bf16.msra.mxu0 0
    %1024 = vmatprep.subr.bf16.mxu0 0
    %1025 = vmatpush1.bf16.msra.mxu0 0
    %1026 = vmatprep.subr.bf16.mxu0 0
    %1027 = vmatpush1.bf16.msra.mxu0 0
    %1028 = vmatprep.subr.bf16.mxu0 0
    %1029 = vmatpush1.bf16.msra.mxu0 0
    %1030 = vmatprep.subr.bf16.mxu0 0
    %1031 = vmatpush1.bf16.msra.mxu0 0
    %1032 = vmatprep.subr.bf16.mxu0 0
    %1033 = vmatpush1.bf16.msra.mxu0 0
    %1034 = vmatprep.subr.bf16.mxu0 0
    %1035 = vmatpush1.bf16.msra.mxu0 0
    %1036 = vmatprep.subr.bf16.mxu0 %v969
    %1037 = vmatpush1.bf16.msra.mxu0 %v972
    %1038 = vmatprep.subr.bf16.mxu0 0
    %1039 = vmatpush2.bf16.msra.mxu0 0
    %1040 = vmatprep.subr.bf16.mxu0 0
    %1041 = vmatpush2.bf16.msra.mxu0 0
    %1042 = vmatprep.subr.bf16.mxu0 0
    %1043 = vmatpush2.bf16.msra.mxu0 0
    %1044 = vmatprep.subr.bf16.mxu0 0
    %1045 = vmatpush2.bf16.msra.mxu0 0
    %1046 = vmatprep.subr.bf16.mxu0 0
    %1047 = vmatpush2.bf16.msra.mxu0 0
    %1048 = vmatprep.subr.bf16.mxu0 0
    %1049 = vmatpush2.bf16.msra.mxu0 0
    %1050 = vmatprep.subr.bf16.mxu0 0
    %1051 = vmatpush2.bf16.msra.mxu0 0
    %1052 = vmatprep.subr.bf16.mxu0 0
    %1053 = vmatpush2.bf16.msra.mxu0 0
    %1054 = vmatprep.mubr.bf16.mxu0 0
    %1055 = vmatmul.mubr.bf16.gmra.mxu0 %v979
    %v1056 = vpop.f32.mrf.mxu0
    %v1057 = vadd.f32 0.0, %v1056
    %v1058 = vpop.f32.mrf.mxu0
    %v1059 = vadd.f32 0.0, %v1058
    %v1060 = vpop.f32.mrf.mxu0
    %v1061 = vpop.f32.mrf.mxu0
    %1062 = vdwg.mxu0
    %v1063 = vmax.f32 %v1016, 0.0
    %v1064 = vmax.f32 %v1018, 0.0
    %v1065 = vmax.f32 %v1057, 0.0
    %v1066 = vmax.f32 %v1059, 0.0
    %v1067 = vsel %vm358, %v1063, 0.0
    %v1068 = vsel %vm359, %v1064, 0.0
    %v1069 = vsel %vm360, %v1065, 0.0
    %v1070 = vsel %vm361, %v1066, 0.0
    %v1075 = vrot.slane %v1067, 7
    %v1076 = vrot.slane %v1068, 7
    %v1077 = vrot.slane %v1069, 7
    %v1078 = vrot.slane %v1070, 7
    %1079 = vrot.lane.b32.xlu0 %v1075, 11
    %v1080 = vpop.permute.xlu0 %1079
    %1081 = vrot.lane.b32.xlu0 %v1076, 11
    %v1082 = vpop.permute.xlu0 %1081
    %1083 = vrot.lane.b32.xlu0 %v1077, 11
    %v1084 = vpop.permute.xlu0 %1083
    %1085 = vrot.lane.b32.xlu0 %v1078, 11
    %v1086 = vpop.permute.xlu0 %1085
    %v1087 = vsel %vm382, %v1080, %v1082
    %v1088 = vsel %vm382, %v1082, %v1084
    %v1089 = vsel %vm382, %v1084, %v1086
    %1094 = vst.msk [vmem:[#allocation2] sm:$0x7e] %vm390, %v1080
    %1095 = vst [vmem:[#allocation2 + $0x8] sm:$0x7e] %v1087
    %1096 = vst [vmem:[#allocation2 + $0x10] sm:$0x7e] %v1088
    %1097 = vst.msk [vmem:[#allocation2 + $0x18] sm:$0x7e] %vm394, %v1089
    %v1098 = vrot.slane %v1067, 1
    %v1099 = vrot.slane %v1068, 1
    %v1100 = vrot.slane %v1069, 1
    %v1101 = vrot.slane %v1070, 1
    %1102 = vrot.lane.b32.xlu0 %v1098, 10
    %v1103 = vpop.permute.xlu0 %1102
    %1104 = vrot.lane.b32.xlu0 %v1099, 10
    %v1105 = vpop.permute.xlu0 %1104
    %1106 = vrot.lane.b32.xlu0 %v1100, 10
    %v1107 = vpop.permute.xlu0 %1106
    %1108 = vrot.lane.b32.xlu0 %v1101, 10
    %v1109 = vpop.permute.xlu0 %1108
    %v1110 = vsel %vm147, %v1103, %v1105
    %v1111 = vsel %vm147, %v1105, %v1107
    %v1112 = vsel %vm147, %v1107, %v1109
    %1117 = vst.msk [vmem:[#allocation2] sm:$0x80] %vm415, %v1103
    %1118 = vst [vmem:[#allocation2 + $0x8] sm:$0x80] %v1110
    %1119 = vst [vmem:[#allocation2 + $0x10] sm:$0x80] %v1111
    %1120 = vst.msk [vmem:[#allocation2 + $0x18] sm:$0x80] %vm419, %v1112
    %1121 = vst.msk [vmem:[#allocation2 + $0x20] sm:$0x1f] %vm421, %v1103
    %1122 = vst [vmem:[#allocation2 + $0x28] sm:$0x1f] %v1110
    %1123 = vst [vmem:[#allocation2 + $0x30] sm:$0x1f] %v1111
    %1124 = vst.msk [vmem:[#allocation2 + $0x38] sm:$0x1f] %vm425, %v1112
    %v1125 = vrot.slane %v1067, 3
    %v1126 = vrot.slane %v1068, 3
    %v1127 = vrot.slane %v1069, 3
    %v1128 = vrot.slane %v1070, 3
    %1129 = vrot.lane.b32.xlu0 %v1125, 9
    %v1130 = vpop.permute.xlu0 %1129
    %1131 = vrot.lane.b32.xlu0 %v1126, 9
    %v1132 = vpop.permute.xlu0 %1131
    %1133 = vrot.lane.b32.xlu0 %v1127, 9
    %v1134 = vpop.permute.xlu0 %1133
    %1135 = vrot.lane.b32.xlu0 %v1128, 9
    %v1136 = vpop.permute.xlu0 %1135
    %v1137 = vsel %vm159, %v1130, %v1132
    %v1138 = vsel %vm159, %v1132, %v1134
    %v1139 = vsel %vm159, %v1134, %v1136
    %1144 = vst.msk [vmem:[#allocation2 + $0x20] sm:$0xe0] %vm446, %v1130
    %1145 = vst [vmem:[#allocation2 + $0x28] sm:$0xe0] %v1137
    %1146 = vst [vmem:[#allocation2 + $0x30] sm:$0xe0] %v1138
    %1147 = vst.msk [vmem:[#allocation2 + $0x38] sm:$0xe0] %vm450, %v1139
    %1148 = vst.msk [vmem:[#allocation2 + $0x40] sm:$0x7] %vm452, %v1130
    %1149 = vst [vmem:[#allocation2 + $0x48] sm:$0x7] %v1137
    %1150 = vst [vmem:[#allocation2 + $0x50] sm:$0x7] %v1138
    %1151 = vst.msk [vmem:[#allocation2 + $0x58] sm:$0x7] %vm456, %v1139
    %v1152 = vrot.slane %v1067, 5
    %v1153 = vrot.slane %v1068, 5
    %v1154 = vrot.slane %v1069, 5
    %v1155 = vrot.slane %v1070, 5
    %1156 = vrot.lane.b32.xlu0 %v1152, 8
    %v1157 = vpop.permute.xlu0 %1156
    %1158 = vrot.lane.b32.xlu0 %v1153, 8
    %v1159 = vpop.permute.xlu0 %1158
    %1160 = vrot.lane.b32.xlu0 %v1154, 8
    %v1161 = vpop.permute.xlu0 %1160
    %1162 = vrot.lane.b32.xlu0 %v1155, 8
    %v1163 = vpop.permute.xlu0 %1162
    %v1164 = vsel %vm171, %v1157, %v1159
    %v1165 = vsel %vm171, %v1159, %v1161
    %v1166 = vsel %vm171, %v1161, %v1163
    %1171 = vst.msk [vmem:[#allocation2 + $0x40] sm:$0xf8] %vm477, %v1157
    %1172 = vst [vmem:[#allocation2 + $0x48] sm:$0xf8] %v1164
    %1173 = vst [vmem:[#allocation2 + $0x50] sm:$0xf8] %v1165
    %1174 = vst.msk [vmem:[#allocation2 + $0x58] sm:$0xf8] %vm481, %v1166
    %1175 = vst.msk [vmem:[#allocation2 + $0x60] sm:$0x1] %vm483, %v1157
    %1176 = vst [vmem:[#allocation2 + $0x68] sm:$0x1] %v1164
    %1177 = vst [vmem:[#allocation2 + $0x70] sm:$0x1] %v1165
    %1178 = vst.msk [vmem:[#allocation2 + $0x78] sm:$0x1] %vm487, %v1166
    %1179 = vrot.lane.b32.xlu0 %v1075, 7
    %v1180 = vpop.permute.xlu0 %1179
    %1181 = vrot.lane.b32.xlu0 %v1076, 7
    %v1182 = vpop.permute.xlu0 %1181
    %1183 = vrot.lane.b32.xlu0 %v1077, 7
    %v1184 = vpop.permute.xlu0 %1183
    %1185 = vrot.lane.b32.xlu0 %v1078, 7
    %v1186 = vpop.permute.xlu0 %1185
    %v1187 = vsel %vm183, %v1180, %v1182
    %v1188 = vsel %vm183, %v1182, %v1184
    %v1189 = vsel %vm183, %v1184, %v1186
    %1194 = vst.msk [vmem:[#allocation2 + $0x60] sm:$0x7e] %vm504, %v1180
    %1195 = vst [vmem:[#allocation2 + $0x68] sm:$0x7e] %v1187
    %1196 = vst [vmem:[#allocation2 + $0x70] sm:$0x7e] %v1188
    %1197 = vst.msk [vmem:[#allocation2 + $0x78] sm:$0x7e] %vm508, %v1189
    %1198 = vrot.lane.b32.xlu0 %v1098, 6
    %v1199 = vpop.permute.xlu0 %1198
    %1200 = vrot.lane.b32.xlu0 %v1099, 6
    %v1201 = vpop.permute.xlu0 %1200
    %1202 = vrot.lane.b32.xlu0 %v1100, 6
    %v1203 = vpop.permute.xlu0 %1202
    %1204 = vrot.lane.b32.xlu0 %v1101, 6
    %v1205 = vpop.permute.xlu0 %1204
    %v1206 = vsel %vm195, %v1199, %v1201
    %v1207 = vsel %vm195, %v1201, %v1203
    %v1208 = vsel %vm195, %v1203, %v1205
    %1213 = vst.msk [vmem:[#allocation2 + $0x60] sm:$0x80] %vm525, %v1199
    %1214 = vst [vmem:[#allocation2 + $0x68] sm:$0x80] %v1206
    %1215 = vst [vmem:[#allocation2 + $0x70] sm:$0x80] %v1207
    %1216 = vst.msk [vmem:[#allocation2 + $0x78] sm:$0x80] %vm529, %v1208
    %1217 = vst.msk [vmem:[#allocation2 + $0x80] sm:$0x1f] %vm531, %v1199
    %1218 = vst [vmem:[#allocation2 + $0x88] sm:$0x1f] %v1206
    %1219 = vst [vmem:[#allocation2 + $0x90] sm:$0x1f] %v1207
    %1220 = vst.msk [vmem:[#allocation2 + $0x98] sm:$0x1f] %vm535, %v1208
    %1221 = vrot.lane.b32.xlu0 %v1125, 5
    %v1222 = vpop.permute.xlu0 %1221
    %1223 = vrot.lane.b32.xlu0 %v1126, 5
    %v1224 = vpop.permute.xlu0 %1223
    %1225 = vrot.lane.b32.xlu0 %v1127, 5
    %v1226 = vpop.permute.xlu0 %1225
    %1227 = vrot.lane.b32.xlu0 %v1128, 5
    %v1228 = vpop.permute.xlu0 %1227
    %v1229 = vsel %vm545, %v1222, %v1224
    %v1230 = vsel %vm545, %v1224, %v1226
    %v1231 = vsel %vm545, %v1226, %v1228
    %1236 = vst.msk [vmem:[#allocation2 + $0x80] sm:$0xe0] %vm553, %v1222
    %1237 = vst [vmem:[#allocation2 + $0x88] sm:$0xe0] %v1229
    %1238 = vst [vmem:[#allocation2 + $0x90] sm:$0xe0] %v1230
    %1239 = vst.msk [vmem:[#allocation2 + $0x98] sm:$0xe0] %vm557, %v1231
    %1240 = vst.msk [vmem:[#allocation2 + $0xa0] sm:$0x7] %vm559, %v1222
    %1241 = vst [vmem:[#allocation2 + $0xa8] sm:$0x7] %v1229
    %1242 = vst [vmem:[#allocation2 + $0xb0] sm:$0x7] %v1230
    %1243 = vst.msk [vmem:[#allocation2 + $0xb8] sm:$0x7] %vm563, %v1231
    %v1244 = vld [vmem:[#allocation2] sm:$0xff]
    %v1245 = vld [vmem:[#allocation2 + $0x8] sm:$0xff]
    %v1246 = vld [vmem:[#allocation2 + $0x10] sm:$0xff]
    %v1247 = vld [vmem:[#allocation2 + $0x18] sm:$0xff]
    %v1248 = vld [vmem:[#allocation2 + $0x20] sm:$0xff]
    %v1249 = vld [vmem:[#allocation2 + $0x28] sm:$0xff]
    %v1250 = vld [vmem:[#allocation2 + $0x30] sm:$0xff]
    %v1251 = vld [vmem:[#allocation2 + $0x38] sm:$0xff]
    %v1252 = vld [vmem:[#allocation2 + $0x40] sm:$0xff]
    %v1253 = vld [vmem:[#allocation2 + $0x48] sm:$0xff]
    %v1254 = vld [vmem:[#allocation2 + $0x50] sm:$0xff]
    %v1255 = vld [vmem:[#allocation2 + $0x58] sm:$0xff]
    %v1256 = vld [vmem:[#allocation2 + $0x60] sm:$0xff]
    %v1257 = vld [vmem:[#allocation2 + $0x68] sm:$0xff]
    %v1258 = vld [vmem:[#allocation2 + $0x70] sm:$0xff]
    %v1259 = vld [vmem:[#allocation2 + $0x78] sm:$0xff]
    %v1260 = vld [vmem:[#allocation2 + $0x80] sm:$0xff]
    %v1261 = vld [vmem:[#allocation2 + $0x88] sm:$0xff]
    %v1262 = vld [vmem:[#allocation2 + $0x90] sm:$0xff]
    %v1263 = vld [vmem:[#allocation2 + $0x98] sm:$0xff]
    %v1264 = vld [vmem:[#allocation2 + $0xa0] sm:$0x7]
    %v1265 = vld [vmem:[#allocation2 + $0xa8] sm:$0x7]
    %v1266 = vld [vmem:[#allocation2 + $0xb0] sm:$0x7]
    %v1267 = vld [vmem:[#allocation2 + $0xb8] sm:$0x7]
    %v1268 = vpack.c.bf16 %v1248, %v1244
    %v1269 = vpack.c.bf16 %v1249, %v1245
    %v1270 = vpack.c.bf16 %v1250, %v1246
    %v1271 = vpack.c.bf16 %v1251, %v1247
    %v1272 = vpack.c.bf16 %v1256, %v1252
    %v1273 = vpack.c.bf16 %v1257, %v1253
    %v1274 = vpack.c.bf16 %v1258, %v1254
    %v1275 = vpack.c.bf16 %v1259, %v1255
    %v1276 = vpack.c.bf16 %v1264, %v1260
    %v1277 = vpack.c.bf16 %v1265, %v1261
    %v1278 = vpack.c.bf16 %v1266, %v1262
    %v1279 = vpack.c.bf16 %v1267, %v1263
    %v1280 = vld [vmem:[#allocation6 + $0x20] sm:$0x7]
    %1293 = vrot.lane.b32.xlu0 %v1268, 120
    %v1294 = vpop.permute.xlu0 %1293
    %1295 = vrot.lane.b32.xlu0 %v1269, 120
    %v1296 = vpop.permute.xlu0 %1295
    %1297 = vrot.lane.b32.xlu0 %v1270, 120
    %v1298 = vpop.permute.xlu0 %1297
    %1299 = vrot.lane.b32.xlu0 %v1271, 120
    %v1300 = vpop.permute.xlu0 %1299
    %1301 = vrot.lane.b32.xlu0 %v1272, 120
    %v1302 = vpop.permute.xlu0 %1301
    %1303 = vrot.lane.b32.xlu0 %v1273, 120
    %v1304 = vpop.permute.xlu0 %1303
    %1305 = vrot.lane.b32.xlu0 %v1274, 120
    %v1306 = vpop.permute.xlu0 %1305
    %1307 = vrot.lane.b32.xlu0 %v1275, 120
    %v1308 = vpop.permute.xlu0 %1307
    %1309 = vrot.lane.b32.xlu0 %v1276, 120
    %v1310 = vpop.permute.xlu0 %1309
    %1311 = vrot.lane.b32.xlu0 %v1277, 120
    %v1312 = vpop.permute.xlu0 %1311
    %1313 = vrot.lane.b32.xlu0 %v1278, 120
    %v1314 = vpop.permute.xlu0 %1313
    %1315 = vrot.lane.b32.xlu0 %v1279, 120
    %v1316 = vpop.permute.xlu0 %1315
    %v1317 = vsel %vm231, %v1294, %v1296
    %v1318 = vsel %vm231, %v1296, %v1298
    %v1319 = vsel %vm231, %v1298, %v1300
    %v1320 = vsel %vm231, %v1302, %v1304
    %v1321 = vsel %vm231, %v1304, %v1306
    %v1322 = vsel %vm231, %v1306, %v1308
    %v1323 = vsel %vm231, %v1310, %v1312
    %v1324 = vsel %vm231, %v1312, %v1314
    %v1325 = vsel %vm231, %v1314, %v1316
    %v1335 = vsel %vm655, %v1280, 0
    %v1338 = vand.u32 %v1323, %v662
    %v1341 = vand.u32 %v1324, %v662
    %v1344 = vand.u32 %v1325, %v662
    %v1347 = vand.u32 %v1316, %v662
    %1349 = vmatprep.subr.bf16.mxu0 0
    %1350 = vmatpush1.bf16.msra.mxu0 0
    %1351 = vmatprep.subr.bf16.mxu0 0
    %1352 = vmatpush1.bf16.msra.mxu0 0
    %1353 = vmatprep.subr.bf16.mxu0 0
    %1354 = vmatpush1.bf16.msra.mxu0 0
    %1355 = vmatprep.subr.bf16.mxu0 0
    %1356 = vmatpush1.bf16.msra.mxu0 0
    %1357 = vmatprep.subr.bf16.mxu0 0
    %1358 = vmatpush1.bf16.msra.mxu0 0
    %1359 = vmatprep.subr.bf16.mxu0 %v1341
    %1360 = vmatpush1.bf16.msra.mxu0 %v1338
    %1361 = vmatprep.subr.bf16.mxu0 %v1321
    %1362 = vmatpush1.bf16.msra.mxu0 %v1320
    %1363 = vmatprep.subr.bf16.mxu0 %v1318
    %1364 = vmatpush1.bf16.msra.mxu0 %v1317
    %1365 = vmatprep.subr.bf16.mxu0 0
    %1366 = vmatpush2.bf16.msra.mxu0 0
    %1367 = vmatprep.subr.bf16.mxu0 0
    %1368 = vmatpush2.bf16.msra.mxu0 0
    %1369 = vmatprep.subr.bf16.mxu0 0
    %1370 = vmatpush2.bf16.msra.mxu0 0
    %1371 = vmatprep.subr.bf16.mxu0 0
    %1372 = vmatpush2.bf16.msra.mxu0 0
    %1373 = vmatprep.subr.bf16.mxu0 0
    %1374 = vmatpush2.bf16.msra.mxu0 0
    %1375 = vmatprep.subr.bf16.mxu0 0
    %1376 = vmatpush2.bf16.msra.mxu0 0
    %1377 = vmatprep.subr.bf16.mxu0 0
    %1378 = vmatpush2.bf16.msra.mxu0 0
    %1379 = vmatprep.subr.bf16.mxu0 0
    %1380 = vmatpush2.bf16.msra.mxu0 0
    %1381 = vmatprep.mubr.bf16.mxu0 0
    %1382 = vmatmul.mubr.bf16.gmra.mxu0 %v1335
    %v1383 = vpop.f32.mrf.mxu0
    %v1384 = vadd.f32 0.0, %v1383
    %v1385 = vpop.f32.mrf.mxu0
    %v1386 = vadd.f32 0.0, %v1385
    %v1387 = vpop.f32.mrf.mxu0
    %v1388 = vpop.f32.mrf.mxu0
    %1389 = vdwg.mxu0
    %1390 = vmatprep.subr.bf16.mxu0 0
    %1391 = vmatpush1.bf16.msra.mxu0 0
    %1392 = vmatprep.subr.bf16.mxu0 0
    %1393 = vmatpush1.bf16.msra.mxu0 0
    %1394 = vmatprep.subr.bf16.mxu0 0
    %1395 = vmatpush1.bf16.msra.mxu0 0
    %1396 = vmatprep.subr.bf16.mxu0 0
    %1397 = vmatpush1.bf16.msra.mxu0 0
    %1398 = vmatprep.subr.bf16.mxu0 0
    %1399 = vmatpush1.bf16.msra.mxu0 0
    %1400 = vmatprep.subr.bf16.mxu0 %v1347
    %1401 = vmatpush1.bf16.msra.mxu0 %v1344
    %1402 = vmatprep.subr.bf16.mxu0 %v1308
    %1403 = vmatpush1.bf16.msra.mxu0 %v1322
    %1404 = vmatprep.subr.bf16.mxu0 %v1300
    %1405 = vmatpush1.bf16.msra.mxu0 %v1319
    %1406 = vmatprep.subr.bf16.mxu0 0
    %1407 = vmatpush2.bf16.msra.mxu0 0
    %1408 = vmatprep.subr.bf16.mxu0 0
    %1409 = vmatpush2.bf16.msra.mxu0 0
    %1410 = vmatprep.subr.bf16.mxu0 0
    %1411 = vmatpush2.bf16.msra.mxu0 0
    %1412 = vmatprep.subr.bf16.mxu0 0
    %1413 = vmatpush2.bf16.msra.mxu0 0
    %1414 = vmatprep.subr.bf16.mxu0 0
    %1415 = vmatpush2.bf16.msra.mxu0 0
    %1416 = vmatprep.subr.bf16.mxu0 0
    %1417 = vmatpush2.bf16.msra.mxu0 0
    %1418 = vmatprep.subr.bf16.mxu0 0
    %1419 = vmatpush2.bf16.msra.mxu0 0
    %1420 = vmatprep.subr.bf16.mxu0 0
    %1421 = vmatpush2.bf16.msra.mxu0 0
    %1422 = vmatprep.mubr.bf16.mxu0 0
    %1423 = vmatmul.mubr.bf16.gmra.mxu0 %v1335
    %v1424 = vpop.f32.mrf.mxu0
    %v1425 = vadd.f32 0.0, %v1424
    %v1426 = vpop.f32.mrf.mxu0
    %v1427 = vadd.f32 0.0, %v1426
    %v1428 = vpop.f32.mrf.mxu0
    %v1429 = vpop.f32.mrf.mxu0
    %1430 = vdwg.mxu0
    %v1431 = vmax.f32 %v1384, 0.0
    %v1432 = vmax.f32 %v1386, 0.0
    %v1433 = vmax.f32 %v1425, 0.0
    %v1434 = vmax.f32 %v1427, 0.0
    %v1439 = vrot.slane %v1431, 3
    %v1440 = vrot.slane %v1432, 3
    %v1441 = vrot.slane %v1433, 3
    %v1442 = vrot.slane %v1434, 3
    %v1447 = vadd.f32 %v1431, %v1439
    %v1448 = vadd.f32 %v1432, %v1440
    %v1449 = vadd.f32 %v1433, %v1441
    %v1450 = vadd.f32 %v1434, %v1442
    %v1451 = vadd.f32 %v1447, %v806
    %v1452 = vadd.f32 %v1448, %v807
    %v1453 = vadd.f32 %v1449, %v808
    %v1454 = vadd.f32 %v1450, %v809
    %v1455 = vsel %vm358, %v1451, 0.0
    %v1456 = vsel %vm359, %v1452, 0.0
    %v1457 = vsel %vm360, %v1453, 0.0
    %v1458 = vsel %vm361, %v1454, 0.0
    %v1463 = vrot.slane %v1455, 7
    %v1464 = vrot.slane %v1456, 7
    %v1465 = vrot.slane %v1457, 7
    %v1466 = vrot.slane %v1458, 7
    %1467 = vrot.lane.b32.xlu0 %v1463, 10
    %v1468 = vpop.permute.xlu0 %1467
    %1469 = vrot.lane.b32.xlu0 %v1464, 10
    %v1470 = vpop.permute.xlu0 %1469
    %1471 = vrot.lane.b32.xlu0 %v1465, 10
    %v1472 = vpop.permute.xlu0 %1471
    %1473 = vrot.lane.b32.xlu0 %v1466, 10
    %v1474 = vpop.permute.xlu0 %1473
    %v1475 = vsel %vm147, %v1468, %v1470
    %v1476 = vsel %vm147, %v1470, %v1472
    %v1477 = vsel %vm147, %v1472, %v1474
    %1482 = vst.msk [vmem:[#allocation2] sm:$0xe] %vm833, %v1468
    %1483 = vst [vmem:[#allocation2 + $0x8] sm:$0xe] %v1475
    %1484 = vst [vmem:[#allocation2 + $0x10] sm:$0xe] %v1476
    %1485 = vst.msk [vmem:[#allocation2 + $0x18] sm:$0xe] %vm837, %v1477
    %v1486 = vrot.slane %v1455, 4
    %v1487 = vrot.slane %v1456, 4
    %v1488 = vrot.slane %v1457, 4
    %v1489 = vrot.slane %v1458, 4
    %1490 = vrot.lane.b32.xlu0 %v1486, 9
    %v1491 = vpop.permute.xlu0 %1490
    %1492 = vrot.lane.b32.xlu0 %v1487, 9
    %v1493 = vpop.permute.xlu0 %1492
    %1494 = vrot.lane.b32.xlu0 %v1488, 9
    %v1495 = vpop.permute.xlu0 %1494
    %1496 = vrot.lane.b32.xlu0 %v1489, 9
    %v1497 = vpop.permute.xlu0 %1496
    %v1498 = vsel %vm159, %v1491, %v1493
    %v1499 = vsel %vm159, %v1493, %v1495
    %v1500 = vsel %vm159, %v1495, %v1497
    %1505 = vst.msk [vmem:[#allocation2] sm:$0x70] %vm858, %v1491
    %1506 = vst [vmem:[#allocation2 + $0x8] sm:$0x70] %v1498
    %1507 = vst [vmem:[#allocation2 + $0x10] sm:$0x70] %v1499
    %1508 = vst.msk [vmem:[#allocation2 + $0x18] sm:$0x70] %vm862, %v1500
    %v1509 = vrot.slane %v1455, 1
    %v1510 = vrot.slane %v1456, 1
    %v1511 = vrot.slane %v1457, 1
    %v1512 = vrot.slane %v1458, 1
    %1513 = vrot.lane.b32.xlu0 %v1509, 8
    %v1514 = vpop.permute.xlu0 %1513
    %1515 = vrot.lane.b32.xlu0 %v1510, 8
    %v1516 = vpop.permute.xlu0 %1515
    %1517 = vrot.lane.b32.xlu0 %v1511, 8
    %v1518 = vpop.permute.xlu0 %1517
    %1519 = vrot.lane.b32.xlu0 %v1512, 8
    %v1520 = vpop.permute.xlu0 %1519
    %v1521 = vsel %vm171, %v1514, %v1516
    %v1522 = vsel %vm171, %v1516, %v1518
    %v1523 = vsel %vm171, %v1518, %v1520
    %1528 = vst.msk [vmem:[#allocation2] sm:$0x80] %vm883, %v1514
    %1529 = vst [vmem:[#allocation2 + $0x8] sm:$0x80] %v1521
    %1530 = vst [vmem:[#allocation2 + $0x10] sm:$0x80] %v1522
    %1531 = vst.msk [vmem:[#allocation2 + $0x18] sm:$0x80] %vm887, %v1523
    %1532 = vst.msk [vmem:[#allocation2 + $0x20] sm:$0x3] %vm889, %v1514
    %1533 = vst [vmem:[#allocation2 + $0x28] sm:$0x3] %v1521
    %1534 = vst [vmem:[#allocation2 + $0x30] sm:$0x3] %v1522
    %1535 = vst.msk [vmem:[#allocation2 + $0x38] sm:$0x3] %vm893, %v1523
    %v1536 = vrot.slane %v1455, 6
    %v1537 = vrot.slane %v1456, 6
    %v1538 = vrot.slane %v1457, 6
    %v1539 = vrot.slane %v1458, 6
    %1540 = vrot.lane.b32.xlu0 %v1536, 7
    %v1541 = vpop.permute.xlu0 %1540
    %1542 = vrot.lane.b32.xlu0 %v1537, 7
    %v1543 = vpop.permute.xlu0 %1542
    %1544 = vrot.lane.b32.xlu0 %v1538, 7
    %v1545 = vpop.permute.xlu0 %1544
    %1546 = vrot.lane.b32.xlu0 %v1539, 7
    %v1547 = vpop.permute.xlu0 %1546
    %v1548 = vsel %vm183, %v1541, %v1543
    %v1549 = vsel %vm183, %v1543, %v1545
    %v1550 = vsel %vm183, %v1545, %v1547
    %1555 = vst.msk [vmem:[#allocation2 + $0x20] sm:$0x1c] %vm914, %v1541
    %1556 = vst [vmem:[#allocation2 + $0x28] sm:$0x1c] %v1548
    %1557 = vst [vmem:[#allocation2 + $0x30] sm:$0x1c] %v1549
    %1558 = vst.msk [vmem:[#allocation2 + $0x38] sm:$0x1c] %vm918, %v1550
    %v1559 = vrot.slane %v1455, 3
    %v1560 = vrot.slane %v1456, 3
    %v1561 = vrot.slane %v1457, 3
    %v1562 = vrot.slane %v1458, 3
    %1563 = vrot.lane.b32.xlu0 %v1559, 6
    %v1564 = vpop.permute.xlu0 %1563
    %1565 = vrot.lane.b32.xlu0 %v1560, 6
    %v1566 = vpop.permute.xlu0 %1565
    %1567 = vrot.lane.b32.xlu0 %v1561, 6
    %v1568 = vpop.permute.xlu0 %1567
    %1569 = vrot.lane.b32.xlu0 %v1562, 6
    %v1570 = vpop.permute.xlu0 %1569
    %v1571 = vsel %vm195, %v1564, %v1566
    %v1572 = vsel %vm195, %v1566, %v1568
    %v1573 = vsel %vm195, %v1568, %v1570
    %1578 = vst.msk [vmem:[#allocation2 + $0x20] sm:$0xe0] %vm939, %v1564
    %1579 = vst [vmem:[#allocation2 + $0x28] sm:$0xe0] %v1571
    %1580 = vst [vmem:[#allocation2 + $0x30] sm:$0xe0] %v1572
    %1581 = vst.msk [vmem:[#allocation2 + $0x38] sm:$0xe0] %vm943, %v1573
    %v1582 = vld [vmem:[#allocation2] sm:$0xff]
    %v1583 = vld [vmem:[#allocation2 + $0x8] sm:$0xff]
    %v1584 = vld [vmem:[#allocation2 + $0x10] sm:$0xff]
    %v1585 = vld [vmem:[#allocation2 + $0x18] sm:$0xff]
    %v1586 = vld [vmem:[#allocation2 + $0x20] sm:$0xff]
    %v1587 = vld [vmem:[#allocation2 + $0x28] sm:$0xff]
    %v1588 = vld [vmem:[#allocation2 + $0x30] sm:$0xff]
    %v1589 = vld [vmem:[#allocation2 + $0x38] sm:$0xff]
    %v1590 = vpack.c.bf16 %v1586, %v1582
    %v1591 = vpack.c.bf16 %v1587, %v1583
    %v1592 = vpack.c.bf16 %v1588, %v1584
    %v1593 = vpack.c.bf16 %v1589, %v1585
    %v1594 = vld [vmem:[#allocation6 + $0x28] sm:$0x7]
    %1599 = vrot.lane.b32.xlu0 %v1590, 120
    %v1600 = vpop.permute.xlu0 %1599
    %1601 = vrot.lane.b32.xlu0 %v1591, 120
    %v1602 = vpop.permute.xlu0 %1601
    %1603 = vrot.lane.b32.xlu0 %v1592, 120
    %v1604 = vpop.permute.xlu0 %1603
    %1605 = vrot.lane.b32.xlu0 %v1593, 120
    %v1606 = vpop.permute.xlu0 %1605
    %v1607 = vsel %vm231, %v1600, %v1602
    %v1608 = vsel %vm231, %v1602, %v1604
    %v1609 = vsel %vm231, %v1604, %v1606
    %v1615 = vsel %vm977, %v1594, 0
    %1617 = vmatprep.subr.bf16.mxu0 0
    %1618 = vmatpush1.bf16.msra.mxu0 0
    %1619 = vmatprep.subr.bf16.mxu0 0
    %1620 = vmatpush1.bf16.msra.mxu0 0
    %1621 = vmatprep.subr.bf16.mxu0 0
    %1622 = vmatpush1.bf16.msra.mxu0 0
    %1623 = vmatprep.subr.bf16.mxu0 0
    %1624 = vmatpush1.bf16.msra.mxu0 0
    %1625 = vmatprep.subr.bf16.mxu0 0
    %1626 = vmatpush1.bf16.msra.mxu0 0
    %1627 = vmatprep.subr.bf16.mxu0 0
    %1628 = vmatpush1.bf16.msra.mxu0 0
    %1629 = vmatprep.subr.bf16.mxu0 0
    %1630 = vmatpush1.bf16.msra.mxu0 0
    %1631 = vmatprep.subr.bf16.mxu0 %v1608
    %1632 = vmatpush1.bf16.msra.mxu0 %v1607
    %1633 = vmatprep.subr.bf16.mxu0 0
    %1634 = vmatpush2.bf16.msra.mxu0 0
    %1635 = vmatprep.subr.bf16.mxu0 0
    %1636 = vmatpush2.bf16.msra.mxu0 0
    %1637 = vmatprep.subr.bf16.mxu0 0
    %1638 = vmatpush2.bf16.msra.mxu0 0
    %1639 = vmatprep.subr.bf16.mxu0 0
    %1640 = vmatpush2.bf16.msra.mxu0 0
    %1641 = vmatprep.subr.bf16.mxu0 0
    %1642 = vmatpush2.bf16.msra.mxu0 0
    %1643 = vmatprep.subr.bf16.mxu0 0
    %1644 = vmatpush2.bf16.msra.mxu0 0
    %1645 = vmatprep.subr.bf16.mxu0 0
    %1646 = vmatpush2.bf16.msra.mxu0 0
    %1647 = vmatprep.subr.bf16.mxu0 0
    %1648 = vmatpush2.bf16.msra.mxu0 0
    %1649 = vmatprep.mubr.bf16.mxu0 0
    %1650 = vmatmul.mubr.bf16.gmra.mxu0 %v1615
    %v1651 = vpop.f32.mrf.mxu0
    %v1652 = vadd.f32 0.0, %v1651
    %v1653 = vpop.f32.mrf.mxu0
    %v1654 = vadd.f32 0.0, %v1653
    %v1655 = vpop.f32.mrf.mxu0
    %v1656 = vpop.f32.mrf.mxu0
    %1657 = vdwg.mxu0
    %1658 = vmatprep.subr.bf16.mxu0 0
    %1659 = vmatpush1.bf16.msra.mxu0 0
    %1660 = vmatprep.subr.bf16.mxu0 0
    %1661 = vmatpush1.bf16.msra.mxu0 0
    %1662 = vmatprep.subr.bf16.mxu0 0
    %1663 = vmatpush1.bf16.msra.mxu0 0
    %1664 = vmatprep.subr.bf16.mxu0 0
    %1665 = vmatpush1.bf16.msra.mxu0 0
    %1666 = vmatprep.subr.bf16.mxu0 0
    %1667 = vmatpush1.bf16.msra.mxu0 0
    %1668 = vmatprep.subr.bf16.mxu0 0
    %1669 = vmatpush1.bf16.msra.mxu0 0
    %1670 = vmatprep.subr.bf16.mxu0 0
    %1671 = vmatpush1.bf16.msra.mxu0 0
    %1672 = vmatprep.subr.bf16.mxu0 %v1606
    %1673 = vmatpush1.bf16.msra.mxu0 %v1609
    %1674 = vmatprep.subr.bf16.mxu0 0
    %1675 = vmatpush2.bf16.msra.mxu0 0
    %1676 = vmatprep.subr.bf16.mxu0 0
    %1677 = vmatpush2.bf16.msra.mxu0 0
    %1678 = vmatprep.subr.bf16.mxu0 0
    %1679 = vmatpush2.bf16.msra.mxu0 0
    %1680 = vmatprep.subr.bf16.mxu0 0
    %1681 = vmatpush2.bf16.msra.mxu0 0
    %1682 = vmatprep.subr.bf16.mxu0 0
    %1683 = vmatpush2.bf16.msra.mxu0 0
    %1684 = vmatprep.subr.bf16.mxu0 0
    %1685 = vmatpush2.bf16.msra.mxu0 0
    %1686 = vmatprep.subr.bf16.mxu0 0
    %1687 = vmatpush2.bf16.msra.mxu0 0
    %1688 = vmatprep.subr.bf16.mxu0 0
    %1689 = vmatpush2.bf16.msra.mxu0 0
    %1690 = vmatprep.mubr.bf16.mxu0 0
    %1691 = vmatmul.mubr.bf16.gmra.mxu0 %v1615
    %v1692 = vpop.f32.mrf.mxu0
    %v1693 = vadd.f32 0.0, %v1692
    %v1694 = vpop.f32.mrf.mxu0
    %v1695 = vadd.f32 0.0, %v1694
    %v1696 = vpop.f32.mrf.mxu0
    %v1697 = vpop.f32.mrf.mxu0
    %1698 = vdwg.mxu0
    %v1699 = vmax.f32 %v1652, 0.0
    %v1700 = vmax.f32 %v1654, 0.0
    %v1701 = vmax.f32 %v1693, 0.0
    %v1702 = vmax.f32 %v1695, 0.0
    %v1703 = vsel %vm358, %v1699, 0.0
    %v1704 = vsel %vm359, %v1700, 0.0
    %v1705 = vsel %vm360, %v1701, 0.0
    %v1706 = vsel %vm361, %v1702, 0.0
    %v1711 = vrot.slane %v1703, 7
    %v1712 = vrot.slane %v1704, 7
    %v1713 = vrot.slane %v1705, 7
    %v1714 = vrot.slane %v1706, 7
    %1715 = vrot.lane.b32.xlu0 %v1711, 11
    %v1716 = vpop.permute.xlu0 %1715
    %1717 = vrot.lane.b32.xlu0 %v1712, 11
    %v1718 = vpop.permute.xlu0 %1717
    %1719 = vrot.lane.b32.xlu0 %v1713, 11
    %v1720 = vpop.permute.xlu0 %1719
    %1721 = vrot.lane.b32.xlu0 %v1714, 11
    %v1722 = vpop.permute.xlu0 %1721
    %v1723 = vsel %vm382, %v1716, %v1718
    %v1724 = vsel %vm382, %v1718, %v1720
    %v1725 = vsel %vm382, %v1720, %v1722
    %1730 = vst.msk [vmem:[#allocation2] sm:$0x7e] %vm390, %v1716
    %1731 = vst [vmem:[#allocation2 + $0x8] sm:$0x7e] %v1723
    %1732 = vst [vmem:[#allocation2 + $0x10] sm:$0x7e] %v1724
    %1733 = vst.msk [vmem:[#allocation2 + $0x18] sm:$0x7e] %vm394, %v1725
    %v1734 = vrot.slane %v1703, 1
    %v1735 = vrot.slane %v1704, 1
    %v1736 = vrot.slane %v1705, 1
    %v1737 = vrot.slane %v1706, 1
    %1738 = vrot.lane.b32.xlu0 %v1734, 10
    %v1739 = vpop.permute.xlu0 %1738
    %1740 = vrot.lane.b32.xlu0 %v1735, 10
    %v1741 = vpop.permute.xlu0 %1740
    %1742 = vrot.lane.b32.xlu0 %v1736, 10
    %v1743 = vpop.permute.xlu0 %1742
    %1744 = vrot.lane.b32.xlu0 %v1737, 10
    %v1745 = vpop.permute.xlu0 %1744
    %v1746 = vsel %vm147, %v1739, %v1741
    %v1747 = vsel %vm147, %v1741, %v1743
    %v1748 = vsel %vm147, %v1743, %v1745
    %1753 = vst.msk [vmem:[#allocation2] sm:$0x80] %vm415, %v1739
    %1754 = vst [vmem:[#allocation2 + $0x8] sm:$0x80] %v1746
    %1755 = vst [vmem:[#allocation2 + $0x10] sm:$0x80] %v1747
    %1756 = vst.msk [vmem:[#allocation2 + $0x18] sm:$0x80] %vm419, %v1748
    %1757 = vst.msk [vmem:[#allocation2 + $0x20] sm:$0x1f] %vm421, %v1739
    %1758 = vst [vmem:[#allocation2 + $0x28] sm:$0x1f] %v1746
    %1759 = vst [vmem:[#allocation2 + $0x30] sm:$0x1f] %v1747
    %1760 = vst.msk [vmem:[#allocation2 + $0x38] sm:$0x1f] %vm425, %v1748
    %v1761 = vrot.slane %v1703, 3
    %v1762 = vrot.slane %v1704, 3
    %v1763 = vrot.slane %v1705, 3
    %v1764 = vrot.slane %v1706, 3
    %1765 = vrot.lane.b32.xlu0 %v1761, 9
    %v1766 = vpop.permute.xlu0 %1765
    %1767 = vrot.lane.b32.xlu0 %v1762, 9
    %v1768 = vpop.permute.xlu0 %1767
    %1769 = vrot.lane.b32.xlu0 %v1763, 9
    %v1770 = vpop.permute.xlu0 %1769
    %1771 = vrot.lane.b32.xlu0 %v1764, 9
    %v1772 = vpop.permute.xlu0 %1771
    %v1773 = vsel %vm159, %v1766, %v1768
    %v1774 = vsel %vm159, %v1768, %v1770
    %v1775 = vsel %vm159, %v1770, %v1772
    %1780 = vst.msk [vmem:[#allocation2 + $0x20] sm:$0xe0] %vm446, %v1766
    %1781 = vst [vmem:[#allocation2 + $0x28] sm:$0xe0] %v1773
    %1782 = vst [vmem:[#allocation2 + $0x30] sm:$0xe0] %v1774
    %1783 = vst.msk [vmem:[#allocation2 + $0x38] sm:$0xe0] %vm450, %v1775
    %1784 = vst.msk [vmem:[#allocation2 + $0x40] sm:$0x7] %vm452, %v1766
    %1785 = vst [vmem:[#allocation2 + $0x48] sm:$0x7] %v1773
    %1786 = vst [vmem:[#allocation2 + $0x50] sm:$0x7] %v1774
    %1787 = vst.msk [vmem:[#allocation2 + $0x58] sm:$0x7] %vm456, %v1775
    %v1788 = vrot.slane %v1703, 5
    %v1789 = vrot.slane %v1704, 5
    %v1790 = vrot.slane %v1705, 5
    %v1791 = vrot.slane %v1706, 5
    %1792 = vrot.lane.b32.xlu0 %v1788, 8
    %v1793 = vpop.permute.xlu0 %1792
    %1794 = vrot.lane.b32.xlu0 %v1789, 8
    %v1795 = vpop.permute.xlu0 %1794
    %1796 = vrot.lane.b32.xlu0 %v1790, 8
    %v1797 = vpop.permute.xlu0 %1796
    %1798 = vrot.lane.b32.xlu0 %v1791, 8
    %v1799 = vpop.permute.xlu0 %1798
    %v1800 = vsel %vm171, %v1793, %v1795
    %v1801 = vsel %vm171, %v1795, %v1797
    %v1802 = vsel %vm171, %v1797, %v1799
    %1807 = vst.msk [vmem:[#allocation2 + $0x40] sm:$0xf8] %vm477, %v1793
    %1808 = vst [vmem:[#allocation2 + $0x48] sm:$0xf8] %v1800
    %1809 = vst [vmem:[#allocation2 + $0x50] sm:$0xf8] %v1801
    %1810 = vst.msk [vmem:[#allocation2 + $0x58] sm:$0xf8] %vm481, %v1802
    %1811 = vst.msk [vmem:[#allocation2 + $0x60] sm:$0x1] %vm483, %v1793
    %1812 = vst [vmem:[#allocation2 + $0x68] sm:$0x1] %v1800
    %1813 = vst [vmem:[#allocation2 + $0x70] sm:$0x1] %v1801
    %1814 = vst.msk [vmem:[#allocation2 + $0x78] sm:$0x1] %vm487, %v1802
    %1815 = vrot.lane.b32.xlu0 %v1711, 7
    %v1816 = vpop.permute.xlu0 %1815
    %1817 = vrot.lane.b32.xlu0 %v1712, 7
    %v1818 = vpop.permute.xlu0 %1817
    %1819 = vrot.lane.b32.xlu0 %v1713, 7
    %v1820 = vpop.permute.xlu0 %1819
    %1821 = vrot.lane.b32.xlu0 %v1714, 7
    %v1822 = vpop.permute.xlu0 %1821
    %v1823 = vsel %vm183, %v1816, %v1818
    %v1824 = vsel %vm183, %v1818, %v1820
    %v1825 = vsel %vm183, %v1820, %v1822
    %1830 = vst.msk [vmem:[#allocation2 + $0x60] sm:$0x7e] %vm504, %v1816
    %1831 = vst [vmem:[#allocation2 + $0x68] sm:$0x7e] %v1823
    %1832 = vst [vmem:[#allocation2 + $0x70] sm:$0x7e] %v1824
    %1833 = vst.msk [vmem:[#allocation2 + $0x78] sm:$0x7e] %vm508, %v1825
    %1834 = vrot.lane.b32.xlu0 %v1734, 6
    %v1835 = vpop.permute.xlu0 %1834
    %1836 = vrot.lane.b32.xlu0 %v1735, 6
    %v1837 = vpop.permute.xlu0 %1836
    %1838 = vrot.lane.b32.xlu0 %v1736, 6
    %v1839 = vpop.permute.xlu0 %1838
    %1840 = vrot.lane.b32.xlu0 %v1737, 6
    %v1841 = vpop.permute.xlu0 %1840
    %v1842 = vsel %vm195, %v1835, %v1837
    %v1843 = vsel %vm195, %v1837, %v1839
    %v1844 = vsel %vm195, %v1839, %v1841
    %1849 = vst.msk [vmem:[#allocation2 + $0x60] sm:$0x80] %vm525, %v1835
    %1850 = vst [vmem:[#allocation2 + $0x68] sm:$0x80] %v1842
    %1851 = vst [vmem:[#allocation2 + $0x70] sm:$0x80] %v1843
    %1852 = vst.msk [vmem:[#allocation2 + $0x78] sm:$0x80] %vm529, %v1844
    %1853 = vst.msk [vmem:[#allocation2 + $0x80] sm:$0x1f] %vm531, %v1835
    %1854 = vst [vmem:[#allocation2 + $0x88] sm:$0x1f] %v1842
    %1855 = vst [vmem:[#allocation2 + $0x90] sm:$0x1f] %v1843
    %1856 = vst.msk [vmem:[#allocation2 + $0x98] sm:$0x1f] %vm535, %v1844
    %1857 = vrot.lane.b32.xlu0 %v1761, 5
    %v1858 = vpop.permute.xlu0 %1857
    %1859 = vrot.lane.b32.xlu0 %v1762, 5
    %v1860 = vpop.permute.xlu0 %1859
    %1861 = vrot.lane.b32.xlu0 %v1763, 5
    %v1862 = vpop.permute.xlu0 %1861
    %1863 = vrot.lane.b32.xlu0 %v1764, 5
    %v1864 = vpop.permute.xlu0 %1863
    %v1865 = vsel %vm545, %v1858, %v1860
    %v1866 = vsel %vm545, %v1860, %v1862
    %v1867 = vsel %vm545, %v1862, %v1864
    %1872 = vst.msk [vmem:[#allocation2 + $0x80] sm:$0xe0] %vm553, %v1858
    %1873 = vst [vmem:[#allocation2 + $0x88] sm:$0xe0] %v1865
    %1874 = vst [vmem:[#allocation2 + $0x90] sm:$0xe0] %v1866
    %1875 = vst.msk [vmem:[#allocation2 + $0x98] sm:$0xe0] %vm557, %v1867
    %1876 = vst.msk [vmem:[#allocation2 + $0xa0] sm:$0x7] %vm559, %v1858
    %1877 = vst [vmem:[#allocation2 + $0xa8] sm:$0x7] %v1865
    %1878 = vst [vmem:[#allocation2 + $0xb0] sm:$0x7] %v1866
    %1879 = vst.msk [vmem:[#allocation2 + $0xb8] sm:$0x7] %vm563, %v1867
    %v1880 = vld [vmem:[#allocation2] sm:$0xff]
    %v1881 = vld [vmem:[#allocation2 + $0x8] sm:$0xff]
    %v1882 = vld [vmem:[#allocation2 + $0x10] sm:$0xff]
    %v1883 = vld [vmem:[#allocation2 + $0x18] sm:$0xff]
    %v1884 = vld [vmem:[#allocation2 + $0x20] sm:$0xff]
    %v1885 = vld [vmem:[#allocation2 + $0x28] sm:$0xff]
    %v1886 = vld [vmem:[#allocation2 + $0x30] sm:$0xff]
    %v1887 = vld [vmem:[#allocation2 + $0x38] sm:$0xff]
    %v1888 = vld [vmem:[#allocation2 + $0x40] sm:$0xff]
    %v1889 = vld [vmem:[#allocation2 + $0x48] sm:$0xff]
    %v1890 = vld [vmem:[#allocation2 + $0x50] sm:$0xff]
    %v1891 = vld [vmem:[#allocation2 + $0x58] sm:$0xff]
    %v1892 = vld [vmem:[#allocation2 + $0x60] sm:$0xff]
    %v1893 = vld [vmem:[#allocation2 + $0x68] sm:$0xff]
    %v1894 = vld [vmem:[#allocation2 + $0x70] sm:$0xff]
    %v1895 = vld [vmem:[#allocation2 + $0x78] sm:$0xff]
    %v1896 = vld [vmem:[#allocation2 + $0x80] sm:$0xff]
    %v1897 = vld [vmem:[#allocation2 + $0x88] sm:$0xff]
    %v1898 = vld [vmem:[#allocation2 + $0x90] sm:$0xff]
    %v1899 = vld [vmem:[#allocation2 + $0x98] sm:$0xff]
    %v1900 = vld [vmem:[#allocation2 + $0xa0] sm:$0x7]
    %v1901 = vld [vmem:[#allocation2 + $0xa8] sm:$0x7]
    %v1902 = vld [vmem:[#allocation2 + $0xb0] sm:$0x7]
    %v1903 = vld [vmem:[#allocation2 + $0xb8] sm:$0x7]
    %v1904 = vpack.c.bf16 %v1884, %v1880
    %v1905 = vpack.c.bf16 %v1885, %v1881
    %v1906 = vpack.c.bf16 %v1886, %v1882
    %v1907 = vpack.c.bf16 %v1887, %v1883
    %v1908 = vpack.c.bf16 %v1892, %v1888
    %v1909 = vpack.c.bf16 %v1893, %v1889
    %v1910 = vpack.c.bf16 %v1894, %v1890
    %v1911 = vpack.c.bf16 %v1895, %v1891
    %v1912 = vpack.c.bf16 %v1900, %v1896
    %v1913 = vpack.c.bf16 %v1901, %v1897
    %v1914 = vpack.c.bf16 %v1902, %v1898
    %v1915 = vpack.c.bf16 %v1903, %v1899
    %v1916 = vld [vmem:[#allocation6 + $0x30] sm:$0x7]
    %1929 = vrot.lane.b32.xlu0 %v1904, 120
    %v1930 = vpop.permute.xlu0 %1929
    %1931 = vrot.lane.b32.xlu0 %v1905, 120
    %v1932 = vpop.permute.xlu0 %1931
    %1933 = vrot.lane.b32.xlu0 %v1906, 120
    %v1934 = vpop.permute.xlu0 %1933
    %1935 = vrot.lane.b32.xlu0 %v1907, 120
    %v1936 = vpop.permute.xlu0 %1935
    %1937 = vrot.lane.b32.xlu0 %v1908, 120
    %v1938 = vpop.permute.xlu0 %1937
    %1939 = vrot.lane.b32.xlu0 %v1909, 120
    %v1940 = vpop.permute.xlu0 %1939
    %1941 = vrot.lane.b32.xlu0 %v1910, 120
    %v1942 = vpop.permute.xlu0 %1941
    %1943 = vrot.lane.b32.xlu0 %v1911, 120
    %v1944 = vpop.permute.xlu0 %1943
    %1945 = vrot.lane.b32.xlu0 %v1912, 120
    %v1946 = vpop.permute.xlu0 %1945
    %1947 = vrot.lane.b32.xlu0 %v1913, 120
    %v1948 = vpop.permute.xlu0 %1947
    %1949 = vrot.lane.b32.xlu0 %v1914, 120
    %v1950 = vpop.permute.xlu0 %1949
    %1951 = vrot.lane.b32.xlu0 %v1915, 120
    %v1952 = vpop.permute.xlu0 %1951
    %v1953 = vsel %vm231, %v1930, %v1932
    %v1954 = vsel %vm231, %v1932, %v1934
    %v1955 = vsel %vm231, %v1934, %v1936
    %v1956 = vsel %vm231, %v1938, %v1940
    %v1957 = vsel %vm231, %v1940, %v1942
    %v1958 = vsel %vm231, %v1942, %v1944
    %v1959 = vsel %vm231, %v1946, %v1948
    %v1960 = vsel %vm231, %v1948, %v1950
    %v1961 = vsel %vm231, %v1950, %v1952
    %v1971 = vsel %vm655, %v1916, 0
    %v1974 = vand.u32 %v1959, %v662
    %v1977 = vand.u32 %v1960, %v662
    %v1980 = vand.u32 %v1961, %v662
    %v1983 = vand.u32 %v1952, %v662
    %1985 = vmatprep.subr.bf16.mxu0 0
    %1986 = vmatpush1.bf16.msra.mxu0 0
    %1987 = vmatprep.subr.bf16.mxu0 0
    %1988 = vmatpush1.bf16.msra.mxu0 0
    %1989 = vmatprep.subr.bf16.mxu0 0
    %1990 = vmatpush1.bf16.msra.mxu0 0
    %1991 = vmatprep.subr.bf16.mxu0 0
    %1992 = vmatpush1.bf16.msra.mxu0 0
    %1993 = vmatprep.subr.bf16.mxu0 0
    %1994 = vmatpush1.bf16.msra.mxu0 0
    %1995 = vmatprep.subr.bf16.mxu0 %v1977
    %1996 = vmatpush1.bf16.msra.mxu0 %v1974
    %1997 = vmatprep.subr.bf16.mxu0 %v1957
    %1998 = vmatpush1.bf16.msra.mxu0 %v1956
    %1999 = vmatprep.subr.bf16.mxu0 %v1954
    %2000 = vmatpush1.bf16.msra.mxu0 %v1953
    %2001 = vmatprep.subr.bf16.mxu0 0
    %2002 = vmatpush2.bf16.msra.mxu0 0
    %2003 = vmatprep.subr.bf16.mxu0 0
    %2004 = vmatpush2.bf16.msra.mxu0 0
    %2005 = vmatprep.subr.bf16.mxu0 0
    %2006 = vmatpush2.bf16.msra.mxu0 0
    %2007 = vmatprep.subr.bf16.mxu0 0
    %2008 = vmatpush2.bf16.msra.mxu0 0
    %2009 = vmatprep.subr.bf16.mxu0 0
    %2010 = vmatpush2.bf16.msra.mxu0 0
    %2011 = vmatprep.subr.bf16.mxu0 0
    %2012 = vmatpush2.bf16.msra.mxu0 0
    %2013 = vmatprep.subr.bf16.mxu0 0
    %2014 = vmatpush2.bf16.msra.mxu0 0
    %2015 = vmatprep.subr.bf16.mxu0 0
    %2016 = vmatpush2.bf16.msra.mxu0 0
    %2017 = vmatprep.mubr.bf16.mxu0 0
    %2018 = vmatmul.mubr.bf16.gmra.mxu0 %v1971
    %v2019 = vpop.f32.mrf.mxu0
    %v2020 = vadd.f32 0.0, %v2019
    %v2021 = vpop.f32.mrf.mxu0
    %v2022 = vadd.f32 0.0, %v2021
    %v2023 = vpop.f32.mrf.mxu0
    %v2024 = vpop.f32.mrf.mxu0
    %2025 = vdwg.mxu0
    %2026 = vmatprep.subr.bf16.mxu0 0
    %2027 = vmatpush1.bf16.msra.mxu0 0
    %2028 = vmatprep.subr.bf16.mxu0 0
    %2029 = vmatpush1.bf16.msra.mxu0 0
    %2030 = vmatprep.subr.bf16.mxu0 0
    %2031 = vmatpush1.bf16.msra.mxu0 0
    %2032 = vmatprep.subr.bf16.mxu0 0
    %2033 = vmatpush1.bf16.msra.mxu0 0
    %2034 = vmatprep.subr.bf16.mxu0 0
    %2035 = vmatpush1.bf16.msra.mxu0 0
    %2036 = vmatprep.subr.bf16.mxu0 %v1983
    %2037 = vmatpush1.bf16.msra.mxu0 %v1980
    %2038 = vmatprep.subr.bf16.mxu0 %v1944
    %2039 = vmatpush1.bf16.msra.mxu0 %v1958
    %2040 = vmatprep.subr.bf16.mxu0 %v1936
    %2041 = vmatpush1.bf16.msra.mxu0 %v1955
    %2042 = vmatprep.subr.bf16.mxu0 0
    %2043 = vmatpush2.bf16.msra.mxu0 0
    %2044 = vmatprep.subr.bf16.mxu0 0
    %2045 = vmatpush2.bf16.msra.mxu0 0
    %2046 = vmatprep.subr.bf16.mxu0 0
    %2047 = vmatpush2.bf16.msra.mxu0 0
    %2048 = vmatprep.subr.bf16.mxu0 0
    %2049 = vmatpush2.bf16.msra.mxu0 0
    %2050 = vmatprep.subr.bf16.mxu0 0
    %2051 = vmatpush2.bf16.msra.mxu0 0
    %2052 = vmatprep.subr.bf16.mxu0 0
    %2053 = vmatpush2.bf16.msra.mxu0 0
    %2054 = vmatprep.subr.bf16.mxu0 0
    %2055 = vmatpush2.bf16.msra.mxu0 0
    %2056 = vmatprep.subr.bf16.mxu0 0
    %2057 = vmatpush2.bf16.msra.mxu0 0
    %2058 = vmatprep.mubr.bf16.mxu0 0
    %2059 = vmatmul.mubr.bf16.gmra.mxu0 %v1971
    %v2060 = vpop.f32.mrf.mxu0
    %v2061 = vadd.f32 0.0, %v2060
    %v2062 = vpop.f32.mrf.mxu0
    %v2063 = vadd.f32 0.0, %v2062
    %v2064 = vpop.f32.mrf.mxu0
    %v2065 = vpop.f32.mrf.mxu0
    %2066 = vdwg.mxu0
    %v2067 = vmax.f32 %v2020, 0.0
    %v2068 = vmax.f32 %v2022, 0.0
    %v2069 = vmax.f32 %v2061, 0.0
    %v2070 = vmax.f32 %v2063, 0.0
    %v2075 = vrot.slane %v2067, 3
    %v2076 = vrot.slane %v2068, 3
    %v2077 = vrot.slane %v2069, 3
    %v2078 = vrot.slane %v2070, 3
    %v2083 = vadd.f32 %v2067, %v2075
    %v2084 = vadd.f32 %v2068, %v2076
    %v2085 = vadd.f32 %v2069, %v2077
    %v2086 = vadd.f32 %v2070, %v2078
    %v2087 = vadd.f32 %v2083, %v1455
    %v2088 = vadd.f32 %v2084, %v1456
    %v2089 = vadd.f32 %v2085, %v1457
    %v2090 = vadd.f32 %v2086, %v1458
    %v2091 = vsel %vm358, %v2087, 0.0
    %v2092 = vsel %vm359, %v2088, 0.0
    %v2093 = vsel %vm360, %v2089, 0.0
    %v2094 = vsel %vm361, %v2090, 0.0
    %v2095 = vld [vmem:[#allocation8] sm:$0xff]
    %v2096 = vld [vmem:[#allocation8 + $0x10] sm:$0xff]
    %v2097 = vld [vmem:[#allocation8 + $0x20] sm:$0xff]
    %v2098 = vld [vmem:[#allocation8 + $0x30] sm:$0xff]
    %v2099 = vld [vmem:[#allocation8 + $0x40] sm:$0xff]
    %v2100 = vld [vmem:[#allocation8 + $0x50] sm:$0xff]
    %v2101 = vld [vmem:[#allocation8 + $0x60] sm:$0xff]
    %v2102 = vld [vmem:[#allocation8 + $0x70] sm:$0xff]
    %v2103 = vld [vmem:[#allocation8 + $0x80] sm:$0xff]
    %v2104 = vld [vmem:[#allocation8 + $0x90] sm:$0xff]
    %v2105 = vld [vmem:[#allocation8 + $0xa0] sm:$0xff]
    %v2106 = vld [vmem:[#allocation8 + $0xb0] sm:$0xff]
    %v2107 = vld [vmem:[#allocation8 + $0xc0] sm:$0xff]
    %v2108 = vld [vmem:[#allocation8 + $0xd0] sm:$0xff]
    %v2109 = vld [vmem:[#allocation8 + $0xe0] sm:$0xff]
    %v2110 = vld [vmem:[#allocation8 + $0xf0] sm:$0xff]
    %v2111 = vld [vmem:[#allocation8 + $0x100] sm:$0xff]
    %v2112 = vld [vmem:[#allocation8 + $0x110] sm:$0xff]
    %v2113 = vld [vmem:[#allocation8 + $0x120] sm:$0xff]
    %v2114 = vld [vmem:[#allocation8 + $0x130] sm:$0xff]
    %v2115 = vld [vmem:[#allocation8 + $0x140] sm:$0xff]
    %v2116 = vld [vmem:[#allocation8 + $0x150] sm:$0xff]
    %v2117 = vld [vmem:[#allocation8 + $0x160] sm:$0xff]
    %v2118 = vld [vmem:[#allocation8 + $0x170] sm:$0xff]
    %v2119 = vld [vmem:[#allocation8 + $0x180] sm:$0xff]
    %v2120 = vld [vmem:[#allocation8 + $0x190] sm:$0xff]
    %v2121 = vld [vmem:[#allocation8 + $0x1a0] sm:$0xff]
    %v2122 = vld [vmem:[#allocation8 + $0x1b0] sm:$0xff]
    %v2123 = vld [vmem:[#allocation8 + $0x1c0] sm:$0xff]
    %v2124 = vld [vmem:[#allocation8 + $0x1d0] sm:$0xff]
    %v2125 = vld [vmem:[#allocation8 + $0x1e0] sm:$0xff]
    %v2126 = vld [vmem:[#allocation8 + $0x1f0] sm:$0xff]
    %v2127 = vld [vmem:[#allocation8 + $0x200] sm:$0xff]
    %v2128 = vld [vmem:[#allocation8 + $0x210] sm:$0xff]
    %v2129 = vld [vmem:[#allocation8 + $0x220] sm:$0xff]
    %v2130 = vld [vmem:[#allocation8 + $0x230] sm:$0xff]
    %v2131 = vld [vmem:[#allocation8 + $0x240] sm:$0xff]
    %v2132 = vld [vmem:[#allocation8 + $0x250] sm:$0xff]
    %v2133 = vld [vmem:[#allocation8 + $0x260] sm:$0xff]
    %v2134 = vld [vmem:[#allocation8 + $0x270] sm:$0xff]
    %v2135 = vld [vmem:[#allocation8 + $0x280] sm:$0xff]
    %v2136 = vld [vmem:[#allocation8 + $0x290] sm:$0xff]
    %v2137 = vld [vmem:[#allocation8 + $0x2a0] sm:$0xff]
    %v2138 = vld [vmem:[#allocation8 + $0x2b0] sm:$0xff]
    %v2139 = vld [vmem:[#allocation8 + $0x2c0] sm:$0xff]
    %v2140 = vld [vmem:[#allocation8 + $0x2d0] sm:$0xff]
    %v2141 = vld [vmem:[#allocation8 + $0x2e0] sm:$0xff]
    %v2142 = vld [vmem:[#allocation8 + $0x2f0] sm:$0xff]
    %v2143 = vld [vmem:[#allocation8 + $0x300] sm:$0xff]
    %v2144 = vld [vmem:[#allocation8 + $0x310] sm:$0xff]
    %v2145 = vld [vmem:[#allocation8 + $0x320] sm:$0xff]
    %v2146 = vld [vmem:[#allocation8 + $0x330] sm:$0xff]
    %v2147 = vld [vmem:[#allocation8 + $0x340] sm:$0xff]
    %v2148 = vld [vmem:[#allocation8 + $0x350] sm:$0xff]
    %v2149 = vld [vmem:[#allocation8 + $0x360] sm:$0xff]
    %v2150 = vld [vmem:[#allocation8 + $0x370] sm:$0xff]
    %v2151 = vld [vmem:[#allocation8 + $0x380] sm:$0xff]
    %v2152 = vpack.c.bf16 %v2091, %v2091
    %v2153 = vpack.c.bf16 %v2092, %v2092
    %v2154 = vpack.c.bf16 %v2093, %v2093
    %v2155 = vpack.c.bf16 %v2094, %v2094
    %v2213 = vunpack.c.l.b16 %v2095
    %v2214 = vunpack.c.h.b16 %v2095
    %v2215 = vunpack.c.l.b16 %v2096
    %v2216 = vunpack.c.h.b16 %v2096
    %v2217 = vunpack.c.l.b16 %v2097
    %v2218 = vunpack.c.h.b16 %v2097
    %v2219 = vunpack.c.l.b16 %v2098
    %v2220 = vunpack.c.h.b16 %v2098
    %v2221 = vunpack.c.l.b16 %v2099
    %v2222 = vunpack.c.h.b16 %v2099
    %v2223 = vunpack.c.l.b16 %v2100
    %v2224 = vunpack.c.h.b16 %v2100
    %v2225 = vunpack.c.l.b16 %v2101
    %v2226 = vunpack.c.h.b16 %v2101
    %v2227 = vunpack.c.l.b16 %v2102
    %v2228 = vunpack.c.h.b16 %v2102
    %v2229 = vunpack.c.l.b16 %v2103
    %v2230 = vunpack.c.h.b16 %v2103
    %v2231 = vunpack.c.l.b16 %v2104
    %v2232 = vunpack.c.h.b16 %v2104
    %v2233 = vunpack.c.l.b16 %v2105
    %v2234 = vunpack.c.h.b16 %v2105
    %v2235 = vunpack.c.l.b16 %v2106
    %v2236 = vunpack.c.h.b16 %v2106
    %v2237 = vunpack.c.l.b16 %v2107
    %v2238 = vunpack.c.h.b16 %v2107
    %v2239 = vunpack.c.l.b16 %v2108
    %v2240 = vunpack.c.h.b16 %v2108
    %v2241 = vunpack.c.l.b16 %v2109
    %v2242 = vunpack.c.h.b16 %v2109
    %v2243 = vunpack.c.l.b16 %v2110
    %v2244 = vunpack.c.h.b16 %v2110
    %v2245 = vunpack.c.l.b16 %v2111
    %v2246 = vunpack.c.h.b16 %v2111
    %v2247 = vunpack.c.l.b16 %v2112
    %v2248 = vunpack.c.h.b16 %v2112
    %v2249 = vunpack.c.l.b16 %v2113
    %v2250 = vunpack.c.h.b16 %v2113
    %v2251 = vunpack.c.l.b16 %v2114
    %v2252 = vunpack.c.h.b16 %v2114
    %v2253 = vunpack.c.l.b16 %v2115
    %v2254 = vunpack.c.h.b16 %v2115
    %v2255 = vunpack.c.l.b16 %v2116
    %v2256 = vunpack.c.h.b16 %v2116
    %v2257 = vunpack.c.l.b16 %v2117
    %v2258 = vunpack.c.h.b16 %v2117
    %v2259 = vunpack.c.l.b16 %v2118
    %v2260 = vunpack.c.h.b16 %v2118
    %v2261 = vunpack.c.l.b16 %v2119
    %v2262 = vunpack.c.h.b16 %v2119
    %v2263 = vunpack.c.l.b16 %v2120
    %v2264 = vunpack.c.h.b16 %v2120
    %v2265 = vunpack.c.l.b16 %v2121
    %v2266 = vunpack.c.h.b16 %v2121
    %v2267 = vunpack.c.l.b16 %v2122
    %v2268 = vunpack.c.h.b16 %v2122
    %v2269 = vunpack.c.l.b16 %v2123
    %v2270 = vunpack.c.h.b16 %v2123
    %v2271 = vunpack.c.l.b16 %v2124
    %v2272 = vunpack.c.h.b16 %v2124
    %v2273 = vunpack.c.l.b16 %v2125
    %v2274 = vunpack.c.h.b16 %v2125
    %v2275 = vunpack.c.l.b16 %v2126
    %v2276 = vunpack.c.h.b16 %v2126
    %v2277 = vunpack.c.l.b16 %v2127
    %v2278 = vunpack.c.h.b16 %v2127
    %v2279 = vunpack.c.l.b16 %v2128
    %v2280 = vunpack.c.h.b16 %v2128
    %v2281 = vunpack.c.l.b16 %v2129
    %v2282 = vunpack.c.h.b16 %v2129
    %v2283 = vunpack.c.l.b16 %v2130
    %v2284 = vunpack.c.h.b16 %v2130
    %v2285 = vunpack.c.l.b16 %v2131
    %v2286 = vunpack.c.h.b16 %v2131
    %v2287 = vunpack.c.l.b16 %v2132
    %v2288 = vunpack.c.h.b16 %v2132
    %v2289 = vunpack.c.l.b16 %v2133
    %v2290 = vunpack.c.h.b16 %v2133
    %v2291 = vunpack.c.l.b16 %v2134
    %v2292 = vunpack.c.h.b16 %v2134
    %v2293 = vunpack.c.l.b16 %v2135
    %v2294 = vunpack.c.h.b16 %v2135
    %v2295 = vunpack.c.l.b16 %v2136
    %v2296 = vunpack.c.h.b16 %v2136
    %v2297 = vunpack.c.l.b16 %v2137
    %v2298 = vunpack.c.h.b16 %v2137
    %v2299 = vunpack.c.l.b16 %v2138
    %v2300 = vunpack.c.h.b16 %v2138
    %v2301 = vunpack.c.l.b16 %v2139
    %v2302 = vunpack.c.h.b16 %v2139
    %v2303 = vunpack.c.l.b16 %v2140
    %v2304 = vunpack.c.h.b16 %v2140
    %v2305 = vunpack.c.l.b16 %v2141
    %v2306 = vunpack.c.h.b16 %v2141
    %v2307 = vunpack.c.l.b16 %v2142
    %v2308 = vunpack.c.h.b16 %v2142
    %v2309 = vunpack.c.l.b16 %v2143
    %v2310 = vunpack.c.h.b16 %v2143
    %v2311 = vunpack.c.l.b16 %v2144
    %v2312 = vunpack.c.h.b16 %v2144
    %v2313 = vunpack.c.l.b16 %v2145
    %v2314 = vunpack.c.h.b16 %v2145
    %v2315 = vunpack.c.l.b16 %v2146
    %v2316 = vunpack.c.h.b16 %v2146
    %v2317 = vunpack.c.l.b16 %v2147
    %v2318 = vunpack.c.h.b16 %v2147
    %v2319 = vunpack.c.l.b16 %v2148
    %v2320 = vunpack.c.h.b16 %v2148
    %v2321 = vunpack.c.l.b16 %v2149
    %v2322 = vunpack.c.h.b16 %v2149
    %v2323 = vunpack.c.l.b16 %v2150
    %v2324 = vunpack.c.h.b16 %v2150
    %v2325 = vunpack.c.l.b16 %v2151
    %v2326 = vunpack.c.h.b16 %v2151
    %v2327 = vpack.c.b16 %v2215, %v2213
    %v2328 = vpack.c.b16 %v2216, %v2214
    %v2329 = vpack.c.b16 %v2219, %v2217
    %v2330 = vpack.c.b16 %v2220, %v2218
    %v2331 = vpack.c.b16 %v2223, %v2221
    %v2332 = vpack.c.b16 %v2224, %v2222
    %v2333 = vpack.c.b16 %v2227, %v2225
    %v2334 = vpack.c.b16 %v2228, %v2226
    %v2335 = vpack.c.b16 %v2231, %v2229
    %v2336 = vpack.c.b16 %v2232, %v2230
    %v2337 = vpack.c.b16 %v2235, %v2233
    %v2338 = vpack.c.b16 %v2236, %v2234
    %v2339 = vpack.c.b16 %v2239, %v2237
    %v2340 = vpack.c.b16 %v2240, %v2238
    %v2341 = vpack.c.b16 %v2243, %v2241
    %v2342 = vpack.c.b16 %v2244, %v2242
    %v2343 = vpack.c.b16 %v2247, %v2245
    %v2344 = vpack.c.b16 %v2248, %v2246
    %v2345 = vpack.c.b16 %v2251, %v2249
    %v2346 = vpack.c.b16 %v2252, %v2250
    %v2347 = vpack.c.b16 %v2255, %v2253
    %v2348 = vpack.c.b16 %v2256, %v2254
    %v2349 = vpack.c.b16 %v2259, %v2257
    %v2350 = vpack.c.b16 %v2260, %v2258
    %v2351 = vpack.c.b16 %v2263, %v2261
    %v2352 = vpack.c.b16 %v2264, %v2262
    %v2353 = vpack.c.b16 %v2267, %v2265
    %v2354 = vpack.c.b16 %v2268, %v2266
    %v2355 = vpack.c.b16 %v2271, %v2269
    %v2356 = vpack.c.b16 %v2272, %v2270
    %v2357 = vpack.c.b16 %v2275, %v2273
    %v2358 = vpack.c.b16 %v2276, %v2274
    %v2359 = vpack.c.b16 %v2279, %v2277
    %v2360 = vpack.c.b16 %v2280, %v2278
    %v2361 = vpack.c.b16 %v2283, %v2281
    %v2362 = vpack.c.b16 %v2284, %v2282
    %v2363 = vpack.c.b16 %v2287, %v2285
    %v2364 = vpack.c.b16 %v2288, %v2286
    %v2365 = vpack.c.b16 %v2291, %v2289
    %v2366 = vpack.c.b16 %v2292, %v2290
    %v2367 = vpack.c.b16 %v2295, %v2293
    %v2368 = vpack.c.b16 %v2296, %v2294
    %v2369 = vpack.c.b16 %v2299, %v2297
    %v2370 = vpack.c.b16 %v2300, %v2298
    %v2371 = vpack.c.b16 %v2303, %v2301
    %v2372 = vpack.c.b16 %v2304, %v2302
    %v2373 = vpack.c.b16 %v2307, %v2305
    %v2374 = vpack.c.b16 %v2308, %v2306
    %v2375 = vpack.c.b16 %v2311, %v2309
    %v2376 = vpack.c.b16 %v2312, %v2310
    %v2377 = vpack.c.b16 %v2315, %v2313
    %v2378 = vpack.c.b16 %v2316, %v2314
    %v2379 = vpack.c.b16 %v2319, %v2317
    %v2380 = vpack.c.b16 %v2320, %v2318
    %v2381 = vpack.c.b16 %v2323, %v2321
    %v2382 = vpack.c.b16 %v2324, %v2322
    %v2383 = vpack.c.b16 %v2325, %v2325
    %v2384 = vpack.c.b16 %v2326, %v2326
    %vm2441 = vcmask 588800
    %v2443 = vsel %vm2441, %v2155, 0
    %vm2445 = vcmask 1043456
    %v2447 = vsel %vm2445, %v2383, 0
    %v2450 = vsel %vm2445, %v2384, 0
    %2452 = vmatprep.subr.bf16.mxu0 %v2342
    %2453 = vmatpush1.bf16.msra.mxu0 %v2341
    %2454 = vmatprep.subr.bf16.mxu0 %v2340
    %2455 = vmatpush1.bf16.msra.mxu0 %v2339
    %2456 = vmatprep.subr.bf16.mxu0 %v2338
    %2457 = vmatpush1.bf16.msra.mxu0 %v2337
    %2458 = vmatprep.subr.bf16.mxu0 %v2336
    %2459 = vmatpush1.bf16.msra.mxu0 %v2335
    %2460 = vmatprep.subr.bf16.mxu0 %v2334
    %2461 = vmatpush1.bf16.msra.mxu0 %v2333
    %2462 = vmatprep.subr.bf16.mxu0 %v2332
    %2463 = vmatpush1.bf16.msra.mxu0 %v2331
    %2464 = vmatprep.subr.bf16.mxu0 %v2330
    %2465 = vmatpush1.bf16.msra.mxu0 %v2329
    %2466 = vmatprep.subr.bf16.mxu0 %v2328
    %2467 = vmatpush1.bf16.msra.mxu0 %v2327
    %2468 = vmatprep.subr.bf16.mxu0 %v2358
    %2469 = vmatpush2.bf16.msra.mxu0 %v2357
    %2470 = vmatprep.subr.bf16.mxu0 %v2356
    %2471 = vmatpush2.bf16.msra.mxu0 %v2355
    %2472 = vmatprep.subr.bf16.mxu0 %v2354
    %2473 = vmatpush2.bf16.msra.mxu0 %v2353
    %2474 = vmatprep.subr.bf16.mxu0 %v2352
    %2475 = vmatpush2.bf16.msra.mxu0 %v2351
    %2476 = vmatprep.subr.bf16.mxu0 %v2350
    %2477 = vmatpush2.bf16.msra.mxu0 %v2349
    %2478 = vmatprep.subr.bf16.mxu0 %v2348
    %2479 = vmatpush2.bf16.msra.mxu0 %v2347
    %2480 = vmatprep.subr.bf16.mxu0 %v2346
    %2481 = vmatpush2.bf16.msra.mxu0 %v2345
    %2482 = vmatprep.subr.bf16.mxu0 %v2344
    %2483 = vmatpush2.bf16.msra.mxu0 %v2343
    %2484 = vmatprep.mubr.bf16.mxu0 %v2153
    %2485 = vmatmul.mubr.bf16.gmra.mxu0 %v2152
    %v2486 = vpop.f32.mrf.mxu0
    %v2487 = vadd.f32 0.0, %v2486
    %v2488 = vpop.f32.mrf.mxu0
    %v2489 = vadd.f32 0.0, %v2488
    %v2490 = vpop.f32.mrf.mxu0
    %v2491 = vpop.f32.mrf.mxu0
    %2492 = vdwg.mxu0
    %2493 = vmatprep.subr.bf16.mxu0 %v2374
    %2494 = vmatpush1.bf16.msra.mxu0 %v2373
    %2495 = vmatprep.subr.bf16.mxu0 %v2372
    %2496 = vmatpush1.bf16.msra.mxu0 %v2371
    %2497 = vmatprep.subr.bf16.mxu0 %v2370
    %2498 = vmatpush1.bf16.msra.mxu0 %v2369
    %2499 = vmatprep.subr.bf16.mxu0 %v2368
    %2500 = vmatpush1.bf16.msra.mxu0 %v2367
    %2501 = vmatprep.subr.bf16.mxu0 %v2366
    %2502 = vmatpush1.bf16.msra.mxu0 %v2365
    %2503 = vmatprep.subr.bf16.mxu0 %v2364
    %2504 = vmatpush1.bf16.msra.mxu0 %v2363
    %2505 = vmatprep.subr.bf16.mxu0 %v2362
    %2506 = vmatpush1.bf16.msra.mxu0 %v2361
    %2507 = vmatprep.subr.bf16.mxu0 %v2360
    %2508 = vmatpush1.bf16.msra.mxu0 %v2359
    %2509 = vmatprep.subr.bf16.mxu0 0
    %2510 = vmatpush2.bf16.msra.mxu0 0
    %2511 = vmatprep.subr.bf16.mxu0 0
    %2512 = vmatpush2.bf16.msra.mxu0 0
    %2513 = vmatprep.subr.bf16.mxu0 0
    %2514 = vmatpush2.bf16.msra.mxu0 0
    %2515 = vmatprep.subr.bf16.mxu0 %v2450
    %2516 = vmatpush2.bf16.msra.mxu0 %v2447
    %2517 = vmatprep.subr.bf16.mxu0 %v2382
    %2518 = vmatpush2.bf16.msra.mxu0 %v2381
    %2519 = vmatprep.subr.bf16.mxu0 %v2380
    %2520 = vmatpush2.bf16.msra.mxu0 %v2379
    %2521 = vmatprep.subr.bf16.mxu0 %v2378
    %2522 = vmatpush2.bf16.msra.mxu0 %v2377
    %2523 = vmatprep.subr.bf16.mxu0 %v2376
    %2524 = vmatpush2.bf16.msra.mxu0 %v2375
    %2525 = vmatprep.mubr.bf16.mxu0 %v2443
    %2526 = vmatmul.mubr.bf16.gmra.mxu0 %v2154
    %v2527 = vpop.f32.mrf.mxu0
    %v2528 = vadd.f32 %v2487, %v2527
    %v2529 = vpop.f32.mrf.mxu0
    %v2530 = vadd.f32 %v2489, %v2529
    %v2531 = vpop.f32.mrf.mxu0
    %v2532 = vpop.f32.mrf.mxu0
    %2533 = vdwg.mxu0
    %v2534 = vmul.f32 %v2528, 0.33333334
    %v2535 = vmul.f32 %v2530, 0.33333334
    %s2536 = scalar_lea.vmem [#allocation9], 1
    %v2537 = vld [vmem:[%s2536] ss:$4 sm:$0x3]
    %vm2538 = vcmp.gt.f32.partialorder %v2537, 0.5
    %v2541 = vrot.slane %v2534, 7
    %v2542 = vrot.slane %v2535, 7
    %2543 = vrot.lane.b32.xlu0 %v2541, 10
    %v2544 = vpop.permute.xlu0 %2543
    %2545 = vrot.lane.b32.xlu0 %v2542, 10
    %v2546 = vpop.permute.xlu0 %2545
    %v2547 = vsel %vm147, %v2544, %v2546
    %2550 = vst.msk [vmem:[#allocation2] sm:$0xe] %vm833, %v2544
    %vm2551 = vcmask 404481
    %2552 = vst.msk [vmem:[#allocation2 + $0x8] sm:$0xe] %vm2551, %v2547
    %v2553 = vrot.slane %v2534, 4
    %v2554 = vrot.slane %v2535, 4
    %2555 = vrot.lane.b32.xlu0 %v2553, 9
    %v2556 = vpop.permute.xlu0 %2555
    %2557 = vrot.lane.b32.xlu0 %v2554, 9
    %v2558 = vpop.permute.xlu0 %2557
    %v2559 = vsel %vm159, %v2556, %v2558
    %2562 = vst.msk [vmem:[#allocation2] sm:$0x70] %vm858, %v2556
    %vm2563 = vcmask 399364
    %2564 = vst.msk [vmem:[#allocation2 + $0x8] sm:$0x70] %vm2563, %v2559
    %v2565 = vrot.slane %v2534, 1
    %v2566 = vrot.slane %v2535, 1
    %2567 = vrot.lane.b32.xlu0 %v2565, 8
    %v2568 = vpop.permute.xlu0 %2567
    %2569 = vrot.lane.b32.xlu0 %v2566, 8
    %v2570 = vpop.permute.xlu0 %2569
    %v2571 = vsel %vm171, %v2568, %v2570
    %2574 = vst.msk [vmem:[#allocation2] sm:$0x80] %vm883, %v2568
    %vm2575 = vcmask 392199
    %2576 = vst.msk [vmem:[#allocation2 + $0x8] sm:$0x80] %vm2575, %v2571
    %2577 = vst.msk [vmem:[#allocation2 + $0x20] sm:$0x3] %vm889, %v2568
    %vm2578 = vcmask 386048
    %2579 = vst.msk [vmem:[#allocation2 + $0x28] sm:$0x3] %vm2578, %v2571
    %v2580 = vrot.slane %v2534, 6
    %v2581 = vrot.slane %v2535, 6
    %2582 = vrot.lane.b32.xlu0 %v2580, 7
    %v2583 = vpop.permute.xlu0 %2582
    %2584 = vrot.lane.b32.xlu0 %v2581, 7
    %v2585 = vpop.permute.xlu0 %2584
    %v2586 = vsel %vm183, %v2583, %v2585
    %2589 = vst.msk [vmem:[#allocation2 + $0x20] sm:$0x1c] %vm914, %v2583
    %vm2590 = vcmask 380930
    %2591 = vst.msk [vmem:[#allocation2 + $0x28] sm:$0x1c] %vm2590, %v2586
    %v2592 = vrot.slane %v2534, 3
    %v2593 = vrot.slane %v2535, 3
    %2594 = vrot.lane.b32.xlu0 %v2592, 6
    %v2595 = vpop.permute.xlu0 %2594
    %2596 = vrot.lane.b32.xlu0 %v2593, 6
    %v2597 = vpop.permute.xlu0 %2596
    %v2598 = vsel %vm195, %v2595, %v2597
    %2601 = vst.msk [vmem:[#allocation2 + $0x20] sm:$0xe0] %vm939, %v2595
    %vm2602 = vcmask 375813
    %2603 = vst.msk [vmem:[#allocation2 + $0x28] sm:$0xe0] %vm2602, %v2598
    %v2604 = vld [vmem:[#allocation2] sm:$0xff]
    %v2605 = vld [vmem:[#allocation2 + $0x8] sm:$0xff]
    %v2606 = vld [vmem:[#allocation2 + $0x20] sm:$0xff]
    %v2607 = vld [vmem:[#allocation2 + $0x28] sm:$0xff]
    %v2608 = vpack.c.bf16 %v2606, %v2604
    %v2609 = vpack.c.bf16 %v2607, %v2605
    %v2610 = vld [vmem:[#allocation6 + $0x38] sm:$0xf]
    %v2611 = vld [vmem:[#allocation6 + $0x40] sm:$0xf]
    %v2612 = vld [vmem:[#allocation6 + $0x48] sm:$0x1]
    %v2616 = vunpack.c.l.b16 %v2610
    %v2617 = vunpack.c.l.b16 %v2611
    %v2618 = vunpack.c.l.b16 %v2612
    %v2619 = vpack.c.b16 %v2617, %v2616
    %v2620 = vpack.c.b16 %v2618, %v2618
    %2623 = vrot.lane.b32.xlu0 %v2608, 120
    %v2624 = vpop.permute.xlu0 %2623
    %2625 = vrot.lane.b32.xlu0 %v2609, 120
    %v2626 = vpop.permute.xlu0 %2625
    %v2627 = vsel %vm231, %v2624, %v2626
    %v2631 = vsel %vm977, %v2619, 0
    %v2634 = vsel %vm977, %v2620, 0
    %2636 = vmatprep.subr.bf16.mxu0 0
    %2637 = vmatpush1.bf16.msra.mxu0 0
    %2638 = vmatprep.subr.bf16.mxu0 0
    %2639 = vmatpush1.bf16.msra.mxu0 0
    %2640 = vmatprep.subr.bf16.mxu0 0
    %2641 = vmatpush1.bf16.msra.mxu0 0
    %2642 = vmatprep.subr.bf16.mxu0 0
    %2643 = vmatpush1.bf16.msra.mxu0 0
    %2644 = vmatprep.subr.bf16.mxu0 0
    %2645 = vmatpush1.bf16.msra.mxu0 0
    %2646 = vmatprep.subr.bf16.mxu0 0
    %2647 = vmatpush1.bf16.msra.mxu0 0
    %2648 = vmatprep.subr.bf16.mxu0 0
    %2649 = vmatpush1.bf16.msra.mxu0 0
    %2650 = vmatprep.subr.bf16.mxu0 %v2626
    %2651 = vmatpush1.bf16.msra.mxu0 %v2627
    %2652 = vmatprep.subr.bf16.mxu0 0
    %2653 = vmatpush2.bf16.msra.mxu0 0
    %2654 = vmatprep.subr.bf16.mxu0 0
    %2655 = vmatpush2.bf16.msra.mxu0 0
    %2656 = vmatprep.subr.bf16.mxu0 0
    %2657 = vmatpush2.bf16.msra.mxu0 0
    %2658 = vmatprep.subr.bf16.mxu0 0
    %2659 = vmatpush2.bf16.msra.mxu0 0
    %2660 = vmatprep.subr.bf16.mxu0 0
    %2661 = vmatpush2.bf16.msra.mxu0 0
    %2662 = vmatprep.subr.bf16.mxu0 0
    %2663 = vmatpush2.bf16.msra.mxu0 0
    %2664 = vmatprep.subr.bf16.mxu0 0
    %2665 = vmatpush2.bf16.msra.mxu0 0
    %2666 = vmatprep.subr.bf16.mxu0 0
    %2667 = vmatpush2.bf16.msra.mxu0 0
    %2668 = vmatprep.mubr.bf16.mxu0 0
    %2669 = vmatmul.mubr.bf16.gmra.mxu0 %v2631
    %v2670 = vpop.f32.mrf.mxu0
    %v2671 = vadd.f32 0.0, %v2670
    %v2672 = vpop.f32.mrf.mxu0
    %v2673 = vadd.f32 0.0, %v2672
    %v2674 = vpop.f32.mrf.mxu0
    %v2675 = vadd.f32 0.0, %v2674
    %v2676 = vpop.f32.mrf.mxu0
    %v2677 = vadd.f32 0.0, %v2676
    %2678 = vmatprep.mubr.bf16.mxu0 0
    %2679 = vmatmul.mubr.bf16.gmra.mxu0 %v2634
    %v2680 = vpop.f32.mrf.mxu0
    %v2681 = vadd.f32 0.0, %v2680
    %v2682 = vpop.f32.mrf.mxu0
    %v2683 = vadd.f32 0.0, %v2682
    %v2684 = vpop.f32.mrf.mxu0
    %v2685 = vpop.f32.mrf.mxu0
    %2686 = vdwg.mxu0
    %v2687 = vmax.f32 %v2671, 0.0
    %v2688 = vmax.f32 %v2673, 0.0
    %v2689 = vmax.f32 %v2675, 0.0
    %v2690 = vmax.f32 %v2677, 0.0
    %v2691 = vsel %vm2538, 1, 0
    %v2692 = vlaneseq
    %v2693 = vshrl.u32 %v2692, 7
    %v2694 = vsub.s32 0, %v2693
    %v2695 = vrot.slane %v2691, %v2694
    %v2696 = vlaneseq
    %v2697 = vshrl.u32 %v2696, 7
    %v2698 = vsub.s32 1, %v2697
    %v2699 = vrot.slane %v2691, %v2698
    %vm2700 = vcmp.eq.s32.totalorder %v2695, 1
    %vm2701 = vcmp.eq.s32.totalorder %v2699, 1
    %v2702 = vsel %vm2700, %v2687, 0.0
    %v2703 = vsel %vm2701, %v2688, 0.0
    %v2704 = vsel %vm2700, %v2689, 0.0
    %v2705 = vsel %vm2701, %v2690, 0.0
    %vm2710 = vcmask 1040384
    %v2711 = vrot.slane %v2702, 7
    %v2712 = vrot.slane %v2703, 7
    %v2713 = vrot.slane %v2704, 7
    %v2714 = vsel %vm2710, %v2711, %v2713
    %v2715 = vrot.slane %v2705, 7
    %v2716 = vsel %vm2710, %v2712, %v2715
    %2717 = vrot.lane.b32.xlu0 %v2711, 11
    %v2718 = vpop.permute.xlu0 %2717
    %2719 = vrot.lane.b32.xlu0 %v2712, 11
    %v2720 = vpop.permute.xlu0 %2719
    %2721 = vrot.lane.b32.xlu0 %v2714, 11
    %v2722 = vpop.permute.xlu0 %2721
    %2723 = vrot.lane.b32.xlu0 %v2716, 11
    %v2724 = vpop.permute.xlu0 %2723
    %v2725 = vsel %vm382, %v2718, %v2720
    %v2726 = vsel %vm382, %v2722, %v2724
    %vm2731 = vcmask 1047641
    %2732 = vst.msk [vmem:[#allocation2] sm:$0xfe] %vm2731, %v2718
    %vm2733 = vcmask 416769
    %2734 = vst.msk [vmem:[#allocation2 + $0x8] sm:$0xfe] %vm2733, %v2725
    %vm2735 = vcmask 1044568
    %2736 = vst.msk [vmem:[#allocation2 + $0x20] sm:$0x1f] %vm2735, %v2722
    %vm2737 = vcmask 413696
    %2738 = vst.msk [vmem:[#allocation2 + $0x28] sm:$0x1f] %vm2737, %v2726
    %v2739 = vrot.slane %v2702, 3
    %v2740 = vrot.slane %v2703, 3
    %v2741 = vrot.slane %v2704, 3
    %v2742 = vsel %vm659, %v2739, %v2741
    %v2743 = vrot.slane %v2705, 3
    %v2744 = vsel %vm659, %v2740, %v2743
    %2745 = vrot.lane.b32.xlu0 %v2739, 10
    %v2746 = vpop.permute.xlu0 %2745
    %2747 = vrot.lane.b32.xlu0 %v2740, 10
    %v2748 = vpop.permute.xlu0 %2747
    %2749 = vrot.lane.b32.xlu0 %v2742, 10
    %v2750 = vpop.permute.xlu0 %2749
    %2751 = vrot.lane.b32.xlu0 %v2744, 10
    %v2752 = vpop.permute.xlu0 %2751
    %2753 = vrot.lane.b32.xlu0 %v2741, 10
    %v2754 = vpop.permute.xlu0 %2753
    %2755 = vrot.lane.b32.xlu0 %v2743, 10
    %v2756 = vpop.permute.xlu0 %2755
    %v2757 = vsel %vm147, %v2746, %v2748
    %v2758 = vsel %vm147, %v2750, %v2752
    %v2759 = vsel %vm147, %v2754, %v2756
    %vm2766 = vcmask 1047637
    %2767 = vst.msk [vmem:[#allocation2 + $0x20] sm:$0xe0] %vm2766, %v2746
    %vm2768 = vcmask 408581
    %2769 = vst.msk [vmem:[#allocation2 + $0x28] sm:$0xe0] %vm2768, %v2757
    %vm2770 = vcmask 1047632
    %2771 = vst.msk [vmem:[#allocation2 + $0x40] sm:$0xff] %vm2770, %v2750
    %vm2772 = vcmask 408576
    %2773 = vst.msk [vmem:[#allocation2 + $0x48] sm:$0xff] %vm2772, %v2758
    %vm2774 = vcmask 1040464
    %2775 = vst.msk [vmem:[#allocation2 + $0x60] sm:$0x1] %vm2774, %v2754
    %vm2776 = vcmask 401408
    %2777 = vst.msk [vmem:[#allocation2 + $0x68] sm:$0x1] %vm2776, %v2759
    %2778 = vrot.lane.b32.xlu0 %v2711, 9
    %v2779 = vpop.permute.xlu0 %2778
    %2780 = vrot.lane.b32.xlu0 %v2712, 9
    %v2781 = vpop.permute.xlu0 %2780
    %2782 = vrot.lane.b32.xlu0 %v2714, 9
    %v2783 = vpop.permute.xlu0 %2782
    %2784 = vrot.lane.b32.xlu0 %v2716, 9
    %v2785 = vpop.permute.xlu0 %2784
    %v2786 = vsel %vm159, %v2779, %v2781
    %v2787 = vsel %vm159, %v2783, %v2785
    %vm2792 = vcmask 1047625
    %2793 = vst.msk [vmem:[#allocation2 + $0x60] sm:$0xfe] %vm2792, %v2779
    %vm2794 = vcmask 400385
    %2795 = vst.msk [vmem:[#allocation2 + $0x68] sm:$0xfe] %vm2794, %v2786
    %vm2796 = vcmask 1044552
    %2797 = vst.msk [vmem:[#allocation2 + $0x80] sm:$0x1f] %vm2796, %v2783
    %vm2798 = vcmask 397312
    %2799 = vst.msk [vmem:[#allocation2 + $0x88] sm:$0x1f] %vm2798, %v2787
    %2800 = vrot.lane.b32.xlu0 %v2739, 8
    %v2801 = vpop.permute.xlu0 %2800
    %2802 = vrot.lane.b32.xlu0 %v2740, 8
    %v2803 = vpop.permute.xlu0 %2802
    %2804 = vrot.lane.b32.xlu0 %v2742, 8
    %v2805 = vpop.permute.xlu0 %2804
    %2806 = vrot.lane.b32.xlu0 %v2744, 8
    %v2807 = vpop.permute.xlu0 %2806
    %2808 = vrot.lane.b32.xlu0 %v2741, 8
    %v2809 = vpop.permute.xlu0 %2808
    %2810 = vrot.lane.b32.xlu0 %v2743, 8
    %v2811 = vpop.permute.xlu0 %2810
    %v2812 = vsel %vm171, %v2801, %v2803
    %v2813 = vsel %vm171, %v2805, %v2807
    %v2814 = vsel %vm171, %v2809, %v2811
    %vm2821 = vcmask 1047621
    %2822 = vst.msk [vmem:[#allocation2 + $0x80] sm:$0xe0] %vm2821, %v2801
    %vm2823 = vcmask 392197
    %2824 = vst.msk [vmem:[#allocation2 + $0x88] sm:$0xe0] %vm2823, %v2812
    %vm2825 = vcmask 1047616
    %2826 = vst.msk [vmem:[#allocation2 + $0xa0] sm:$0xff] %vm2825, %v2805
    %vm2827 = vcmask 392192
    %2828 = vst.msk [vmem:[#allocation2 + $0xa8] sm:$0xff] %vm2827, %v2813
    %2829 = vst.msk [vmem:[#allocation2 + $0xc0] sm:$0x1] %vm483, %v2809
    %vm2830 = vcmask 385024
    %2831 = vst.msk [vmem:[#allocation2 + $0xc8] sm:$0x1] %vm2830, %v2814
    %2832 = vrot.lane.b32.xlu0 %v2711, 7
    %v2833 = vpop.permute.xlu0 %2832
    %2834 = vrot.lane.b32.xlu0 %v2712, 7
    %v2835 = vpop.permute.xlu0 %2834
    %2836 = vrot.lane.b32.xlu0 %v2714, 7
    %v2837 = vpop.permute.xlu0 %2836
    %2838 = vrot.lane.b32.xlu0 %v2716, 7
    %v2839 = vpop.permute.xlu0 %2838
    %v2840 = vsel %vm183, %v2833, %v2835
    %v2841 = vsel %vm183, %v2837, %v2839
    %vm2846 = vcmask 1047609
    %2847 = vst.msk [vmem:[#allocation2 + $0xc0] sm:$0xfe] %vm2846, %v2833
    %vm2848 = vcmask 384001
    %2849 = vst.msk [vmem:[#allocation2 + $0xc8] sm:$0xfe] %vm2848, %v2840
    %vm2850 = vcmask 1044536
    %2851 = vst.msk [vmem:[#allocation2 + $0xe0] sm:$0x1f] %vm2850, %v2837
    %vm2852 = vcmask 380928
    %2853 = vst.msk [vmem:[#allocation2 + $0xe8] sm:$0x1f] %vm2852, %v2841
    %2854 = vrot.lane.b32.xlu0 %v2739, 6
    %v2855 = vpop.permute.xlu0 %2854
    %2856 = vrot.lane.b32.xlu0 %v2740, 6
    %v2857 = vpop.permute.xlu0 %2856
    %2858 = vrot.lane.b32.xlu0 %v2742, 6
    %v2859 = vpop.permute.xlu0 %2858
    %2860 = vrot.lane.b32.xlu0 %v2744, 6
    %v2861 = vpop.permute.xlu0 %2860
    %2862 = vrot.lane.b32.xlu0 %v2741, 6
    %v2863 = vpop.permute.xlu0 %2862
    %2864 = vrot.lane.b32.xlu0 %v2743, 6
    %v2865 = vpop.permute.xlu0 %2864
    %v2866 = vsel %vm195, %v2855, %v2857
    %v2867 = vsel %vm195, %v2859, %v2861
    %v2868 = vsel %vm195, %v2863, %v2865
    %2875 = vst.msk [vmem:[#allocation2 + $0xe0] sm:$0xe0] %vm939, %v2855
    %2876 = vst.msk [vmem:[#allocation2 + $0xe8] sm:$0xe0] %vm2602, %v2866
    %vm2877 = vcmask 1047600
    %2878 = vst.msk [vmem:[#allocation2 + $0x100] sm:$0xff] %vm2877, %v2859
    %vm2879 = vcmask 375808
    %2880 = vst.msk [vmem:[#allocation2 + $0x108] sm:$0xff] %vm2879, %v2867
    %vm2881 = vcmask 1040432
    %2882 = vst.msk [vmem:[#allocation2 + $0x120] sm:$0x1] %vm2881, %v2863
    %vm2883 = vcmask 368640
    %2884 = vst.msk [vmem:[#allocation2 + $0x128] sm:$0x1] %vm2883, %v2868
    %2885 = vrot.lane.b32.xlu0 %v2711, 5
    %v2886 = vpop.permute.xlu0 %2885
    %2887 = vrot.lane.b32.xlu0 %v2712, 5
    %v2888 = vpop.permute.xlu0 %2887
    %2889 = vrot.lane.b32.xlu0 %v2714, 5
    %v2890 = vpop.permute.xlu0 %2889
    %2891 = vrot.lane.b32.xlu0 %v2716, 5
    %v2892 = vpop.permute.xlu0 %2891
    %v2893 = vsel %vm545, %v2886, %v2888
    %v2894 = vsel %vm545, %v2890, %v2892
    %vm2899 = vcmask 1047593
    %2900 = vst.msk [vmem:[#allocation2 + $0x120] sm:$0xfe] %vm2899, %v2886
    %vm2901 = vcmask 367617
    %2902 = vst.msk [vmem:[#allocation2 + $0x128] sm:$0xfe] %vm2901, %v2893
    %vm2903 = vcmask 1044520
    %2904 = vst.msk [vmem:[#allocation2 + $0x140] sm:$0x1f] %vm2903, %v2890
    %vm2905 = vcmask 364544
    %2906 = vst.msk [vmem:[#allocation2 + $0x148] sm:$0x1f] %vm2905, %v2894
    %v2907 = vld [vmem:[#allocation2] sm:$0xff]
    %v2908 = vld [vmem:[#allocation2 + $0x8] sm:$0xff]
    %v2909 = vld [vmem:[#allocation2 + $0x20] sm:$0xff]
    %v2910 = vld [vmem:[#allocation2 + $0x28] sm:$0xff]
    %v2911 = vld [vmem:[#allocation2 + $0x40] sm:$0xff]
    %v2912 = vld [vmem:[#allocation2 + $0x48] sm:$0xff]
    %v2913 = vld [vmem:[#allocation2 + $0x60] sm:$0xff]
    %v2914 = vld [vmem:[#allocation2 + $0x68] sm:$0xff]
    %v2915 = vld [vmem:[#allocation2 + $0x80] sm:$0xff]
    %v2916 = vld [vmem:[#allocation2 + $0x88] sm:$0xff]
    %v2917 = vld [vmem:[#allocation2 + $0xa0] sm:$0xff]
    %v2918 = vld [vmem:[#allocation2 + $0xa8] sm:$0xff]
    %v2919 = vld [vmem:[#allocation2 + $0xc0] sm:$0xff]
    %v2920 = vld [vmem:[#allocation2 + $0xc8] sm:$0xff]
    %v2921 = vld [vmem:[#allocation2 + $0xe0] sm:$0xff]
    %v2922 = vld [vmem:[#allocation2 + $0xe8] sm:$0xff]
    %v2923 = vld [vmem:[#allocation2 + $0x100] sm:$0xff]
    %v2924 = vld [vmem:[#allocation2 + $0x108] sm:$0xff]
    %v2925 = vld [vmem:[#allocation2 + $0x120] sm:$0xff]
    %v2926 = vld [vmem:[#allocation2 + $0x128] sm:$0xff]
    %v2927 = vld [vmem:[#allocation2 + $0x140] sm:$0x1f]
    %v2928 = vld [vmem:[#allocation2 + $0x148] sm:$0x1f]
    %v2929 = vpack.c.bf16 %v2909, %v2907
    %v2930 = vpack.c.bf16 %v2910, %v2908
    %v2931 = vpack.c.bf16 %v2913, %v2911
    %v2932 = vpack.c.bf16 %v2914, %v2912
    %v2933 = vpack.c.bf16 %v2917, %v2915
    %v2934 = vpack.c.bf16 %v2918, %v2916
    %v2935 = vpack.c.bf16 %v2921, %v2919
    %v2936 = vpack.c.bf16 %v2922, %v2920
    %v2937 = vpack.c.bf16 %v2925, %v2923
    %v2938 = vpack.c.bf16 %v2926, %v2924
    %v2939 = vpack.c.bf16 %v2927, %v2927
    %v2940 = vpack.c.bf16 %v2928, %v2928
    %v2941 = vld [vmem:[#allocation6 + $0x50] sm:$0xf]
    %v2942 = vld [vmem:[#allocation6 + $0x58] sm:$0x3]
    %v2945 = vunpack.c.l.b16 %v2941
    %v2946 = vunpack.c.l.b16 %v2942
    %v2947 = vpack.c.b16 %v2946, %v2945
    %2960 = vrot.lane.b32.xlu0 %v2929, 120
    %v2961 = vpop.permute.xlu0 %2960
    %2962 = vrot.lane.b32.xlu0 %v2930, 120
    %v2963 = vpop.permute.xlu0 %2962
    %2964 = vrot.lane.b32.xlu0 %v2931, 120
    %v2965 = vpop.permute.xlu0 %2964
    %2966 = vrot.lane.b32.xlu0 %v2932, 120
    %v2967 = vpop.permute.xlu0 %2966
    %2968 = vrot.lane.b32.xlu0 %v2933, 120
    %v2969 = vpop.permute.xlu0 %2968
    %2970 = vrot.lane.b32.xlu0 %v2934, 120
    %v2971 = vpop.permute.xlu0 %2970
    %2972 = vrot.lane.b32.xlu0 %v2935, 120
    %v2973 = vpop.permute.xlu0 %2972
    %2974 = vrot.lane.b32.xlu0 %v2936, 120
    %v2975 = vpop.permute.xlu0 %2974
    %2976 = vrot.lane.b32.xlu0 %v2937, 120
    %v2977 = vpop.permute.xlu0 %2976
    %2978 = vrot.lane.b32.xlu0 %v2938, 120
    %v2979 = vpop.permute.xlu0 %2978
    %2980 = vrot.lane.b32.xlu0 %v2939, 120
    %v2981 = vpop.permute.xlu0 %2980
    %2982 = vrot.lane.b32.xlu0 %v2940, 120
    %v2983 = vpop.permute.xlu0 %2982
    %v2984 = vsel %vm231, %v2961, %v2963
    %v2985 = vsel %vm231, %v2965, %v2967
    %v2986 = vsel %vm231, %v2969, %v2971
    %v2987 = vsel %vm231, %v2973, %v2975
    %v2988 = vsel %vm231, %v2977, %v2979
    %v2989 = vsel %vm231, %v2981, %v2983
    %vm3000 = vcmask 695296
    %v3002 = vsel %vm3000, %v2947, 0
    %v3004 = vsel %vm785, 4294967295, 65535
    %v3005 = vsel %vm238, %v3004, 0
    %v3007 = vand.u32 %v2989, %v3005
    %v3010 = vand.u32 %v2983, %v3005
    %3012 = vmatprep.subr.bf16.mxu0 0
    %3013 = vmatpush1.bf16.msra.mxu0 0
    %3014 = vmatprep.subr.bf16.mxu0 0
    %3015 = vmatpush1.bf16.msra.mxu0 0
    %3016 = vmatprep.subr.bf16.mxu0 %v3010
    %3017 = vmatpush1.bf16.msra.mxu0 %v3007
    %3018 = vmatprep.subr.bf16.mxu0 %v2979
    %3019 = vmatpush1.bf16.msra.mxu0 %v2988
    %3020 = vmatprep.subr.bf16.mxu0 %v2975
    %3021 = vmatpush1.bf16.msra.mxu0 %v2987
    %3022 = vmatprep.subr.bf16.mxu0 %v2971
    %3023 = vmatpush1.bf16.msra.mxu0 %v2986
    %3024 = vmatprep.subr.bf16.mxu0 %v2967
    %3025 = vmatpush1.bf16.msra.mxu0 %v2985
    %3026 = vmatprep.subr.bf16.mxu0 %v2963
    %3027 = vmatpush1.bf16.msra.mxu0 %v2984
    %3028 = vmatprep.subr.bf16.mxu0 0
    %3029 = vmatpush2.bf16.msra.mxu0 0
    %3030 = vmatprep.subr.bf16.mxu0 0
    %3031 = vmatpush2.bf16.msra.mxu0 0
    %3032 = vmatprep.subr.bf16.mxu0 0
    %3033 = vmatpush2.bf16.msra.mxu0 0
    %3034 = vmatprep.subr.bf16.mxu0 0
    %3035 = vmatpush2.bf16.msra.mxu0 0
    %3036 = vmatprep.subr.bf16.mxu0 0
    %3037 = vmatpush2.bf16.msra.mxu0 0
    %3038 = vmatprep.subr.bf16.mxu0 0
    %3039 = vmatpush2.bf16.msra.mxu0 0
    %3040 = vmatprep.subr.bf16.mxu0 0
    %3041 = vmatpush2.bf16.msra.mxu0 0
    %3042 = vmatprep.subr.bf16.mxu0 0
    %3043 = vmatpush2.bf16.msra.mxu0 0
    %3044 = vmatprep.mubr.bf16.mxu0 0
    %3045 = vmatmul.mubr.bf16.gmra.mxu0 %v3002
    %v3046 = vpop.f32.mrf.mxu0
    %v3047 = vadd.f32 0.0, %v3046
    %v3048 = vpop.f32.mrf.mxu0
    %v3049 = vadd.f32 0.0, %v3048
    %v3050 = vpop.f32.mrf.mxu0
    %v3051 = vadd.f32 0.0, %v3050
    %v3052 = vpop.f32.mrf.mxu0
    %v3053 = vadd.f32 0.0, %v3052
    %3054 = vdwg.mxu0
    %v3055 = vmax.f32 %v3047, 0.0
    %v3056 = vmax.f32 %v3049, 0.0
    %v3057 = vmax.f32 %v3051, 0.0
    %v3058 = vmax.f32 %v3053, 0.0
    %v3063 = vrot.slane %v3055, 6
    %v3064 = vrot.slane %v3057, 6
    %v3065 = vsel %vm785, %v3063, %v3064
    %v3066 = vrot.slane %v3056, 6
    %v3067 = vrot.slane %v3058, 6
    %v3068 = vsel %vm785, %v3066, %v3067
    %v3071 = vadd.f32 %v3055, %v3065
    %v3072 = vadd.f32 %v3056, %v3068
    %v3077 = vrot.slane %v2675, 4
    %v3078 = vrot.slane %v2681, 4
    %v3079 = vsel %vm2445, %v3077, %v3078
    %v3080 = vrot.slane %v2677, 4
    %v3081 = vrot.slane %v2683, 4
    %v3082 = vsel %vm2445, %v3080, %v3081
    %v3085 = vadd.f32 %v3071, %v3079
    %v3086 = vadd.f32 %v3072, %v3082
    %v3087 = vsel %vm2700, %v3085, 0.0
    %v3088 = vsel %vm2701, %v3086, 0.0
    %v3091 = vrot.slane %v3087, 7
    %v3092 = vrot.slane %v3088, 7
    %3093 = vrot.lane.b32.xlu0 %v3091, 10
    %v3094 = vpop.permute.xlu0 %3093
    %3095 = vrot.lane.b32.xlu0 %v3092, 10
    %v3096 = vpop.permute.xlu0 %3095
    %v3097 = vsel %vm147, %v3094, %v3096
    %vm3100 = vcmask 1046609
    %3101 = vst.msk [vmem:[#allocation2] sm:$0x7e] %vm3100, %v3094
    %vm3102 = vcmask 407553
    %3103 = vst.msk [vmem:[#allocation2 + $0x8] sm:$0x7e] %vm3102, %v3097
    %v3104 = vrot.slane %v3087, 1
    %v3105 = vrot.slane %v3088, 1
    %3106 = vrot.lane.b32.xlu0 %v3104, 9
    %v3107 = vpop.permute.xlu0 %3106
    %3108 = vrot.lane.b32.xlu0 %v3105, 9
    %v3109 = vpop.permute.xlu0 %3108
    %v3110 = vsel %vm159, %v3107, %v3109
    %vm3113 = vcmask 1047631
    %3114 = vst.msk [vmem:[#allocation2] sm:$0x80] %vm3113, %v3107
    %vm3115 = vcmask 400391
    %3116 = vst.msk [vmem:[#allocation2 + $0x8] sm:$0x80] %vm3115, %v3110
    %3117 = vst.msk [vmem:[#allocation2 + $0x20] sm:$0x1f] %vm2796, %v3107
    %3118 = vst.msk [vmem:[#allocation2 + $0x28] sm:$0x1f] %vm2798, %v3110
    %v3119 = vrot.slane %v3087, 3
    %v3120 = vrot.slane %v3088, 3
    %3121 = vrot.lane.b32.xlu0 %v3119, 8
    %v3122 = vpop.permute.xlu0 %3121
    %3123 = vrot.lane.b32.xlu0 %v3120, 8
    %v3124 = vpop.permute.xlu0 %3123
    %v3125 = vsel %vm171, %v3122, %v3124
    %3128 = vst.msk [vmem:[#allocation2 + $0x20] sm:$0xe0] %vm2821, %v3122
    %3129 = vst.msk [vmem:[#allocation2 + $0x28] sm:$0xe0] %vm2823, %v3125
    %vm3130 = vcmask 1042496
    %3131 = vst.msk [vmem:[#allocation2 + $0x40] sm:$0x7] %vm3130, %v3122
    %vm3132 = vcmask 387072
    %3133 = vst.msk [vmem:[#allocation2 + $0x48] sm:$0x7] %vm3132, %v3125
    %v3134 = vrot.slane %v3087, 5
    %v3135 = vrot.slane %v3088, 5
    %3136 = vrot.lane.b32.xlu0 %v3134, 7
    %v3137 = vpop.permute.xlu0 %3136
    %3138 = vrot.lane.b32.xlu0 %v3135, 7
    %v3139 = vpop.permute.xlu0 %3138
    %v3140 = vsel %vm183, %v3137, %v3139
    %vm3143 = vcmask 1047611
    %3144 = vst.msk [vmem:[#allocation2 + $0x40] sm:$0xf8] %vm3143, %v3137
    %vm3145 = vcmask 384003
    %3146 = vst.msk [vmem:[#allocation2 + $0x48] sm:$0xf8] %vm3145, %v3140
    %vm3147 = vcmask 1040440
    %3148 = vst.msk [vmem:[#allocation2 + $0x60] sm:$0x1] %vm3147, %v3137
    %vm3149 = vcmask 376832
    %3150 = vst.msk [vmem:[#allocation2 + $0x68] sm:$0x1] %vm3149, %v3140
    %3151 = vrot.lane.b32.xlu0 %v3091, 6
    %v3152 = vpop.permute.xlu0 %3151
    %3153 = vrot.lane.b32.xlu0 %v3092, 6
    %v3154 = vpop.permute.xlu0 %3153
    %v3155 = vsel %vm195, %v3152, %v3154
    %vm3158 = vcmask 1046577
    %3159 = vst.msk [vmem:[#allocation2 + $0x60] sm:$0x7e] %vm3158, %v3152
    %vm3160 = vcmask 374785
    %3161 = vst.msk [vmem:[#allocation2 + $0x68] sm:$0x7e] %vm3160, %v3155
    %v3162 = vld [vmem:[#allocation2] sm:$0xff]
    %v3163 = vld [vmem:[#allocation2 + $0x8] sm:$0xff]
    %v3164 = vld [vmem:[#allocation2 + $0x20] sm:$0xff]
    %v3165 = vld [vmem:[#allocation2 + $0x28] sm:$0xff]
    %v3166 = vld [vmem:[#allocation2 + $0x40] sm:$0xff]
    %v3167 = vld [vmem:[#allocation2 + $0x48] sm:$0xff]
    %v3168 = vld [vmem:[#allocation2 + $0x60] sm:$0x7f]
    %v3169 = vld [vmem:[#allocation2 + $0x68] sm:$0x7f]
    %v3170 = vpack.c.bf16 %v3164, %v3162
    %v3171 = vpack.c.bf16 %v3165, %v3163
    %v3172 = vpack.c.bf16 %v3168, %v3166
    %v3173 = vpack.c.bf16 %v3169, %v3167
    %v3174 = vld [vmem:[#allocation6 + $0x60] sm:$0xf]
    %v3175 = vld [vmem:[#allocation6 + $0x68] sm:$0x3]
    %v3178 = vunpack.c.l.b16 %v3174
    %v3179 = vunpack.c.l.b16 %v3175
    %v3180 = vpack.c.b16 %v3179, %v3178
    %3185 = vrot.lane.b32.xlu0 %v3170, 120
    %v3186 = vpop.permute.xlu0 %3185
    %3187 = vrot.lane.b32.xlu0 %v3171, 120
    %v3188 = vpop.permute.xlu0 %3187
    %3189 = vrot.lane.b32.xlu0 %v3172, 120
    %v3190 = vpop.permute.xlu0 %3189
    %3191 = vrot.lane.b32.xlu0 %v3173, 120
    %v3192 = vpop.permute.xlu0 %3191
    %v3193 = vsel %vm231, %v3186, %v3188
    %v3194 = vsel %vm231, %v3190, %v3192
    %vm3197 = vcmask 252928
    %v3199 = vsel %vm3197, %v3180, 0
    %vm3201 = vcmask 1046528
    %vm3202 = vcmask 1047552
    %v3203 = vsel %vm3201, 4294967295, 65535
    %v3204 = vsel %vm3202, %v3203, 0
    %v3206 = vand.u32 %v3194, %v3204
    %v3209 = vand.u32 %v3192, %v3204
    %3211 = vmatprep.subr.bf16.mxu0 0
    %3212 = vmatpush1.bf16.msra.mxu0 0
    %3213 = vmatprep.subr.bf16.mxu0 0
    %3214 = vmatpush1.bf16.msra.mxu0 0
    %3215 = vmatprep.subr.bf16.mxu0 0
    %3216 = vmatpush1.bf16.msra.mxu0 0
    %3217 = vmatprep.subr.bf16.mxu0 0
    %3218 = vmatpush1.bf16.msra.mxu0 0
    %3219 = vmatprep.subr.bf16.mxu0 0
    %3220 = vmatpush1.bf16.msra.mxu0 0
    %3221 = vmatprep.subr.bf16.mxu0 0
    %3222 = vmatpush1.bf16.msra.mxu0 0
    %3223 = vmatprep.subr.bf16.mxu0 %v3209
    %3224 = vmatpush1.bf16.msra.mxu0 %v3206
    %3225 = vmatprep.subr.bf16.mxu0 %v3188
    %3226 = vmatpush1.bf16.msra.mxu0 %v3193
    %3227 = vmatprep.subr.bf16.mxu0 0
    %3228 = vmatpush2.bf16.msra.mxu0 0
    %3229 = vmatprep.subr.bf16.mxu0 0
    %3230 = vmatpush2.bf16.msra.mxu0 0
    %3231 = vmatprep.subr.bf16.mxu0 0
    %3232 = vmatpush2.bf16.msra.mxu0 0
    %3233 = vmatprep.subr.bf16.mxu0 0
    %3234 = vmatpush2.bf16.msra.mxu0 0
    %3235 = vmatprep.subr.bf16.mxu0 0
    %3236 = vmatpush2.bf16.msra.mxu0 0
    %3237 = vmatprep.subr.bf16.mxu0 0
    %3238 = vmatpush2.bf16.msra.mxu0 0
    %3239 = vmatprep.subr.bf16.mxu0 0
    %3240 = vmatpush2.bf16.msra.mxu0 0
    %3241 = vmatprep.subr.bf16.mxu0 0
    %3242 = vmatpush2.bf16.msra.mxu0 0
    %3243 = vmatprep.mubr.bf16.mxu0 0
    %3244 = vmatmul.mubr.bf16.gmra.mxu0 %v3199
    %v3245 = vpop.f32.mrf.mxu0
    %v3246 = vadd.f32 0.0, %v3245
    %v3247 = vpop.f32.mrf.mxu0
    %v3248 = vadd.f32 0.0, %v3247
    %v3249 = vpop.f32.mrf.mxu0
    %v3250 = vadd.f32 0.0, %v3249
    %v3251 = vpop.f32.mrf.mxu0
    %v3252 = vadd.f32 0.0, %v3251
    %3253 = vdwg.mxu0
    %v3254 = vmax.f32 %v3246, 0.0
    %v3255 = vmax.f32 %v3248, 0.0
    %v3256 = vmax.f32 %v3250, 0.0
    %v3257 = vmax.f32 %v3252, 0.0
    %v3258 = vsel %vm2700, %v3254, 0.0
    %v3259 = vsel %vm2701, %v3255, 0.0
    %v3260 = vsel %vm2700, %v3256, 0.0
    %v3261 = vsel %vm2701, %v3257, 0.0
    %v3266 = vrot.slane %v3258, 7
    %v3267 = vrot.slane %v3259, 7
    %v3268 = vrot.slane %v3260, 7
    %v3269 = vsel %vm2710, %v3266, %v3268
    %v3270 = vrot.slane %v3261, 7
    %v3271 = vsel %vm2710, %v3267, %v3270
    %3272 = vrot.lane.b32.xlu0 %v3266, 11
    %v3273 = vpop.permute.xlu0 %3272
    %3274 = vrot.lane.b32.xlu0 %v3267, 11
    %v3275 = vpop.permute.xlu0 %3274
    %3276 = vrot.lane.b32.xlu0 %v3269, 11
    %v3277 = vpop.permute.xlu0 %3276
    %3278 = vrot.lane.b32.xlu0 %v3271, 11
    %v3279 = vpop.permute.xlu0 %3278
    %v3280 = vsel %vm382, %v3273, %v3275
    %v3281 = vsel %vm382, %v3277, %v3279
    %3286 = vst.msk [vmem:[#allocation2] sm:$0xfe] %vm2731, %v3273
    %3287 = vst.msk [vmem:[#allocation2 + $0x8] sm:$0xfe] %vm2733, %v3280
    %3288 = vst.msk [vmem:[#allocation2 + $0x20] sm:$0x1f] %vm2735, %v3277
    %3289 = vst.msk [vmem:[#allocation2 + $0x28] sm:$0x1f] %vm2737, %v3281
    %v3290 = vrot.slane %v3258, 3
    %v3291 = vrot.slane %v3259, 3
    %v3292 = vrot.slane %v3260, 3
    %v3293 = vsel %vm659, %v3290, %v3292
    %v3294 = vrot.slane %v3261, 3
    %v3295 = vsel %vm659, %v3291, %v3294
    %3296 = vrot.lane.b32.xlu0 %v3290, 10
    %v3297 = vpop.permute.xlu0 %3296
    %3298 = vrot.lane.b32.xlu0 %v3291, 10
    %v3299 = vpop.permute.xlu0 %3298
    %3300 = vrot.lane.b32.xlu0 %v3293, 10
    %v3301 = vpop.permute.xlu0 %3300
    %3302 = vrot.lane.b32.xlu0 %v3295, 10
    %v3303 = vpop.permute.xlu0 %3302
    %3304 = vrot.lane.b32.xlu0 %v3292, 10
    %v3305 = vpop.permute.xlu0 %3304
    %3306 = vrot.lane.b32.xlu0 %v3294, 10
    %v3307 = vpop.permute.xlu0 %3306
    %v3308 = vsel %vm147, %v3297, %v3299
    %v3309 = vsel %vm147, %v3301, %v3303
    %v3310 = vsel %vm147, %v3305, %v3307
    %3317 = vst.msk [vmem:[#allocation2 + $0x20] sm:$0xe0] %vm2766, %v3297
    %3318 = vst.msk [vmem:[#allocation2 + $0x28] sm:$0xe0] %vm2768, %v3308
    %3319 = vst.msk [vmem:[#allocation2 + $0x40] sm:$0xff] %vm2770, %v3301
    %3320 = vst.msk [vmem:[#allocation2 + $0x48] sm:$0xff] %vm2772, %v3309
    %3321 = vst.msk [vmem:[#allocation2 + $0x60] sm:$0x1] %vm2774, %v3305
    %3322 = vst.msk [vmem:[#allocation2 + $0x68] sm:$0x1] %vm2776, %v3310
    %3323 = vrot.lane.b32.xlu0 %v3266, 9
    %v3324 = vpop.permute.xlu0 %3323
    %3325 = vrot.lane.b32.xlu0 %v3267, 9
    %v3326 = vpop.permute.xlu0 %3325
    %3327 = vrot.lane.b32.xlu0 %v3269, 9
    %v3328 = vpop.permute.xlu0 %3327
    %3329 = vrot.lane.b32.xlu0 %v3271, 9
    %v3330 = vpop.permute.xlu0 %3329
    %v3331 = vsel %vm159, %v3324, %v3326
    %v3332 = vsel %vm159, %v3328, %v3330
    %3337 = vst.msk [vmem:[#allocation2 + $0x60] sm:$0xfe] %vm2792, %v3324
    %3338 = vst.msk [vmem:[#allocation2 + $0x68] sm:$0xfe] %vm2794, %v3331
    %3339 = vst.msk [vmem:[#allocation2 + $0x80] sm:$0x1f] %vm2796, %v3328
    %3340 = vst.msk [vmem:[#allocation2 + $0x88] sm:$0x1f] %vm2798, %v3332
    %3341 = vrot.lane.b32.xlu0 %v3290, 8
    %v3342 = vpop.permute.xlu0 %3341
    %3343 = vrot.lane.b32.xlu0 %v3291, 8
    %v3344 = vpop.permute.xlu0 %3343
    %3345 = vrot.lane.b32.xlu0 %v3293, 8
    %v3346 = vpop.permute.xlu0 %3345
    %3347 = vrot.lane.b32.xlu0 %v3295, 8
    %v3348 = vpop.permute.xlu0 %3347
    %3349 = vrot.lane.b32.xlu0 %v3292, 8
    %v3350 = vpop.permute.xlu0 %3349
    %3351 = vrot.lane.b32.xlu0 %v3294, 8
    %v3352 = vpop.permute.xlu0 %3351
    %v3353 = vsel %vm171, %v3342, %v3344
    %v3354 = vsel %vm171, %v3346, %v3348
    %v3355 = vsel %vm171, %v3350, %v3352
    %3362 = vst.msk [vmem:[#allocation2 + $0x80] sm:$0xe0] %vm2821, %v3342
    %3363 = vst.msk [vmem:[#allocation2 + $0x88] sm:$0xe0] %vm2823, %v3353
    %3364 = vst.msk [vmem:[#allocation2 + $0xa0] sm:$0xff] %vm2825, %v3346
    %3365 = vst.msk [vmem:[#allocation2 + $0xa8] sm:$0xff] %vm2827, %v3354
    %3366 = vst.msk [vmem:[#allocation2 + $0xc0] sm:$0x1] %vm483, %v3350
    %3367 = vst.msk [vmem:[#allocation2 + $0xc8] sm:$0x1] %vm2830, %v3355
    %3368 = vrot.lane.b32.xlu0 %v3266, 7
    %v3369 = vpop.permute.xlu0 %3368
    %3370 = vrot.lane.b32.xlu0 %v3267, 7
    %v3371 = vpop.permute.xlu0 %3370
    %3372 = vrot.lane.b32.xlu0 %v3269, 7
    %v3373 = vpop.permute.xlu0 %3372
    %3374 = vrot.lane.b32.xlu0 %v3271, 7
    %v3375 = vpop.permute.xlu0 %3374
    %v3376 = vsel %vm183, %v3369, %v3371
    %v3377 = vsel %vm183, %v3373, %v3375
    %3382 = vst.msk [vmem:[#allocation2 + $0xc0] sm:$0xfe] %vm2846, %v3369
    %3383 = vst.msk [vmem:[#allocation2 + $0xc8] sm:$0xfe] %vm2848, %v3376
    %3384 = vst.msk [vmem:[#allocation2 + $0xe0] sm:$0x1f] %vm2850, %v3373
    %3385 = vst.msk [vmem:[#allocation2 + $0xe8] sm:$0x1f] %vm2852, %v3377
    %3386 = vrot.lane.b32.xlu0 %v3290, 6
    %v3387 = vpop.permute.xlu0 %3386
    %3388 = vrot.lane.b32.xlu0 %v3291, 6
    %v3389 = vpop.permute.xlu0 %3388
    %3390 = vrot.lane.b32.xlu0 %v3293, 6
    %v3391 = vpop.permute.xlu0 %3390
    %3392 = vrot.lane.b32.xlu0 %v3295, 6
    %v3393 = vpop.permute.xlu0 %3392
    %3394 = vrot.lane.b32.xlu0 %v3292, 6
    %v3395 = vpop.permute.xlu0 %3394
    %3396 = vrot.lane.b32.xlu0 %v3294, 6
    %v3397 = vpop.permute.xlu0 %3396
    %v3398 = vsel %vm195, %v3387, %v3389
    %v3399 = vsel %vm195, %v3391, %v3393
    %v3400 = vsel %vm195, %v3395, %v3397
    %3407 = vst.msk [vmem:[#allocation2 + $0xe0] sm:$0xe0] %vm939, %v3387
    %3408 = vst.msk [vmem:[#allocation2 + $0xe8] sm:$0xe0] %vm2602, %v3398
    %3409 = vst.msk [vmem:[#allocation2 + $0x100] sm:$0xff] %vm2877, %v3391
    %3410 = vst.msk [vmem:[#allocation2 + $0x108] sm:$0xff] %vm2879, %v3399
    %3411 = vst.msk [vmem:[#allocation2 + $0x120] sm:$0x1] %vm2881, %v3395
    %3412 = vst.msk [vmem:[#allocation2 + $0x128] sm:$0x1] %vm2883, %v3400
    %3413 = vrot.lane.b32.xlu0 %v3266, 5
    %v3414 = vpop.permute.xlu0 %3413
    %3415 = vrot.lane.b32.xlu0 %v3267, 5
    %v3416 = vpop.permute.xlu0 %3415
    %3417 = vrot.lane.b32.xlu0 %v3269, 5
    %v3418 = vpop.permute.xlu0 %3417
    %3419 = vrot.lane.b32.xlu0 %v3271, 5
    %v3420 = vpop.permute.xlu0 %3419
    %v3421 = vsel %vm545, %v3414, %v3416
    %v3422 = vsel %vm545, %v3418, %v3420
    %3427 = vst.msk [vmem:[#allocation2 + $0x120] sm:$0xfe] %vm2899, %v3414
    %3428 = vst.msk [vmem:[#allocation2 + $0x128] sm:$0xfe] %vm2901, %v3421
    %3429 = vst.msk [vmem:[#allocation2 + $0x140] sm:$0x1f] %vm2903, %v3418
    %3430 = vst.msk [vmem:[#allocation2 + $0x148] sm:$0x1f] %vm2905, %v3422
    %v3431 = vld [vmem:[#allocation2] sm:$0xff]
    %v3432 = vld [vmem:[#allocation2 + $0x8] sm:$0xff]
    %v3433 = vld [vmem:[#allocation2 + $0x20] sm:$0xff]
    %v3434 = vld [vmem:[#allocation2 + $0x28] sm:$0xff]
    %v3435 = vld [vmem:[#allocation2 + $0x40] sm:$0xff]
    %v3436 = vld [vmem:[#allocation2 + $0x48] sm:$0xff]
    %v3437 = vld [vmem:[#allocation2 + $0x60] sm:$0xff]
    %v3438 = vld [vmem:[#allocation2 + $0x68] sm:$0xff]
    %v3439 = vld [vmem:[#allocation2 + $0x80] sm:$0xff]
    %v3440 = vld [vmem:[#allocation2 + $0x88] sm:$0xff]
    %v3441 = vld [vmem:[#allocation2 + $0xa0] sm:$0xff]
    %v3442 = vld [vmem:[#allocation2 + $0xa8] sm:$0xff]
    %v3443 = vld [vmem:[#allocation2 + $0xc0] sm:$0xff]
    %v3444 = vld [vmem:[#allocation2 + $0xc8] sm:$0xff]
    %v3445 = vld [vmem:[#allocation2 + $0xe0] sm:$0xff]
    %v3446 = vld [vmem:[#allocation2 + $0xe8] sm:$0xff]
    %v3447 = vld [vmem:[#allocation2 + $0x100] sm:$0xff]
    %v3448 = vld [vmem:[#allocation2 + $0x108] sm:$0xff]
    %v3449 = vld [vmem:[#allocation2 + $0x120] sm:$0xff]
    %v3450 = vld [vmem:[#allocation2 + $0x128] sm:$0xff]
    %v3451 = vld [vmem:[#allocation2 + $0x140] sm:$0x1f]
    %v3452 = vld [vmem:[#allocation2 + $0x148] sm:$0x1f]
    %v3453 = vpack.c.bf16 %v3433, %v3431
    %v3454 = vpack.c.bf16 %v3434, %v3432
    %v3455 = vpack.c.bf16 %v3437, %v3435
    %v3456 = vpack.c.bf16 %v3438, %v3436
    %v3457 = vpack.c.bf16 %v3441, %v3439
    %v3458 = vpack.c.bf16 %v3442, %v3440
    %v3459 = vpack.c.bf16 %v3445, %v3443
    %v3460 = vpack.c.bf16 %v3446, %v3444
    %v3461 = vpack.c.bf16 %v3449, %v3447
    %v3462 = vpack.c.bf16 %v3450, %v3448
    %v3463 = vpack.c.bf16 %v3451, %v3451
    %v3464 = vpack.c.bf16 %v3452, %v3452
    %v3465 = vld [vmem:[#allocation6 + $0x70] sm:$0xf]
    %v3466 = vld [vmem:[#allocation6 + $0x78] sm:$0x3]
    %v3469 = vunpack.c.l.b16 %v3465
    %v3470 = vunpack.c.l.b16 %v3466
    %v3471 = vpack.c.b16 %v3470, %v3469
    %3484 = vrot.lane.b32.xlu0 %v3453, 120
    %v3485 = vpop.permute.xlu0 %3484
    %3486 = vrot.lane.b32.xlu0 %v3454, 120
    %v3487 = vpop.permute.xlu0 %3486
    %3488 = vrot.lane.b32.xlu0 %v3455, 120
    %v3489 = vpop.permute.xlu0 %3488
    %3490 = vrot.lane.b32.xlu0 %v3456, 120
    %v3491 = vpop.permute.xlu0 %3490
    %3492 = vrot.lane.b32.xlu0 %v3457, 120
    %v3493 = vpop.permute.xlu0 %3492
    %3494 = vrot.lane.b32.xlu0 %v3458, 120
    %v3495 = vpop.permute.xlu0 %3494
    %3496 = vrot.lane.b32.xlu0 %v3459, 120
    %v3497 = vpop.permute.xlu0 %3496
    %3498 = vrot.lane.b32.xlu0 %v3460, 120
    %v3499 = vpop.permute.xlu0 %3498
    %3500 = vrot.lane.b32.xlu0 %v3461, 120
    %v3501 = vpop.permute.xlu0 %3500
    %3502 = vrot.lane.b32.xlu0 %v3462, 120
    %v3503 = vpop.permute.xlu0 %3502
    %3504 = vrot.lane.b32.xlu0 %v3463, 120
    %v3505 = vpop.permute.xlu0 %3504
    %3506 = vrot.lane.b32.xlu0 %v3464, 120
    %v3507 = vpop.permute.xlu0 %3506
    %v3508 = vsel %vm231, %v3485, %v3487
    %v3509 = vsel %vm231, %v3489, %v3491
    %v3510 = vsel %vm231, %v3493, %v3495
    %v3511 = vsel %vm231, %v3497, %v3499
    %v3512 = vsel %vm231, %v3501, %v3503
    %v3513 = vsel %vm231, %v3505, %v3507
    %v3525 = vsel %vm3000, %v3471, 0
    %v3528 = vand.u32 %v3513, %v3005
    %v3531 = vand.u32 %v3507, %v3005
    %3533 = vmatprep.subr.bf16.mxu0 0
    %3534 = vmatpush1.bf16.msra.mxu0 0
    %3535 = vmatprep.subr.bf16.mxu0 0
    %3536 = vmatpush1.bf16.msra.mxu0 0
    %3537 = vmatprep.subr.bf16.mxu0 %v3531
    %3538 = vmatpush1.bf16.msra.mxu0 %v3528
    %3539 = vmatprep.subr.bf16.mxu0 %v3503
    %3540 = vmatpush1.bf16.msra.mxu0 %v3512
    %3541 = vmatprep.subr.bf16.mxu0 %v3499
    %3542 = vmatpush1.bf16.msra.mxu0 %v3511
    %3543 = vmatprep.subr.bf16.mxu0 %v3495
    %3544 = vmatpush1.bf16.msra.mxu0 %v3510
    %3545 = vmatprep.subr.bf16.mxu0 %v3491
    %3546 = vmatpush1.bf16.msra.mxu0 %v3509
    %3547 = vmatprep.subr.bf16.mxu0 %v3487
    %3548 = vmatpush1.bf16.msra.mxu0 %v3508
    %3549 = vmatprep.subr.bf16.mxu0 0
    %3550 = vmatpush2.bf16.msra.mxu0 0
    %3551 = vmatprep.subr.bf16.mxu0 0
    %3552 = vmatpush2.bf16.msra.mxu0 0
    %3553 = vmatprep.subr.bf16.mxu0 0
    %3554 = vmatpush2.bf16.msra.mxu0 0
    %3555 = vmatprep.subr.bf16.mxu0 0
    %3556 = vmatpush2.bf16.msra.mxu0 0
    %3557 = vmatprep.subr.bf16.mxu0 0
    %3558 = vmatpush2.bf16.msra.mxu0 0
    %3559 = vmatprep.subr.bf16.mxu0 0
    %3560 = vmatpush2.bf16.msra.mxu0 0
    %3561 = vmatprep.subr.bf16.mxu0 0
    %3562 = vmatpush2.bf16.msra.mxu0 0
    %3563 = vmatprep.subr.bf16.mxu0 0
    %3564 = vmatpush2.bf16.msra.mxu0 0
    %3565 = vmatprep.mubr.bf16.mxu0 0
    %3566 = vmatmul.mubr.bf16.gmra.mxu0 %v3525
    %v3567 = vpop.f32.mrf.mxu0
    %v3568 = vadd.f32 0.0, %v3567
    %v3569 = vpop.f32.mrf.mxu0
    %v3570 = vadd.f32 0.0, %v3569
    %v3571 = vpop.f32.mrf.mxu0
    %v3572 = vadd.f32 0.0, %v3571
    %v3573 = vpop.f32.mrf.mxu0
    %v3574 = vadd.f32 0.0, %v3573
    %3575 = vdwg.mxu0
    %v3576 = vmax.f32 %v3568, 0.0
    %v3577 = vmax.f32 %v3570, 0.0
    %v3578 = vmax.f32 %v3572, 0.0
    %v3579 = vmax.f32 %v3574, 0.0
    %v3584 = vrot.slane %v3576, 6
    %v3585 = vrot.slane %v3578, 6
    %v3586 = vsel %vm785, %v3584, %v3585
    %v3587 = vrot.slane %v3577, 6
    %v3588 = vrot.slane %v3579, 6
    %v3589 = vsel %vm785, %v3587, %v3588
    %v3592 = vadd.f32 %v3576, %v3586
    %v3593 = vadd.f32 %v3577, %v3589
    %v3594 = vadd.f32 %v3592, %v3087
    %v3595 = vadd.f32 %v3593, %v3088
    %v3596 = vsel %vm2700, %v3594, 0.0
    %v3597 = vsel %vm2701, %v3595, 0.0
    %v3600 = vrot.slane %v3596, 7
    %v3601 = vrot.slane %v3597, 7
    %3602 = vrot.lane.b32.xlu0 %v3600, 10
    %v3603 = vpop.permute.xlu0 %3602
    %3604 = vrot.lane.b32.xlu0 %v3601, 10
    %v3605 = vpop.permute.xlu0 %3604
    %v3606 = vsel %vm147, %v3603, %v3605
    %3609 = vst.msk [vmem:[#allocation2] sm:$0x7e] %vm3100, %v3603
    %3610 = vst.msk [vmem:[#allocation2 + $0x8] sm:$0x7e] %vm3102, %v3606
    %v3611 = vrot.slane %v3596, 1
    %v3612 = vrot.slane %v3597, 1
    %3613 = vrot.lane.b32.xlu0 %v3611, 9
    %v3614 = vpop.permute.xlu0 %3613
    %3615 = vrot.lane.b32.xlu0 %v3612, 9
    %v3616 = vpop.permute.xlu0 %3615
    %v3617 = vsel %vm159, %v3614, %v3616
    %3620 = vst.msk [vmem:[#allocation2] sm:$0x80] %vm3113, %v3614
    %3621 = vst.msk [vmem:[#allocation2 + $0x8] sm:$0x80] %vm3115, %v3617
    %3622 = vst.msk [vmem:[#allocation2 + $0x20] sm:$0x1f] %vm2796, %v3614
    %3623 = vst.msk [vmem:[#allocation2 + $0x28] sm:$0x1f] %vm2798, %v3617
    %v3624 = vrot.slane %v3596, 3
    %v3625 = vrot.slane %v3597, 3
    %3626 = vrot.lane.b32.xlu0 %v3624, 8
    %v3627 = vpop.permute.xlu0 %3626
    %3628 = vrot.lane.b32.xlu0 %v3625, 8
    %v3629 = vpop.permute.xlu0 %3628
    %v3630 = vsel %vm171, %v3627, %v3629
    %3633 = vst.msk [vmem:[#allocation2 + $0x20] sm:$0xe0] %vm2821, %v3627
    %3634 = vst.msk [vmem:[#allocation2 + $0x28] sm:$0xe0] %vm2823, %v3630
    %3635 = vst.msk [vmem:[#allocation2 + $0x40] sm:$0x7] %vm3130, %v3627
    %3636 = vst.msk [vmem:[#allocation2 + $0x48] sm:$0x7] %vm3132, %v3630
    %v3637 = vrot.slane %v3596, 5
    %v3638 = vrot.slane %v3597, 5
    %3639 = vrot.lane.b32.xlu0 %v3637, 7
    %v3640 = vpop.permute.xlu0 %3639
    %3641 = vrot.lane.b32.xlu0 %v3638, 7
    %v3642 = vpop.permute.xlu0 %3641
    %v3643 = vsel %vm183, %v3640, %v3642
    %3646 = vst.msk [vmem:[#allocation2 + $0x40] sm:$0xf8] %vm3143, %v3640
    %3647 = vst.msk [vmem:[#allocation2 + $0x48] sm:$0xf8] %vm3145, %v3643
    %3648 = vst.msk [vmem:[#allocation2 + $0x60] sm:$0x1] %vm3147, %v3640
    %3649 = vst.msk [vmem:[#allocation2 + $0x68] sm:$0x1] %vm3149, %v3643
    %3650 = vrot.lane.b32.xlu0 %v3600, 6
    %v3651 = vpop.permute.xlu0 %3650
    %3652 = vrot.lane.b32.xlu0 %v3601, 6
    %v3653 = vpop.permute.xlu0 %3652
    %v3654 = vsel %vm195, %v3651, %v3653
    %3657 = vst.msk [vmem:[#allocation2 + $0x60] sm:$0x7e] %vm3158, %v3651
    %3658 = vst.msk [vmem:[#allocation2 + $0x68] sm:$0x7e] %vm3160, %v3654
    %v3659 = vld [vmem:[#allocation2] sm:$0xff]
    %v3660 = vld [vmem:[#allocation2 + $0x8] sm:$0xff]
    %v3661 = vld [vmem:[#allocation2 + $0x20] sm:$0xff]
    %v3662 = vld [vmem:[#allocation2 + $0x28] sm:$0xff]
    %v3663 = vld [vmem:[#allocation2 + $0x40] sm:$0xff]
    %v3664 = vld [vmem:[#allocation2 + $0x48] sm:$0xff]
    %v3665 = vld [vmem:[#allocation2 + $0x60] sm:$0x7f]
    %v3666 = vld [vmem:[#allocation2 + $0x68] sm:$0x7f]
    %v3667 = vpack.c.bf16 %v3661, %v3659
    %v3668 = vpack.c.bf16 %v3662, %v3660
    %v3669 = vpack.c.bf16 %v3665, %v3663
    %v3670 = vpack.c.bf16 %v3666, %v3664
    %v3671 = vld [vmem:[#allocation6 + $0x80] sm:$0xf]
    %v3672 = vld [vmem:[#allocation6 + $0x88] sm:$0x3]
    %v3675 = vunpack.c.l.b16 %v3671
    %v3676 = vunpack.c.l.b16 %v3672
    %v3677 = vpack.c.b16 %v3676, %v3675
    %3682 = vrot.lane.b32.xlu0 %v3667, 120
    %v3683 = vpop.permute.xlu0 %3682
    %3684 = vrot.lane.b32.xlu0 %v3668, 120
    %v3685 = vpop.permute.xlu0 %3684
    %3686 = vrot.lane.b32.xlu0 %v3669, 120
    %v3687 = vpop.permute.xlu0 %3686
    %3688 = vrot.lane.b32.xlu0 %v3670, 120
    %v3689 = vpop.permute.xlu0 %3688
    %v3690 = vsel %vm231, %v3683, %v3685
    %v3691 = vsel %vm231, %v3687, %v3689
    %v3695 = vsel %vm3197, %v3677, 0
    %v3698 = vand.u32 %v3691, %v3204
    %v3701 = vand.u32 %v3689, %v3204
    %3703 = vmatprep.subr.bf16.mxu0 0
    %3704 = vmatpush1.bf16.msra.mxu0 0
    %3705 = vmatprep.subr.bf16.mxu0 0
    %3706 = vmatpush1.bf16.msra.mxu0 0
    %3707 = vmatprep.subr.bf16.mxu0 0
    %3708 = vmatpush1.bf16.msra.mxu0 0
    %3709 = vmatprep.subr.bf16.mxu0 0
    %3710 = vmatpush1.bf16.msra.mxu0 0
    %3711 = vmatprep.subr.bf16.mxu0 0
    %3712 = vmatpush1.bf16.msra.mxu0 0
    %3713 = vmatprep.subr.bf16.mxu0 0
    %3714 = vmatpush1.bf16.msra.mxu0 0
    %3715 = vmatprep.subr.bf16.mxu0 %v3701
    %3716 = vmatpush1.bf16.msra.mxu0 %v3698
    %3717 = vmatprep.subr.bf16.mxu0 %v3685
    %3718 = vmatpush1.bf16.msra.mxu0 %v3690
    %3719 = vmatprep.subr.bf16.mxu0 0
    %3720 = vmatpush2.bf16.msra.mxu0 0
    %3721 = vmatprep.subr.bf16.mxu0 0
    %3722 = vmatpush2.bf16.msra.mxu0 0
    %3723 = vmatprep.subr.bf16.mxu0 0
    %3724 = vmatpush2.bf16.msra.mxu0 0
    %3725 = vmatprep.subr.bf16.mxu0 0
    %3726 = vmatpush2.bf16.msra.mxu0 0
    %3727 = vmatprep.subr.bf16.mxu0 0
    %3728 = vmatpush2.bf16.msra.mxu0 0
    %3729 = vmatprep.subr.bf16.mxu0 0
    %3730 = vmatpush2.bf16.msra.mxu0 0
    %3731 = vmatprep.subr.bf16.mxu0 0
    %3732 = vmatpush2.bf16.msra.mxu0 0
    %3733 = vmatprep.subr.bf16.mxu0 0
    %3734 = vmatpush2.bf16.msra.mxu0 0
    %3735 = vmatprep.mubr.bf16.mxu0 0
    %3736 = vmatmul.mubr.bf16.gmra.mxu0 %v3695
    %v3737 = vpop.f32.mrf.mxu0
    %v3738 = vadd.f32 0.0, %v3737
    %v3739 = vpop.f32.mrf.mxu0
    %v3740 = vadd.f32 0.0, %v3739
    %v3741 = vpop.f32.mrf.mxu0
    %v3742 = vadd.f32 0.0, %v3741
    %v3743 = vpop.f32.mrf.mxu0
    %v3744 = vadd.f32 0.0, %v3743
    %3745 = vdwg.mxu0
    %v3746 = vmax.f32 %v3738, 0.0
    %v3747 = vmax.f32 %v3740, 0.0
    %v3748 = vmax.f32 %v3742, 0.0
    %v3749 = vmax.f32 %v3744, 0.0
    %v3750 = vsel %vm2700, %v3746, 0.0
    %v3751 = vsel %vm2701, %v3747, 0.0
    %v3752 = vsel %vm2700, %v3748, 0.0
    %v3753 = vsel %vm2701, %v3749, 0.0
    %v3758 = vrot.slane %v3750, 7
    %v3759 = vrot.slane %v3751, 7
    %v3760 = vrot.slane %v3752, 7
    %v3761 = vsel %vm2710, %v3758, %v3760
    %v3762 = vrot.slane %v3753, 7
    %v3763 = vsel %vm2710, %v3759, %v3762
    %3764 = vrot.lane.b32.xlu0 %v3758, 11
    %v3765 = vpop.permute.xlu0 %3764
    %3766 = vrot.lane.b32.xlu0 %v3759, 11
    %v3767 = vpop.permute.xlu0 %3766
    %3768 = vrot.lane.b32.xlu0 %v3761, 11
    %v3769 = vpop.permute.xlu0 %3768
    %3770 = vrot.lane.b32.xlu0 %v3763, 11
    %v3771 = vpop.permute.xlu0 %3770
    %v3772 = vsel %vm382, %v3765, %v3767
    %v3773 = vsel %vm382, %v3769, %v3771
    %3778 = vst.msk [vmem:[#allocation2] sm:$0xfe] %vm2731, %v3765
    %3779 = vst.msk [vmem:[#allocation2 + $0x8] sm:$0xfe] %vm2733, %v3772
    %3780 = vst.msk [vmem:[#allocation2 + $0x20] sm:$0x1f] %vm2735, %v3769
    %3781 = vst.msk [vmem:[#allocation2 + $0x28] sm:$0x1f] %vm2737, %v3773
    %v3782 = vrot.slane %v3750, 3
    %v3783 = vrot.slane %v3751, 3
    %v3784 = vrot.slane %v3752, 3
    %v3785 = vsel %vm659, %v3782, %v3784
    %v3786 = vrot.slane %v3753, 3
    %v3787 = vsel %vm659, %v3783, %v3786
    %3788 = vrot.lane.b32.xlu0 %v3782, 10
    %v3789 = vpop.permute.xlu0 %3788
    %3790 = vrot.lane.b32.xlu0 %v3783, 10
    %v3791 = vpop.permute.xlu0 %3790
    %3792 = vrot.lane.b32.xlu0 %v3785, 10
    %v3793 = vpop.permute.xlu0 %3792
    %3794 = vrot.lane.b32.xlu0 %v3787, 10
    %v3795 = vpop.permute.xlu0 %3794
    %3796 = vrot.lane.b32.xlu0 %v3784, 10
    %v3797 = vpop.permute.xlu0 %3796
    %3798 = vrot.lane.b32.xlu0 %v3786, 10
    %v3799 = vpop.permute.xlu0 %3798
    %v3800 = vsel %vm147, %v3789, %v3791
    %v3801 = vsel %vm147, %v3793, %v3795
    %v3802 = vsel %vm147, %v3797, %v3799
    %3809 = vst.msk [vmem:[#allocation2 + $0x20] sm:$0xe0] %vm2766, %v3789
    %3810 = vst.msk [vmem:[#allocation2 + $0x28] sm:$0xe0] %vm2768, %v3800
    %3811 = vst.msk [vmem:[#allocation2 + $0x40] sm:$0xff] %vm2770, %v3793
    %3812 = vst.msk [vmem:[#allocation2 + $0x48] sm:$0xff] %vm2772, %v3801
    %3813 = vst.msk [vmem:[#allocation2 + $0x60] sm:$0x1] %vm2774, %v3797
    %3814 = vst.msk [vmem:[#allocation2 + $0x68] sm:$0x1] %vm2776, %v3802
    %3815 = vrot.lane.b32.xlu0 %v3758, 9
    %v3816 = vpop.permute.xlu0 %3815
    %3817 = vrot.lane.b32.xlu0 %v3759, 9
    %v3818 = vpop.permute.xlu0 %3817
    %3819 = vrot.lane.b32.xlu0 %v3761, 9
    %v3820 = vpop.permute.xlu0 %3819
    %3821 = vrot.lane.b32.xlu0 %v3763, 9
    %v3822 = vpop.permute.xlu0 %3821
    %v3823 = vsel %vm159, %v3816, %v3818
    %v3824 = vsel %vm159, %v3820, %v3822
    %3829 = vst.msk [vmem:[#allocation2 + $0x60] sm:$0xfe] %vm2792, %v3816
    %3830 = vst.msk [vmem:[#allocation2 + $0x68] sm:$0xfe] %vm2794, %v3823
    %3831 = vst.msk [vmem:[#allocation2 + $0x80] sm:$0x1f] %vm2796, %v3820
    %3832 = vst.msk [vmem:[#allocation2 + $0x88] sm:$0x1f] %vm2798, %v3824
    %3833 = vrot.lane.b32.xlu0 %v3782, 8
    %v3834 = vpop.permute.xlu0 %3833
    %3835 = vrot.lane.b32.xlu0 %v3783, 8
    %v3836 = vpop.permute.xlu0 %3835
    %3837 = vrot.lane.b32.xlu0 %v3785, 8
    %v3838 = vpop.permute.xlu0 %3837
    %3839 = vrot.lane.b32.xlu0 %v3787, 8
    %v3840 = vpop.permute.xlu0 %3839
    %3841 = vrot.lane.b32.xlu0 %v3784, 8
    %v3842 = vpop.permute.xlu0 %3841
    %3843 = vrot.lane.b32.xlu0 %v3786, 8
    %v3844 = vpop.permute.xlu0 %3843
    %v3845 = vsel %vm171, %v3834, %v3836
    %v3846 = vsel %vm171, %v3838, %v3840
    %v3847 = vsel %vm171, %v3842, %v3844
    %3854 = vst.msk [vmem:[#allocation2 + $0x80] sm:$0xe0] %vm2821, %v3834
    %3855 = vst.msk [vmem:[#allocation2 + $0x88] sm:$0xe0] %vm2823, %v3845
    %3856 = vst.msk [vmem:[#allocation2 + $0xa0] sm:$0xff] %vm2825, %v3838
    %3857 = vst.msk [vmem:[#allocation2 + $0xa8] sm:$0xff] %vm2827, %v3846
    %3858 = vst.msk [vmem:[#allocation2 + $0xc0] sm:$0x1] %vm483, %v3842
    %3859 = vst.msk [vmem:[#allocation2 + $0xc8] sm:$0x1] %vm2830, %v3847
    %3860 = vrot.lane.b32.xlu0 %v3758, 7
    %v3861 = vpop.permute.xlu0 %3860
    %3862 = vrot.lane.b32.xlu0 %v3759, 7
    %v3863 = vpop.permute.xlu0 %3862
    %3864 = vrot.lane.b32.xlu0 %v3761, 7
    %v3865 = vpop.permute.xlu0 %3864
    %3866 = vrot.lane.b32.xlu0 %v3763, 7
    %v3867 = vpop.permute.xlu0 %3866
    %v3868 = vsel %vm183, %v3861, %v3863
    %v3869 = vsel %vm183, %v3865, %v3867
    %3874 = vst.msk [vmem:[#allocation2 + $0xc0] sm:$0xfe] %vm2846, %v3861
    %3875 = vst.msk [vmem:[#allocation2 + $0xc8] sm:$0xfe] %vm2848, %v3868
    %3876 = vst.msk [vmem:[#allocation2 + $0xe0] sm:$0x1f] %vm2850, %v3865
    %3877 = vst.msk [vmem:[#allocation2 + $0xe8] sm:$0x1f] %vm2852, %v3869
    %3878 = vrot.lane.b32.xlu0 %v3782, 6
    %v3879 = vpop.permute.xlu0 %3878
    %3880 = vrot.lane.b32.xlu0 %v3783, 6
    %v3881 = vpop.permute.xlu0 %3880
    %3882 = vrot.lane.b32.xlu0 %v3785, 6
    %v3883 = vpop.permute.xlu0 %3882
    %3884 = vrot.lane.b32.xlu0 %v3787, 6
    %v3885 = vpop.permute.xlu0 %3884
    %3886 = vrot.lane.b32.xlu0 %v3784, 6
    %v3887 = vpop.permute.xlu0 %3886
    %3888 = vrot.lane.b32.xlu0 %v3786, 6
    %v3889 = vpop.permute.xlu0 %3888
    %v3890 = vsel %vm195, %v3879, %v3881
    %v3891 = vsel %vm195, %v3883, %v3885
    %v3892 = vsel %vm195, %v3887, %v3889
    %3899 = vst.msk [vmem:[#allocation2 + $0xe0] sm:$0xe0] %vm939, %v3879
    %3900 = vst.msk [vmem:[#allocation2 + $0xe8] sm:$0xe0] %vm2602, %v3890
    %3901 = vst.msk [vmem:[#allocation2 + $0x100] sm:$0xff] %vm2877, %v3883
    %3902 = vst.msk [vmem:[#allocation2 + $0x108] sm:$0xff] %vm2879, %v3891
    %3903 = vst.msk [vmem:[#allocation2 + $0x120] sm:$0x1] %vm2881, %v3887
    %3904 = vst.msk [vmem:[#allocation2 + $0x128] sm:$0x1] %vm2883, %v3892
    %3905 = vrot.lane.b32.xlu0 %v3758, 5
    %v3906 = vpop.permute.xlu0 %3905
    %3907 = vrot.lane.b32.xlu0 %v3759, 5
    %v3908 = vpop.permute.xlu0 %3907
    %3909 = vrot.lane.b32.xlu0 %v3761, 5
    %v3910 = vpop.permute.xlu0 %3909
    %3911 = vrot.lane.b32.xlu0 %v3763, 5
    %v3912 = vpop.permute.xlu0 %3911
    %v3913 = vsel %vm545, %v3906, %v3908
    %v3914 = vsel %vm545, %v3910, %v3912
    %3919 = vst.msk [vmem:[#allocation2 + $0x120] sm:$0xfe] %vm2899, %v3906
    %3920 = vst.msk [vmem:[#allocation2 + $0x128] sm:$0xfe] %vm2901, %v3913
    %3921 = vst.msk [vmem:[#allocation2 + $0x140] sm:$0x1f] %vm2903, %v3910
    %3922 = vst.msk [vmem:[#allocation2 + $0x148] sm:$0x1f] %vm2905, %v3914
    %v3923 = vld [vmem:[#allocation2] sm:$0xff]
    %v3924 = vld [vmem:[#allocation2 + $0x8] sm:$0xff]
    %v3925 = vld [vmem:[#allocation2 + $0x20] sm:$0xff]
    %v3926 = vld [vmem:[#allocation2 + $0x28] sm:$0xff]
    %v3927 = vld [vmem:[#allocation2 + $0x40] sm:$0xff]
    %v3928 = vld [vmem:[#allocation2 + $0x48] sm:$0xff]
    %v3929 = vld [vmem:[#allocation2 + $0x60] sm:$0xff]
    %v3930 = vld [vmem:[#allocation2 + $0x68] sm:$0xff]
    %v3931 = vld [vmem:[#allocation2 + $0x80] sm:$0xff]
    %v3932 = vld [vmem:[#allocation2 + $0x88] sm:$0xff]
    %v3933 = vld [vmem:[#allocation2 + $0xa0] sm:$0xff]
    %v3934 = vld [vmem:[#allocation2 + $0xa8] sm:$0xff]
    %v3935 = vld [vmem:[#allocation2 + $0xc0] sm:$0xff]
    %v3936 = vld [vmem:[#allocation2 + $0xc8] sm:$0xff]
    %v3937 = vld [vmem:[#allocation2 + $0xe0] sm:$0xff]
    %v3938 = vld [vmem:[#allocation2 + $0xe8] sm:$0xff]
    %v3939 = vld [vmem:[#allocation2 + $0x100] sm:$0xff]
    %v3940 = vld [vmem:[#allocation2 + $0x108] sm:$0xff]
    %v3941 = vld [vmem:[#allocation2 + $0x120] sm:$0xff]
    %v3942 = vld [vmem:[#allocation2 + $0x128] sm:$0xff]
    %v3943 = vld [vmem:[#allocation2 + $0x140] sm:$0x1f]
    %v3944 = vld [vmem:[#allocation2 + $0x148] sm:$0x1f]
    %v3945 = vpack.c.bf16 %v3925, %v3923
    %v3946 = vpack.c.bf16 %v3926, %v3924
    %v3947 = vpack.c.bf16 %v3929, %v3927
    %v3948 = vpack.c.bf16 %v3930, %v3928
    %v3949 = vpack.c.bf16 %v3933, %v3931
    %v3950 = vpack.c.bf16 %v3934, %v3932
    %v3951 = vpack.c.bf16 %v3937, %v3935
    %v3952 = vpack.c.bf16 %v3938, %v3936
    %v3953 = vpack.c.bf16 %v3941, %v3939
    %v3954 = vpack.c.bf16 %v3942, %v3940
    %v3955 = vpack.c.bf16 %v3943, %v3943
    %v3956 = vpack.c.bf16 %v3944, %v3944
    %v3957 = vld [vmem:[#allocation6 + $0x90] sm:$0xf]
    %v3958 = vld [vmem:[#allocation6 + $0x98] sm:$0x3]
    %v3961 = vunpack.c.l.b16 %v3957
    %v3962 = vunpack.c.l.b16 %v3958
    %v3963 = vpack.c.b16 %v3962, %v3961
    %3976 = vrot.lane.b32.xlu0 %v3945, 120
    %v3977 = vpop.permute.xlu0 %3976
    %3978 = vrot.lane.b32.xlu0 %v3946, 120
    %v3979 = vpop.permute.xlu0 %3978
    %3980 = vrot.lane.b32.xlu0 %v3947, 120
    %v3981 = vpop.permute.xlu0 %3980
    %3982 = vrot.lane.b32.xlu0 %v3948, 120
    %v3983 = vpop.permute.xlu0 %3982
    %3984 = vrot.lane.b32.xlu0 %v3949, 120
    %v3985 = vpop.permute.xlu0 %3984
    %3986 = vrot.lane.b32.xlu0 %v3950, 120
    %v3987 = vpop.permute.xlu0 %3986
    %3988 = vrot.lane.b32.xlu0 %v3951, 120
    %v3989 = vpop.permute.xlu0 %3988
    %3990 = vrot.lane.b32.xlu0 %v3952, 120
    %v3991 = vpop.permute.xlu0 %3990
    %3992 = vrot.lane.b32.xlu0 %v3953, 120
    %v3993 = vpop.permute.xlu0 %3992
    %3994 = vrot.lane.b32.xlu0 %v3954, 120
    %v3995 = vpop.permute.xlu0 %3994
    %3996 = vrot.lane.b32.xlu0 %v3955, 120
    %v3997 = vpop.permute.xlu0 %3996
    %3998 = vrot.lane.b32.xlu0 %v3956, 120
    %v3999 = vpop.permute.xlu0 %3998
    %v4000 = vsel %vm231, %v3977, %v3979
    %v4001 = vsel %vm231, %v3981, %v3983
    %v4002 = vsel %vm231, %v3985, %v3987
    %v4003 = vsel %vm231, %v3989, %v3991
    %v4004 = vsel %vm231, %v3993, %v3995
    %v4005 = vsel %vm231, %v3997, %v3999
    %v4017 = vsel %vm3000, %v3963, 0
    %v4020 = vand.u32 %v4005, %v3005
    %v4023 = vand.u32 %v3999, %v3005
    %4025 = vmatprep.subr.bf16.mxu0 0
    %4026 = vmatpush1.bf16.msra.mxu0 0
    %4027 = vmatprep.subr.bf16.mxu0 0
    %4028 = vmatpush1.bf16.msra.mxu0 0
    %4029 = vmatprep.subr.bf16.mxu0 %v4023
    %4030 = vmatpush1.bf16.msra.mxu0 %v4020
    %4031 = vmatprep.subr.bf16.mxu0 %v3995
    %4032 = vmatpush1.bf16.msra.mxu0 %v4004
    %4033 = vmatprep.subr.bf16.mxu0 %v3991
    %4034 = vmatpush1.bf16.msra.mxu0 %v4003
    %4035 = vmatprep.subr.bf16.mxu0 %v3987
    %4036 = vmatpush1.bf16.msra.mxu0 %v4002
    %4037 = vmatprep.subr.bf16.mxu0 %v3983
    %4038 = vmatpush1.bf16.msra.mxu0 %v4001
    %4039 = vmatprep.subr.bf16.mxu0 %v3979
    %4040 = vmatpush1.bf16.msra.mxu0 %v4000
    %4041 = vmatprep.subr.bf16.mxu0 0
    %4042 = vmatpush2.bf16.msra.mxu0 0
    %4043 = vmatprep.subr.bf16.mxu0 0
    %4044 = vmatpush2.bf16.msra.mxu0 0
    %4045 = vmatprep.subr.bf16.mxu0 0
    %4046 = vmatpush2.bf16.msra.mxu0 0
    %4047 = vmatprep.subr.bf16.mxu0 0
    %4048 = vmatpush2.bf16.msra.mxu0 0
    %4049 = vmatprep.subr.bf16.mxu0 0
    %4050 = vmatpush2.bf16.msra.mxu0 0
    %4051 = vmatprep.subr.bf16.mxu0 0
    %4052 = vmatpush2.bf16.msra.mxu0 0
    %4053 = vmatprep.subr.bf16.mxu0 0
    %4054 = vmatpush2.bf16.msra.mxu0 0
    %4055 = vmatprep.subr.bf16.mxu0 0
    %4056 = vmatpush2.bf16.msra.mxu0 0
    %4057 = vmatprep.mubr.bf16.mxu0 0
    %4058 = vmatmul.mubr.bf16.gmra.mxu0 %v4017
    %v4059 = vpop.f32.mrf.mxu0
    %v4060 = vadd.f32 0.0, %v4059
    %v4061 = vpop.f32.mrf.mxu0
    %v4062 = vadd.f32 0.0, %v4061
    %v4063 = vpop.f32.mrf.mxu0
    %v4064 = vadd.f32 0.0, %v4063
    %v4065 = vpop.f32.mrf.mxu0
    %v4066 = vadd.f32 0.0, %v4065
    %4067 = vdwg.mxu0
    %v4068 = vmax.f32 %v4060, 0.0
    %v4069 = vmax.f32 %v4062, 0.0
    %v4070 = vmax.f32 %v4064, 0.0
    %v4071 = vmax.f32 %v4066, 0.0
    %v4076 = vrot.slane %v4068, 6
    %v4077 = vrot.slane %v4070, 6
    %v4078 = vsel %vm785, %v4076, %v4077
    %v4079 = vrot.slane %v4069, 6
    %v4080 = vrot.slane %v4071, 6
    %v4081 = vsel %vm785, %v4079, %v4080
    %v4084 = vadd.f32 %v4068, %v4078
    %v4085 = vadd.f32 %v4069, %v4081
    %v4086 = vadd.f32 %v4084, %v3596
    %v4087 = vadd.f32 %v4085, %v3597
    %v4088 = vsel %vm2700, %v4086, 0.0
    %v4089 = vsel %vm2701, %v4087, 0.0
    %v4090 = vld [vmem:[#allocation8 + $0x8] sm:$0xf]
    %v4091 = vld [vmem:[#allocation8 + $0x18] sm:$0xf]
    %v4092 = vld [vmem:[#allocation8 + $0x28] sm:$0xf]
    %v4093 = vld [vmem:[#allocation8 + $0x38] sm:$0xf]
    %v4094 = vld [vmem:[#allocation8 + $0x48] sm:$0xf]
    %v4095 = vld [vmem:[#allocation8 + $0x58] sm:$0xf]
    %v4096 = vld [vmem:[#allocation8 + $0x68] sm:$0xf]
    %v4097 = vld [vmem:[#allocation8 + $0x78] sm:$0xf]
    %v4098 = vld [vmem:[#allocation8 + $0x88] sm:$0xf]
    %v4099 = vld [vmem:[#allocation8 + $0x98] sm:$0xf]
    %v4100 = vld [vmem:[#allocation8 + $0xa8] sm:$0xf]
    %v4101 = vld [vmem:[#allocation8 + $0xb8] sm:$0xf]
    %v4102 = vld [vmem:[#allocation8 + $0xc8] sm:$0xf]
    %v4103 = vld [vmem:[#allocation8 + $0xd8] sm:$0xf]
    %v4104 = vld [vmem:[#allocation8 + $0xe8] sm:$0xf]
    %v4105 = vld [vmem:[#allocation8 + $0xf8] sm:$0xf]
    %v4106 = vld [vmem:[#allocation8 + $0x108] sm:$0xf]
    %v4107 = vld [vmem:[#allocation8 + $0x118] sm:$0xf]
    %v4108 = vld [vmem:[#allocation8 + $0x128] sm:$0xf]
    %v4109 = vld [vmem:[#allocation8 + $0x138] sm:$0xf]
    %v4110 = vld [vmem:[#allocation8 + $0x148] sm:$0xf]
    %v4111 = vpack.c.bf16 %v4088, %v4088
    %v4112 = vpack.c.bf16 %v4089, %v4089
    %v4134 = vunpack.c.l.b16 %v4090
    %v4135 = vunpack.c.l.b16 %v4091
    %v4136 = vunpack.c.l.b16 %v4092
    %v4137 = vunpack.c.l.b16 %v4093
    %v4138 = vunpack.c.l.b16 %v4094
    %v4139 = vunpack.c.l.b16 %v4095
    %v4140 = vunpack.c.l.b16 %v4096
    %v4141 = vunpack.c.l.b16 %v4097
    %v4142 = vunpack.c.l.b16 %v4098
    %v4143 = vunpack.c.l.b16 %v4099
    %v4144 = vunpack.c.l.b16 %v4100
    %v4145 = vunpack.c.l.b16 %v4101
    %v4146 = vunpack.c.l.b16 %v4102
    %v4147 = vunpack.c.l.b16 %v4103
    %v4148 = vunpack.c.l.b16 %v4104
    %v4149 = vunpack.c.l.b16 %v4105
    %v4150 = vunpack.c.l.b16 %v4106
    %v4151 = vunpack.c.l.b16 %v4107
    %v4152 = vunpack.c.l.b16 %v4108
    %v4153 = vunpack.c.l.b16 %v4109
    %v4154 = vunpack.c.l.b16 %v4110
    %v4155 = vpack.c.b16 %v4135, %v4134
    %v4156 = vpack.c.b16 %v4137, %v4136
    %v4157 = vpack.c.b16 %v4139, %v4138
    %v4158 = vpack.c.b16 %v4141, %v4140
    %v4159 = vpack.c.b16 %v4143, %v4142
    %v4160 = vpack.c.b16 %v4145, %v4144
    %v4161 = vpack.c.b16 %v4147, %v4146
    %v4162 = vpack.c.b16 %v4149, %v4148
    %v4163 = vpack.c.b16 %v4151, %v4150
    %v4164 = vpack.c.b16 %v4153, %v4152
    %v4165 = vpack.c.b16 %v4154, %v4154
    %vm4176 = vcmask 326656
    %v4178 = vsel %vm4176, %v4112, 0
    %v4181 = vsel %vm2445, %v4165, 0
    %4183 = vmatprep.subr.bf16.mxu0 0
    %4184 = vmatpush1.bf16.msra.mxu0 %v4162
    %4185 = vmatprep.subr.bf16.mxu0 0
    %4186 = vmatpush1.bf16.msra.mxu0 %v4161
    %4187 = vmatprep.subr.bf16.mxu0 0
    %4188 = vmatpush1.bf16.msra.mxu0 %v4160
    %4189 = vmatprep.subr.bf16.mxu0 0
    %4190 = vmatpush1.bf16.msra.mxu0 %v4159
    %4191 = vmatprep.subr.bf16.mxu0 0
    %4192 = vmatpush1.bf16.msra.mxu0 %v4158
    %4193 = vmatprep.subr.bf16.mxu0 0
    %4194 = vmatpush1.bf16.msra.mxu0 %v4157
    %4195 = vmatprep.subr.bf16.mxu0 0
    %4196 = vmatpush1.bf16.msra.mxu0 %v4156
    %4197 = vmatprep.subr.bf16.mxu0 0
    %4198 = vmatpush1.bf16.msra.mxu0 %v4155
    %4199 = vmatprep.subr.bf16.mxu0 0
    %4200 = vmatpush2.bf16.msra.mxu0 0
    %4201 = vmatprep.subr.bf16.mxu0 0
    %4202 = vmatpush2.bf16.msra.mxu0 0
    %4203 = vmatprep.subr.bf16.mxu0 0
    %4204 = vmatpush2.bf16.msra.mxu0 0
    %4205 = vmatprep.subr.bf16.mxu0 0
    %4206 = vmatpush2.bf16.msra.mxu0 0
    %4207 = vmatprep.subr.bf16.mxu0 0
    %4208 = vmatpush2.bf16.msra.mxu0 0
    %4209 = vmatprep.subr.bf16.mxu0 0
    %4210 = vmatpush2.bf16.msra.mxu0 %v4181
    %4211 = vmatprep.subr.bf16.mxu0 0
    %4212 = vmatpush2.bf16.msra.mxu0 %v4164
    %4213 = vmatprep.subr.bf16.mxu0 0
    %4214 = vmatpush2.bf16.msra.mxu0 %v4163
    %4215 = vmatprep.mubr.bf16.mxu0 %v4178
    %4216 = vmatmul.mubr.bf16.gmra.mxu0 %v4111
    %v4217 = vpop.f32.mrf.mxu0
    %v4218 = vadd.f32 0.0, %v4217
    %v4219 = vpop.f32.mrf.mxu0
    %v4220 = vpop.f32.mrf.mxu0
    %v4221 = vpop.f32.mrf.mxu0
    %4222 = vdwg.mxu0
    %v4223 = vmul.f32 %v4218, 0.33333334
    %v4224 = vld [vmem:[#allocation9 + $0x2] sm:$0x1]
    %vm4225 = vcmp.gt.f32.partialorder %v4224, 0.5
    %v4227 = vrot.slane %v4223, 7
    %4228 = vrot.lane.b32.xlu0 %v4227, 10
    %v4229 = vpop.permute.xlu0 %4228
    %vm4231 = vcmask 669777
    %4232 = vst.msk [vmem:[#allocation2] sm:$0x7e] %vm4231, %v4229
    %v4233 = vrot.slane %v4223, 1
    %4234 = vrot.lane.b32.xlu0 %v4233, 9
    %v4235 = vpop.permute.xlu0 %4234
    %vm4237 = vcmask 662607
    %4238 = vst.msk [vmem:[#allocation2] sm:$0x80] %vm4237, %v4235
    %vm4239 = vcmask 659528
    %4240 = vst.msk [vmem:[#allocation2 + $0x20] sm:$0x1f] %vm4239, %v4235
    %v4241 = vrot.slane %v4223, 3
    %4242 = vrot.lane.b32.xlu0 %v4241, 8
    %v4243 = vpop.permute.xlu0 %4242
    %vm4245 = vcmask 654405
    %4246 = vst.msk [vmem:[#allocation2 + $0x20] sm:$0xe0] %vm4245, %v4243
    %vm4247 = vcmask 649280
    %4248 = vst.msk [vmem:[#allocation2 + $0x40] sm:$0x7] %vm4247, %v4243
    %v4249 = vrot.slane %v4223, 5
    %4250 = vrot.lane.b32.xlu0 %v4249, 7
    %v4251 = vpop.permute.xlu0 %4250
    %vm4253 = vcmask 646203
    %4254 = vst.msk [vmem:[#allocation2 + $0x40] sm:$0xf8] %vm4253, %v4251
    %vm4255 = vcmask 639032
    %4256 = vst.msk [vmem:[#allocation2 + $0x60] sm:$0x1] %vm4255, %v4251
    %4257 = vrot.lane.b32.xlu0 %v4227, 6
    %v4258 = vpop.permute.xlu0 %4257
    %vm4260 = vcmask 636977
    %4261 = vst.msk [vmem:[#allocation2 + $0x60] sm:$0x7e] %vm4260, %v4258
    %v4262 = vld [vmem:[#allocation2] sm:$0xff]
    %v4263 = vld [vmem:[#allocation2 + $0x20] sm:$0xff]
    %v4264 = vld [vmem:[#allocation2 + $0x40] sm:$0xff]
    %v4265 = vld [vmem:[#allocation2 + $0x60] sm:$0x7f]
    %v4266 = vpack.c.bf16 %v4263, %v4262
    %v4267 = vpack.c.bf16 %v4265, %v4264
    %v4268 = vld [vmem:[#allocation6 + $0xa0] sm:$0xf]
    %v4269 = vld [vmem:[#allocation6 + $0xa8] sm:$0xf]
    %v4270 = vld [vmem:[#allocation6 + $0xb0] sm:$0xf]
    %v4271 = vld [vmem:[#allocation6 + $0xb8] sm:$0xf]
    %v4272 = vld [vmem:[#allocation6 + $0xc0] sm:$0xf]
    %v4273 = vld [vmem:[#allocation6 + $0xc8] sm:$0xf]
    %v4274 = vld [vmem:[#allocation6 + $0xd0] sm:$0x7]
    %v4282 = vunpack.c.l.b16 %v4268
    %v4283 = vunpack.c.l.b16 %v4269
    %v4284 = vunpack.c.l.b16 %v4270
    %v4285 = vunpack.c.l.b16 %v4271
    %v4286 = vunpack.c.l.b16 %v4272
    %v4287 = vunpack.c.l.b16 %v4273
    %v4288 = vunpack.c.l.b16 %v4274
    %v4289 = vpack.c.b16 %v4283, %v4282
    %v4290 = vpack.c.b16 %v4285, %v4284
    %v4291 = vpack.c.b16 %v4287, %v4286
    %v4292 = vpack.c.b16 %v4288, %v4288
    %4295 = vrot.lane.b32.xlu0 %v4266, 120
    %v4296 = vpop.permute.xlu0 %4295
    %4297 = vrot.lane.b32.xlu0 %v4267, 120
    %v4298 = vpop.permute.xlu0 %4297
    %v4301 = vsel %vm3197, %v4289, 0
    %v4304 = vsel %vm3197, %v4290, 0
    %v4307 = vsel %vm3197, %v4291, 0
    %v4310 = vsel %vm3197, %v4292, 0
    %v4313 = vand.u32 %v4298, %v3204
    %4315 = vmatprep.subr.bf16.mxu0 0
    %4316 = vmatpush1.bf16.msra.mxu0 0
    %4317 = vmatprep.subr.bf16.mxu0 0
    %4318 = vmatpush1.bf16.msra.mxu0 0
    %4319 = vmatprep.subr.bf16.mxu0 0
    %4320 = vmatpush1.bf16.msra.mxu0 0
    %4321 = vmatprep.subr.bf16.mxu0 0
    %4322 = vmatpush1.bf16.msra.mxu0 0
    %4323 = vmatprep.subr.bf16.mxu0 0
    %4324 = vmatpush1.bf16.msra.mxu0 0
    %4325 = vmatprep.subr.bf16.mxu0 0
    %4326 = vmatpush1.bf16.msra.mxu0 0
    %4327 = vmatprep.subr.bf16.mxu0 0
    %4328 = vmatpush1.bf16.msra.mxu0 %v4313
    %4329 = vmatprep.subr.bf16.mxu0 0
    %4330 = vmatpush1.bf16.msra.mxu0 %v4296
    %4331 = vmatprep.subr.bf16.mxu0 0
    %4332 = vmatpush2.bf16.msra.mxu0 0
    %4333 = vmatprep.subr.bf16.mxu0 0
    %4334 = vmatpush2.bf16.msra.mxu0 0
    %4335 = vmatprep.subr.bf16.mxu0 0
    %4336 = vmatpush2.bf16.msra.mxu0 0
    %4337 = vmatprep.subr.bf16.mxu0 0
    %4338 = vmatpush2.bf16.msra.mxu0 0
    %4339 = vmatprep.subr.bf16.mxu0 0
    %4340 = vmatpush2.bf16.msra.mxu0 0
    %4341 = vmatprep.subr.bf16.mxu0 0
    %4342 = vmatpush2.bf16.msra.mxu0 0
    %4343 = vmatprep.subr.bf16.mxu0 0
    %4344 = vmatpush2.bf16.msra.mxu0 0
    %4345 = vmatprep.subr.bf16.mxu0 0
    %4346 = vmatpush2.bf16.msra.mxu0 0
    %4347 = vmatprep.mubr.bf16.mxu0 0
    %4348 = vmatmul.mubr.bf16.gmra.mxu0 %v4301
    %v4349 = vpop.f32.mrf.mxu0
    %v4350 = vadd.f32 0.0, %v4349
    %v4351 = vpop.f32.mrf.mxu0
    %v4352 = vpop.f32.mrf.mxu0
    %v4353 = vadd.f32 0.0, %v4352
    %v4354 = vpop.f32.mrf.mxu0
    %4355 = vmatprep.mubr.bf16.mxu0 0
    %4356 = vmatmul.mubr.bf16.gmra.mxu0 %v4304
    %v4357 = vpop.f32.mrf.mxu0
    %v4358 = vadd.f32 0.0, %v4357
    %v4359 = vpop.f32.mrf.mxu0
    %v4360 = vpop.f32.mrf.mxu0
    %v4361 = vadd.f32 0.0, %v4360
    %v4362 = vpop.f32.mrf.mxu0
    %4363 = vmatprep.mubr.bf16.mxu0 0
    %4364 = vmatmul.mubr.bf16.gmra.mxu0 %v4307
    %v4365 = vpop.f32.mrf.mxu0
    %v4366 = vadd.f32 0.0, %v4365
    %v4367 = vpop.f32.mrf.mxu0
    %v4368 = vpop.f32.mrf.mxu0
    %v4369 = vadd.f32 0.0, %v4368
    %v4370 = vpop.f32.mrf.mxu0
    %4371 = vmatprep.mubr.bf16.mxu0 0
    %4372 = vmatmul.mubr.bf16.gmra.mxu0 %v4310
    %v4373 = vpop.f32.mrf.mxu0
    %v4374 = vadd.f32 0.0, %v4373
    %v4375 = vpop.f32.mrf.mxu0
    %v4376 = vpop.f32.mrf.mxu0
    %v4377 = vpop.f32.mrf.mxu0
    %4378 = vdwg.mxu0
    %v4379 = vmax.f32 %v4350, 0.0
    %v4380 = vmax.f32 %v4353, 0.0
    %v4381 = vmax.f32 %v4358, 0.0
    %v4382 = vmax.f32 %v4361, 0.0
    %v4383 = vmax.f32 %v4366, 0.0
    %v4384 = vsel %vm4225, 1, 0
    %v4385 = vlaneseq
    %v4386 = vshrl.u32 %v4385, 7
    %v4387 = vsub.s32 0, %v4386
    %v4388 = vrot.slane %v4384, %v4387
    %vm4389 = vcmp.eq.s32.totalorder %v4388, 1
    %v4390 = vsel %vm4389, %v4379, 0.0
    %v4391 = vsel %vm4389, %v4380, 0.0
    %v4392 = vsel %vm4389, %v4381, 0.0
    %v4393 = vsel %vm4389, %v4382, 0.0
    %v4394 = vsel %vm4389, %v4383, 0.0
    %v4400 = vrot.slane %v4390, 7
    %v4401 = vrot.slane %v4391, 7
    %v4402 = vsel %vm2710, %v4400, %v4401
    %v4403 = vrot.slane %v4392, 7
    %v4404 = vsel %vm2710, %v4401, %v4403
    %v4405 = vrot.slane %v4393, 7
    %v4406 = vsel %vm2710, %v4403, %v4405
    %v4407 = vrot.slane %v4394, 7
    %v4408 = vsel %vm2710, %v4405, %v4407
    %4409 = vrot.lane.b32.xlu0 %v4400, 11
    %v4410 = vpop.permute.xlu0 %4409
    %4411 = vrot.lane.b32.xlu0 %v4402, 11
    %v4412 = vpop.permute.xlu0 %4411
    %4413 = vrot.lane.b32.xlu0 %v4404, 11
    %v4414 = vpop.permute.xlu0 %4413
    %4415 = vrot.lane.b32.xlu0 %v4406, 11
    %v4416 = vpop.permute.xlu0 %4415
    %4417 = vrot.lane.b32.xlu0 %v4408, 11
    %v4418 = vpop.permute.xlu0 %4417
    %vm4424 = vcmask 679001
    %4425 = vst.msk [vmem:[#allocation2] sm:$0xfe] %vm4424, %v4410
    %vm4426 = vcmask 679000
    %4427 = vst.msk [vmem:[#allocation2 + $0x20] sm:$0xff] %vm4426, %v4412
    %4428 = vst.msk [vmem:[#allocation2 + $0x40] sm:$0xff] %vm4426, %v4414
    %4429 = vst.msk [vmem:[#allocation2 + $0x60] sm:$0xff] %vm4426, %v4416
    %vm4430 = vcmask 675928
    %4431 = vst.msk [vmem:[#allocation2 + $0x80] sm:$0x1f] %vm4430, %v4418
    %v4432 = vrot.slane %v4390, 3
    %v4433 = vrot.slane %v4391, 3
    %v4434 = vsel %vm659, %v4432, %v4433
    %v4435 = vrot.slane %v4392, 3
    %v4436 = vsel %vm659, %v4433, %v4435
    %v4437 = vrot.slane %v4393, 3
    %v4438 = vsel %vm659, %v4435, %v4437
    %v4439 = vrot.slane %v4394, 3
    %v4440 = vsel %vm659, %v4437, %v4439
    %4441 = vrot.lane.b32.xlu0 %v4432, 10
    %v4442 = vpop.permute.xlu0 %4441
    %4443 = vrot.lane.b32.xlu0 %v4434, 10
    %v4444 = vpop.permute.xlu0 %4443
    %4445 = vrot.lane.b32.xlu0 %v4436, 10
    %v4446 = vpop.permute.xlu0 %4445
    %4447 = vrot.lane.b32.xlu0 %v4438, 10
    %v4448 = vpop.permute.xlu0 %4447
    %4449 = vrot.lane.b32.xlu0 %v4440, 10
    %v4450 = vpop.permute.xlu0 %4449
    %4451 = vrot.lane.b32.xlu0 %v4439, 10
    %v4452 = vpop.permute.xlu0 %4451
    %vm4459 = vcmask 670805
    %4460 = vst.msk [vmem:[#allocation2 + $0x80] sm:$0xe0] %vm4459, %v4442
    %vm4461 = vcmask 670800
    %4462 = vst.msk [vmem:[#allocation2 + $0xa0] sm:$0xff] %vm4461, %v4444
    %4463 = vst.msk [vmem:[#allocation2 + $0xc0] sm:$0xff] %vm4461, %v4446
    %4464 = vst.msk [vmem:[#allocation2 + $0xe0] sm:$0xff] %vm4461, %v4448
    %4465 = vst.msk [vmem:[#allocation2 + $0x100] sm:$0xff] %vm4461, %v4450
    %vm4466 = vcmask 663632
    %4467 = vst.msk [vmem:[#allocation2 + $0x120] sm:$0x1] %vm4466, %v4452
    %4468 = vrot.lane.b32.xlu0 %v4400, 9
    %v4469 = vpop.permute.xlu0 %4468
    %4470 = vrot.lane.b32.xlu0 %v4402, 9
    %v4471 = vpop.permute.xlu0 %4470
    %4472 = vrot.lane.b32.xlu0 %v4404, 9
    %v4473 = vpop.permute.xlu0 %4472
    %4474 = vrot.lane.b32.xlu0 %v4406, 9
    %v4475 = vpop.permute.xlu0 %4474
    %4476 = vrot.lane.b32.xlu0 %v4408, 9
    %v4477 = vpop.permute.xlu0 %4476
    %vm4483 = vcmask 662601
    %4484 = vst.msk [vmem:[#allocation2 + $0x120] sm:$0xfe] %vm4483, %v4469
    %vm4485 = vcmask 662600
    %4486 = vst.msk [vmem:[#allocation2 + $0x140] sm:$0xff] %vm4485, %v4471
    %4487 = vst.msk [vmem:[#allocation2 + $0x160] sm:$0xff] %vm4485, %v4473
    %4488 = vst.msk [vmem:[#allocation2 + $0x180] sm:$0xff] %vm4485, %v4475
    %4489 = vst.msk [vmem:[#allocation2 + $0x1a0] sm:$0x1f] %vm4239, %v4477
    %4490 = vrot.lane.b32.xlu0 %v4432, 8
    %v4491 = vpop.permute.xlu0 %4490
    %4492 = vrot.lane.b32.xlu0 %v4434, 8
    %v4493 = vpop.permute.xlu0 %4492
    %4494 = vrot.lane.b32.xlu0 %v4436, 8
    %v4495 = vpop.permute.xlu0 %4494
    %4496 = vrot.lane.b32.xlu0 %v4438, 8
    %v4497 = vpop.permute.xlu0 %4496
    %4498 = vrot.lane.b32.xlu0 %v4440, 8
    %v4499 = vpop.permute.xlu0 %4498
    %4500 = vrot.lane.b32.xlu0 %v4439, 8
    %v4501 = vpop.permute.xlu0 %4500
    %4508 = vst.msk [vmem:[#allocation2 + $0x1a0] sm:$0xe0] %vm4245, %v4491
    %vm4509 = vcmask 654400
    %4510 = vst.msk [vmem:[#allocation2 + $0x1c0] sm:$0xff] %vm4509, %v4493
    %4511 = vst.msk [vmem:[#allocation2 + $0x1e0] sm:$0xff] %vm4509, %v4495
    %4512 = vst.msk [vmem:[#allocation2 + $0x200] sm:$0xff] %vm4509, %v4497
    %4513 = vst.msk [vmem:[#allocation2 + $0x220] sm:$0xff] %vm4509, %v4499
    %vm4514 = vcmask 647232
    %4515 = vst.msk [vmem:[#allocation2 + $0x240] sm:$0x1] %vm4514, %v4501
    %4516 = vrot.lane.b32.xlu0 %v4400, 7
    %v4517 = vpop.permute.xlu0 %4516
    %4518 = vrot.lane.b32.xlu0 %v4402, 7
    %v4519 = vpop.permute.xlu0 %4518
    %4520 = vrot.lane.b32.xlu0 %v4404, 7
    %v4521 = vpop.permute.xlu0 %4520
    %4522 = vrot.lane.b32.xlu0 %v4406, 7
    %v4523 = vpop.permute.xlu0 %4522
    %4524 = vrot.lane.b32.xlu0 %v4408, 7
    %v4525 = vpop.permute.xlu0 %4524
    %vm4531 = vcmask 646201
    %4532 = vst.msk [vmem:[#allocation2 + $0x240] sm:$0xfe] %vm4531, %v4517
    %vm4533 = vcmask 646200
    %4534 = vst.msk [vmem:[#allocation2 + $0x260] sm:$0xff] %vm4533, %v4519
    %4535 = vst.msk [vmem:[#allocation2 + $0x280] sm:$0xff] %vm4533, %v4521
    %4536 = vst.msk [vmem:[#allocation2 + $0x2a0] sm:$0xff] %vm4533, %v4523
    %vm4537 = vcmask 643128
    %4538 = vst.msk [vmem:[#allocation2 + $0x2c0] sm:$0x1f] %vm4537, %v4525
    %4539 = vrot.lane.b32.xlu0 %v4432, 6
    %v4540 = vpop.permute.xlu0 %4539
    %4541 = vrot.lane.b32.xlu0 %v4434, 6
    %v4542 = vpop.permute.xlu0 %4541
    %4543 = vrot.lane.b32.xlu0 %v4436, 6
    %v4544 = vpop.permute.xlu0 %4543
    %4545 = vrot.lane.b32.xlu0 %v4438, 6
    %v4546 = vpop.permute.xlu0 %4545
    %4547 = vrot.lane.b32.xlu0 %v4440, 6
    %v4548 = vpop.permute.xlu0 %4547
    %4549 = vrot.lane.b32.xlu0 %v4439, 6
    %v4550 = vpop.permute.xlu0 %4549
    %vm4557 = vcmask 638005
    %4558 = vst.msk [vmem:[#allocation2 + $0x2c0] sm:$0xe0] %vm4557, %v4540
    %vm4559 = vcmask 638000
    %4560 = vst.msk [vmem:[#allocation2 + $0x2e0] sm:$0xff] %vm4559, %v4542
    %4561 = vst.msk [vmem:[#allocation2 + $0x300] sm:$0xff] %vm4559, %v4544
    %4562 = vst.msk [vmem:[#allocation2 + $0x320] sm:$0xff] %vm4559, %v4546
    %4563 = vst.msk [vmem:[#allocation2 + $0x340] sm:$0xff] %vm4559, %v4548
    %vm4564 = vcmask 630832
    %4565 = vst.msk [vmem:[#allocation2 + $0x360] sm:$0x1] %vm4564, %v4550
    %4566 = vrot.lane.b32.xlu0 %v4400, 5
    %v4567 = vpop.permute.xlu0 %4566
    %4568 = vrot.lane.b32.xlu0 %v4402, 5
    %v4569 = vpop.permute.xlu0 %4568
    %4570 = vrot.lane.b32.xlu0 %v4404, 5
    %v4571 = vpop.permute.xlu0 %4570
    %4572 = vrot.lane.b32.xlu0 %v4406, 5
    %v4573 = vpop.permute.xlu0 %4572
    %4574 = vrot.lane.b32.xlu0 %v4408, 5
    %v4575 = vpop.permute.xlu0 %4574
    %vm4581 = vcmask 629801
    %4582 = vst.msk [vmem:[#allocation2 + $0x360] sm:$0xfe] %vm4581, %v4567
    %vm4583 = vcmask 629800
    %4584 = vst.msk [vmem:[#allocation2 + $0x380] sm:$0xff] %vm4583, %v4569
    %4585 = vst.msk [vmem:[#allocation2 + $0x3a0] sm:$0xff] %vm4583, %v4571
    %4586 = vst.msk [vmem:[#allocation2 + $0x3c0] sm:$0xff] %vm4583, %v4573
    %vm4587 = vcmask 626728
    %4588 = vst.msk [vmem:[#allocation2 + $0x3e0] sm:$0x1f] %vm4587, %v4575
    %v4589 = vld [vmem:[#allocation2] sm:$0xff]
    %v4590 = vld [vmem:[#allocation2 + $0x20] sm:$0xff]
    %v4591 = vld [vmem:[#allocation2 + $0x40] sm:$0xff]
    %v4592 = vld [vmem:[#allocation2 + $0x60] sm:$0xff]
    %v4593 = vld [vmem:[#allocation2 + $0x80] sm:$0xff]
    %v4594 = vld [vmem:[#allocation2 + $0xa0] sm:$0xff]
    %v4595 = vld [vmem:[#allocation2 + $0xc0] sm:$0xff]
    %v4596 = vld [vmem:[#allocation2 + $0xe0] sm:$0xff]
    %v4597 = vld [vmem:[#allocation2 + $0x100] sm:$0xff]
    %v4598 = vld [vmem:[#allocation2 + $0x120] sm:$0xff]
    %v4599 = vld [vmem:[#allocation2 + $0x140] sm:$0xff]
    %v4600 = vld [vmem:[#allocation2 + $0x160] sm:$0xff]
    %v4601 = vld [vmem:[#allocation2 + $0x180] sm:$0xff]
    %v4602 = vld [vmem:[#allocation2 + $0x1a0] sm:$0xff]
    %v4603 = vld [vmem:[#allocation2 + $0x1c0] sm:$0xff]
    %v4604 = vld [vmem:[#allocation2 + $0x1e0] sm:$0xff]
    %v4605 = vld [vmem:[#allocation2 + $0x200] sm:$0xff]
    %v4606 = vld [vmem:[#allocation2 + $0x220] sm:$0xff]
    %v4607 = vld [vmem:[#allocation2 + $0x240] sm:$0xff]
    %v4608 = vld [vmem:[#allocation2 + $0x260] sm:$0xff]
    %v4609 = vld [vmem:[#allocation2 + $0x280] sm:$0xff]
    %v4610 = vld [vmem:[#allocation2 + $0x2a0] sm:$0xff]
    %v4611 = vld [vmem:[#allocation2 + $0x2c0] sm:$0xff]
    %v4612 = vld [vmem:[#allocation2 + $0x2e0] sm:$0xff]
    %v4613 = vld [vmem:[#allocation2 + $0x300] sm:$0xff]
    %v4614 = vld [vmem:[#allocation2 + $0x320] sm:$0xff]
    %v4615 = vld [vmem:[#allocation2 + $0x340] sm:$0xff]
    %v4616 = vld [vmem:[#allocation2 + $0x360] sm:$0xff]
    %v4617 = vld [vmem:[#allocation2 + $0x380] sm:$0xff]
    %v4618 = vld [vmem:[#allocation2 + $0x3a0] sm:$0xff]
    %v4619 = vld [vmem:[#allocation2 + $0x3c0] sm:$0xff]
    %v4620 = vld [vmem:[#allocation2 + $0x3e0] sm:$0x1f]
    %v4621 = vpack.c.bf16 %v4590, %v4589
    %v4622 = vpack.c.bf16 %v4592, %v4591
    %v4623 = vpack.c.bf16 %v4594, %v4593
    %v4624 = vpack.c.bf16 %v4596, %v4595
    %v4625 = vpack.c.bf16 %v4598, %v4597
    %v4626 = vpack.c.bf16 %v4600, %v4599
    %v4627 = vpack.c.bf16 %v4602, %v4601
    %v4628 = vpack.c.bf16 %v4604, %v4603
    %v4629 = vpack.c.bf16 %v4606, %v4605
    %v4630 = vpack.c.bf16 %v4608, %v4607
    %v4631 = vpack.c.bf16 %v4610, %v4609
    %v4632 = vpack.c.bf16 %v4612, %v4611
    %v4633 = vpack.c.bf16 %v4614, %v4613
    %v4634 = vpack.c.bf16 %v4616, %v4615
    %v4635 = vpack.c.bf16 %v4618, %v4617
    %v4636 = vpack.c.bf16 %v4620, %v4619
    %v4637 = vld [vmem:[#allocation6 + $0xd8] sm:$0xff]
    %v4638 = vld [vmem:[#allocation6 + $0xe0] sm:$0xff]
    %v4639 = vld [vmem:[#allocation6 + $0xe8] sm:$0xff]
    %v4640 = vld [vmem:[#allocation6 + $0xf0] sm:$0xff]
    %v4641 = vld [vmem:[#allocation6 + $0xf8] sm:$0x33]
    %v4647 = vunpack.c.l.b16 %v4637
    %v4648 = vunpack.c.h.b16 %v4637
    %v4649 = vunpack.c.l.b16 %v4638
    %v4650 = vunpack.c.h.b16 %v4638
    %v4651 = vunpack.c.l.b16 %v4639
    %v4652 = vunpack.c.h.b16 %v4639
    %v4653 = vunpack.c.l.b16 %v4640
    %v4654 = vunpack.c.h.b16 %v4640
    %v4655 = vunpack.c.l.b16 %v4641
    %v4656 = vunpack.c.h.b16 %v4641
    %v4657 = vpack.c.b16 %v4649, %v4647
    %v4658 = vpack.c.b16 %v4650, %v4648
    %v4659 = vpack.c.b16 %v4653, %v4651
    %v4660 = vpack.c.b16 %v4654, %v4652
    %v4661 = vpack.c.b16 %v4655, %v4655
    %v4662 = vpack.c.b16 %v4656, %v4656
    %4682 = vrot.lane.b32.xlu0 %v4621, 120
    %v4683 = vpop.permute.xlu0 %4682
    %4684 = vrot.lane.b32.xlu0 %v4622, 120
    %v4685 = vpop.permute.xlu0 %4684
    %4686 = vrot.lane.b32.xlu0 %v4623, 120
    %v4687 = vpop.permute.xlu0 %4686
    %4688 = vrot.lane.b32.xlu0 %v4624, 120
    %v4689 = vpop.permute.xlu0 %4688
    %4690 = vrot.lane.b32.xlu0 %v4625, 120
    %v4691 = vpop.permute.xlu0 %4690
    %4692 = vrot.lane.b32.xlu0 %v4626, 120
    %v4693 = vpop.permute.xlu0 %4692
    %4694 = vrot.lane.b32.xlu0 %v4627, 120
    %v4695 = vpop.permute.xlu0 %4694
    %4696 = vrot.lane.b32.xlu0 %v4628, 120
    %v4697 = vpop.permute.xlu0 %4696
    %4698 = vrot.lane.b32.xlu0 %v4629, 120
    %v4699 = vpop.permute.xlu0 %4698
    %4700 = vrot.lane.b32.xlu0 %v4630, 120
    %v4701 = vpop.permute.xlu0 %4700
    %4702 = vrot.lane.b32.xlu0 %v4631, 120
    %v4703 = vpop.permute.xlu0 %4702
    %4704 = vrot.lane.b32.xlu0 %v4632, 120
    %v4705 = vpop.permute.xlu0 %4704
    %4706 = vrot.lane.b32.xlu0 %v4633, 120
    %v4707 = vpop.permute.xlu0 %4706
    %4708 = vrot.lane.b32.xlu0 %v4634, 120
    %v4709 = vpop.permute.xlu0 %4708
    %4710 = vrot.lane.b32.xlu0 %v4635, 120
    %v4711 = vpop.permute.xlu0 %4710
    %4712 = vrot.lane.b32.xlu0 %v4636, 120
    %v4713 = vpop.permute.xlu0 %4712
    %vm4729 = vcmask 1022976
    %v4731 = vsel %vm4729, %v4658, 0
    %v4734 = vsel %vm4729, %v4660, 0
    %v4737 = vsel %vm4729, %v4662, 0
    %v4739 = vsel %vm660, 4294967295, 65535
    %v4740 = vsel %vm3201, %v4739, 0
    %v4742 = vand.u32 %v4713, %v4740
    %4744 = vmatprep.subr.bf16.mxu0 0
    %4745 = vmatpush1.bf16.msra.mxu0 %v4697
    %4746 = vmatprep.subr.bf16.mxu0 0
    %4747 = vmatpush1.bf16.msra.mxu0 %v4695
    %4748 = vmatprep.subr.bf16.mxu0 0
    %4749 = vmatpush1.bf16.msra.mxu0 %v4693
    %4750 = vmatprep.subr.bf16.mxu0 0
    %4751 = vmatpush1.bf16.msra.mxu0 %v4691
    %4752 = vmatprep.subr.bf16.mxu0 0
    %4753 = vmatpush1.bf16.msra.mxu0 %v4689
    %4754 = vmatprep.subr.bf16.mxu0 0
    %4755 = vmatpush1.bf16.msra.mxu0 %v4687
    %4756 = vmatprep.subr.bf16.mxu0 0
    %4757 = vmatpush1.bf16.msra.mxu0 %v4685
    %4758 = vmatprep.subr.bf16.mxu0 0
    %4759 = vmatpush1.bf16.msra.mxu0 %v4683
    %4760 = vmatprep.subr.bf16.mxu0 0
    %4761 = vmatpush2.bf16.msra.mxu0 %v4742
    %4762 = vmatprep.subr.bf16.mxu0 0
    %4763 = vmatpush2.bf16.msra.mxu0 %v4711
    %4764 = vmatprep.subr.bf16.mxu0 0
    %4765 = vmatpush2.bf16.msra.mxu0 %v4709
    %4766 = vmatprep.subr.bf16.mxu0 0
    %4767 = vmatpush2.bf16.msra.mxu0 %v4707
    %4768 = vmatprep.subr.bf16.mxu0 0
    %4769 = vmatpush2.bf16.msra.mxu0 %v4705
    %4770 = vmatprep.subr.bf16.mxu0 0
    %4771 = vmatpush2.bf16.msra.mxu0 %v4703
    %4772 = vmatprep.subr.bf16.mxu0 0
    %4773 = vmatpush2.bf16.msra.mxu0 %v4701
    %4774 = vmatprep.subr.bf16.mxu0 0
    %4775 = vmatpush2.bf16.msra.mxu0 %v4699
    %4776 = vmatprep.mubr.bf16.mxu0 %v4731
    %4777 = vmatmul.mubr.bf16.gmra.mxu0 %v4657
    %v4778 = vpop.f32.mrf.mxu0
    %v4779 = vadd.f32 0.0, %v4778
    %v4780 = vpop.f32.mrf.mxu0
    %v4781 = vpop.f32.mrf.mxu0
    %v4782 = vadd.f32 0.0, %v4781
    %v4783 = vpop.f32.mrf.mxu0
    %4784 = vmatprep.mubr.bf16.mxu0 %v4734
    %4785 = vmatmul.mubr.bf16.gmra.mxu0 %v4659
    %v4786 = vpop.f32.mrf.mxu0
    %v4787 = vadd.f32 0.0, %v4786
    %v4788 = vpop.f32.mrf.mxu0
    %v4789 = vpop.f32.mrf.mxu0
    %v4790 = vadd.f32 0.0, %v4789
    %v4791 = vpop.f32.mrf.mxu0
    %4792 = vmatprep.mubr.bf16.mxu0 %v4737
    %4793 = vmatmul.mubr.bf16.gmra.mxu0 %v4661
    %v4794 = vpop.f32.mrf.mxu0
    %v4795 = vadd.f32 0.0, %v4794
    %v4796 = vpop.f32.mrf.mxu0
    %v4797 = vpop.f32.mrf.mxu0
    %v4798 = vpop.f32.mrf.mxu0
    %4799 = vdwg.mxu0
    %v4800 = vmax.f32 %v4779, 0.0
    %v4801 = vmax.f32 %v4782, 0.0
    %v4802 = vmax.f32 %v4787, 0.0
    %v4803 = vmax.f32 %v4790, 0.0
    %v4804 = vmax.f32 %v4795, 0.0
    %v4808 = vrot.slane %v4802, 2
    %v4809 = vrot.slane %v4803, 2
    %v4810 = vsel %vm660, %v4808, %v4809
    %v4811 = vrot.slane %v4804, 2
    %v4812 = vsel %vm660, %v4809, %v4811
    %v4816 = vadd.f32 %v4800, %v4810
    %v4817 = vadd.f32 %v4801, %v4812
    %v4818 = vadd.f32 %v4802, %v4811
    %v4822 = vrot.slane %v4366, 4
    %v4823 = vrot.slane %v4369, 4
    %v4824 = vsel %vm2445, %v4822, %v4823
    %v4825 = vrot.slane %v4374, 4
    %v4826 = vsel %vm2445, %v4823, %v4825
    %v4830 = vadd.f32 %v4816, %v4824
    %v4831 = vadd.f32 %v4817, %v4826
    %v4832 = vadd.f32 %v4818, %v4825
    %v4833 = vsel %vm4389, %v4830, 0.0
    %v4834 = vsel %vm4389, %v4831, 0.0
    %v4835 = vsel %vm4389, %v4832, 0.0
    %v4839 = vrot.slane %v4833, 7
    %v4840 = vrot.slane %v4834, 7
    %v4841 = vsel %vm2710, %v4839, %v4840
    %v4842 = vrot.slane %v4835, 7
    %v4843 = vsel %vm2710, %v4840, %v4842
    %4844 = vrot.lane.b32.xlu0 %v4839, 10
    %v4845 = vpop.permute.xlu0 %4844
    %4846 = vrot.lane.b32.xlu0 %v4841, 10
    %v4847 = vpop.permute.xlu0 %4846
    %4848 = vrot.lane.b32.xlu0 %v4843, 10
    %v4849 = vpop.permute.xlu0 %4848
    %vm4853 = vcmask 670801
    %4854 = vst.msk [vmem:[#allocation2] sm:$0xfe] %vm4853, %v4845
    %4855 = vst.msk [vmem:[#allocation2 + $0x20] sm:$0xff] %vm4461, %v4847
    %vm4856 = vcmask 665680
    %4857 = vst.msk [vmem:[#allocation2 + $0x40] sm:$0x7] %vm4856, %v4849
    %v4858 = vrot.slane %v4833, 5
    %v4859 = vrot.slane %v4834, 5
    %v4860 = vsel %vm238, %v4858, %v4859
    %v4861 = vrot.slane %v4835, 5
    %v4862 = vsel %vm238, %v4859, %v4861
    %4863 = vrot.lane.b32.xlu0 %v4858, 9
    %v4864 = vpop.permute.xlu0 %4863
    %4865 = vrot.lane.b32.xlu0 %v4860, 9
    %v4866 = vpop.permute.xlu0 %4865
    %4867 = vrot.lane.b32.xlu0 %v4862, 9
    %v4868 = vpop.permute.xlu0 %4867
    %vm4872 = vcmask 662603
    %4873 = vst.msk [vmem:[#allocation2 + $0x40] sm:$0xf8] %vm4872, %v4864
    %4874 = vst.msk [vmem:[#allocation2 + $0x60] sm:$0xff] %vm4485, %v4866
    %4875 = vst.msk [vmem:[#allocation2 + $0x80] sm:$0x1f] %vm4239, %v4868
    %v4876 = vrot.slane %v4833, 3
    %v4877 = vrot.slane %v4834, 3
    %v4878 = vsel %vm659, %v4876, %v4877
    %v4879 = vrot.slane %v4835, 3
    %v4880 = vsel %vm659, %v4877, %v4879
    %4881 = vrot.lane.b32.xlu0 %v4876, 8
    %v4882 = vpop.permute.xlu0 %4881
    %4883 = vrot.lane.b32.xlu0 %v4878, 8
    %v4884 = vpop.permute.xlu0 %4883
    %4885 = vrot.lane.b32.xlu0 %v4880, 8
    %v4886 = vpop.permute.xlu0 %4885
    %4890 = vst.msk [vmem:[#allocation2 + $0x80] sm:$0xe0] %vm4245, %v4882
    %4891 = vst.msk [vmem:[#allocation2 + $0xa0] sm:$0xff] %vm4509, %v4884
    %vm4892 = vcmask 653376
    %4893 = vst.msk [vmem:[#allocation2 + $0xc0] sm:$0x7f] %vm4892, %v4886
    %v4894 = vrot.slane %v4833, 1
    %v4895 = vrot.slane %v4834, 1
    %v4896 = vsel %vm3201, %v4894, %v4895
    %v4897 = vrot.slane %v4835, 1
    %v4898 = vsel %vm3201, %v4895, %v4897
    %4899 = vrot.lane.b32.xlu0 %v4894, 7
    %v4900 = vpop.permute.xlu0 %4899
    %4901 = vrot.lane.b32.xlu0 %v4896, 7
    %v4902 = vpop.permute.xlu0 %4901
    %4903 = vrot.lane.b32.xlu0 %v4898, 7
    %v4904 = vpop.permute.xlu0 %4903
    %4905 = vrot.lane.b32.xlu0 %v4897, 7
    %v4906 = vpop.permute.xlu0 %4905
    %vm4911 = vcmask 646207
    %4912 = vst.msk [vmem:[#allocation2 + $0xc0] sm:$0x80] %vm4911, %v4900
    %4913 = vst.msk [vmem:[#allocation2 + $0xe0] sm:$0xff] %vm4533, %v4902
    %4914 = vst.msk [vmem:[#allocation2 + $0x100] sm:$0xff] %vm4533, %v4904
    %4915 = vst.msk [vmem:[#allocation2 + $0x120] sm:$0x1] %vm4255, %v4906
    %4916 = vrot.lane.b32.xlu0 %v4839, 6
    %v4917 = vpop.permute.xlu0 %4916
    %4918 = vrot.lane.b32.xlu0 %v4841, 6
    %v4919 = vpop.permute.xlu0 %4918
    %4920 = vrot.lane.b32.xlu0 %v4843, 6
    %v4921 = vpop.permute.xlu0 %4920
    %vm4925 = vcmask 638001
    %4926 = vst.msk [vmem:[#allocation2 + $0x120] sm:$0xfe] %vm4925, %v4917
    %4927 = vst.msk [vmem:[#allocation2 + $0x140] sm:$0xff] %vm4559, %v4919
    %vm4928 = vcmask 632880
    %4929 = vst.msk [vmem:[#allocation2 + $0x160] sm:$0x7] %vm4928, %v4921
    %v4930 = vld [vmem:[#allocation2] sm:$0xff]
    %v4931 = vld [vmem:[#allocation2 + $0x20] sm:$0xff]
    %v4932 = vld [vmem:[#allocation2 + $0x40] sm:$0xff]
    %v4933 = vld [vmem:[#allocation2 + $0x60] sm:$0xff]
    %v4934 = vld [vmem:[#allocation2 + $0x80] sm:$0xff]
    %v4935 = vld [vmem:[#allocation2 + $0xa0] sm:$0xff]
    %v4936 = vld [vmem:[#allocation2 + $0xc0] sm:$0xff]
    %v4937 = vld [vmem:[#allocation2 + $0xe0] sm:$0xff]
    %v4938 = vld [vmem:[#allocation2 + $0x100] sm:$0xff]
    %v4939 = vld [vmem:[#allocation2 + $0x120] sm:$0xff]
    %v4940 = vld [vmem:[#allocation2 + $0x140] sm:$0xff]
    %v4941 = vld [vmem:[#allocation2 + $0x160] sm:$0x7]
    %v4942 = vpack.c.bf16 %v4931, %v4930
    %v4943 = vpack.c.bf16 %v4933, %v4932
    %v4944 = vpack.c.bf16 %v4935, %v4934
    %v4945 = vpack.c.bf16 %v4937, %v4936
    %v4946 = vpack.c.bf16 %v4939, %v4938
    %v4947 = vpack.c.bf16 %v4941, %v4940
    %v4948 = vld [vmem:[#allocation6 + $0x100] sm:$0xf]
    %v4949 = vld [vmem:[#allocation6 + $0x108] sm:$0xf]
    %v4950 = vld [vmem:[#allocation6 + $0x110] sm:$0xf]
    %v4951 = vld [vmem:[#allocation6 + $0x118] sm:$0xf]
    %v4952 = vld [vmem:[#allocation6 + $0x120] sm:$0x3]
    %v4958 = vunpack.c.l.b16 %v4948
    %v4959 = vunpack.c.l.b16 %v4949
    %v4960 = vunpack.c.l.b16 %v4950
    %v4961 = vunpack.c.l.b16 %v4951
    %v4962 = vunpack.c.l.b16 %v4952
    %v4963 = vpack.c.b16 %v4959, %v4958
    %v4964 = vpack.c.b16 %v4961, %v4960
    %v4965 = vpack.c.b16 %v4962, %v4962
    %4972 = vrot.lane.b32.xlu0 %v4942, 120
    %v4973 = vpop.permute.xlu0 %4972
    %4974 = vrot.lane.b32.xlu0 %v4943, 120
    %v4975 = vpop.permute.xlu0 %4974
    %4976 = vrot.lane.b32.xlu0 %v4944, 120
    %v4977 = vpop.permute.xlu0 %4976
    %4978 = vrot.lane.b32.xlu0 %v4945, 120
    %v4979 = vpop.permute.xlu0 %4978
    %4980 = vrot.lane.b32.xlu0 %v4946, 120
    %v4981 = vpop.permute.xlu0 %4980
    %4982 = vrot.lane.b32.xlu0 %v4947, 120
    %v4983 = vpop.permute.xlu0 %4982
    %vm4989 = vcmask 744448
    %v4991 = vsel %vm4989, %v4963, 0
    %v4994 = vsel %vm4989, %v4964, 0
    %v4997 = vsel %vm4989, %v4965, 0
    %v5000 = vand.u32 %v4983, %v662
    %5002 = vmatprep.subr.bf16.mxu0 0
    %5003 = vmatpush1.bf16.msra.mxu0 0
    %5004 = vmatprep.subr.bf16.mxu0 0
    %5005 = vmatpush1.bf16.msra.mxu0 0
    %5006 = vmatprep.subr.bf16.mxu0 0
    %5007 = vmatpush1.bf16.msra.mxu0 %v5000
    %5008 = vmatprep.subr.bf16.mxu0 0
    %5009 = vmatpush1.bf16.msra.mxu0 %v4981
    %5010 = vmatprep.subr.bf16.mxu0 0
    %5011 = vmatpush1.bf16.msra.mxu0 %v4979
    %5012 = vmatprep.subr.bf16.mxu0 0
    %5013 = vmatpush1.bf16.msra.mxu0 %v4977
    %5014 = vmatprep.subr.bf16.mxu0 0
    %5015 = vmatpush1.bf16.msra.mxu0 %v4975
    %5016 = vmatprep.subr.bf16.mxu0 0
    %5017 = vmatpush1.bf16.msra.mxu0 %v4973
    %5018 = vmatprep.subr.bf16.mxu0 0
    %5019 = vmatpush2.bf16.msra.mxu0 0
    %5020 = vmatprep.subr.bf16.mxu0 0
    %5021 = vmatpush2.bf16.msra.mxu0 0
    %5022 = vmatprep.subr.bf16.mxu0 0
    %5023 = vmatpush2.bf16.msra.mxu0 0
    %5024 = vmatprep.subr.bf16.mxu0 0
    %5025 = vmatpush2.bf16.msra.mxu0 0
    %5026 = vmatprep.subr.bf16.mxu0 0
    %5027 = vmatpush2.bf16.msra.mxu0 0
    %5028 = vmatprep.subr.bf16.mxu0 0
    %5029 = vmatpush2.bf16.msra.mxu0 0
    %5030 = vmatprep.subr.bf16.mxu0 0
    %5031 = vmatpush2.bf16.msra.mxu0 0
    %5032 = vmatprep.subr.bf16.mxu0 0
    %5033 = vmatpush2.bf16.msra.mxu0 0
    %5034 = vmatprep.mubr.bf16.mxu0 0
    %5035 = vmatmul.mubr.bf16.gmra.mxu0 %v4991
    %v5036 = vpop.f32.mrf.mxu0
    %v5037 = vadd.f32 0.0, %v5036
    %v5038 = vpop.f32.mrf.mxu0
    %v5039 = vpop.f32.mrf.mxu0
    %v5040 = vadd.f32 0.0, %v5039
    %v5041 = vpop.f32.mrf.mxu0
    %5042 = vmatprep.mubr.bf16.mxu0 0
    %5043 = vmatmul.mubr.bf16.gmra.mxu0 %v4994
    %v5044 = vpop.f32.mrf.mxu0
    %v5045 = vadd.f32 0.0, %v5044
    %v5046 = vpop.f32.mrf.mxu0
    %v5047 = vpop.f32.mrf.mxu0
    %v5048 = vadd.f32 0.0, %v5047
    %v5049 = vpop.f32.mrf.mxu0
    %5050 = vmatprep.mubr.bf16.mxu0 0
    %5051 = vmatmul.mubr.bf16.gmra.mxu0 %v4997
    %v5052 = vpop.f32.mrf.mxu0
    %v5053 = vadd.f32 0.0, %v5052
    %v5054 = vpop.f32.mrf.mxu0
    %v5055 = vpop.f32.mrf.mxu0
    %v5056 = vpop.f32.mrf.mxu0
    %5057 = vdwg.mxu0
    %v5058 = vmax.f32 %v5037, 0.0
    %v5059 = vmax.f32 %v5040, 0.0
    %v5060 = vmax.f32 %v5045, 0.0
    %v5061 = vmax.f32 %v5048, 0.0
    %v5062 = vmax.f32 %v5053, 0.0
    %v5063 = vsel %vm4389, %v5058, 0.0
    %v5064 = vsel %vm4389, %v5059, 0.0
    %v5065 = vsel %vm4389, %v5060, 0.0
    %v5066 = vsel %vm4389, %v5061, 0.0
    %v5067 = vsel %vm4389, %v5062, 0.0
    %v5073 = vrot.slane %v5063, 7
    %v5074 = vrot.slane %v5064, 7
    %v5075 = vsel %vm2710, %v5073, %v5074
    %v5076 = vrot.slane %v5065, 7
    %v5077 = vsel %vm2710, %v5074, %v5076
    %v5078 = vrot.slane %v5066, 7
    %v5079 = vsel %vm2710, %v5076, %v5078
    %v5080 = vrot.slane %v5067, 7
    %v5081 = vsel %vm2710, %v5078, %v5080
    %5082 = vrot.lane.b32.xlu0 %v5073, 11
    %v5083 = vpop.permute.xlu0 %5082
    %5084 = vrot.lane.b32.xlu0 %v5075, 11
    %v5085 = vpop.permute.xlu0 %5084
    %5086 = vrot.lane.b32.xlu0 %v5077, 11
    %v5087 = vpop.permute.xlu0 %5086
    %5088 = vrot.lane.b32.xlu0 %v5079, 11
    %v5089 = vpop.permute.xlu0 %5088
    %5090 = vrot.lane.b32.xlu0 %v5081, 11
    %v5091 = vpop.permute.xlu0 %5090
    %5097 = vst.msk [vmem:[#allocation2] sm:$0xfe] %vm4424, %v5083
    %5098 = vst.msk [vmem:[#allocation2 + $0x20] sm:$0xff] %vm4426, %v5085
    %5099 = vst.msk [vmem:[#allocation2 + $0x40] sm:$0xff] %vm4426, %v5087
    %5100 = vst.msk [vmem:[#allocation2 + $0x60] sm:$0xff] %vm4426, %v5089
    %5101 = vst.msk [vmem:[#allocation2 + $0x80] sm:$0x1f] %vm4430, %v5091
    %v5102 = vrot.slane %v5063, 3
    %v5103 = vrot.slane %v5064, 3
    %v5104 = vsel %vm659, %v5102, %v5103
    %v5105 = vrot.slane %v5065, 3
    %v5106 = vsel %vm659, %v5103, %v5105
    %v5107 = vrot.slane %v5066, 3
    %v5108 = vsel %vm659, %v5105, %v5107
    %v5109 = vrot.slane %v5067, 3
    %v5110 = vsel %vm659, %v5107, %v5109
    %5111 = vrot.lane.b32.xlu0 %v5102, 10
    %v5112 = vpop.permute.xlu0 %5111
    %5113 = vrot.lane.b32.xlu0 %v5104, 10
    %v5114 = vpop.permute.xlu0 %5113
    %5115 = vrot.lane.b32.xlu0 %v5106, 10
    %v5116 = vpop.permute.xlu0 %5115
    %5117 = vrot.lane.b32.xlu0 %v5108, 10
    %v5118 = vpop.permute.xlu0 %5117
    %5119 = vrot.lane.b32.xlu0 %v5110, 10
    %v5120 = vpop.permute.xlu0 %5119
    %5121 = vrot.lane.b32.xlu0 %v5109, 10
    %v5122 = vpop.permute.xlu0 %5121
    %5129 = vst.msk [vmem:[#allocation2 + $0x80] sm:$0xe0] %vm4459, %v5112
    %5130 = vst.msk [vmem:[#allocation2 + $0xa0] sm:$0xff] %vm4461, %v5114
    %5131 = vst.msk [vmem:[#allocation2 + $0xc0] sm:$0xff] %vm4461, %v5116
    %5132 = vst.msk [vmem:[#allocation2 + $0xe0] sm:$0xff] %vm4461, %v5118
    %5133 = vst.msk [vmem:[#allocation2 + $0x100] sm:$0xff] %vm4461, %v5120
    %5134 = vst.msk [vmem:[#allocation2 + $0x120] sm:$0x1] %vm4466, %v5122
    %5135 = vrot.lane.b32.xlu0 %v5073, 9
    %v5136 = vpop.permute.xlu0 %5135
    %5137 = vrot.lane.b32.xlu0 %v5075, 9
    %v5138 = vpop.permute.xlu0 %5137
    %5139 = vrot.lane.b32.xlu0 %v5077, 9
    %v5140 = vpop.permute.xlu0 %5139
    %5141 = vrot.lane.b32.xlu0 %v5079, 9
    %v5142 = vpop.permute.xlu0 %5141
    %5143 = vrot.lane.b32.xlu0 %v5081, 9
    %v5144 = vpop.permute.xlu0 %5143
    %5150 = vst.msk [vmem:[#allocation2 + $0x120] sm:$0xfe] %vm4483, %v5136
    %5151 = vst.msk [vmem:[#allocation2 + $0x140] sm:$0xff] %vm4485, %v5138
    %5152 = vst.msk [vmem:[#allocation2 + $0x160] sm:$0xff] %vm4485, %v5140
    %5153 = vst.msk [vmem:[#allocation2 + $0x180] sm:$0xff] %vm4485, %v5142
    %5154 = vst.msk [vmem:[#allocation2 + $0x1a0] sm:$0x1f] %vm4239, %v5144
    %5155 = vrot.lane.b32.xlu0 %v5102, 8
    %v5156 = vpop.permute.xlu0 %5155
    %5157 = vrot.lane.b32.xlu0 %v5104, 8
    %v5158 = vpop.permute.xlu0 %5157
    %5159 = vrot.lane.b32.xlu0 %v5106, 8
    %v5160 = vpop.permute.xlu0 %5159
    %5161 = vrot.lane.b32.xlu0 %v5108, 8
    %v5162 = vpop.permute.xlu0 %5161
    %5163 = vrot.lane.b32.xlu0 %v5110, 8
    %v5164 = vpop.permute.xlu0 %5163
    %5165 = vrot.lane.b32.xlu0 %v5109, 8
    %v5166 = vpop.permute.xlu0 %5165
    %5173 = vst.msk [vmem:[#allocation2 + $0x1a0] sm:$0xe0] %vm4245, %v5156
    %5174 = vst.msk [vmem:[#allocation2 + $0x1c0] sm:$0xff] %vm4509, %v5158
    %5175 = vst.msk [vmem:[#allocation2 + $0x1e0] sm:$0xff] %vm4509, %v5160
    %5176 = vst.msk [vmem:[#allocation2 + $0x200] sm:$0xff] %vm4509, %v5162
    %5177 = vst.msk [vmem:[#allocation2 + $0x220] sm:$0xff] %vm4509, %v5164
    %5178 = vst.msk [vmem:[#allocation2 + $0x240] sm:$0x1] %vm4514, %v5166
    %5179 = vrot.lane.b32.xlu0 %v5073, 7
    %v5180 = vpop.permute.xlu0 %5179
    %5181 = vrot.lane.b32.xlu0 %v5075, 7
    %v5182 = vpop.permute.xlu0 %5181
    %5183 = vrot.lane.b32.xlu0 %v5077, 7
    %v5184 = vpop.permute.xlu0 %5183
    %5185 = vrot.lane.b32.xlu0 %v5079, 7
    %v5186 = vpop.permute.xlu0 %5185
    %5187 = vrot.lane.b32.xlu0 %v5081, 7
    %v5188 = vpop.permute.xlu0 %5187
    %5194 = vst.msk [vmem:[#allocation2 + $0x240] sm:$0xfe] %vm4531, %v5180
    %5195 = vst.msk [vmem:[#allocation2 + $0x260] sm:$0xff] %vm4533, %v5182
    %5196 = vst.msk [vmem:[#allocation2 + $0x280] sm:$0xff] %vm4533, %v5184
    %5197 = vst.msk [vmem:[#allocation2 + $0x2a0] sm:$0xff] %vm4533, %v5186
    %5198 = vst.msk [vmem:[#allocation2 + $0x2c0] sm:$0x1f] %vm4537, %v5188
    %5199 = vrot.lane.b32.xlu0 %v5102, 6
    %v5200 = vpop.permute.xlu0 %5199
    %5201 = vrot.lane.b32.xlu0 %v5104, 6
    %v5202 = vpop.permute.xlu0 %5201
    %5203 = vrot.lane.b32.xlu0 %v5106, 6
    %v5204 = vpop.permute.xlu0 %5203
    %5205 = vrot.lane.b32.xlu0 %v5108, 6
    %v5206 = vpop.permute.xlu0 %5205
    %5207 = vrot.lane.b32.xlu0 %v5110, 6
    %v5208 = vpop.permute.xlu0 %5207
    %5209 = vrot.lane.b32.xlu0 %v5109, 6
    %v5210 = vpop.permute.xlu0 %5209
    %5217 = vst.msk [vmem:[#allocation2 + $0x2c0] sm:$0xe0] %vm4557, %v5200
    %5218 = vst.msk [vmem:[#allocation2 + $0x2e0] sm:$0xff] %vm4559, %v5202
    %5219 = vst.msk [vmem:[#allocation2 + $0x300] sm:$0xff] %vm4559, %v5204
    %5220 = vst.msk [vmem:[#allocation2 + $0x320] sm:$0xff] %vm4559, %v5206
    %5221 = vst.msk [vmem:[#allocation2 + $0x340] sm:$0xff] %vm4559, %v5208
    %5222 = vst.msk [vmem:[#allocation2 + $0x360] sm:$0x1] %vm4564, %v5210
    %5223 = vrot.lane.b32.xlu0 %v5073, 5
    %v5224 = vpop.permute.xlu0 %5223
    %5225 = vrot.lane.b32.xlu0 %v5075, 5
    %v5226 = vpop.permute.xlu0 %5225
    %5227 = vrot.lane.b32.xlu0 %v5077, 5
    %v5228 = vpop.permute.xlu0 %5227
    %5229 = vrot.lane.b32.xlu0 %v5079, 5
    %v5230 = vpop.permute.xlu0 %5229
    %5231 = vrot.lane.b32.xlu0 %v5081, 5
    %v5232 = vpop.permute.xlu0 %5231
    %5238 = vst.msk [vmem:[#allocation2 + $0x360] sm:$0xfe] %vm4581, %v5224
    %5239 = vst.msk [vmem:[#allocation2 + $0x380] sm:$0xff] %vm4583, %v5226
    %5240 = vst.msk [vmem:[#allocation2 + $0x3a0] sm:$0xff] %vm4583, %v5228
    %5241 = vst.msk [vmem:[#allocation2 + $0x3c0] sm:$0xff] %vm4583, %v5230
    %5242 = vst.msk [vmem:[#allocation2 + $0x3e0] sm:$0x1f] %vm4587, %v5232
    %v5243 = vld [vmem:[#allocation2] sm:$0xff]
    %v5244 = vld [vmem:[#allocation2 + $0x20] sm:$0xff]
    %v5245 = vld [vmem:[#allocation2 + $0x40] sm:$0xff]
    %v5246 = vld [vmem:[#allocation2 + $0x60] sm:$0xff]
    %v5247 = vld [vmem:[#allocation2 + $0x80] sm:$0xff]
    %v5248 = vld [vmem:[#allocation2 + $0xa0] sm:$0xff]
    %v5249 = vld [vmem:[#allocation2 + $0xc0] sm:$0xff]
    %v5250 = vld [vmem:[#allocation2 + $0xe0] sm:$0xff]
    %v5251 = vld [vmem:[#allocation2 + $0x100] sm:$0xff]
    %v5252 = vld [vmem:[#allocation2 + $0x120] sm:$0xff]
    %v5253 = vld [vmem:[#allocation2 + $0x140] sm:$0xff]
    %v5254 = vld [vmem:[#allocation2 + $0x160] sm:$0xff]
    %v5255 = vld [vmem:[#allocation2 + $0x180] sm:$0xff]
    %v5256 = vld [vmem:[#allocation2 + $0x1a0] sm:$0xff]
    %v5257 = vld [vmem:[#allocation2 + $0x1c0] sm:$0xff]
    %v5258 = vld [vmem:[#allocation2 + $0x1e0] sm:$0xff]
    %v5259 = vld [vmem:[#allocation2 + $0x200] sm:$0xff]
    %v5260 = vld [vmem:[#allocation2 + $0x220] sm:$0xff]
    %v5261 = vld [vmem:[#allocation2 + $0x240] sm:$0xff]
    %v5262 = vld [vmem:[#allocation2 + $0x260] sm:$0xff]
    %v5263 = vld [vmem:[#allocation2 + $0x280] sm:$0xff]
    %v5264 = vld [vmem:[#allocation2 + $0x2a0] sm:$0xff]
    %v5265 = vld [vmem:[#allocation2 + $0x2c0] sm:$0xff]
    %v5266 = vld [vmem:[#allocation2 + $0x2e0] sm:$0xff]
    %v5267 = vld [vmem:[#allocation2 + $0x300] sm:$0xff]
    %v5268 = vld [vmem:[#allocation2 + $0x320] sm:$0xff]
    %v5269 = vld [vmem:[#allocation2 + $0x340] sm:$0xff]
    %v5270 = vld [vmem:[#allocation2 + $0x360] sm:$0xff]
    %v5271 = vld [vmem:[#allocation2 + $0x380] sm:$0xff]
    %v5272 = vld [vmem:[#allocation2 + $0x3a0] sm:$0xff]
    %v5273 = vld [vmem:[#allocation2 + $0x3c0] sm:$0xff]
    %v5274 = vld [vmem:[#allocation2 + $0x3e0] sm:$0x1f]
    %v5275 = vpack.c.bf16 %v5244, %v5243
    %v5276 = vpack.c.bf16 %v5246, %v5245
    %v5277 = vpack.c.bf16 %v5248, %v5247
    %v5278 = vpack.c.bf16 %v5250, %v5249
    %v5279 = vpack.c.bf16 %v5252, %v5251
    %v5280 = vpack.c.bf16 %v5254, %v5253
    %v5281 = vpack.c.bf16 %v5256, %v5255
    %v5282 = vpack.c.bf16 %v5258, %v5257
    %v5283 = vpack.c.bf16 %v5260, %v5259
    %v5284 = vpack.c.bf16 %v5262, %v5261
    %v5285 = vpack.c.bf16 %v5264, %v5263
    %v5286 = vpack.c.bf16 %v5266, %v5265
    %v5287 = vpack.c.bf16 %v5268, %v5267
    %v5288 = vpack.c.bf16 %v5270, %v5269
    %v5289 = vpack.c.bf16 %v5272, %v5271
    %v5290 = vpack.c.bf16 %v5274, %v5273
    %v5291 = vld [vmem:[#allocation6 + $0x128] sm:$0xff]
    %v5292 = vld [vmem:[#allocation6 + $0x130] sm:$0xff]
    %v5293 = vld [vmem:[#allocation6 + $0x138] sm:$0xff]
    %v5294 = vld [vmem:[#allocation6 + $0x140] sm:$0xff]
    %v5295 = vld [vmem:[#allocation6 + $0x148] sm:$0x33]
    %v5301 = vunpack.c.l.b16 %v5291
    %v5302 = vunpack.c.h.b16 %v5291
    %v5303 = vunpack.c.l.b16 %v5292
    %v5304 = vunpack.c.h.b16 %v5292
    %v5305 = vunpack.c.l.b16 %v5293
    %v5306 = vunpack.c.h.b16 %v5293
    %v5307 = vunpack.c.l.b16 %v5294
    %v5308 = vunpack.c.h.b16 %v5294
    %v5309 = vunpack.c.l.b16 %v5295
    %v5310 = vunpack.c.h.b16 %v5295
    %v5311 = vpack.c.b16 %v5303, %v5301
    %v5312 = vpack.c.b16 %v5304, %v5302
    %v5313 = vpack.c.b16 %v5307, %v5305
    %v5314 = vpack.c.b16 %v5308, %v5306
    %v5315 = vpack.c.b16 %v5309, %v5309
    %v5316 = vpack.c.b16 %v5310, %v5310
    %5336 = vrot.lane.b32.xlu0 %v5275, 120
    %v5337 = vpop.permute.xlu0 %5336
    %5338 = vrot.lane.b32.xlu0 %v5276, 120
    %v5339 = vpop.permute.xlu0 %5338
    %5340 = vrot.lane.b32.xlu0 %v5277, 120
    %v5341 = vpop.permute.xlu0 %5340
    %5342 = vrot.lane.b32.xlu0 %v5278, 120
    %v5343 = vpop.permute.xlu0 %5342
    %5344 = vrot.lane.b32.xlu0 %v5279, 120
    %v5345 = vpop.permute.xlu0 %5344
    %5346 = vrot.lane.b32.xlu0 %v5280, 120
    %v5347 = vpop.permute.xlu0 %5346
    %5348 = vrot.lane.b32.xlu0 %v5281, 120
    %v5349 = vpop.permute.xlu0 %5348
    %5350 = vrot.lane.b32.xlu0 %v5282, 120
    %v5351 = vpop.permute.xlu0 %5350
    %5352 = vrot.lane.b32.xlu0 %v5283, 120
    %v5353 = vpop.permute.xlu0 %5352
    %5354 = vrot.lane.b32.xlu0 %v5284, 120
    %v5355 = vpop.permute.xlu0 %5354
    %5356 = vrot.lane.b32.xlu0 %v5285, 120
    %v5357 = vpop.permute.xlu0 %5356
    %5358 = vrot.lane.b32.xlu0 %v5286, 120
    %v5359 = vpop.permute.xlu0 %5358
    %5360 = vrot.lane.b32.xlu0 %v5287, 120
    %v5361 = vpop.permute.xlu0 %5360
    %5362 = vrot.lane.b32.xlu0 %v5288, 120
    %v5363 = vpop.permute.xlu0 %5362
    %5364 = vrot.lane.b32.xlu0 %v5289, 120
    %v5365 = vpop.permute.xlu0 %5364
    %5366 = vrot.lane.b32.xlu0 %v5290, 120
    %v5367 = vpop.permute.xlu0 %5366
    %v5384 = vsel %vm4729, %v5312, 0
    %v5387 = vsel %vm4729, %v5314, 0
    %v5390 = vsel %vm4729, %v5316, 0
    %v5393 = vand.u32 %v5367, %v4740
    %5395 = vmatprep.subr.bf16.mxu0 0
    %5396 = vmatpush1.bf16.msra.mxu0 %v5351
    %5397 = vmatprep.subr.bf16.mxu0 0
    %5398 = vmatpush1.bf16.msra.mxu0 %v5349
    %5399 = vmatprep.subr.bf16.mxu0 0
    %5400 = vmatpush1.bf16.msra.mxu0 %v5347
    %5401 = vmatprep.subr.bf16.mxu0 0
    %5402 = vmatpush1.bf16.msra.mxu0 %v5345
    %5403 = vmatprep.subr.bf16.mxu0 0
    %5404 = vmatpush1.bf16.msra.mxu0 %v5343
    %5405 = vmatprep.subr.bf16.mxu0 0
    %5406 = vmatpush1.bf16.msra.mxu0 %v5341
    %5407 = vmatprep.subr.bf16.mxu0 0
    %5408 = vmatpush1.bf16.msra.mxu0 %v5339
    %5409 = vmatprep.subr.bf16.mxu0 0
    %5410 = vmatpush1.bf16.msra.mxu0 %v5337
    %5411 = vmatprep.subr.bf16.mxu0 0
    %5412 = vmatpush2.bf16.msra.mxu0 %v5393
    %5413 = vmatprep.subr.bf16.mxu0 0
    %5414 = vmatpush2.bf16.msra.mxu0 %v5365
    %5415 = vmatprep.subr.bf16.mxu0 0
    %5416 = vmatpush2.bf16.msra.mxu0 %v5363
    %5417 = vmatprep.subr.bf16.mxu0 0
    %5418 = vmatpush2.bf16.msra.mxu0 %v5361
    %5419 = vmatprep.subr.bf16.mxu0 0
    %5420 = vmatpush2.bf16.msra.mxu0 %v5359
    %5421 = vmatprep.subr.bf16.mxu0 0
    %5422 = vmatpush2.bf16.msra.mxu0 %v5357
    %5423 = vmatprep.subr.bf16.mxu0 0
    %5424 = vmatpush2.bf16.msra.mxu0 %v5355
    %5425 = vmatprep.subr.bf16.mxu0 0
    %5426 = vmatpush2.bf16.msra.mxu0 %v5353
    %5427 = vmatprep.mubr.bf16.mxu0 %v5384
    %5428 = vmatmul.mubr.bf16.gmra.mxu0 %v5311
    %v5429 = vpop.f32.mrf.mxu0
    %v5430 = vadd.f32 0.0, %v5429
    %v5431 = vpop.f32.mrf.mxu0
    %v5432 = vpop.f32.mrf.mxu0
    %v5433 = vadd.f32 0.0, %v5432
    %v5434 = vpop.f32.mrf.mxu0
    %5435 = vmatprep.mubr.bf16.mxu0 %v5387
    %5436 = vmatmul.mubr.bf16.gmra.mxu0 %v5313
    %v5437 = vpop.f32.mrf.mxu0
    %v5438 = vadd.f32 0.0, %v5437
    %v5439 = vpop.f32.mrf.mxu0
    %v5440 = vpop.f32.mrf.mxu0
    %v5441 = vadd.f32 0.0, %v5440
    %v5442 = vpop.f32.mrf.mxu0
    %5443 = vmatprep.mubr.bf16.mxu0 %v5390
    %5444 = vmatmul.mubr.bf16.gmra.mxu0 %v5315
    %v5445 = vpop.f32.mrf.mxu0
    %v5446 = vadd.f32 0.0, %v5445
    %v5447 = vpop.f32.mrf.mxu0
    %v5448 = vpop.f32.mrf.mxu0
    %v5449 = vpop.f32.mrf.mxu0
    %5450 = vdwg.mxu0
    %v5451 = vmax.f32 %v5430, 0.0
    %v5452 = vmax.f32 %v5433, 0.0
    %v5453 = vmax.f32 %v5438, 0.0
    %v5454 = vmax.f32 %v5441, 0.0
    %v5455 = vmax.f32 %v5446, 0.0
    %v5459 = vrot.slane %v5453, 2
    %v5460 = vrot.slane %v5454, 2
    %v5461 = vsel %vm660, %v5459, %v5460
    %v5462 = vrot.slane %v5455, 2
    %v5463 = vsel %vm660, %v5460, %v5462
    %v5467 = vadd.f32 %v5451, %v5461
    %v5468 = vadd.f32 %v5452, %v5463
    %v5469 = vadd.f32 %v5453, %v5462
    %v5470 = vadd.f32 %v5467, %v4833
    %v5471 = vadd.f32 %v5468, %v4834
    %v5472 = vadd.f32 %v5469, %v4835
    %v5473 = vsel %vm4389, %v5470, 0.0
    %v5474 = vsel %vm4389, %v5471, 0.0
    %v5475 = vsel %vm4389, %v5472, 0.0
    %v5479 = vrot.slane %v5473, 7
    %v5480 = vrot.slane %v5474, 7
    %v5481 = vsel %vm2710, %v5479, %v5480
    %v5482 = vrot.slane %v5475, 7
    %v5483 = vsel %vm2710, %v5480, %v5482
    %5484 = vrot.lane.b32.xlu0 %v5479, 10
    %v5485 = vpop.permute.xlu0 %5484
    %5486 = vrot.lane.b32.xlu0 %v5481, 10
    %v5487 = vpop.permute.xlu0 %5486
    %5488 = vrot.lane.b32.xlu0 %v5483, 10
    %v5489 = vpop.permute.xlu0 %5488
    %5493 = vst.msk [vmem:[#allocation2] sm:$0xfe] %vm4853, %v5485
    %5494 = vst.msk [vmem:[#allocation2 + $0x20] sm:$0xff] %vm4461, %v5487
    %5495 = vst.msk [vmem:[#allocation2 + $0x40] sm:$0x7] %vm4856, %v5489
    %v5496 = vrot.slane %v5473, 5
    %v5497 = vrot.slane %v5474, 5
    %v5498 = vsel %vm238, %v5496, %v5497
    %v5499 = vrot.slane %v5475, 5
    %v5500 = vsel %vm238, %v5497, %v5499
    %5501 = vrot.lane.b32.xlu0 %v5496, 9
    %v5502 = vpop.permute.xlu0 %5501
    %5503 = vrot.lane.b32.xlu0 %v5498, 9
    %v5504 = vpop.permute.xlu0 %5503
    %5505 = vrot.lane.b32.xlu0 %v5500, 9
    %v5506 = vpop.permute.xlu0 %5505
    %5510 = vst.msk [vmem:[#allocation2 + $0x40] sm:$0xf8] %vm4872, %v5502
    %5511 = vst.msk [vmem:[#allocation2 + $0x60] sm:$0xff] %vm4485, %v5504
    %5512 = vst.msk [vmem:[#allocation2 + $0x80] sm:$0x1f] %vm4239, %v5506
    %v5513 = vrot.slane %v5473, 3
    %v5514 = vrot.slane %v5474, 3
    %v5515 = vsel %vm659, %v5513, %v5514
    %v5516 = vrot.slane %v5475, 3
    %v5517 = vsel %vm659, %v5514, %v5516
    %5518 = vrot.lane.b32.xlu0 %v5513, 8
    %v5519 = vpop.permute.xlu0 %5518
    %5520 = vrot.lane.b32.xlu0 %v5515, 8
    %v5521 = vpop.permute.xlu0 %5520
    %5522 = vrot.lane.b32.xlu0 %v5517, 8
    %v5523 = vpop.permute.xlu0 %5522
    %5527 = vst.msk [vmem:[#allocation2 + $0x80] sm:$0xe0] %vm4245, %v5519
    %5528 = vst.msk [vmem:[#allocation2 + $0xa0] sm:$0xff] %vm4509, %v5521
    %5529 = vst.msk [vmem:[#allocation2 + $0xc0] sm:$0x7f] %vm4892, %v5523
    %v5530 = vrot.slane %v5473, 1
    %v5531 = vrot.slane %v5474, 1
    %v5532 = vsel %vm3201, %v5530, %v5531
    %v5533 = vrot.slane %v5475, 1
    %v5534 = vsel %vm3201, %v5531, %v5533
    %5535 = vrot.lane.b32.xlu0 %v5530, 7
    %v5536 = vpop.permute.xlu0 %5535
    %5537 = vrot.lane.b32.xlu0 %v5532, 7
    %v5538 = vpop.permute.xlu0 %5537
    %5539 = vrot.lane.b32.xlu0 %v5534, 7
    %v5540 = vpop.permute.xlu0 %5539
    %5541 = vrot.lane.b32.xlu0 %v5533, 7
    %v5542 = vpop.permute.xlu0 %5541
    %5547 = vst.msk [vmem:[#allocation2 + $0xc0] sm:$0x80] %vm4911, %v5536
    %5548 = vst.msk [vmem:[#allocation2 + $0xe0] sm:$0xff] %vm4533, %v5538
    %5549 = vst.msk [vmem:[#allocation2 + $0x100] sm:$0xff] %vm4533, %v5540
    %5550 = vst.msk [vmem:[#allocation2 + $0x120] sm:$0x1] %vm4255, %v5542
    %5551 = vrot.lane.b32.xlu0 %v5479, 6
    %v5552 = vpop.permute.xlu0 %5551
    %5553 = vrot.lane.b32.xlu0 %v5481, 6
    %v5554 = vpop.permute.xlu0 %5553
    %5555 = vrot.lane.b32.xlu0 %v5483, 6
    %v5556 = vpop.permute.xlu0 %5555
    %5560 = vst.msk [vmem:[#allocation2 + $0x120] sm:$0xfe] %vm4925, %v5552
    %5561 = vst.msk [vmem:[#allocation2 + $0x140] sm:$0xff] %vm4559, %v5554
    %5562 = vst.msk [vmem:[#allocation2 + $0x160] sm:$0x7] %vm4928, %v5556
    %v5563 = vld [vmem:[#allocation2] sm:$0xff]
    %v5564 = vld [vmem:[#allocation2 + $0x20] sm:$0xff]
    %v5565 = vld [vmem:[#allocation2 + $0x40] sm:$0xff]
    %v5566 = vld [vmem:[#allocation2 + $0x60] sm:$0xff]
    %v5567 = vld [vmem:[#allocation2 + $0x80] sm:$0xff]
    %v5568 = vld [vmem:[#allocation2 + $0xa0] sm:$0xff]
    %v5569 = vld [vmem:[#allocation2 + $0xc0] sm:$0xff]
    %v5570 = vld [vmem:[#allocation2 + $0xe0] sm:$0xff]
    %v5571 = vld [vmem:[#allocation2 + $0x100] sm:$0xff]
    %v5572 = vld [vmem:[#allocation2 + $0x120] sm:$0xff]
    %v5573 = vld [vmem:[#allocation2 + $0x140] sm:$0xff]
    %v5574 = vld [vmem:[#allocation2 + $0x160] sm:$0x7]
    %v5575 = vpack.c.bf16 %v5564, %v5563
    %v5576 = vpack.c.bf16 %v5566, %v5565
    %v5577 = vpack.c.bf16 %v5568, %v5567
    %v5578 = vpack.c.bf16 %v5570, %v5569
    %v5579 = vpack.c.bf16 %v5572, %v5571
    %v5580 = vpack.c.bf16 %v5574, %v5573
    %v5581 = vld [vmem:[#allocation6 + $0x150] sm:$0xf]
    %v5582 = vld [vmem:[#allocation6 + $0x158] sm:$0xf]
    %v5583 = vld [vmem:[#allocation6 + $0x160] sm:$0xf]
    %v5584 = vld [vmem:[#allocation6 + $0x168] sm:$0xf]
    %v5585 = vld [vmem:[#allocation6 + $0x170] sm:$0x3]
    %v5591 = vunpack.c.l.b16 %v5581
    %v5592 = vunpack.c.l.b16 %v5582
    %v5593 = vunpack.c.l.b16 %v5583
    %v5594 = vunpack.c.l.b16 %v5584
    %v5595 = vunpack.c.l.b16 %v5585
    %v5596 = vpack.c.b16 %v5592, %v5591
    %v5597 = vpack.c.b16 %v5594, %v5593
    %v5598 = vpack.c.b16 %v5595, %v5595
    %5605 = vrot.lane.b32.xlu0 %v5575, 120
    %v5606 = vpop.permute.xlu0 %5605
    %5607 = vrot.lane.b32.xlu0 %v5576, 120
    %v5608 = vpop.permute.xlu0 %5607
    %5609 = vrot.lane.b32.xlu0 %v5577, 120
    %v5610 = vpop.permute.xlu0 %5609
    %5611 = vrot.lane.b32.xlu0 %v5578, 120
    %v5612 = vpop.permute.xlu0 %5611
    %5613 = vrot.lane.b32.xlu0 %v5579, 120
    %v5614 = vpop.permute.xlu0 %5613
    %5615 = vrot.lane.b32.xlu0 %v5580, 120
    %v5616 = vpop.permute.xlu0 %5615
    %v5623 = vsel %vm4989, %v5596, 0
    %v5626 = vsel %vm4989, %v5597, 0
    %v5629 = vsel %vm4989, %v5598, 0
    %v5632 = vand.u32 %v5616, %v662
    %5634 = vmatprep.subr.bf16.mxu0 0
    %5635 = vmatpush1.bf16.msra.mxu0 0
    %5636 = vmatprep.subr.bf16.mxu0 0
    %5637 = vmatpush1.bf16.msra.mxu0 0
    %5638 = vmatprep.subr.bf16.mxu0 0
    %5639 = vmatpush1.bf16.msra.mxu0 %v5632
    %5640 = vmatprep.subr.bf16.mxu0 0
    %5641 = vmatpush1.bf16.msra.mxu0 %v5614
    %5642 = vmatprep.subr.bf16.mxu0 0
    %5643 = vmatpush1.bf16.msra.mxu0 %v5612
    %5644 = vmatprep.subr.bf16.mxu0 0
    %5645 = vmatpush1.bf16.msra.mxu0 %v5610
    %5646 = vmatprep.subr.bf16.mxu0 0
    %5647 = vmatpush1.bf16.msra.mxu0 %v5608
    %5648 = vmatprep.subr.bf16.mxu0 0
    %5649 = vmatpush1.bf16.msra.mxu0 %v5606
    %5650 = vmatprep.subr.bf16.mxu0 0
    %5651 = vmatpush2.bf16.msra.mxu0 0
    %5652 = vmatprep.subr.bf16.mxu0 0
    %5653 = vmatpush2.bf16.msra.mxu0 0
    %5654 = vmatprep.subr.bf16.mxu0 0
    %5655 = vmatpush2.bf16.msra.mxu0 0
    %5656 = vmatprep.subr.bf16.mxu0 0
    %5657 = vmatpush2.bf16.msra.mxu0 0
    %5658 = vmatprep.subr.bf16.mxu0 0
    %5659 = vmatpush2.bf16.msra.mxu0 0
    %5660 = vmatprep.subr.bf16.mxu0 0
    %5661 = vmatpush2.bf16.msra.mxu0 0
    %5662 = vmatprep.subr.bf16.mxu0 0
    %5663 = vmatpush2.bf16.msra.mxu0 0
    %5664 = vmatprep.subr.bf16.mxu0 0
    %5665 = vmatpush2.bf16.msra.mxu0 0
    %5666 = vmatprep.mubr.bf16.mxu0 0
    %5667 = vmatmul.mubr.bf16.gmra.mxu0 %v5623
    %v5668 = vpop.f32.mrf.mxu0
    %v5669 = vadd.f32 0.0, %v5668
    %v5670 = vpop.f32.mrf.mxu0
    %v5671 = vpop.f32.mrf.mxu0
    %v5672 = vadd.f32 0.0, %v5671
    %v5673 = vpop.f32.mrf.mxu0
    %5674 = vmatprep.mubr.bf16.mxu0 0
    %5675 = vmatmul.mubr.bf16.gmra.mxu0 %v5626
    %v5676 = vpop.f32.mrf.mxu0
    %v5677 = vadd.f32 0.0, %v5676
    %v5678 = vpop.f32.mrf.mxu0
    %v5679 = vpop.f32.mrf.mxu0
    %v5680 = vadd.f32 0.0, %v5679
    %v5681 = vpop.f32.mrf.mxu0
    %5682 = vmatprep.mubr.bf16.mxu0 0
    %5683 = vmatmul.mubr.bf16.gmra.mxu0 %v5629
    %v5684 = vpop.f32.mrf.mxu0
    %v5685 = vadd.f32 0.0, %v5684
    %v5686 = vpop.f32.mrf.mxu0
    %v5687 = vpop.f32.mrf.mxu0
    %v5688 = vpop.f32.mrf.mxu0
    %5689 = vdwg.mxu0
    %v5690 = vmax.f32 %v5669, 0.0
    %v5691 = vmax.f32 %v5672, 0.0
    %v5692 = vmax.f32 %v5677, 0.0
    %v5693 = vmax.f32 %v5680, 0.0
    %v5694 = vmax.f32 %v5685, 0.0
    %v5695 = vsel %vm4389, %v5690, 0.0
    %v5696 = vsel %vm4389, %v5691, 0.0
    %v5697 = vsel %vm4389, %v5692, 0.0
    %v5698 = vsel %vm4389, %v5693, 0.0
    %v5699 = vsel %vm4389, %v5694, 0.0
    %v5705 = vrot.slane %v5695, 7
    %v5706 = vrot.slane %v5696, 7
    %v5707 = vsel %vm2710, %v5705, %v5706
    %v5708 = vrot.slane %v5697, 7
    %v5709 = vsel %vm2710, %v5706, %v5708
    %v5710 = vrot.slane %v5698, 7
    %v5711 = vsel %vm2710, %v5708, %v5710
    %v5712 = vrot.slane %v5699, 7
    %v5713 = vsel %vm2710, %v5710, %v5712
    %5714 = vrot.lane.b32.xlu0 %v5705, 11
    %v5715 = vpop.permute.xlu0 %5714
    %5716 = vrot.lane.b32.xlu0 %v5707, 11
    %v5717 = vpop.permute.xlu0 %5716
    %5718 = vrot.lane.b32.xlu0 %v5709, 11
    %v5719 = vpop.permute.xlu0 %5718
    %5720 = vrot.lane.b32.xlu0 %v5711, 11
    %v5721 = vpop.permute.xlu0 %5720
    %5722 = vrot.lane.b32.xlu0 %v5713, 11
    %v5723 = vpop.permute.xlu0 %5722
    %5729 = vst.msk [vmem:[#allocation2] sm:$0xfe] %vm4424, %v5715
    %5730 = vst.msk [vmem:[#allocation2 + $0x20] sm:$0xff] %vm4426, %v5717
    %5731 = vst.msk [vmem:[#allocation2 + $0x40] sm:$0xff] %vm4426, %v5719
    %5732 = vst.msk [vmem:[#allocation2 + $0x60] sm:$0xff] %vm4426, %v5721
    %5733 = vst.msk [vmem:[#allocation2 + $0x80] sm:$0x1f] %vm4430, %v5723
    %v5734 = vrot.slane %v5695, 3
    %v5735 = vrot.slane %v5696, 3
    %v5736 = vsel %vm659, %v5734, %v5735
    %v5737 = vrot.slane %v5697, 3
    %v5738 = vsel %vm659, %v5735, %v5737
    %v5739 = vrot.slane %v5698, 3
    %v5740 = vsel %vm659, %v5737, %v5739
    %v5741 = vrot.slane %v5699, 3
    %v5742 = vsel %vm659, %v5739, %v5741
    %5743 = vrot.lane.b32.xlu0 %v5734, 10
    %v5744 = vpop.permute.xlu0 %5743
    %5745 = vrot.lane.b32.xlu0 %v5736, 10
    %v5746 = vpop.permute.xlu0 %5745
    %5747 = vrot.lane.b32.xlu0 %v5738, 10
    %v5748 = vpop.permute.xlu0 %5747
    %5749 = vrot.lane.b32.xlu0 %v5740, 10
    %v5750 = vpop.permute.xlu0 %5749
    %5751 = vrot.lane.b32.xlu0 %v5742, 10
    %v5752 = vpop.permute.xlu0 %5751
    %5753 = vrot.lane.b32.xlu0 %v5741, 10
    %v5754 = vpop.permute.xlu0 %5753
    %5761 = vst.msk [vmem:[#allocation2 + $0x80] sm:$0xe0] %vm4459, %v5744
    %5762 = vst.msk [vmem:[#allocation2 + $0xa0] sm:$0xff] %vm4461, %v5746
    %5763 = vst.msk [vmem:[#allocation2 + $0xc0] sm:$0xff] %vm4461, %v5748
    %5764 = vst.msk [vmem:[#allocation2 + $0xe0] sm:$0xff] %vm4461, %v5750
    %5765 = vst.msk [vmem:[#allocation2 + $0x100] sm:$0xff] %vm4461, %v5752
    %5766 = vst.msk [vmem:[#allocation2 + $0x120] sm:$0x1] %vm4466, %v5754
    %5767 = vrot.lane.b32.xlu0 %v5705, 9
    %v5768 = vpop.permute.xlu0 %5767
    %5769 = vrot.lane.b32.xlu0 %v5707, 9
    %v5770 = vpop.permute.xlu0 %5769
    %5771 = vrot.lane.b32.xlu0 %v5709, 9
    %v5772 = vpop.permute.xlu0 %5771
    %5773 = vrot.lane.b32.xlu0 %v5711, 9
    %v5774 = vpop.permute.xlu0 %5773
    %5775 = vrot.lane.b32.xlu0 %v5713, 9
    %v5776 = vpop.permute.xlu0 %5775
    %5782 = vst.msk [vmem:[#allocation2 + $0x120] sm:$0xfe] %vm4483, %v5768
    %5783 = vst.msk [vmem:[#allocation2 + $0x140] sm:$0xff] %vm4485, %v5770
    %5784 = vst.msk [vmem:[#allocation2 + $0x160] sm:$0xff] %vm4485, %v5772
    %5785 = vst.msk [vmem:[#allocation2 + $0x180] sm:$0xff] %vm4485, %v5774
    %5786 = vst.msk [vmem:[#allocation2 + $0x1a0] sm:$0x1f] %vm4239, %v5776
    %5787 = vrot.lane.b32.xlu0 %v5734, 8
    %v5788 = vpop.permute.xlu0 %5787
    %5789 = vrot.lane.b32.xlu0 %v5736, 8
    %v5790 = vpop.permute.xlu0 %5789
    %5791 = vrot.lane.b32.xlu0 %v5738, 8
    %v5792 = vpop.permute.xlu0 %5791
    %5793 = vrot.lane.b32.xlu0 %v5740, 8
    %v5794 = vpop.permute.xlu0 %5793
    %5795 = vrot.lane.b32.xlu0 %v5742, 8
    %v5796 = vpop.permute.xlu0 %5795
    %5797 = vrot.lane.b32.xlu0 %v5741, 8
    %v5798 = vpop.permute.xlu0 %5797
    %5805 = vst.msk [vmem:[#allocation2 + $0x1a0] sm:$0xe0] %vm4245, %v5788
    %5806 = vst.msk [vmem:[#allocation2 + $0x1c0] sm:$0xff] %vm4509, %v5790
    %5807 = vst.msk [vmem:[#allocation2 + $0x1e0] sm:$0xff] %vm4509, %v5792
    %5808 = vst.msk [vmem:[#allocation2 + $0x200] sm:$0xff] %vm4509, %v5794
    %5809 = vst.msk [vmem:[#allocation2 + $0x220] sm:$0xff] %vm4509, %v5796
    %5810 = vst.msk [vmem:[#allocation2 + $0x240] sm:$0x1] %vm4514, %v5798
    %5811 = vrot.lane.b32.xlu0 %v5705, 7
    %v5812 = vpop.permute.xlu0 %5811
    %5813 = vrot.lane.b32.xlu0 %v5707, 7
    %v5814 = vpop.permute.xlu0 %5813
    %5815 = vrot.lane.b32.xlu0 %v5709, 7
    %v5816 = vpop.permute.xlu0 %5815
    %5817 = vrot.lane.b32.xlu0 %v5711, 7
    %v5818 = vpop.permute.xlu0 %5817
    %5819 = vrot.lane.b32.xlu0 %v5713, 7
    %v5820 = vpop.permute.xlu0 %5819
    %5826 = vst.msk [vmem:[#allocation2 + $0x240] sm:$0xfe] %vm4531, %v5812
    %5827 = vst.msk [vmem:[#allocation2 + $0x260] sm:$0xff] %vm4533, %v5814
    %5828 = vst.msk [vmem:[#allocation2 + $0x280] sm:$0xff] %vm4533, %v5816
    %5829 = vst.msk [vmem:[#allocation2 + $0x2a0] sm:$0xff] %vm4533, %v5818
    %5830 = vst.msk [vmem:[#allocation2 + $0x2c0] sm:$0x1f] %vm4537, %v5820
    %5831 = vrot.lane.b32.xlu0 %v5734, 6
    %v5832 = vpop.permute.xlu0 %5831
    %5833 = vrot.lane.b32.xlu0 %v5736, 6
    %v5834 = vpop.permute.xlu0 %5833
    %5835 = vrot.lane.b32.xlu0 %v5738, 6
    %v5836 = vpop.permute.xlu0 %5835
    %5837 = vrot.lane.b32.xlu0 %v5740, 6
    %v5838 = vpop.permute.xlu0 %5837
    %5839 = vrot.lane.b32.xlu0 %v5742, 6
    %v5840 = vpop.permute.xlu0 %5839
    %5841 = vrot.lane.b32.xlu0 %v5741, 6
    %v5842 = vpop.permute.xlu0 %5841
    %5849 = vst.msk [vmem:[#allocation2 + $0x2c0] sm:$0xe0] %vm4557, %v5832
    %5850 = vst.msk [vmem:[#allocation2 + $0x2e0] sm:$0xff] %vm4559, %v5834
    %5851 = vst.msk [vmem:[#allocation2 + $0x300] sm:$0xff] %vm4559, %v5836
    %5852 = vst.msk [vmem:[#allocation2 + $0x320] sm:$0xff] %vm4559, %v5838
    %5853 = vst.msk [vmem:[#allocation2 + $0x340] sm:$0xff] %vm4559, %v5840
    %5854 = vst.msk [vmem:[#allocation2 + $0x360] sm:$0x1] %vm4564, %v5842
    %5855 = vrot.lane.b32.xlu0 %v5705, 5
    %v5856 = vpop.permute.xlu0 %5855
    %5857 = vrot.lane.b32.xlu0 %v5707, 5
    %v5858 = vpop.permute.xlu0 %5857
    %5859 = vrot.lane.b32.xlu0 %v5709, 5
    %v5860 = vpop.permute.xlu0 %5859
    %5861 = vrot.lane.b32.xlu0 %v5711, 5
    %v5862 = vpop.permute.xlu0 %5861
    %5863 = vrot.lane.b32.xlu0 %v5713, 5
    %v5864 = vpop.permute.xlu0 %5863
    %5870 = vst.msk [vmem:[#allocation2 + $0x360] sm:$0xfe] %vm4581, %v5856
    %5871 = vst.msk [vmem:[#allocation2 + $0x380] sm:$0xff] %vm4583, %v5858
    %5872 = vst.msk [vmem:[#allocation2 + $0x3a0] sm:$0xff] %vm4583, %v5860
    %5873 = vst.msk [vmem:[#allocation2 + $0x3c0] sm:$0xff] %vm4583, %v5862
    %5874 = vst.msk [vmem:[#allocation2 + $0x3e0] sm:$0x1f] %vm4587, %v5864
    %v5875 = vld [vmem:[#allocation2] sm:$0xff]
    %v5876 = vld [vmem:[#allocation2 + $0x20] sm:$0xff]
    %v5877 = vld [vmem:[#allocation2 + $0x40] sm:$0xff]
    %v5878 = vld [vmem:[#allocation2 + $0x60] sm:$0xff]
    %v5879 = vld [vmem:[#allocation2 + $0x80] sm:$0xff]
    %v5880 = vld [vmem:[#allocation2 + $0xa0] sm:$0xff]
    %v5881 = vld [vmem:[#allocation2 + $0xc0] sm:$0xff]
    %v5882 = vld [vmem:[#allocation2 + $0xe0] sm:$0xff]
    %v5883 = vld [vmem:[#allocation2 + $0x100] sm:$0xff]
    %v5884 = vld [vmem:[#allocation2 + $0x120] sm:$0xff]
    %v5885 = vld [vmem:[#allocation2 + $0x140] sm:$0xff]
    %v5886 = vld [vmem:[#allocation2 + $0x160] sm:$0xff]
    %v5887 = vld [vmem:[#allocation2 + $0x180] sm:$0xff]
    %v5888 = vld [vmem:[#allocation2 + $0x1a0] sm:$0xff]
    %v5889 = vld [vmem:[#allocation2 + $0x1c0] sm:$0xff]
    %v5890 = vld [vmem:[#allocation2 + $0x1e0] sm:$0xff]
    %v5891 = vld [vmem:[#allocation2 + $0x200] sm:$0xff]
    %v5892 = vld [vmem:[#allocation2 + $0x220] sm:$0xff]
    %v5893 = vld [vmem:[#allocation2 + $0x240] sm:$0xff]
    %v5894 = vld [vmem:[#allocation2 + $0x260] sm:$0xff]
    %v5895 = vld [vmem:[#allocation2 + $0x280] sm:$0xff]
    %v5896 = vld [vmem:[#allocation2 + $0x2a0] sm:$0xff]
    %v5897 = vld [vmem:[#allocation2 + $0x2c0] sm:$0xff]
    %v5898 = vld [vmem:[#allocation2 + $0x2e0] sm:$0xff]
    %v5899 = vld [vmem:[#allocation2 + $0x300] sm:$0xff]
    %v5900 = vld [vmem:[#allocation2 + $0x320] sm:$0xff]
    %v5901 = vld [vmem:[#allocation2 + $0x340] sm:$0xff]
    %v5902 = vld [vmem:[#allocation2 + $0x360] sm:$0xff]
    %v5903 = vld [vmem:[#allocation2 + $0x380] sm:$0xff]
    %v5904 = vld [vmem:[#allocation2 + $0x3a0] sm:$0xff]
    %v5905 = vld [vmem:[#allocation2 + $0x3c0] sm:$0xff]
    %v5906 = vld [vmem:[#allocation2 + $0x3e0] sm:$0x1f]
    %v5907 = vpack.c.bf16 %v5876, %v5875
    %v5908 = vpack.c.bf16 %v5878, %v5877
    %v5909 = vpack.c.bf16 %v5880, %v5879
    %v5910 = vpack.c.bf16 %v5882, %v5881
    %v5911 = vpack.c.bf16 %v5884, %v5883
    %v5912 = vpack.c.bf16 %v5886, %v5885
    %v5913 = vpack.c.bf16 %v5888, %v5887
    %v5914 = vpack.c.bf16 %v5890, %v5889
    %v5915 = vpack.c.bf16 %v5892, %v5891
    %v5916 = vpack.c.bf16 %v5894, %v5893
    %v5917 = vpack.c.bf16 %v5896, %v5895
    %v5918 = vpack.c.bf16 %v5898, %v5897
    %v5919 = vpack.c.bf16 %v5900, %v5899
    %v5920 = vpack.c.bf16 %v5902, %v5901
    %v5921 = vpack.c.bf16 %v5904, %v5903
    %v5922 = vpack.c.bf16 %v5906, %v5905
    %v5923 = vld [vmem:[#allocation6 + $0x178] sm:$0xff]
    %v5924 = vld [vmem:[#allocation6 + $0x180] sm:$0xff]
    %v5925 = vld [vmem:[#allocation6 + $0x188] sm:$0xff]
    %v5926 = vld [vmem:[#allocation6 + $0x190] sm:$0xff]
    %v5927 = vld [vmem:[#allocation6 + $0x198] sm:$0x33]
    %v5933 = vunpack.c.l.b16 %v5923
    %v5934 = vunpack.c.h.b16 %v5923
    %v5935 = vunpack.c.l.b16 %v5924
    %v5936 = vunpack.c.h.b16 %v5924
    %v5937 = vunpack.c.l.b16 %v5925
    %v5938 = vunpack.c.h.b16 %v5925
    %v5939 = vunpack.c.l.b16 %v5926
    %v5940 = vunpack.c.h.b16 %v5926
    %v5941 = vunpack.c.l.b16 %v5927
    %v5942 = vunpack.c.h.b16 %v5927
    %v5943 = vpack.c.b16 %v5935, %v5933
    %v5944 = vpack.c.b16 %v5936, %v5934
    %v5945 = vpack.c.b16 %v5939, %v5937
    %v5946 = vpack.c.b16 %v5940, %v5938
    %v5947 = vpack.c.b16 %v5941, %v5941
    %v5948 = vpack.c.b16 %v5942, %v5942
    %5968 = vrot.lane.b32.xlu0 %v5907, 120
    %v5969 = vpop.permute.xlu0 %5968
    %5970 = vrot.lane.b32.xlu0 %v5908, 120
    %v5971 = vpop.permute.xlu0 %5970
    %5972 = vrot.lane.b32.xlu0 %v5909, 120
    %v5973 = vpop.permute.xlu0 %5972
    %5974 = vrot.lane.b32.xlu0 %v5910, 120
    %v5975 = vpop.permute.xlu0 %5974
    %5976 = vrot.lane.b32.xlu0 %v5911, 120
    %v5977 = vpop.permute.xlu0 %5976
    %5978 = vrot.lane.b32.xlu0 %v5912, 120
    %v5979 = vpop.permute.xlu0 %5978
    %5980 = vrot.lane.b32.xlu0 %v5913, 120
    %v5981 = vpop.permute.xlu0 %5980
    %5982 = vrot.lane.b32.xlu0 %v5914, 120
    %v5983 = vpop.permute.xlu0 %5982
    %5984 = vrot.lane.b32.xlu0 %v5915, 120
    %v5985 = vpop.permute.xlu0 %5984
    %5986 = vrot.lane.b32.xlu0 %v5916, 120
    %v5987 = vpop.permute.xlu0 %5986
    %5988 = vrot.lane.b32.xlu0 %v5917, 120
    %v5989 = vpop.permute.xlu0 %5988
    %5990 = vrot.lane.b32.xlu0 %v5918, 120
    %v5991 = vpop.permute.xlu0 %5990
    %5992 = vrot.lane.b32.xlu0 %v5919, 120
    %v5993 = vpop.permute.xlu0 %5992
    %5994 = vrot.lane.b32.xlu0 %v5920, 120
    %v5995 = vpop.permute.xlu0 %5994
    %5996 = vrot.lane.b32.xlu0 %v5921, 120
    %v5997 = vpop.permute.xlu0 %5996
    %5998 = vrot.lane.b32.xlu0 %v5922, 120
    %v5999 = vpop.permute.xlu0 %5998
    %v6016 = vsel %vm4729, %v5944, 0
    %v6019 = vsel %vm4729, %v5946, 0
    %v6022 = vsel %vm4729, %v5948, 0
    %v6025 = vand.u32 %v5999, %v4740
    %6027 = vmatprep.subr.bf16.mxu0 0
    %6028 = vmatpush1.bf16.msra.mxu0 %v5983
    %6029 = vmatprep.subr.bf16.mxu0 0
    %6030 = vmatpush1.bf16.msra.mxu0 %v5981
    %6031 = vmatprep.subr.bf16.mxu0 0
    %6032 = vmatpush1.bf16.msra.mxu0 %v5979
    %6033 = vmatprep.subr.bf16.mxu0 0
    %6034 = vmatpush1.bf16.msra.mxu0 %v5977
    %6035 = vmatprep.subr.bf16.mxu0 0
    %6036 = vmatpush1.bf16.msra.mxu0 %v5975
    %6037 = vmatprep.subr.bf16.mxu0 0
    %6038 = vmatpush1.bf16.msra.mxu0 %v5973
    %6039 = vmatprep.subr.bf16.mxu0 0
    %6040 = vmatpush1.bf16.msra.mxu0 %v5971
    %6041 = vmatprep.subr.bf16.mxu0 0
    %6042 = vmatpush1.bf16.msra.mxu0 %v5969
    %6043 = vmatprep.subr.bf16.mxu0 0
    %6044 = vmatpush2.bf16.msra.mxu0 %v6025
    %6045 = vmatprep.subr.bf16.mxu0 0
    %6046 = vmatpush2.bf16.msra.mxu0 %v5997
    %6047 = vmatprep.subr.bf16.mxu0 0
    %6048 = vmatpush2.bf16.msra.mxu0 %v5995
    %6049 = vmatprep.subr.bf16.mxu0 0
    %6050 = vmatpush2.bf16.msra.mxu0 %v5993
    %6051 = vmatprep.subr.bf16.mxu0 0
    %6052 = vmatpush2.bf16.msra.mxu0 %v5991
    %6053 = vmatprep.subr.bf16.mxu0 0
    %6054 = vmatpush2.bf16.msra.mxu0 %v5989
    %6055 = vmatprep.subr.bf16.mxu0 0
    %6056 = vmatpush2.bf16.msra.mxu0 %v5987
    %6057 = vmatprep.subr.bf16.mxu0 0
    %6058 = vmatpush2.bf16.msra.mxu0 %v5985
    %6059 = vmatprep.mubr.bf16.mxu0 %v6016
    %6060 = vmatmul.mubr.bf16.gmra.mxu0 %v5943
    %v6061 = vpop.f32.mrf.mxu0
    %v6062 = vadd.f32 0.0, %v6061
    %v6063 = vpop.f32.mrf.mxu0
    %v6064 = vpop.f32.mrf.mxu0
    %v6065 = vadd.f32 0.0, %v6064
    %v6066 = vpop.f32.mrf.mxu0
    %6067 = vmatprep.mubr.bf16.mxu0 %v6019
    %6068 = vmatmul.mubr.bf16.gmra.mxu0 %v5945
    %v6069 = vpop.f32.mrf.mxu0
    %v6070 = vadd.f32 0.0, %v6069
    %v6071 = vpop.f32.mrf.mxu0
    %v6072 = vpop.f32.mrf.mxu0
    %v6073 = vadd.f32 0.0, %v6072
    %v6074 = vpop.f32.mrf.mxu0
    %6075 = vmatprep.mubr.bf16.mxu0 %v6022
    %6076 = vmatmul.mubr.bf16.gmra.mxu0 %v5947
    %v6077 = vpop.f32.mrf.mxu0
    %v6078 = vadd.f32 0.0, %v6077
    %v6079 = vpop.f32.mrf.mxu0
    %v6080 = vpop.f32.mrf.mxu0
    %v6081 = vpop.f32.mrf.mxu0
    %6082 = vdwg.mxu0
    %v6083 = vmax.f32 %v6062, 0.0
    %v6084 = vmax.f32 %v6065, 0.0
    %v6085 = vmax.f32 %v6070, 0.0
    %v6086 = vmax.f32 %v6073, 0.0
    %v6087 = vmax.f32 %v6078, 0.0
    %v6091 = vrot.slane %v6085, 2
    %v6092 = vrot.slane %v6086, 2
    %v6093 = vsel %vm660, %v6091, %v6092
    %v6094 = vrot.slane %v6087, 2
    %v6095 = vsel %vm660, %v6092, %v6094
    %v6099 = vadd.f32 %v6083, %v6093
    %v6100 = vadd.f32 %v6084, %v6095
    %v6101 = vadd.f32 %v6085, %v6094
    %v6102 = vadd.f32 %v6099, %v5473
    %v6103 = vadd.f32 %v6100, %v5474
    %v6104 = vadd.f32 %v6101, %v5475
    %v6105 = vsel %vm4389, %v6102, 0.0
    %v6106 = vsel %vm4389, %v6103, 0.0
    %v6107 = vsel %vm4389, %v6104, 0.0
    %v6108 = vld [vmem:[#allocation8 + $0xc] sm:$0xf]
    %v6109 = vld [vmem:[#allocation8 + $0x1c] sm:$0xf]
    %v6110 = vld [vmem:[#allocation8 + $0x2c] sm:$0xf]
    %v6111 = vld [vmem:[#allocation8 + $0x3c] sm:$0xf]
    %v6112 = vld [vmem:[#allocation8 + $0x4c] sm:$0xf]
    %v6113 = vld [vmem:[#allocation8 + $0x5c] sm:$0xf]
    %v6114 = vld [vmem:[#allocation8 + $0x6c] sm:$0xf]
    %v6115 = vld [vmem:[#allocation8 + $0x7c] sm:$0xf]
    %v6116 = vld [vmem:[#allocation8 + $0x8c] sm:$0xf]
    %v6117 = vpack.c.bf16 %v6106, %v6105
    %v6118 = vpack.c.bf16 %v6107, %v6107
    %v6128 = vunpack.c.l.b16 %v6108
    %v6129 = vunpack.c.l.b16 %v6109
    %v6130 = vunpack.c.l.b16 %v6110
    %v6131 = vunpack.c.l.b16 %v6111
    %v6132 = vunpack.c.l.b16 %v6112
    %v6133 = vunpack.c.l.b16 %v6113
    %v6134 = vunpack.c.l.b16 %v6114
    %v6135 = vunpack.c.l.b16 %v6115
    %v6136 = vunpack.c.l.b16 %v6116
    %v6137 = vpack.c.b16 %v6129, %v6128
    %v6138 = vpack.c.b16 %v6131, %v6130
    %v6139 = vpack.c.b16 %v6133, %v6132
    %v6140 = vpack.c.b16 %v6135, %v6134
    %v6141 = vpack.c.b16 %v6136, %v6136
    %v6147 = vsel %vm2441, %v6117, 0
    %v6150 = vsel %vm2441, %v6118, 0
    %v6153 = vsel %vm2445, %v6141, 0
    %6155 = vmatprep.subr.bf16.mxu0 0
    %6156 = vmatpush1.bf16.msra.mxu0 0
    %6157 = vmatprep.subr.bf16.mxu0 0
    %6158 = vmatpush1.bf16.msra.mxu0 0
    %6159 = vmatprep.subr.bf16.mxu0 0
    %6160 = vmatpush1.bf16.msra.mxu0 0
    %6161 = vmatprep.subr.bf16.mxu0 0
    %6162 = vmatpush1.bf16.msra.mxu0 %v6153
    %6163 = vmatprep.subr.bf16.mxu0 0
    %6164 = vmatpush1.bf16.msra.mxu0 %v6140
    %6165 = vmatprep.subr.bf16.mxu0 0
    %6166 = vmatpush1.bf16.msra.mxu0 %v6139
    %6167 = vmatprep.subr.bf16.mxu0 0
    %6168 = vmatpush1.bf16.msra.mxu0 %v6138
    %6169 = vmatprep.subr.bf16.mxu0 0
    %6170 = vmatpush1.bf16.msra.mxu0 %v6137
    %6171 = vmatprep.subr.bf16.mxu0 0
    %6172 = vmatpush2.bf16.msra.mxu0 0
    %6173 = vmatprep.subr.bf16.mxu0 0
    %6174 = vmatpush2.bf16.msra.mxu0 0
    %6175 = vmatprep.subr.bf16.mxu0 0
    %6176 = vmatpush2.bf16.msra.mxu0 0
    %6177 = vmatprep.subr.bf16.mxu0 0
    %6178 = vmatpush2.bf16.msra.mxu0 0
    %6179 = vmatprep.subr.bf16.mxu0 0
    %6180 = vmatpush2.bf16.msra.mxu0 0
    %6181 = vmatprep.subr.bf16.mxu0 0
    %6182 = vmatpush2.bf16.msra.mxu0 0
    %6183 = vmatprep.subr.bf16.mxu0 0
    %6184 = vmatpush2.bf16.msra.mxu0 0
    %6185 = vmatprep.subr.bf16.mxu0 0
    %6186 = vmatpush2.bf16.msra.mxu0 0
    %6187 = vmatprep.mubr.bf16.mxu0 0
    %6188 = vmatmul.mubr.bf16.gmra.mxu0 %v6147
    %v6189 = vpop.f32.mrf.mxu0
    %v6190 = vadd.f32 0.0, %v6189
    %v6191 = vpop.f32.mrf.mxu0
    %v6192 = vpop.f32.mrf.mxu0
    %v6193 = vadd.f32 0.0, %v6192
    %v6194 = vpop.f32.mrf.mxu0
    %6195 = vmatprep.mubr.bf16.mxu0 0
    %6196 = vmatmul.mubr.bf16.gmra.mxu0 %v6150
    %v6197 = vpop.f32.mrf.mxu0
    %v6198 = vadd.f32 0.0, %v6197
    %v6199 = vpop.f32.mrf.mxu0
    %v6200 = vpop.f32.mrf.mxu0
    %v6201 = vpop.f32.mrf.mxu0
    %6202 = vdwg.mxu0
    %v6203 = vmul.f32 %v6190, 0.33333334
    %v6204 = vmul.f32 %v6193, 0.33333334
    %v6205 = vmul.f32 %v6198, 0.33333334
    %v6206 = vmax.f32 %v6203, 0.0
    %v6207 = vmax.f32 %v6204, 0.0
    %v6208 = vmax.f32 %v6205, 0.0
    %v6212 = vrot.slane %v6206, 7
    %v6213 = vrot.slane %v6207, 7
    %v6214 = vsel %vm2710, %v6212, %v6213
    %v6215 = vrot.slane %v6208, 7
    %v6216 = vsel %vm2710, %v6213, %v6215
    %6217 = vrot.lane.b32.xlu0 %v6212, 9
    %v6218 = vpop.permute.xlu0 %6217
    %6219 = vrot.lane.b32.xlu0 %v6214, 9
    %v6220 = vpop.permute.xlu0 %6219
    %6221 = vrot.lane.b32.xlu0 %v6216, 9
    %v6222 = vpop.permute.xlu0 %6221
    %6226 = vst.msk [vmem:[#allocation2] sm:$0xfe] %vm2792, %v6218
    %vm6227 = vcmask 72705
    %6228 = vst.msk [vmem:[#allocation2 + $0x8] sm:$0xfe] %vm6227, %v6218
    %vm6229 = vcmask 1047624
    %6230 = vst.msk [vmem:[#allocation2 + $0x20] sm:$0xff] %vm6229, %v6220
    %6231 = vst.msk [vmem:[#allocation2 + $0x28] sm:$0xff] %vm159, %v6220
    %6232 = vst.msk [vmem:[#allocation2 + $0x40] sm:$0x7] %vm452, %v6222
    %vm6233 = vcmask 67584
    %6234 = vst.msk [vmem:[#allocation2 + $0x48] sm:$0x7] %vm6233, %v6222
    %v6235 = vrot.slane %v6206, 5
    %v6236 = vrot.slane %v6207, 5
    %v6237 = vsel %vm238, %v6235, %v6236
    %v6238 = vrot.slane %v6208, 5
    %v6239 = vsel %vm238, %v6236, %v6238
    %6240 = vrot.lane.b32.xlu0 %v6235, 8
    %v6241 = vpop.permute.xlu0 %6240
    %6242 = vrot.lane.b32.xlu0 %v6237, 8
    %v6243 = vpop.permute.xlu0 %6242
    %6244 = vrot.lane.b32.xlu0 %v6239, 8
    %v6245 = vpop.permute.xlu0 %6244
    %6249 = vst.msk [vmem:[#allocation2 + $0x40] sm:$0xf8] %vm477, %v6241
    %vm6250 = vcmask 64515
    %6251 = vst.msk [vmem:[#allocation2 + $0x48] sm:$0xf8] %vm6250, %v6241
    %6252 = vst.msk [vmem:[#allocation2 + $0x60] sm:$0xff] %vm2825, %v6243
    %6253 = vst.msk [vmem:[#allocation2 + $0x68] sm:$0xff] %vm171, %v6243
    %vm6254 = vcmask 1044544
    %6255 = vst.msk [vmem:[#allocation2 + $0x80] sm:$0x1f] %vm6254, %v6245
    %vm6256 = vcmask 61440
    %6257 = vst.msk [vmem:[#allocation2 + $0x88] sm:$0x1f] %vm6256, %v6245
    %v6258 = vrot.slane %v6206, 3
    %v6259 = vrot.slane %v6207, 3
    %v6260 = vsel %vm659, %v6258, %v6259
    %v6261 = vrot.slane %v6208, 3
    %v6262 = vsel %vm659, %v6259, %v6261
    %6263 = vrot.lane.b32.xlu0 %v6258, 7
    %v6264 = vpop.permute.xlu0 %6263
    %6265 = vrot.lane.b32.xlu0 %v6260, 7
    %v6266 = vpop.permute.xlu0 %6265
    %6267 = vrot.lane.b32.xlu0 %v6262, 7
    %v6268 = vpop.permute.xlu0 %6267
    %vm6272 = vcmask 1047613
    %6273 = vst.msk [vmem:[#allocation2 + $0x80] sm:$0xe0] %vm6272, %v6264
    %vm6274 = vcmask 56325
    %6275 = vst.msk [vmem:[#allocation2 + $0x88] sm:$0xe0] %vm6274, %v6264
    %vm6276 = vcmask 1047608
    %6277 = vst.msk [vmem:[#allocation2 + $0xa0] sm:$0xff] %vm6276, %v6266
    %6278 = vst.msk [vmem:[#allocation2 + $0xa8] sm:$0xff] %vm183, %v6266
    %vm6279 = vcmask 1046584
    %6280 = vst.msk [vmem:[#allocation2 + $0xc0] sm:$0x7f] %vm6279, %v6268
    %vm6281 = vcmask 55296
    %6282 = vst.msk [vmem:[#allocation2 + $0xc8] sm:$0x7f] %vm6281, %v6268
    %v6283 = vld [vmem:[#allocation2] sm:$0xff]
    %v6284 = vld [vmem:[#allocation2 + $0x8] sm:$0xff]
    %v6285 = vld [vmem:[#allocation2 + $0x20] sm:$0xff]
    %v6286 = vld [vmem:[#allocation2 + $0x28] sm:$0xff]
    %v6287 = vld [vmem:[#allocation2 + $0x40] sm:$0xff]
    %v6288 = vld [vmem:[#allocation2 + $0x48] sm:$0xff]
    %v6289 = vld [vmem:[#allocation2 + $0x60] sm:$0xff]
    %v6290 = vld [vmem:[#allocation2 + $0x68] sm:$0xff]
    %v6291 = vld [vmem:[#allocation2 + $0x80] sm:$0xff]
    %v6292 = vld [vmem:[#allocation2 + $0x88] sm:$0xff]
    %v6293 = vld [vmem:[#allocation2 + $0xa0] sm:$0xff]
    %v6294 = vld [vmem:[#allocation2 + $0xa8] sm:$0xff]
    %v6295 = vld [vmem:[#allocation2 + $0xc0] sm:$0x7f]
    %v6296 = vld [vmem:[#allocation2 + $0xc8] sm:$0x7f]
    %v6297 = vpack.c.bf16 %v6285, %v6283
    %v6298 = vpack.c.bf16 %v6286, %v6284
    %v6299 = vpack.c.bf16 %v6289, %v6287
    %v6300 = vpack.c.bf16 %v6290, %v6288
    %v6301 = vpack.c.bf16 %v6293, %v6291
    %v6302 = vpack.c.bf16 %v6294, %v6292
    %v6303 = vpack.c.bf16 %v6295, %v6295
    %v6304 = vpack.c.bf16 %v6296, %v6296
    %v6305 = vld [vmem:[#allocation6 + $0x1a0] sm:$0xf]
    %v6306 = vld [vmem:[#allocation6 + $0x1a8] sm:$0xf]
    %v6307 = vld [vmem:[#allocation6 + $0x1b0] sm:$0xf]
    %v6308 = vld [vmem:[#allocation6 + $0x1b8] sm:$0xf]
    %v6309 = vld [vmem:[#allocation6 + $0x1c0] sm:$0xf]
    %v6310 = vld [vmem:[#allocation6 + $0x1c8] sm:$0xf]
    %v6311 = vld [vmem:[#allocation6 + $0x1d0] sm:$0xf]
    %v6319 = vunpack.c.l.b16 %v6305
    %v6320 = vunpack.c.l.b16 %v6306
    %v6321 = vunpack.c.l.b16 %v6307
    %v6322 = vunpack.c.l.b16 %v6308
    %v6323 = vunpack.c.l.b16 %v6309
    %v6324 = vunpack.c.l.b16 %v6310
    %v6325 = vunpack.c.l.b16 %v6311
    %v6326 = vpack.c.b16 %v6320, %v6319
    %v6327 = vpack.c.b16 %v6322, %v6321
    %v6328 = vpack.c.b16 %v6324, %v6323
    %v6329 = vpack.c.b16 %v6325, %v6325
    %6338 = vrot.lane.b32.xlu0 %v6297, 120
    %v6339 = vpop.permute.xlu0 %6338
    %6340 = vrot.lane.b32.xlu0 %v6298, 120
    %v6341 = vpop.permute.xlu0 %6340
    %6342 = vrot.lane.b32.xlu0 %v6299, 120
    %v6343 = vpop.permute.xlu0 %6342
    %6344 = vrot.lane.b32.xlu0 %v6300, 120
    %v6345 = vpop.permute.xlu0 %6344
    %6346 = vrot.lane.b32.xlu0 %v6301, 120
    %v6347 = vpop.permute.xlu0 %6346
    %6348 = vrot.lane.b32.xlu0 %v6302, 120
    %v6349 = vpop.permute.xlu0 %6348
    %6350 = vrot.lane.b32.xlu0 %v6303, 120
    %v6351 = vpop.permute.xlu0 %6350
    %6352 = vrot.lane.b32.xlu0 %v6304, 120
    %v6353 = vpop.permute.xlu0 %6352
    %v6354 = vsel %vm231, %v6339, %v6341
    %v6355 = vsel %vm231, %v6343, %v6345
    %v6356 = vsel %vm231, %v6347, %v6349
    %v6357 = vsel %vm231, %v6351, %v6353
    %vm6361 = vcmask 449536
    %v6363 = vsel %vm6361, %v6326, 0
    %v6366 = vsel %vm6361, %v6327, 0
    %v6369 = vsel %vm6361, %v6328, 0
    %v6372 = vsel %vm6361, %v6329, 0
    %v6374 = vsel %vm238, 4294967295, 65535
    %v6375 = vsel %vm2445, %v6374, 0
    %v6377 = vand.u32 %v6357, %v6375
    %6379 = vmatprep.subr.bf16.mxu0 0
    %6380 = vmatpush1.bf16.msra.mxu0 0
    %6381 = vmatprep.subr.bf16.mxu0 0
    %6382 = vmatpush1.bf16.msra.mxu0 0
    %6383 = vmatprep.subr.bf16.mxu0 0
    %6384 = vmatpush1.bf16.msra.mxu0 0
    %6385 = vmatprep.subr.bf16.mxu0 0
    %6386 = vmatpush1.bf16.msra.mxu0 0
    %6387 = vmatprep.subr.bf16.mxu0 0
    %6388 = vmatpush1.bf16.msra.mxu0 %v6377
    %6389 = vmatprep.subr.bf16.mxu0 0
    %6390 = vmatpush1.bf16.msra.mxu0 %v6356
    %6391 = vmatprep.subr.bf16.mxu0 0
    %6392 = vmatpush1.bf16.msra.mxu0 %v6355
    %6393 = vmatprep.subr.bf16.mxu0 0
    %6394 = vmatpush1.bf16.msra.mxu0 %v6354
    %6395 = vmatprep.subr.bf16.mxu0 0
    %6396 = vmatpush2.bf16.msra.mxu0 0
    %6397 = vmatprep.subr.bf16.mxu0 0
    %6398 = vmatpush2.bf16.msra.mxu0 0
    %6399 = vmatprep.subr.bf16.mxu0 0
    %6400 = vmatpush2.bf16.msra.mxu0 0
    %6401 = vmatprep.subr.bf16.mxu0 0
    %6402 = vmatpush2.bf16.msra.mxu0 0
    %6403 = vmatprep.subr.bf16.mxu0 0
    %6404 = vmatpush2.bf16.msra.mxu0 0
    %6405 = vmatprep.subr.bf16.mxu0 0
    %6406 = vmatpush2.bf16.msra.mxu0 0
    %6407 = vmatprep.subr.bf16.mxu0 0
    %6408 = vmatpush2.bf16.msra.mxu0 0
    %6409 = vmatprep.subr.bf16.mxu0 0
    %6410 = vmatpush2.bf16.msra.mxu0 0
    %6411 = vmatprep.mubr.bf16.mxu0 0
    %6412 = vmatmul.mubr.bf16.gmra.mxu0 %v6363
    %v6413 = vpop.f32.mrf.mxu0
    %v6414 = vadd.f32 0.0, %v6413
    %v6415 = vpop.f32.mrf.mxu0
    %v6416 = vpop.f32.mrf.mxu0
    %v6417 = vadd.f32 0.0, %v6416
    %v6418 = vpop.f32.mrf.mxu0
    %6419 = vmatprep.mubr.bf16.mxu0 0
    %6420 = vmatmul.mubr.bf16.gmra.mxu0 %v6366
    %v6421 = vpop.f32.mrf.mxu0
    %v6422 = vadd.f32 0.0, %v6421
    %v6423 = vpop.f32.mrf.mxu0
    %v6424 = vpop.f32.mrf.mxu0
    %v6425 = vadd.f32 0.0, %v6424
    %v6426 = vpop.f32.mrf.mxu0
    %6427 = vmatprep.mubr.bf16.mxu0 0
    %6428 = vmatmul.mubr.bf16.gmra.mxu0 %v6369
    %v6429 = vpop.f32.mrf.mxu0
    %v6430 = vadd.f32 0.0, %v6429
    %v6431 = vpop.f32.mrf.mxu0
    %v6432 = vpop.f32.mrf.mxu0
    %v6433 = vadd.f32 0.0, %v6432
    %v6434 = vpop.f32.mrf.mxu0
    %6435 = vmatprep.mubr.bf16.mxu0 0
    %6436 = vmatmul.mubr.bf16.gmra.mxu0 %v6372
    %v6437 = vpop.f32.mrf.mxu0
    %v6438 = vadd.f32 0.0, %v6437
    %v6439 = vpop.f32.mrf.mxu0
    %v6440 = vpop.f32.mrf.mxu0
    %v6441 = vpop.f32.mrf.mxu0
    %6442 = vdwg.mxu0
    %v6443 = vmax.f32 %v6414, 0.0
    %v6444 = vmax.f32 %v6417, 0.0
    %v6445 = vmax.f32 %v6422, 0.0
    %v6446 = vmax.f32 %v6425, 0.0
    %v6447 = vmax.f32 %v6430, 0.0
    %v6448 = vmax.f32 %v6433, 0.0
    %v6449 = vmax.f32 %v6438, 0.0
    %6450 = vxpose.xlu0.b32.start [1/16] %v6443, 128
    %6451 = vxpose.xlu0.b32.cont [2/16] %v6444, 128
    %6452 = vxpose.xlu0.b32.cont [3/16] %v6445, 128
    %6453 = vxpose.xlu0.b32.cont [4/16] %v6446, 128
    %6454 = vxpose.xlu0.b32.cont [5/16] %v6447, 128
    %6455 = vxpose.xlu0.b32.cont [6/16] %v6448, 128
    %6456 = vxpose.xlu0.b32.cont [7/16] %v6449, 128
    %6457 = vxpose.xlu0.b32.cont [8/16] 0.0, 128
    %6458 = vxpose.xlu0.b32.cont [9/16] 0.0, 128
    %6459 = vxpose.xlu0.b32.cont [10/16] 0.0, 128
    %6460 = vxpose.xlu0.b32.cont [11/16] 0.0, 128
    %6461 = vxpose.xlu0.b32.cont [12/16] 0.0, 128
    %6462 = vxpose.xlu0.b32.cont [13/16] 0.0, 128
    %6463 = vxpose.xlu0.b32.cont [14/16] 0.0, 128
    %6464 = vxpose.xlu0.b32.cont [15/16] 0.0, 128
    %6465 = vxpose.xlu0.b32.end [16/16] 0.0, 128
    %v6466 = vpop.trf.xlu0
    %v6467 = vpop.trf.xlu0
    %v6468 = vpop.trf.xlu0
    %v6469 = vpop.trf.xlu0
    %v6470 = vpop.trf.xlu0
    %v6471 = vpop.trf.xlu0
    %v6472 = vpop.trf.xlu0
    %v6473 = vpop.trf.xlu0
    %v6474 = vpop.trf.xlu0
    %v6475 = vpop.trf.xlu0
    %v6476 = vpop.trf.xlu0
    %v6477 = vpop.trf.xlu0
    %v6478 = vpop.trf.xlu0
    %v6479 = vpop.trf.xlu0
    %v6480 = vpop.trf.xlu0
    %v6481 = vpop.trf.xlu0
    %v6483 = vrot.slane %v6469, 7
    %v6485 = vsel %vm2710, %v6467, %v6483
    %v6486 = vsel %vm785, %v6485, %v6467
    %v6487 = vsel %vm238, %v6486, %v6483
    %v6488 = vsel %vm2445, %v6487, %v6467
    %v6489 = vsel %vm659, %v6488, %v6483
    %v6490 = vsel %vm660, %v6489, %v6467
    %v6491 = vsel %vm3201, %v6490, %v6483
    %v6493 = vrot.slane %v6491, 6
    %v6495 = vrot.slane %v6491, 2
    %v6497 = vsel %vm785, %v6493, %v6495
    %v6498 = vsel %vm2445, %v6497, %v6493
    %v6499 = vsel %vm660, %v6498, %v6495
    %6501 = vrot.lane.b32.xlu0 %v6499, 56
    %v6502 = vpop.permute.xlu0 %6501
    %vm6504 = vcmask 457728
    %v6505 = vsel %vm6504, %v6491, %v6502
    %v6506 = vpack.c.bf16 %v6505, %v6505
    %v6507 = vld [vmem:[#allocation11] sm:$0xff]
    %v6508 = vld [vmem:[#allocation11 + $0x8] sm:$0xff]
    %v6509 = vld [vmem:[#allocation11 + $0x10] sm:$0xff]
    %v6510 = vld [vmem:[#allocation11 + $0x18] sm:$0xff]
    %v6511 = vld [vmem:[#allocation11 + $0x20] sm:$0xff]
    %v6512 = vld [vmem:[#allocation11 + $0x28] sm:$0xff]
    %v6513 = vld [vmem:[#allocation11 + $0x30] sm:$0xff]
    %v6514 = vld [vmem:[#allocation11 + $0x38] sm:$0xff]
    %v6515 = vld [vmem:[#allocation11 + $0x40] sm:$0xff]
    %v6516 = vld [vmem:[#allocation11 + $0x48] sm:$0xff]
    %v6517 = vld [vmem:[#allocation11 + $0x50] sm:$0xff]
    %v6518 = vld [vmem:[#allocation11 + $0x58] sm:$0xff]
    %v6519 = vld [vmem:[#allocation11 + $0x60] sm:$0xff]
    %v6520 = vld [vmem:[#allocation11 + $0x68] sm:$0xff]
    %v6521 = vld [vmem:[#allocation11 + $0x70] sm:$0xff]
    %v6522 = vld [vmem:[#allocation11 + $0x78] sm:$0xff]
    %v6523 = vld [vmem:[#allocation11 + $0x80] sm:$0xff]
    %v6524 = vld [vmem:[#allocation11 + $0x88] sm:$0xff]
    %v6525 = vld [vmem:[#allocation11 + $0x90] sm:$0xff]
    %v6526 = vld [vmem:[#allocation11 + $0x98] sm:$0xff]
    %v6527 = vld [vmem:[#allocation11 + $0xa0] sm:$0xff]
    %v6528 = vld [vmem:[#allocation11 + $0xa8] sm:$0xff]
    %v6529 = vld [vmem:[#allocation11 + $0xb0] sm:$0xff]
    %v6530 = vld [vmem:[#allocation11 + $0xb8] sm:$0xff]
    %v6531 = vld [vmem:[#allocation11 + $0xc0] sm:$0xff]
    %v6532 = vld [vmem:[#allocation11 + $0xc8] sm:$0xff]
    %v6533 = vld [vmem:[#allocation11 + $0xd0] sm:$0xff]
    %v6534 = vld [vmem:[#allocation11 + $0xd8] sm:$0xff]
    %v6535 = vld [vmem:[#allocation11 + $0xe0] sm:$0xff]
    %v6536 = vld [vmem:[#allocation11 + $0xe8] sm:$0xff]
    %v6537 = vld [vmem:[#allocation11 + $0xf0] sm:$0xff]
    %v6538 = vld [vmem:[#allocation11 + $0xf8] sm:$0xff]
    %v6539 = vld [vmem:[#allocation11 + $0x100] sm:$0xff]
    %v6540 = vld [vmem:[#allocation11 + $0x108] sm:$0xff]
    %v6541 = vld [vmem:[#allocation11 + $0x110] sm:$0xff]
    %v6542 = vld [vmem:[#allocation11 + $0x118] sm:$0xff]
    %v6543 = vld [vmem:[#allocation11 + $0x120] sm:$0xff]
    %v6544 = vld [vmem:[#allocation11 + $0x128] sm:$0xff]
    %v6545 = vld [vmem:[#allocation11 + $0x130] sm:$0xff]
    %v6546 = vld [vmem:[#allocation11 + $0x138] sm:$0xff]
    %v6547 = vld [vmem:[#allocation11 + $0x140] sm:$0xff]
    %v6548 = vld [vmem:[#allocation11 + $0x148] sm:$0xff]
    %v6549 = vld [vmem:[#allocation11 + $0x150] sm:$0xff]
    %v6550 = vld [vmem:[#allocation11 + $0x158] sm:$0xff]
    %v6551 = vld [vmem:[#allocation11 + $0x160] sm:$0xff]
    %v6552 = vld [vmem:[#allocation11 + $0x168] sm:$0xff]
    %v6553 = vld [vmem:[#allocation11 + $0x170] sm:$0xff]
    %v6554 = vld [vmem:[#allocation11 + $0x178] sm:$0xff]
    %v6555 = vld [vmem:[#allocation11 + $0x180] sm:$0xff]
    %v6556 = vld [vmem:[#allocation11 + $0x188] sm:$0xff]
    %v6557 = vld [vmem:[#allocation11 + $0x190] sm:$0xff]
    %v6558 = vld [vmem:[#allocation11 + $0x198] sm:$0xff]
    %v6559 = vld [vmem:[#allocation11 + $0x1a0] sm:$0xff]
    %v6560 = vld [vmem:[#allocation11 + $0x1a8] sm:$0xff]
    %v6561 = vld [vmem:[#allocation11 + $0x1b0] sm:$0xff]
    %v6562 = vld [vmem:[#allocation11 + $0x1b8] sm:$0xff]
    %v6563 = vld [vmem:[#allocation15] ss:$4 sm:$0xff]
    %v6565 = vlaneseq
    %v6566 = vshrl.u32 %v6565, 7
    %v6567 = vsub.s32 0, %v6566
    %v6568 = vrot.slane %v6563, %v6567
    %v6569 = vlaneseq
    %v6570 = vshrl.u32 %v6569, 7
    %v6571 = vsub.s32 1, %v6570
    %v6572 = vrot.slane %v6563, %v6571
    %v6573 = vlaneseq
    %v6574 = vshrl.u32 %v6573, 7
    %v6575 = vsub.s32 2, %v6574
    %v6576 = vrot.slane %v6563, %v6575
    %v6577 = vlaneseq
    %v6578 = vshrl.u32 %v6577, 7
    %v6579 = vsub.s32 3, %v6578
    %v6580 = vrot.slane %v6563, %v6579
    %v6581 = vlaneseq
    %v6582 = vshrl.u32 %v6581, 7
    %v6583 = vsub.s32 4, %v6582
    %v6584 = vrot.slane %v6563, %v6583
    %v6585 = vlaneseq
    %v6586 = vshrl.u32 %v6585, 7
    %v6587 = vsub.s32 5, %v6586
    %v6588 = vrot.slane %v6563, %v6587
    %v6589 = vlaneseq
    %v6590 = vshrl.u32 %v6589, 7
    %v6591 = vsub.s32 6, %v6590
    %v6592 = vrot.slane %v6563, %v6591
    %v6593 = vlaneseq
    %v6594 = vshrl.u32 %v6593, 7
    %v6595 = vsub.s32 7, %v6594
    %v6596 = vrot.slane %v6563, %v6595
    %v6661 = vunpack.c.l.b16 %v6507
    %v6662 = vunpack.c.h.b16 %v6507
    %v6663 = vunpack.c.l.b16 %v6508
    %v6664 = vunpack.c.h.b16 %v6508
    %v6665 = vunpack.c.l.b16 %v6509
    %v6666 = vunpack.c.h.b16 %v6509
    %v6667 = vunpack.c.l.b16 %v6510
    %v6668 = vunpack.c.h.b16 %v6510
    %v6669 = vunpack.c.l.b16 %v6511
    %v6670 = vunpack.c.h.b16 %v6511
    %v6671 = vunpack.c.l.b16 %v6512
    %v6672 = vunpack.c.h.b16 %v6512
    %v6673 = vunpack.c.l.b16 %v6513
    %v6674 = vunpack.c.h.b16 %v6513
    %v6675 = vunpack.c.l.b16 %v6514
    %v6676 = vunpack.c.h.b16 %v6514
    %v6677 = vunpack.c.l.b16 %v6515
    %v6678 = vunpack.c.h.b16 %v6515
    %v6679 = vunpack.c.l.b16 %v6516
    %v6680 = vunpack.c.h.b16 %v6516
    %v6681 = vunpack.c.l.b16 %v6517
    %v6682 = vunpack.c.h.b16 %v6517
    %v6683 = vunpack.c.l.b16 %v6518
    %v6684 = vunpack.c.h.b16 %v6518
    %v6685 = vunpack.c.l.b16 %v6519
    %v6686 = vunpack.c.h.b16 %v6519
    %v6687 = vunpack.c.l.b16 %v6520
    %v6688 = vunpack.c.h.b16 %v6520
    %v6689 = vunpack.c.l.b16 %v6521
    %v6690 = vunpack.c.h.b16 %v6521
    %v6691 = vunpack.c.l.b16 %v6522
    %v6692 = vunpack.c.h.b16 %v6522
    %v6693 = vunpack.c.l.b16 %v6523
    %v6694 = vunpack.c.h.b16 %v6523
    %v6695 = vunpack.c.l.b16 %v6524
    %v6696 = vunpack.c.h.b16 %v6524
    %v6697 = vunpack.c.l.b16 %v6525
    %v6698 = vunpack.c.h.b16 %v6525
    %v6699 = vunpack.c.l.b16 %v6526
    %v6700 = vunpack.c.h.b16 %v6526
    %v6701 = vunpack.c.l.b16 %v6527
    %v6702 = vunpack.c.h.b16 %v6527
    %v6703 = vunpack.c.l.b16 %v6528
    %v6704 = vunpack.c.h.b16 %v6528
    %v6705 = vunpack.c.l.b16 %v6529
    %v6706 = vunpack.c.h.b16 %v6529
    %v6707 = vunpack.c.l.b16 %v6530
    %v6708 = vunpack.c.h.b16 %v6530
    %v6709 = vunpack.c.l.b16 %v6531
    %v6710 = vunpack.c.h.b16 %v6531
    %v6711 = vunpack.c.l.b16 %v6532
    %v6712 = vunpack.c.h.b16 %v6532
    %v6713 = vunpack.c.l.b16 %v6533
    %v6714 = vunpack.c.h.b16 %v6533
    %v6715 = vunpack.c.l.b16 %v6534
    %v6716 = vunpack.c.h.b16 %v6534
    %v6717 = vunpack.c.l.b16 %v6535
    %v6718 = vunpack.c.h.b16 %v6535
    %v6719 = vunpack.c.l.b16 %v6536
    %v6720 = vunpack.c.h.b16 %v6536
    %v6721 = vunpack.c.l.b16 %v6537
    %v6722 = vunpack.c.h.b16 %v6537
    %v6723 = vunpack.c.l.b16 %v6538
    %v6724 = vunpack.c.h.b16 %v6538
    %v6725 = vunpack.c.l.b16 %v6539
    %v6726 = vunpack.c.h.b16 %v6539
    %v6727 = vunpack.c.l.b16 %v6540
    %v6728 = vunpack.c.h.b16 %v6540
    %v6729 = vunpack.c.l.b16 %v6541
    %v6730 = vunpack.c.h.b16 %v6541
    %v6731 = vunpack.c.l.b16 %v6542
    %v6732 = vunpack.c.h.b16 %v6542
    %v6733 = vunpack.c.l.b16 %v6543
    %v6734 = vunpack.c.h.b16 %v6543
    %v6735 = vunpack.c.l.b16 %v6544
    %v6736 = vunpack.c.h.b16 %v6544
    %v6737 = vunpack.c.l.b16 %v6545
    %v6738 = vunpack.c.h.b16 %v6545
    %v6739 = vunpack.c.l.b16 %v6546
    %v6740 = vunpack.c.h.b16 %v6546
    %v6741 = vunpack.c.l.b16 %v6547
    %v6742 = vunpack.c.h.b16 %v6547
    %v6743 = vunpack.c.l.b16 %v6548
    %v6744 = vunpack.c.h.b16 %v6548
    %v6745 = vunpack.c.l.b16 %v6549
    %v6746 = vunpack.c.h.b16 %v6549
    %v6747 = vunpack.c.l.b16 %v6550
    %v6748 = vunpack.c.h.b16 %v6550
    %v6749 = vunpack.c.l.b16 %v6551
    %v6750 = vunpack.c.h.b16 %v6551
    %v6751 = vunpack.c.l.b16 %v6552
    %v6752 = vunpack.c.h.b16 %v6552
    %v6753 = vunpack.c.l.b16 %v6553
    %v6754 = vunpack.c.h.b16 %v6553
    %v6755 = vunpack.c.l.b16 %v6554
    %v6756 = vunpack.c.h.b16 %v6554
    %v6757 = vunpack.c.l.b16 %v6555
    %v6758 = vunpack.c.h.b16 %v6555
    %v6759 = vunpack.c.l.b16 %v6556
    %v6760 = vunpack.c.h.b16 %v6556
    %v6761 = vunpack.c.l.b16 %v6557
    %v6762 = vunpack.c.h.b16 %v6557
    %v6763 = vunpack.c.l.b16 %v6558
    %v6764 = vunpack.c.h.b16 %v6558
    %v6765 = vunpack.c.l.b16 %v6559
    %v6766 = vunpack.c.h.b16 %v6559
    %v6767 = vunpack.c.l.b16 %v6560
    %v6768 = vunpack.c.h.b16 %v6560
    %v6769 = vunpack.c.l.b16 %v6561
    %v6770 = vunpack.c.h.b16 %v6561
    %v6771 = vunpack.c.l.b16 %v6562
    %v6772 = vunpack.c.h.b16 %v6562
    %v6773 = vpack.c.b16 %v6669, %v6661
    %v6774 = vpack.c.b16 %v6670, %v6662
    %v6775 = vpack.c.b16 %v6671, %v6663
    %v6776 = vpack.c.b16 %v6672, %v6664
    %v6777 = vpack.c.b16 %v6673, %v6665
    %v6778 = vpack.c.b16 %v6674, %v6666
    %v6779 = vpack.c.b16 %v6675, %v6667
    %v6780 = vpack.c.b16 %v6676, %v6668
    %v6781 = vpack.c.b16 %v6685, %v6677
    %v6782 = vpack.c.b16 %v6686, %v6678
    %v6783 = vpack.c.b16 %v6687, %v6679
    %v6784 = vpack.c.b16 %v6688, %v6680
    %v6785 = vpack.c.b16 %v6689, %v6681
    %v6786 = vpack.c.b16 %v6690, %v6682
    %v6787 = vpack.c.b16 %v6691, %v6683
    %v6788 = vpack.c.b16 %v6692, %v6684
    %v6789 = vpack.c.b16 %v6701, %v6693
    %v6790 = vpack.c.b16 %v6702, %v6694
    %v6791 = vpack.c.b16 %v6703, %v6695
    %v6792 = vpack.c.b16 %v6704, %v6696
    %v6793 = vpack.c.b16 %v6705, %v6697
    %v6794 = vpack.c.b16 %v6706, %v6698
    %v6795 = vpack.c.b16 %v6707, %v6699
    %v6796 = vpack.c.b16 %v6708, %v6700
    %v6797 = vpack.c.b16 %v6717, %v6709
    %v6798 = vpack.c.b16 %v6718, %v6710
    %v6799 = vpack.c.b16 %v6719, %v6711
    %v6800 = vpack.c.b16 %v6720, %v6712
    %v6801 = vpack.c.b16 %v6721, %v6713
    %v6802 = vpack.c.b16 %v6722, %v6714
    %v6803 = vpack.c.b16 %v6723, %v6715
    %v6804 = vpack.c.b16 %v6724, %v6716
    %v6805 = vpack.c.b16 %v6733, %v6725
    %v6806 = vpack.c.b16 %v6734, %v6726
    %v6807 = vpack.c.b16 %v6735, %v6727
    %v6808 = vpack.c.b16 %v6736, %v6728
    %v6809 = vpack.c.b16 %v6737, %v6729
    %v6810 = vpack.c.b16 %v6738, %v6730
    %v6811 = vpack.c.b16 %v6739, %v6731
    %v6812 = vpack.c.b16 %v6740, %v6732
    %v6813 = vpack.c.b16 %v6749, %v6741
    %v6814 = vpack.c.b16 %v6750, %v6742
    %v6815 = vpack.c.b16 %v6751, %v6743
    %v6816 = vpack.c.b16 %v6752, %v6744
    %v6817 = vpack.c.b16 %v6753, %v6745
    %v6818 = vpack.c.b16 %v6754, %v6746
    %v6819 = vpack.c.b16 %v6755, %v6747
    %v6820 = vpack.c.b16 %v6756, %v6748
    %v6821 = vpack.c.b16 %v6765, %v6757
    %v6822 = vpack.c.b16 %v6766, %v6758
    %v6823 = vpack.c.b16 %v6767, %v6759
    %v6824 = vpack.c.b16 %v6768, %v6760
    %v6825 = vpack.c.b16 %v6769, %v6761
    %v6826 = vpack.c.b16 %v6770, %v6762
    %v6827 = vpack.c.b16 %v6771, %v6763
    %v6828 = vpack.c.b16 %v6772, %v6764
    %vm6885 = vcmask 916480
    %v6887 = vsel %vm6885, %v6506, 0
    %6889 = vmatprep.subr.bf16.mxu0 0
    %6890 = vmatpush1.bf16.msra.mxu0 0
    %6891 = vmatprep.subr.bf16.mxu0 %v6822
    %6892 = vmatpush1.bf16.msra.mxu0 %v6821
    %6893 = vmatprep.subr.bf16.mxu0 %v6814
    %6894 = vmatpush1.bf16.msra.mxu0 %v6813
    %6895 = vmatprep.subr.bf16.mxu0 %v6806
    %6896 = vmatpush1.bf16.msra.mxu0 %v6805
    %6897 = vmatprep.subr.bf16.mxu0 %v6798
    %6898 = vmatpush1.bf16.msra.mxu0 %v6797
    %6899 = vmatprep.subr.bf16.mxu0 %v6790
    %6900 = vmatpush1.bf16.msra.mxu0 %v6789
    %6901 = vmatprep.subr.bf16.mxu0 %v6782
    %6902 = vmatpush1.bf16.msra.mxu0 %v6781
    %6903 = vmatprep.subr.bf16.mxu0 %v6774
    %6904 = vmatpush1.bf16.msra.mxu0 %v6773
    %6905 = vmatprep.subr.bf16.mxu0 0
    %6906 = vmatpush2.bf16.msra.mxu0 0
    %6907 = vmatprep.subr.bf16.mxu0 0
    %6908 = vmatpush2.bf16.msra.mxu0 0
    %6909 = vmatprep.subr.bf16.mxu0 0
    %6910 = vmatpush2.bf16.msra.mxu0 0
    %6911 = vmatprep.subr.bf16.mxu0 0
    %6912 = vmatpush2.bf16.msra.mxu0 0
    %6913 = vmatprep.subr.bf16.mxu0 0
    %6914 = vmatpush2.bf16.msra.mxu0 0
    %6915 = vmatprep.subr.bf16.mxu0 0
    %6916 = vmatpush2.bf16.msra.mxu0 0
    %6917 = vmatprep.subr.bf16.mxu0 0
    %6918 = vmatpush2.bf16.msra.mxu0 0
    %6919 = vmatprep.subr.bf16.mxu0 0
    %6920 = vmatpush2.bf16.msra.mxu0 0
    %6921 = vmatprep.mubr.bf16.mxu0 0
    %6922 = vmatmul.mubr.bf16.gmra.mxu0 %v6887
    %v6923 = vpop.f32.mrf.mxu0
    %v6924 = vadd.f32 %v6568, %v6923
    %v6925 = vpop.f32.mrf.mxu0
    %v6926 = vadd.f32 %v6572, %v6925
    %v6927 = vpop.f32.mrf.mxu0
    %v6928 = vpop.f32.mrf.mxu0
    %6929 = vdwg.mxu0
    %6930 = vmatprep.subr.bf16.mxu0 0
    %6931 = vmatpush1.bf16.msra.mxu0 0
    %6932 = vmatprep.subr.bf16.mxu0 %v6824
    %6933 = vmatpush1.bf16.msra.mxu0 %v6823
    %6934 = vmatprep.subr.bf16.mxu0 %v6816
    %6935 = vmatpush1.bf16.msra.mxu0 %v6815
    %6936 = vmatprep.subr.bf16.mxu0 %v6808
    %6937 = vmatpush1.bf16.msra.mxu0 %v6807
    %6938 = vmatprep.subr.bf16.mxu0 %v6800
    %6939 = vmatpush1.bf16.msra.mxu0 %v6799
    %6940 = vmatprep.subr.bf16.mxu0 %v6792
    %6941 = vmatpush1.bf16.msra.mxu0 %v6791
    %6942 = vmatprep.subr.bf16.mxu0 %v6784
    %6943 = vmatpush1.bf16.msra.mxu0 %v6783
    %6944 = vmatprep.subr.bf16.mxu0 %v6776
    %6945 = vmatpush1.bf16.msra.mxu0 %v6775
    %6946 = vmatprep.subr.bf16.mxu0 0
    %6947 = vmatpush2.bf16.msra.mxu0 0
    %6948 = vmatprep.subr.bf16.mxu0 0
    %6949 = vmatpush2.bf16.msra.mxu0 0
    %6950 = vmatprep.subr.bf16.mxu0 0
    %6951 = vmatpush2.bf16.msra.mxu0 0
    %6952 = vmatprep.subr.bf16.mxu0 0
    %6953 = vmatpush2.bf16.msra.mxu0 0
    %6954 = vmatprep.subr.bf16.mxu0 0
    %6955 = vmatpush2.bf16.msra.mxu0 0
    %6956 = vmatprep.subr.bf16.mxu0 0
    %6957 = vmatpush2.bf16.msra.mxu0 0
    %6958 = vmatprep.subr.bf16.mxu0 0
    %6959 = vmatpush2.bf16.msra.mxu0 0
    %6960 = vmatprep.subr.bf16.mxu0 0
    %6961 = vmatpush2.bf16.msra.mxu0 0
    %6962 = vmatprep.mubr.bf16.mxu0 0
    %6963 = vmatmul.mubr.bf16.gmra.mxu0 %v6887
    %v6964 = vpop.f32.mrf.mxu0
    %v6965 = vadd.f32 %v6576, %v6964
    %v6966 = vpop.f32.mrf.mxu0
    %v6967 = vadd.f32 %v6580, %v6966
    %v6968 = vpop.f32.mrf.mxu0
    %v6969 = vpop.f32.mrf.mxu0
    %6970 = vdwg.mxu0
    %6971 = vmatprep.subr.bf16.mxu0 0
    %6972 = vmatpush1.bf16.msra.mxu0 0
    %6973 = vmatprep.subr.bf16.mxu0 %v6826
    %6974 = vmatpush1.bf16.msra.mxu0 %v6825
    %6975 = vmatprep.subr.bf16.mxu0 %v6818
    %6976 = vmatpush1.bf16.msra.mxu0 %v6817
    %6977 = vmatprep.subr.bf16.mxu0 %v6810
    %6978 = vmatpush1.bf16.msra.mxu0 %v6809
    %6979 = vmatprep.subr.bf16.mxu0 %v6802
    %6980 = vmatpush1.bf16.msra.mxu0 %v6801
    %6981 = vmatprep.subr.bf16.mxu0 %v6794
    %6982 = vmatpush1.bf16.msra.mxu0 %v6793
    %6983 = vmatprep.subr.bf16.mxu0 %v6786
    %6984 = vmatpush1.bf16.msra.mxu0 %v6785
    %6985 = vmatprep.subr.bf16.mxu0 %v6778
    %6986 = vmatpush1.bf16.msra.mxu0 %v6777
    %6987 = vmatprep.subr.bf16.mxu0 0
    %6988 = vmatpush2.bf16.msra.mxu0 0
    %6989 = vmatprep.subr.bf16.mxu0 0
    %6990 = vmatpush2.bf16.msra.mxu0 0
    %6991 = vmatprep.subr.bf16.mxu0 0
    %6992 = vmatpush2.bf16.msra.mxu0 0
    %6993 = vmatprep.subr.bf16.mxu0 0
    %6994 = vmatpush2.bf16.msra.mxu0 0
    %6995 = vmatprep.subr.bf16.mxu0 0
    %6996 = vmatpush2.bf16.msra.mxu0 0
    %6997 = vmatprep.subr.bf16.mxu0 0
    %6998 = vmatpush2.bf16.msra.mxu0 0
    %6999 = vmatprep.subr.bf16.mxu0 0
    %7000 = vmatpush2.bf16.msra.mxu0 0
    %7001 = vmatprep.subr.bf16.mxu0 0
    %7002 = vmatpush2.bf16.msra.mxu0 0
    %7003 = vmatprep.mubr.bf16.mxu0 0
    %7004 = vmatmul.mubr.bf16.gmra.mxu0 %v6887
    %v7005 = vpop.f32.mrf.mxu0
    %v7006 = vadd.f32 %v6584, %v7005
    %v7007 = vpop.f32.mrf.mxu0
    %v7008 = vadd.f32 %v6588, %v7007
    %v7009 = vpop.f32.mrf.mxu0
    %v7010 = vpop.f32.mrf.mxu0
    %7011 = vdwg.mxu0
    %7012 = vmatprep.subr.bf16.mxu0 0
    %7013 = vmatpush1.bf16.msra.mxu0 0
    %7014 = vmatprep.subr.bf16.mxu0 %v6828
    %7015 = vmatpush1.bf16.msra.mxu0 %v6827
    %7016 = vmatprep.subr.bf16.mxu0 %v6820
    %7017 = vmatpush1.bf16.msra.mxu0 %v6819
    %7018 = vmatprep.subr.bf16.mxu0 %v6812
    %7019 = vmatpush1.bf16.msra.mxu0 %v6811
    %7020 = vmatprep.subr.bf16.mxu0 %v6804
    %7021 = vmatpush1.bf16.msra.mxu0 %v6803
    %7022 = vmatprep.subr.bf16.mxu0 %v6796
    %7023 = vmatpush1.bf16.msra.mxu0 %v6795
    %7024 = vmatprep.subr.bf16.mxu0 %v6788
    %7025 = vmatpush1.bf16.msra.mxu0 %v6787
    %7026 = vmatprep.subr.bf16.mxu0 %v6780
    %7027 = vmatpush1.bf16.msra.mxu0 %v6779
    %7028 = vmatprep.subr.bf16.mxu0 0
    %7029 = vmatpush2.bf16.msra.mxu0 0
    %7030 = vmatprep.subr.bf16.mxu0 0
    %7031 = vmatpush2.bf16.msra.mxu0 0
    %7032 = vmatprep.subr.bf16.mxu0 0
    %7033 = vmatpush2.bf16.msra.mxu0 0
    %7034 = vmatprep.subr.bf16.mxu0 0
    %7035 = vmatpush2.bf16.msra.mxu0 0
    %7036 = vmatprep.subr.bf16.mxu0 0
    %7037 = vmatpush2.bf16.msra.mxu0 0
    %7038 = vmatprep.subr.bf16.mxu0 0
    %7039 = vmatpush2.bf16.msra.mxu0 0
    %7040 = vmatprep.subr.bf16.mxu0 0
    %7041 = vmatpush2.bf16.msra.mxu0 0
    %7042 = vmatprep.subr.bf16.mxu0 0
    %7043 = vmatpush2.bf16.msra.mxu0 0
    %7044 = vmatprep.mubr.bf16.mxu0 0
    %7045 = vmatmul.mubr.bf16.gmra.mxu0 %v6887
    %v7046 = vpop.f32.mrf.mxu0
    %v7047 = vadd.f32 %v6592, %v7046
    %v7048 = vpop.f32.mrf.mxu0
    %v7049 = vadd.f32 %v6596, %v7048
    %v7050 = vpop.f32.mrf.mxu0
    %v7051 = vpop.f32.mrf.mxu0
    %7052 = vdwg.mxu0
    %v7053 = vld [vmem:[#allocation12] sm:$0xff]
    %v7054 = vld [vmem:[#allocation12 + $0x8] sm:$0xff]
    %v7055 = vld [vmem:[#allocation12 + $0x10] sm:$0xff]
    %v7056 = vld [vmem:[#allocation12 + $0x18] sm:$0xff]
    %v7057 = vld [vmem:[#allocation12 + $0x20] sm:$0xff]
    %v7058 = vld [vmem:[#allocation12 + $0x28] sm:$0xff]
    %v7059 = vld [vmem:[#allocation12 + $0x30] sm:$0xff]
    %v7060 = vld [vmem:[#allocation12 + $0x38] sm:$0xff]
    %v7061 = vld [vmem:[#allocation12 + $0x40] sm:$0xff]
    %v7062 = vld [vmem:[#allocation12 + $0x48] sm:$0xff]
    %v7063 = vld [vmem:[#allocation12 + $0x50] sm:$0xff]
    %v7064 = vld [vmem:[#allocation12 + $0x58] sm:$0xff]
    %v7065 = vld [vmem:[#allocation12 + $0x60] sm:$0xff]
    %v7066 = vld [vmem:[#allocation12 + $0x68] sm:$0xff]
    %v7067 = vld [vmem:[#allocation12 + $0x70] sm:$0xff]
    %v7068 = vld [vmem:[#allocation12 + $0x78] sm:$0xff]
    %v7069 = vld [vmem:[#allocation12 + $0x80] sm:$0xff]
    %v7070 = vld [vmem:[#allocation12 + $0x88] sm:$0xff]
    %v7071 = vld [vmem:[#allocation12 + $0x90] sm:$0xff]
    %v7072 = vld [vmem:[#allocation12 + $0x98] sm:$0xff]
    %v7073 = vld [vmem:[#allocation12 + $0xa0] sm:$0xff]
    %v7074 = vld [vmem:[#allocation12 + $0xa8] sm:$0xff]
    %v7075 = vld [vmem:[#allocation12 + $0xb0] sm:$0xff]
    %v7076 = vld [vmem:[#allocation12 + $0xb8] sm:$0xff]
    %v7077 = vld [vmem:[#allocation12 + $0xc0] sm:$0xff]
    %v7078 = vld [vmem:[#allocation12 + $0xc8] sm:$0xff]
    %v7079 = vld [vmem:[#allocation12 + $0xd0] sm:$0xff]
    %v7080 = vld [vmem:[#allocation12 + $0xd8] sm:$0xff]
    %v7081 = vld [vmem:[#allocation12 + $0xe0] sm:$0xff]
    %v7082 = vld [vmem:[#allocation12 + $0xe8] sm:$0xff]
    %v7083 = vld [vmem:[#allocation12 + $0xf0] sm:$0xff]
    %v7084 = vld [vmem:[#allocation12 + $0xf8] sm:$0xff]
    %v7085 = vld [vmem:[#allocation12 + $0x100] sm:$0xff]
    %v7086 = vld [vmem:[#allocation12 + $0x108] sm:$0xff]
    %v7087 = vld [vmem:[#allocation12 + $0x110] sm:$0xff]
    %v7088 = vld [vmem:[#allocation12 + $0x118] sm:$0xff]
    %v7089 = vld [vmem:[#allocation12 + $0x120] sm:$0xff]
    %v7090 = vld [vmem:[#allocation12 + $0x128] sm:$0xff]
    %v7091 = vld [vmem:[#allocation12 + $0x130] sm:$0xff]
    %v7092 = vld [vmem:[#allocation12 + $0x138] sm:$0xff]
    %v7093 = vld [vmem:[#allocation12 + $0x140] sm:$0xff]
    %v7094 = vld [vmem:[#allocation12 + $0x148] sm:$0xff]
    %v7095 = vld [vmem:[#allocation12 + $0x150] sm:$0xff]
    %v7096 = vld [vmem:[#allocation12 + $0x158] sm:$0xff]
    %v7097 = vld [vmem:[#allocation12 + $0x160] sm:$0xff]
    %v7098 = vld [vmem:[#allocation12 + $0x168] sm:$0xff]
    %v7099 = vld [vmem:[#allocation12 + $0x170] sm:$0xff]
    %v7100 = vld [vmem:[#allocation12 + $0x178] sm:$0xff]
    %v7101 = vld [vmem:[#allocation12 + $0x180] sm:$0xff]
    %v7102 = vld [vmem:[#allocation12 + $0x188] sm:$0xff]
    %v7103 = vld [vmem:[#allocation12 + $0x190] sm:$0xff]
    %v7104 = vld [vmem:[#allocation12 + $0x198] sm:$0xff]
    %v7105 = vld [vmem:[#allocation12 + $0x1a0] sm:$0xff]
    %v7106 = vld [vmem:[#allocation12 + $0x1a8] sm:$0xff]
    %v7107 = vld [vmem:[#allocation12 + $0x1b0] sm:$0xff]
    %v7108 = vld [vmem:[#allocation12 + $0x1b8] sm:$0xff]
    %v7109 = vld [vmem:[#allocation12 + $0x1c0] sm:$0xff]
    %v7110 = vld [vmem:[#allocation12 + $0x1c8] sm:$0xff]
    %v7111 = vld [vmem:[#allocation12 + $0x1d0] sm:$0xff]
    %v7112 = vld [vmem:[#allocation12 + $0x1d8] sm:$0xff]
    %v7113 = vld [vmem:[#allocation12 + $0x1e0] sm:$0xff]
    %v7114 = vld [vmem:[#allocation12 + $0x1e8] sm:$0xff]
    %v7115 = vld [vmem:[#allocation12 + $0x1f0] sm:$0xff]
    %v7116 = vld [vmem:[#allocation12 + $0x1f8] sm:$0xff]
    %v7117 = vld [vmem:[#allocation12 + $0x200] sm:$0xff]
    %v7118 = vld [vmem:[#allocation12 + $0x208] sm:$0xff]
    %v7119 = vld [vmem:[#allocation12 + $0x210] sm:$0xff]
    %v7120 = vld [vmem:[#allocation12 + $0x218] sm:$0xff]
    %v7121 = vld [vmem:[#allocation12 + $0x220] sm:$0xff]
    %v7122 = vld [vmem:[#allocation12 + $0x228] sm:$0xff]
    %v7123 = vld [vmem:[#allocation12 + $0x230] sm:$0xff]
    %v7124 = vld [vmem:[#allocation12 + $0x238] sm:$0xff]
    %v7125 = vld [vmem:[#allocation12 + $0x240] sm:$0xff]
    %v7126 = vld [vmem:[#allocation12 + $0x248] sm:$0xff]
    %v7127 = vld [vmem:[#allocation12 + $0x250] sm:$0xff]
    %v7128 = vld [vmem:[#allocation12 + $0x258] sm:$0xff]
    %v7129 = vld [vmem:[#allocation12 + $0x260] sm:$0xff]
    %v7130 = vld [vmem:[#allocation12 + $0x268] sm:$0xff]
    %v7131 = vld [vmem:[#allocation12 + $0x270] sm:$0xff]
    %v7132 = vld [vmem:[#allocation12 + $0x278] sm:$0xff]
    %v7133 = vld [vmem:[#allocation12 + $0x280] sm:$0xff]
    %v7134 = vld [vmem:[#allocation12 + $0x288] sm:$0xff]
    %v7135 = vld [vmem:[#allocation12 + $0x290] sm:$0xff]
    %v7136 = vld [vmem:[#allocation12 + $0x298] sm:$0xff]
    %v7137 = vld [vmem:[#allocation12 + $0x2a0] sm:$0xff]
    %v7138 = vld [vmem:[#allocation12 + $0x2a8] sm:$0xff]
    %v7139 = vld [vmem:[#allocation12 + $0x2b0] sm:$0xff]
    %v7140 = vld [vmem:[#allocation12 + $0x2b8] sm:$0xff]
    %v7141 = vld [vmem:[#allocation12 + $0x2c0] sm:$0xff]
    %v7142 = vld [vmem:[#allocation12 + $0x2c8] sm:$0xff]
    %v7143 = vld [vmem:[#allocation12 + $0x2d0] sm:$0xff]
    %v7144 = vld [vmem:[#allocation12 + $0x2d8] sm:$0xff]
    %v7145 = vld [vmem:[#allocation12 + $0x2e0] sm:$0xff]
    %v7146 = vld [vmem:[#allocation12 + $0x2e8] sm:$0xff]
    %v7147 = vld [vmem:[#allocation12 + $0x2f0] sm:$0xff]
    %v7148 = vld [vmem:[#allocation12 + $0x2f8] sm:$0xff]
    %v7149 = vld [vmem:[#allocation12 + $0x300] sm:$0xff]
    %v7150 = vld [vmem:[#allocation12 + $0x308] sm:$0xff]
    %v7151 = vld [vmem:[#allocation12 + $0x310] sm:$0xff]
    %v7152 = vld [vmem:[#allocation12 + $0x318] sm:$0xff]
    %v7153 = vld [vmem:[#allocation12 + $0x320] sm:$0xff]
    %v7154 = vld [vmem:[#allocation12 + $0x328] sm:$0xff]
    %v7155 = vld [vmem:[#allocation12 + $0x330] sm:$0xff]
    %v7156 = vld [vmem:[#allocation12 + $0x338] sm:$0xff]
    %v7157 = vld [vmem:[#allocation12 + $0x340] sm:$0xff]
    %v7158 = vld [vmem:[#allocation12 + $0x348] sm:$0xff]
    %v7159 = vld [vmem:[#allocation12 + $0x350] sm:$0xff]
    %v7160 = vld [vmem:[#allocation12 + $0x358] sm:$0xff]
    %v7161 = vld [vmem:[#allocation12 + $0x360] sm:$0xff]
    %v7162 = vld [vmem:[#allocation12 + $0x368] sm:$0xff]
    %v7163 = vld [vmem:[#allocation12 + $0x370] sm:$0xff]
    %v7164 = vld [vmem:[#allocation12 + $0x378] sm:$0xff]
    %v7165 = vld [vmem:[#allocation12 + $0x380] sm:$0xff]
    %v7166 = vld [vmem:[#allocation12 + $0x388] sm:$0xff]
    %v7167 = vld [vmem:[#allocation12 + $0x390] sm:$0xff]
    %v7168 = vld [vmem:[#allocation12 + $0x398] sm:$0xff]
    %v7169 = vld [vmem:[#allocation12 + $0x3a0] sm:$0xff]
    %v7170 = vld [vmem:[#allocation12 + $0x3a8] sm:$0xff]
    %v7171 = vld [vmem:[#allocation12 + $0x3b0] sm:$0xff]
    %v7172 = vld [vmem:[#allocation12 + $0x3b8] sm:$0xff]
    %v7173 = vld [vmem:[#allocation12 + $0x3c0] sm:$0xff]
    %v7174 = vld [vmem:[#allocation12 + $0x3c8] sm:$0xff]
    %v7175 = vld [vmem:[#allocation12 + $0x3d0] sm:$0xff]
    %v7176 = vld [vmem:[#allocation12 + $0x3d8] sm:$0xff]
    %v7177 = vld [vmem:[#allocation12 + $0x3e0] sm:$0xff]
    %v7178 = vld [vmem:[#allocation12 + $0x3e8] sm:$0xff]
    %v7179 = vld [vmem:[#allocation12 + $0x3f0] sm:$0xff]
    %v7180 = vld [vmem:[#allocation12 + $0x3f8] sm:$0xff]
    %v7309 = vunpack.c.l.b16 %v7053
    %v7310 = vunpack.c.h.b16 %v7053
    %v7311 = vunpack.c.l.b16 %v7054
    %v7312 = vunpack.c.h.b16 %v7054
    %v7313 = vunpack.c.l.b16 %v7055
    %v7314 = vunpack.c.h.b16 %v7055
    %v7315 = vunpack.c.l.b16 %v7056
    %v7316 = vunpack.c.h.b16 %v7056
    %v7317 = vunpack.c.l.b16 %v7057
    %v7318 = vunpack.c.h.b16 %v7057
    %v7319 = vunpack.c.l.b16 %v7058
    %v7320 = vunpack.c.h.b16 %v7058
    %v7321 = vunpack.c.l.b16 %v7059
    %v7322 = vunpack.c.h.b16 %v7059
    %v7323 = vunpack.c.l.b16 %v7060
    %v7324 = vunpack.c.h.b16 %v7060
    %v7325 = vunpack.c.l.b16 %v7061
    %v7326 = vunpack.c.h.b16 %v7061
    %v7327 = vunpack.c.l.b16 %v7062
    %v7328 = vunpack.c.h.b16 %v7062
    %v7329 = vunpack.c.l.b16 %v7063
    %v7330 = vunpack.c.h.b16 %v7063
    %v7331 = vunpack.c.l.b16 %v7064
    %v7332 = vunpack.c.h.b16 %v7064
    %v7333 = vunpack.c.l.b16 %v7065
    %v7334 = vunpack.c.h.b16 %v7065
    %v7335 = vunpack.c.l.b16 %v7066
    %v7336 = vunpack.c.h.b16 %v7066
    %v7337 = vunpack.c.l.b16 %v7067
    %v7338 = vunpack.c.h.b16 %v7067
    %v7339 = vunpack.c.l.b16 %v7068
    %v7340 = vunpack.c.h.b16 %v7068
    %v7341 = vunpack.c.l.b16 %v7069
    %v7342 = vunpack.c.h.b16 %v7069
    %v7343 = vunpack.c.l.b16 %v7070
    %v7344 = vunpack.c.h.b16 %v7070
    %v7345 = vunpack.c.l.b16 %v7071
    %v7346 = vunpack.c.h.b16 %v7071
    %v7347 = vunpack.c.l.b16 %v7072
    %v7348 = vunpack.c.h.b16 %v7072
    %v7349 = vunpack.c.l.b16 %v7073
    %v7350 = vunpack.c.h.b16 %v7073
    %v7351 = vunpack.c.l.b16 %v7074
    %v7352 = vunpack.c.h.b16 %v7074
    %v7353 = vunpack.c.l.b16 %v7075
    %v7354 = vunpack.c.h.b16 %v7075
    %v7355 = vunpack.c.l.b16 %v7076
    %v7356 = vunpack.c.h.b16 %v7076
    %v7357 = vunpack.c.l.b16 %v7077
    %v7358 = vunpack.c.h.b16 %v7077
    %v7359 = vunpack.c.l.b16 %v7078
    %v7360 = vunpack.c.h.b16 %v7078
    %v7361 = vunpack.c.l.b16 %v7079
    %v7362 = vunpack.c.h.b16 %v7079
    %v7363 = vunpack.c.l.b16 %v7080
    %v7364 = vunpack.c.h.b16 %v7080
    %v7365 = vunpack.c.l.b16 %v7081
    %v7366 = vunpack.c.h.b16 %v7081
    %v7367 = vunpack.c.l.b16 %v7082
    %v7368 = vunpack.c.h.b16 %v7082
    %v7369 = vunpack.c.l.b16 %v7083
    %v7370 = vunpack.c.h.b16 %v7083
    %v7371 = vunpack.c.l.b16 %v7084
    %v7372 = vunpack.c.h.b16 %v7084
    %v7373 = vunpack.c.l.b16 %v7085
    %v7374 = vunpack.c.h.b16 %v7085
    %v7375 = vunpack.c.l.b16 %v7086
    %v7376 = vunpack.c.h.b16 %v7086
    %v7377 = vunpack.c.l.b16 %v7087
    %v7378 = vunpack.c.h.b16 %v7087
    %v7379 = vunpack.c.l.b16 %v7088
    %v7380 = vunpack.c.h.b16 %v7088
    %v7381 = vunpack.c.l.b16 %v7089
    %v7382 = vunpack.c.h.b16 %v7089
    %v7383 = vunpack.c.l.b16 %v7090
    %v7384 = vunpack.c.h.b16 %v7090
    %v7385 = vunpack.c.l.b16 %v7091
    %v7386 = vunpack.c.h.b16 %v7091
    %v7387 = vunpack.c.l.b16 %v7092
    %v7388 = vunpack.c.h.b16 %v7092
    %v7389 = vunpack.c.l.b16 %v7093
    %v7390 = vunpack.c.h.b16 %v7093
    %v7391 = vunpack.c.l.b16 %v7094
    %v7392 = vunpack.c.h.b16 %v7094
    %v7393 = vunpack.c.l.b16 %v7095
    %v7394 = vunpack.c.h.b16 %v7095
    %v7395 = vunpack.c.l.b16 %v7096
    %v7396 = vunpack.c.h.b16 %v7096
    %v7397 = vunpack.c.l.b16 %v7097
    %v7398 = vunpack.c.h.b16 %v7097
    %v7399 = vunpack.c.l.b16 %v7098
    %v7400 = vunpack.c.h.b16 %v7098
    %v7401 = vunpack.c.l.b16 %v7099
    %v7402 = vunpack.c.h.b16 %v7099
    %v7403 = vunpack.c.l.b16 %v7100
    %v7404 = vunpack.c.h.b16 %v7100
    %v7405 = vunpack.c.l.b16 %v7101
    %v7406 = vunpack.c.h.b16 %v7101
    %v7407 = vunpack.c.l.b16 %v7102
    %v7408 = vunpack.c.h.b16 %v7102
    %v7409 = vunpack.c.l.b16 %v7103
    %v7410 = vunpack.c.h.b16 %v7103
    %v7411 = vunpack.c.l.b16 %v7104
    %v7412 = vunpack.c.h.b16 %v7104
    %v7413 = vunpack.c.l.b16 %v7105
    %v7414 = vunpack.c.h.b16 %v7105
    %v7415 = vunpack.c.l.b16 %v7106
    %v7416 = vunpack.c.h.b16 %v7106
    %v7417 = vunpack.c.l.b16 %v7107
    %v7418 = vunpack.c.h.b16 %v7107
    %v7419 = vunpack.c.l.b16 %v7108
    %v7420 = vunpack.c.h.b16 %v7108
    %v7421 = vunpack.c.l.b16 %v7109
    %v7422 = vunpack.c.h.b16 %v7109
    %v7423 = vunpack.c.l.b16 %v7110
    %v7424 = vunpack.c.h.b16 %v7110
    %v7425 = vunpack.c.l.b16 %v7111
    %v7426 = vunpack.c.h.b16 %v7111
    %v7427 = vunpack.c.l.b16 %v7112
    %v7428 = vunpack.c.h.b16 %v7112
    %v7429 = vunpack.c.l.b16 %v7113
    %v7430 = vunpack.c.h.b16 %v7113
    %v7431 = vunpack.c.l.b16 %v7114
    %v7432 = vunpack.c.h.b16 %v7114
    %v7433 = vunpack.c.l.b16 %v7115
    %v7434 = vunpack.c.h.b16 %v7115
    %v7435 = vunpack.c.l.b16 %v7116
    %v7436 = vunpack.c.h.b16 %v7116
    %v7437 = vunpack.c.l.b16 %v7117
    %v7438 = vunpack.c.h.b16 %v7117
    %v7439 = vunpack.c.l.b16 %v7118
    %v7440 = vunpack.c.h.b16 %v7118
    %v7441 = vunpack.c.l.b16 %v7119
    %v7442 = vunpack.c.h.b16 %v7119
    %v7443 = vunpack.c.l.b16 %v7120
    %v7444 = vunpack.c.h.b16 %v7120
    %v7445 = vunpack.c.l.b16 %v7121
    %v7446 = vunpack.c.h.b16 %v7121
    %v7447 = vunpack.c.l.b16 %v7122
    %v7448 = vunpack.c.h.b16 %v7122
    %v7449 = vunpack.c.l.b16 %v7123
    %v7450 = vunpack.c.h.b16 %v7123
    %v7451 = vunpack.c.l.b16 %v7124
    %v7452 = vunpack.c.h.b16 %v7124
    %v7453 = vunpack.c.l.b16 %v7125
    %v7454 = vunpack.c.h.b16 %v7125
    %v7455 = vunpack.c.l.b16 %v7126
    %v7456 = vunpack.c.h.b16 %v7126
    %v7457 = vunpack.c.l.b16 %v7127
    %v7458 = vunpack.c.h.b16 %v7127
    %v7459 = vunpack.c.l.b16 %v7128
    %v7460 = vunpack.c.h.b16 %v7128
    %v7461 = vunpack.c.l.b16 %v7129
    %v7462 = vunpack.c.h.b16 %v7129
    %v7463 = vunpack.c.l.b16 %v7130
    %v7464 = vunpack.c.h.b16 %v7130
    %v7465 = vunpack.c.l.b16 %v7131
    %v7466 = vunpack.c.h.b16 %v7131
    %v7467 = vunpack.c.l.b16 %v7132
    %v7468 = vunpack.c.h.b16 %v7132
    %v7469 = vunpack.c.l.b16 %v7133
    %v7470 = vunpack.c.h.b16 %v7133
    %v7471 = vunpack.c.l.b16 %v7134
    %v7472 = vunpack.c.h.b16 %v7134
    %v7473 = vunpack.c.l.b16 %v7135
    %v7474 = vunpack.c.h.b16 %v7135
    %v7475 = vunpack.c.l.b16 %v7136
    %v7476 = vunpack.c.h.b16 %v7136
    %v7477 = vunpack.c.l.b16 %v7137
    %v7478 = vunpack.c.h.b16 %v7137
    %v7479 = vunpack.c.l.b16 %v7138
    %v7480 = vunpack.c.h.b16 %v7138
    %v7481 = vunpack.c.l.b16 %v7139
    %v7482 = vunpack.c.h.b16 %v7139
    %v7483 = vunpack.c.l.b16 %v7140
    %v7484 = vunpack.c.h.b16 %v7140
    %v7485 = vunpack.c.l.b16 %v7141
    %v7486 = vunpack.c.h.b16 %v7141
    %v7487 = vunpack.c.l.b16 %v7142
    %v7488 = vunpack.c.h.b16 %v7142
    %v7489 = vunpack.c.l.b16 %v7143
    %v7490 = vunpack.c.h.b16 %v7143
    %v7491 = vunpack.c.l.b16 %v7144
    %v7492 = vunpack.c.h.b16 %v7144
    %v7493 = vunpack.c.l.b16 %v7145
    %v7494 = vunpack.c.h.b16 %v7145
    %v7495 = vunpack.c.l.b16 %v7146
    %v7496 = vunpack.c.h.b16 %v7146
    %v7497 = vunpack.c.l.b16 %v7147
    %v7498 = vunpack.c.h.b16 %v7147
    %v7499 = vunpack.c.l.b16 %v7148
    %v7500 = vunpack.c.h.b16 %v7148
    %v7501 = vunpack.c.l.b16 %v7149
    %v7502 = vunpack.c.h.b16 %v7149
    %v7503 = vunpack.c.l.b16 %v7150
    %v7504 = vunpack.c.h.b16 %v7150
    %v7505 = vunpack.c.l.b16 %v7151
    %v7506 = vunpack.c.h.b16 %v7151
    %v7507 = vunpack.c.l.b16 %v7152
    %v7508 = vunpack.c.h.b16 %v7152
    %v7509 = vunpack.c.l.b16 %v7153
    %v7510 = vunpack.c.h.b16 %v7153
    %v7511 = vunpack.c.l.b16 %v7154
    %v7512 = vunpack.c.h.b16 %v7154
    %v7513 = vunpack.c.l.b16 %v7155
    %v7514 = vunpack.c.h.b16 %v7155
    %v7515 = vunpack.c.l.b16 %v7156
    %v7516 = vunpack.c.h.b16 %v7156
    %v7517 = vunpack.c.l.b16 %v7157
    %v7518 = vunpack.c.h.b16 %v7157
    %v7519 = vunpack.c.l.b16 %v7158
    %v7520 = vunpack.c.h.b16 %v7158
    %v7521 = vunpack.c.l.b16 %v7159
    %v7522 = vunpack.c.h.b16 %v7159
    %v7523 = vunpack.c.l.b16 %v7160
    %v7524 = vunpack.c.h.b16 %v7160
    %v7525 = vunpack.c.l.b16 %v7161
    %v7526 = vunpack.c.h.b16 %v7161
    %v7527 = vunpack.c.l.b16 %v7162
    %v7528 = vunpack.c.h.b16 %v7162
    %v7529 = vunpack.c.l.b16 %v7163
    %v7530 = vunpack.c.h.b16 %v7163
    %v7531 = vunpack.c.l.b16 %v7164
    %v7532 = vunpack.c.h.b16 %v7164
    %v7533 = vunpack.c.l.b16 %v7165
    %v7534 = vunpack.c.h.b16 %v7165
    %v7535 = vunpack.c.l.b16 %v7166
    %v7536 = vunpack.c.h.b16 %v7166
    %v7537 = vunpack.c.l.b16 %v7167
    %v7538 = vunpack.c.h.b16 %v7167
    %v7539 = vunpack.c.l.b16 %v7168
    %v7540 = vunpack.c.h.b16 %v7168
    %v7541 = vunpack.c.l.b16 %v7169
    %v7542 = vunpack.c.h.b16 %v7169
    %v7543 = vunpack.c.l.b16 %v7170
    %v7544 = vunpack.c.h.b16 %v7170
    %v7545 = vunpack.c.l.b16 %v7171
    %v7546 = vunpack.c.h.b16 %v7171
    %v7547 = vunpack.c.l.b16 %v7172
    %v7548 = vunpack.c.h.b16 %v7172
    %v7549 = vunpack.c.l.b16 %v7173
    %v7550 = vunpack.c.h.b16 %v7173
    %v7551 = vunpack.c.l.b16 %v7174
    %v7552 = vunpack.c.h.b16 %v7174
    %v7553 = vunpack.c.l.b16 %v7175
    %v7554 = vunpack.c.h.b16 %v7175
    %v7555 = vunpack.c.l.b16 %v7176
    %v7556 = vunpack.c.h.b16 %v7176
    %v7557 = vunpack.c.l.b16 %v7177
    %v7558 = vunpack.c.h.b16 %v7177
    %v7559 = vunpack.c.l.b16 %v7178
    %v7560 = vunpack.c.h.b16 %v7178
    %v7561 = vunpack.c.l.b16 %v7179
    %v7562 = vunpack.c.h.b16 %v7179
    %v7563 = vunpack.c.l.b16 %v7180
    %v7564 = vunpack.c.h.b16 %v7180
    %v7565 = vpack.c.b16 %v7317, %v7309
    %v7566 = vpack.c.b16 %v7318, %v7310
    %v7567 = vpack.c.b16 %v7319, %v7311
    %v7568 = vpack.c.b16 %v7320, %v7312
    %v7569 = vpack.c.b16 %v7321, %v7313
    %v7570 = vpack.c.b16 %v7322, %v7314
    %v7571 = vpack.c.b16 %v7323, %v7315
    %v7572 = vpack.c.b16 %v7324, %v7316
    %v7573 = vpack.c.b16 %v7333, %v7325
    %v7574 = vpack.c.b16 %v7334, %v7326
    %v7575 = vpack.c.b16 %v7335, %v7327
    %v7576 = vpack.c.b16 %v7336, %v7328
    %v7577 = vpack.c.b16 %v7337, %v7329
    %v7578 = vpack.c.b16 %v7338, %v7330
    %v7579 = vpack.c.b16 %v7339, %v7331
    %v7580 = vpack.c.b16 %v7340, %v7332
    %v7581 = vpack.c.b16 %v7349, %v7341
    %v7582 = vpack.c.b16 %v7350, %v7342
    %v7583 = vpack.c.b16 %v7351, %v7343
    %v7584 = vpack.c.b16 %v7352, %v7344
    %v7585 = vpack.c.b16 %v7353, %v7345
    %v7586 = vpack.c.b16 %v7354, %v7346
    %v7587 = vpack.c.b16 %v7355, %v7347
    %v7588 = vpack.c.b16 %v7356, %v7348
    %v7589 = vpack.c.b16 %v7365, %v7357
    %v7590 = vpack.c.b16 %v7366, %v7358
    %v7591 = vpack.c.b16 %v7367, %v7359
    %v7592 = vpack.c.b16 %v7368, %v7360
    %v7593 = vpack.c.b16 %v7369, %v7361
    %v7594 = vpack.c.b16 %v7370, %v7362
    %v7595 = vpack.c.b16 %v7371, %v7363
    %v7596 = vpack.c.b16 %v7372, %v7364
    %v7597 = vpack.c.b16 %v7381, %v7373
    %v7598 = vpack.c.b16 %v7382, %v7374
    %v7599 = vpack.c.b16 %v7383, %v7375
    %v7600 = vpack.c.b16 %v7384, %v7376
    %v7601 = vpack.c.b16 %v7385, %v7377
    %v7602 = vpack.c.b16 %v7386, %v7378
    %v7603 = vpack.c.b16 %v7387, %v7379
    %v7604 = vpack.c.b16 %v7388, %v7380
    %v7605 = vpack.c.b16 %v7397, %v7389
    %v7606 = vpack.c.b16 %v7398, %v7390
    %v7607 = vpack.c.b16 %v7399, %v7391
    %v7608 = vpack.c.b16 %v7400, %v7392
    %v7609 = vpack.c.b16 %v7401, %v7393
    %v7610 = vpack.c.b16 %v7402, %v7394
    %v7611 = vpack.c.b16 %v7403, %v7395
    %v7612 = vpack.c.b16 %v7404, %v7396
    %v7613 = vpack.c.b16 %v7413, %v7405
    %v7614 = vpack.c.b16 %v7414, %v7406
    %v7615 = vpack.c.b16 %v7415, %v7407
    %v7616 = vpack.c.b16 %v7416, %v7408
    %v7617 = vpack.c.b16 %v7417, %v7409
    %v7618 = vpack.c.b16 %v7418, %v7410
    %v7619 = vpack.c.b16 %v7419, %v7411
    %v7620 = vpack.c.b16 %v7420, %v7412
    %v7621 = vpack.c.b16 %v7429, %v7421
    %v7622 = vpack.c.b16 %v7430, %v7422
    %v7623 = vpack.c.b16 %v7431, %v7423
    %v7624 = vpack.c.b16 %v7432, %v7424
    %v7625 = vpack.c.b16 %v7433, %v7425
    %v7626 = vpack.c.b16 %v7434, %v7426
    %v7627 = vpack.c.b16 %v7435, %v7427
    %v7628 = vpack.c.b16 %v7436, %v7428
    %v7629 = vpack.c.b16 %v7445, %v7437
    %v7630 = vpack.c.b16 %v7446, %v7438
    %v7631 = vpack.c.b16 %v7447, %v7439
    %v7632 = vpack.c.b16 %v7448, %v7440
    %v7633 = vpack.c.b16 %v7449, %v7441
    %v7634 = vpack.c.b16 %v7450, %v7442
    %v7635 = vpack.c.b16 %v7451, %v7443
    %v7636 = vpack.c.b16 %v7452, %v7444
    %v7637 = vpack.c.b16 %v7461, %v7453
    %v7638 = vpack.c.b16 %v7462, %v7454
    %v7639 = vpack.c.b16 %v7463, %v7455
    %v7640 = vpack.c.b16 %v7464, %v7456
    %v7641 = vpack.c.b16 %v7465, %v7457
    %v7642 = vpack.c.b16 %v7466, %v7458
    %v7643 = vpack.c.b16 %v7467, %v7459
    %v7644 = vpack.c.b16 %v7468, %v7460
    %v7645 = vpack.c.b16 %v7477, %v7469
    %v7646 = vpack.c.b16 %v7478, %v7470
    %v7647 = vpack.c.b16 %v7479, %v7471
    %v7648 = vpack.c.b16 %v7480, %v7472
    %v7649 = vpack.c.b16 %v7481, %v7473
    %v7650 = vpack.c.b16 %v7482, %v7474
    %v7651 = vpack.c.b16 %v7483, %v7475
    %v7652 = vpack.c.b16 %v7484, %v7476
    %v7653 = vpack.c.b16 %v7493, %v7485
    %v7654 = vpack.c.b16 %v7494, %v7486
    %v7655 = vpack.c.b16 %v7495, %v7487
    %v7656 = vpack.c.b16 %v7496, %v7488
    %v7657 = vpack.c.b16 %v7497, %v7489
    %v7658 = vpack.c.b16 %v7498, %v7490
    %v7659 = vpack.c.b16 %v7499, %v7491
    %v7660 = vpack.c.b16 %v7500, %v7492
    %v7661 = vpack.c.b16 %v7509, %v7501
    %v7662 = vpack.c.b16 %v7510, %v7502
    %v7663 = vpack.c.b16 %v7511, %v7503
    %v7664 = vpack.c.b16 %v7512, %v7504
    %v7665 = vpack.c.b16 %v7513, %v7505
    %v7666 = vpack.c.b16 %v7514, %v7506
    %v7667 = vpack.c.b16 %v7515, %v7507
    %v7668 = vpack.c.b16 %v7516, %v7508
    %v7669 = vpack.c.b16 %v7525, %v7517
    %v7670 = vpack.c.b16 %v7526, %v7518
    %v7671 = vpack.c.b16 %v7527, %v7519
    %v7672 = vpack.c.b16 %v7528, %v7520
    %v7673 = vpack.c.b16 %v7529, %v7521
    %v7674 = vpack.c.b16 %v7530, %v7522
    %v7675 = vpack.c.b16 %v7531, %v7523
    %v7676 = vpack.c.b16 %v7532, %v7524
    %v7677 = vpack.c.b16 %v7541, %v7533
    %v7678 = vpack.c.b16 %v7542, %v7534
    %v7679 = vpack.c.b16 %v7543, %v7535
    %v7680 = vpack.c.b16 %v7544, %v7536
    %v7681 = vpack.c.b16 %v7545, %v7537
    %v7682 = vpack.c.b16 %v7546, %v7538
    %v7683 = vpack.c.b16 %v7547, %v7539
    %v7684 = vpack.c.b16 %v7548, %v7540
    %v7685 = vpack.c.b16 %v7557, %v7549
    %v7686 = vpack.c.b16 %v7558, %v7550
    %v7687 = vpack.c.b16 %v7559, %v7551
    %v7688 = vpack.c.b16 %v7560, %v7552
    %v7689 = vpack.c.b16 %v7561, %v7553
    %v7690 = vpack.c.b16 %v7562, %v7554
    %v7691 = vpack.c.b16 %v7563, %v7555
    %v7692 = vpack.c.b16 %v7564, %v7556
    %7821 = vmatprep.subr.bf16.mxu0 %v7622
    %7822 = vmatpush1.bf16.msra.mxu0 %v7621
    %7823 = vmatprep.subr.bf16.mxu0 %v7614
    %7824 = vmatpush1.bf16.msra.mxu0 %v7613
    %7825 = vmatprep.subr.bf16.mxu0 %v7606
    %7826 = vmatpush1.bf16.msra.mxu0 %v7605
    %7827 = vmatprep.subr.bf16.mxu0 %v7598
    %7828 = vmatpush1.bf16.msra.mxu0 %v7597
    %7829 = vmatprep.subr.bf16.mxu0 %v7590
    %7830 = vmatpush1.bf16.msra.mxu0 %v7589
    %7831 = vmatprep.subr.bf16.mxu0 %v7582
    %7832 = vmatpush1.bf16.msra.mxu0 %v7581
    %7833 = vmatprep.subr.bf16.mxu0 %v7574
    %7834 = vmatpush1.bf16.msra.mxu0 %v7573
    %7835 = vmatprep.subr.bf16.mxu0 %v7566
    %7836 = vmatpush1.bf16.msra.mxu0 %v7565
    %7837 = vmatprep.subr.bf16.mxu0 %v7686
    %7838 = vmatpush2.bf16.msra.mxu0 %v7685
    %7839 = vmatprep.subr.bf16.mxu0 %v7678
    %7840 = vmatpush2.bf16.msra.mxu0 %v7677
    %7841 = vmatprep.subr.bf16.mxu0 %v7670
    %7842 = vmatpush2.bf16.msra.mxu0 %v7669
    %7843 = vmatprep.subr.bf16.mxu0 %v7662
    %7844 = vmatpush2.bf16.msra.mxu0 %v7661
    %7845 = vmatprep.subr.bf16.mxu0 %v7654
    %7846 = vmatpush2.bf16.msra.mxu0 %v7653
    %7847 = vmatprep.subr.bf16.mxu0 %v7646
    %7848 = vmatpush2.bf16.msra.mxu0 %v7645
    %7849 = vmatprep.subr.bf16.mxu0 %v7638
    %7850 = vmatpush2.bf16.msra.mxu0 %v7637
    %7851 = vmatprep.subr.bf16.mxu0 %v7630
    %7852 = vmatpush2.bf16.msra.mxu0 %v7629
    %7853 = vmatprep.mubr.bf16.mxu0 0
    %7854 = vmatmul.mubr.bf16.gmra.mxu0 0
    %v7855 = vpop.f32.mrf.mxu0
    %v7856 = vadd.f32 0.0, %v7855
    %v7857 = vpop.f32.mrf.mxu0
    %v7858 = vadd.f32 0.0, %v7857
    %v7859 = vpop.f32.mrf.mxu0
    %v7860 = vpop.f32.mrf.mxu0
    %7861 = vdwg.mxu0
    %7862 = vmatprep.subr.bf16.mxu0 %v7624
    %7863 = vmatpush1.bf16.msra.mxu0 %v7623
    %7864 = vmatprep.subr.bf16.mxu0 %v7616
    %7865 = vmatpush1.bf16.msra.mxu0 %v7615
    %7866 = vmatprep.subr.bf16.mxu0 %v7608
    %7867 = vmatpush1.bf16.msra.mxu0 %v7607
    %7868 = vmatprep.subr.bf16.mxu0 %v7600
    %7869 = vmatpush1.bf16.msra.mxu0 %v7599
    %7870 = vmatprep.subr.bf16.mxu0 %v7592
    %7871 = vmatpush1.bf16.msra.mxu0 %v7591
    %7872 = vmatprep.subr.bf16.mxu0 %v7584
    %7873 = vmatpush1.bf16.msra.mxu0 %v7583
    %7874 = vmatprep.subr.bf16.mxu0 %v7576
    %7875 = vmatpush1.bf16.msra.mxu0 %v7575
    %7876 = vmatprep.subr.bf16.mxu0 %v7568
    %7877 = vmatpush1.bf16.msra.mxu0 %v7567
    %7878 = vmatprep.subr.bf16.mxu0 %v7688
    %7879 = vmatpush2.bf16.msra.mxu0 %v7687
    %7880 = vmatprep.subr.bf16.mxu0 %v7680
    %7881 = vmatpush2.bf16.msra.mxu0 %v7679
    %7882 = vmatprep.subr.bf16.mxu0 %v7672
    %7883 = vmatpush2.bf16.msra.mxu0 %v7671
    %7884 = vmatprep.subr.bf16.mxu0 %v7664
    %7885 = vmatpush2.bf16.msra.mxu0 %v7663
    %7886 = vmatprep.subr.bf16.mxu0 %v7656
    %7887 = vmatpush2.bf16.msra.mxu0 %v7655
    %7888 = vmatprep.subr.bf16.mxu0 %v7648
    %7889 = vmatpush2.bf16.msra.mxu0 %v7647
    %7890 = vmatprep.subr.bf16.mxu0 %v7640
    %7891 = vmatpush2.bf16.msra.mxu0 %v7639
    %7892 = vmatprep.subr.bf16.mxu0 %v7632
    %7893 = vmatpush2.bf16.msra.mxu0 %v7631
    %7894 = vmatprep.mubr.bf16.mxu0 0
    %7895 = vmatmul.mubr.bf16.gmra.mxu0 0
    %v7896 = vpop.f32.mrf.mxu0
    %v7897 = vadd.f32 0.0, %v7896
    %v7898 = vpop.f32.mrf.mxu0
    %v7899 = vadd.f32 0.0, %v7898
    %v7900 = vpop.f32.mrf.mxu0
    %v7901 = vpop.f32.mrf.mxu0
    %7902 = vdwg.mxu0
    %7903 = vmatprep.subr.bf16.mxu0 %v7626
    %7904 = vmatpush1.bf16.msra.mxu0 %v7625
    %7905 = vmatprep.subr.bf16.mxu0 %v7618
    %7906 = vmatpush1.bf16.msra.mxu0 %v7617
    %7907 = vmatprep.subr.bf16.mxu0 %v7610
    %7908 = vmatpush1.bf16.msra.mxu0 %v7609
    %7909 = vmatprep.subr.bf16.mxu0 %v7602
    %7910 = vmatpush1.bf16.msra.mxu0 %v7601
    %7911 = vmatprep.subr.bf16.mxu0 %v7594
    %7912 = vmatpush1.bf16.msra.mxu0 %v7593
    %7913 = vmatprep.subr.bf16.mxu0 %v7586
    %7914 = vmatpush1.bf16.msra.mxu0 %v7585
    %7915 = vmatprep.subr.bf16.mxu0 %v7578
    %7916 = vmatpush1.bf16.msra.mxu0 %v7577
    %7917 = vmatprep.subr.bf16.mxu0 %v7570
    %7918 = vmatpush1.bf16.msra.mxu0 %v7569
    %7919 = vmatprep.subr.bf16.mxu0 %v7690
    %7920 = vmatpush2.bf16.msra.mxu0 %v7689
    %7921 = vmatprep.subr.bf16.mxu0 %v7682
    %7922 = vmatpush2.bf16.msra.mxu0 %v7681
    %7923 = vmatprep.subr.bf16.mxu0 %v7674
    %7924 = vmatpush2.bf16.msra.mxu0 %v7673
    %7925 = vmatprep.subr.bf16.mxu0 %v7666
    %7926 = vmatpush2.bf16.msra.mxu0 %v7665
    %7927 = vmatprep.subr.bf16.mxu0 %v7658
    %7928 = vmatpush2.bf16.msra.mxu0 %v7657
    %7929 = vmatprep.subr.bf16.mxu0 %v7650
    %7930 = vmatpush2.bf16.msra.mxu0 %v7649
    %7931 = vmatprep.subr.bf16.mxu0 %v7642
    %7932 = vmatpush2.bf16.msra.mxu0 %v7641
    %7933 = vmatprep.subr.bf16.mxu0 %v7634
    %7934 = vmatpush2.bf16.msra.mxu0 %v7633
    %7935 = vmatprep.mubr.bf16.mxu0 0
    %7936 = vmatmul.mubr.bf16.gmra.mxu0 0
    %v7937 = vpop.f32.mrf.mxu0
    %v7938 = vadd.f32 0.0, %v7937
    %v7939 = vpop.f32.mrf.mxu0
    %v7940 = vadd.f32 0.0, %v7939
    %v7941 = vpop.f32.mrf.mxu0
    %v7942 = vpop.f32.mrf.mxu0
    %7943 = vdwg.mxu0
    %7944 = vmatprep.subr.bf16.mxu0 %v7628
    %7945 = vmatpush1.bf16.msra.mxu0 %v7627
    %7946 = vmatprep.subr.bf16.mxu0 %v7620
    %7947 = vmatpush1.bf16.msra.mxu0 %v7619
    %7948 = vmatprep.subr.bf16.mxu0 %v7612
    %7949 = vmatpush1.bf16.msra.mxu0 %v7611
    %7950 = vmatprep.subr.bf16.mxu0 %v7604
    %7951 = vmatpush1.bf16.msra.mxu0 %v7603
    %7952 = vmatprep.subr.bf16.mxu0 %v7596
    %7953 = vmatpush1.bf16.msra.mxu0 %v7595
    %7954 = vmatprep.subr.bf16.mxu0 %v7588
    %7955 = vmatpush1.bf16.msra.mxu0 %v7587
    %7956 = vmatprep.subr.bf16.mxu0 %v7580
    %7957 = vmatpush1.bf16.msra.mxu0 %v7579
    %7958 = vmatprep.subr.bf16.mxu0 %v7572
    %7959 = vmatpush1.bf16.msra.mxu0 %v7571
    %7960 = vmatprep.subr.bf16.mxu0 %v7692
    %7961 = vmatpush2.bf16.msra.mxu0 %v7691
    %7962 = vmatprep.subr.bf16.mxu0 %v7684
    %7963 = vmatpush2.bf16.msra.mxu0 %v7683
    %7964 = vmatprep.subr.bf16.mxu0 %v7676
    %7965 = vmatpush2.bf16.msra.mxu0 %v7675
    %7966 = vmatprep.subr.bf16.mxu0 %v7668
    %7967 = vmatpush2.bf16.msra.mxu0 %v7667
    %7968 = vmatprep.subr.bf16.mxu0 %v7660
    %7969 = vmatpush2.bf16.msra.mxu0 %v7659
    %7970 = vmatprep.subr.bf16.mxu0 %v7652
    %7971 = vmatpush2.bf16.msra.mxu0 %v7651
    %7972 = vmatprep.subr.bf16.mxu0 %v7644
    %7973 = vmatpush2.bf16.msra.mxu0 %v7643
    %7974 = vmatprep.subr.bf16.mxu0 %v7636
    %7975 = vmatpush2.bf16.msra.mxu0 %v7635
    %7976 = vmatprep.mubr.bf16.mxu0 0
    %7977 = vmatmul.mubr.bf16.gmra.mxu0 0
    %v7978 = vpop.f32.mrf.mxu0
    %v7979 = vadd.f32 0.0, %v7978
    %v7980 = vpop.f32.mrf.mxu0
    %v7981 = vadd.f32 0.0, %v7980
    %v7982 = vpop.f32.mrf.mxu0
    %v7983 = vpop.f32.mrf.mxu0
    %7984 = vdwg.mxu0
    %v7985 = vadd.f32 %v6924, %v7856
    %v7986 = vadd.f32 %v6926, %v7858
    %v7987 = vadd.f32 %v6965, %v7897
    %v7988 = vadd.f32 %v6967, %v7899
    %v7989 = vadd.f32 %v7006, %v7938
    %v7990 = vadd.f32 %v7008, %v7940
    %v7991 = vadd.f32 %v7047, %v7979
    %v7992 = vadd.f32 %v7049, %v7981
    %v7993 = vxor.u32 %v7985, 2147483648
    %v7994 = vxor.u32 %v7986, 2147483648
    %v7995 = vmul.f32 %v7993, 1.442695
    %v7996 = vpow.pop %v7995
    %v7997 = vmul.f32 %v7994, 1.442695
    %v7998 = vpow.pop %v7997
    %v7999 = vadd.f32 %v7996, 1.0
    %v8000 = vadd.f32 %v7998, 1.0
    %v8001 = vrcp.pop %v7999
    %v8002 = vmul.f32 1.0, %v8001
    %v8003 = vrcp.pop %v8000
    %v8004 = vmul.f32 1.0, %v8003
    %v8005 = vxor.u32 %v7987, 2147483648
    %v8006 = vxor.u32 %v7988, 2147483648
    %v8007 = vmul.f32 %v8005, 1.442695
    %v8008 = vpow.pop %v8007
    %v8009 = vmul.f32 %v8006, 1.442695
    %v8010 = vpow.pop %v8009
    %v8011 = vadd.f32 %v8008, 1.0
    %v8012 = vadd.f32 %v8010, 1.0
    %v8013 = vrcp.pop %v8011
    %v8014 = vmul.f32 1.0, %v8013
    %v8015 = vrcp.pop %v8012
    %v8016 = vmul.f32 1.0, %v8015
    %v8017 = vtanh.pop %v7989
    %v8018 = vtanh.pop %v7990
    %v8019 = vxor.u32 %v7991, 2147483648
    %v8020 = vxor.u32 %v7992, 2147483648
    %v8021 = vmul.f32 %v8019, 1.442695
    %v8022 = vpow.pop %v8021
    %v8023 = vmul.f32 %v8020, 1.442695
    %v8024 = vpow.pop %v8023
    %v8025 = vadd.f32 %v8022, 1.0
    %v8026 = vadd.f32 %v8024, 1.0
    %v8027 = vrcp.pop %v8025
    %v8028 = vmul.f32 1.0, %v8027
    %v8029 = vrcp.pop %v8026
    %v8030 = vmul.f32 1.0, %v8029
    %v8031 = vmul.f32 %v8014, 0.0
    %v8032 = vmul.f32 %v8016, 0.0
    %v8033 = vmul.f32 %v8002, %v8017
    %v8034 = vmul.f32 %v8004, %v8018
    %v8035 = vadd.f32 %v8031, %v8033
    %v8036 = vadd.f32 %v8032, %v8034
    %v8037 = vtanh.pop %v8035
    %v8038 = vtanh.pop %v8036
    %v8039 = vmul.f32 %v8028, %v8037
    %v8040 = vmul.f32 %v8030, %v8038
    %v8041 = vpack.c.bf16 %v8039, %v8039
    %v8042 = vpack.c.bf16 %v8040, %v8040
    %8043 = vmatprep.subr.bf16.mxu0 %v7622
    %8044 = vmatpush1.bf16.msra.mxu0 %v7621
    %8045 = vmatprep.subr.bf16.mxu0 %v7614
    %8046 = vmatpush1.bf16.msra.mxu0 %v7613
    %8047 = vmatprep.subr.bf16.mxu0 %v7606
    %8048 = vmatpush1.bf16.msra.mxu0 %v7605
    %8049 = vmatprep.subr.bf16.mxu0 %v7598
    %8050 = vmatpush1.bf16.msra.mxu0 %v7597
    %8051 = vmatprep.subr.bf16.mxu0 %v7590
    %8052 = vmatpush1.bf16.msra.mxu0 %v7589
    %8053 = vmatprep.subr.bf16.mxu0 %v7582
    %8054 = vmatpush1.bf16.msra.mxu0 %v7581
    %8055 = vmatprep.subr.bf16.mxu0 %v7574
    %8056 = vmatpush1.bf16.msra.mxu0 %v7573
    %8057 = vmatprep.subr.bf16.mxu0 %v7566
    %8058 = vmatpush1.bf16.msra.mxu0 %v7565
    %8059 = vmatprep.subr.bf16.mxu0 %v7686
    %8060 = vmatpush2.bf16.msra.mxu0 %v7685
    %8061 = vmatprep.subr.bf16.mxu0 %v7678
    %8062 = vmatpush2.bf16.msra.mxu0 %v7677
    %8063 = vmatprep.subr.bf16.mxu0 %v7670
    %8064 = vmatpush2.bf16.msra.mxu0 %v7669
    %8065 = vmatprep.subr.bf16.mxu0 %v7662
    %8066 = vmatpush2.bf16.msra.mxu0 %v7661
    %8067 = vmatprep.subr.bf16.mxu0 %v7654
    %8068 = vmatpush2.bf16.msra.mxu0 %v7653
    %8069 = vmatprep.subr.bf16.mxu0 %v7646
    %8070 = vmatpush2.bf16.msra.mxu0 %v7645
    %8071 = vmatprep.subr.bf16.mxu0 %v7638
    %8072 = vmatpush2.bf16.msra.mxu0 %v7637
    %8073 = vmatprep.subr.bf16.mxu0 %v7630
    %8074 = vmatpush2.bf16.msra.mxu0 %v7629
    %8075 = vmatprep.mubr.bf16.mxu0 %v8042
    %8076 = vmatmul.mubr.bf16.gmra.mxu0 %v8041
    %v8077 = vpop.f32.mrf.mxu0
    %v8078 = vadd.f32 0.0, %v8077
    %v8079 = vpop.f32.mrf.mxu0
    %v8080 = vadd.f32 0.0, %v8079
    %v8081 = vpop.f32.mrf.mxu0
    %v8082 = vpop.f32.mrf.mxu0
    %8083 = vdwg.mxu0
    %8084 = vmatprep.subr.bf16.mxu0 %v7624
    %8085 = vmatpush1.bf16.msra.mxu0 %v7623
    %8086 = vmatprep.subr.bf16.mxu0 %v7616
    %8087 = vmatpush1.bf16.msra.mxu0 %v7615
    %8088 = vmatprep.subr.bf16.mxu0 %v7608
    %8089 = vmatpush1.bf16.msra.mxu0 %v7607
    %8090 = vmatprep.subr.bf16.mxu0 %v7600
    %8091 = vmatpush1.bf16.msra.mxu0 %v7599
    %8092 = vmatprep.subr.bf16.mxu0 %v7592
    %8093 = vmatpush1.bf16.msra.mxu0 %v7591
    %8094 = vmatprep.subr.bf16.mxu0 %v7584
    %8095 = vmatpush1.bf16.msra.mxu0 %v7583
    %8096 = vmatprep.subr.bf16.mxu0 %v7576
    %8097 = vmatpush1.bf16.msra.mxu0 %v7575
    %8098 = vmatprep.subr.bf16.mxu0 %v7568
    %8099 = vmatpush1.bf16.msra.mxu0 %v7567
    %8100 = vmatprep.subr.bf16.mxu0 %v7688
    %8101 = vmatpush2.bf16.msra.mxu0 %v7687
    %8102 = vmatprep.subr.bf16.mxu0 %v7680
    %8103 = vmatpush2.bf16.msra.mxu0 %v7679
    %8104 = vmatprep.subr.bf16.mxu0 %v7672
    %8105 = vmatpush2.bf16.msra.mxu0 %v7671
    %8106 = vmatprep.subr.bf16.mxu0 %v7664
    %8107 = vmatpush2.bf16.msra.mxu0 %v7663
    %8108 = vmatprep.subr.bf16.mxu0 %v7656
    %8109 = vmatpush2.bf16.msra.mxu0 %v7655
    %8110 = vmatprep.subr.bf16.mxu0 %v7648
    %8111 = vmatpush2.bf16.msra.mxu0 %v7647
    %8112 = vmatprep.subr.bf16.mxu0 %v7640
    %8113 = vmatpush2.bf16.msra.mxu0 %v7639
    %8114 = vmatprep.subr.bf16.mxu0 %v7632
    %8115 = vmatpush2.bf16.msra.mxu0 %v7631
    %8116 = vmatprep.mubr.bf16.mxu0 %v8042
    %8117 = vmatmul.mubr.bf16.gmra.mxu0 %v8041
    %v8118 = vpop.f32.mrf.mxu0
    %v8119 = vadd.f32 0.0, %v8118
    %v8120 = vpop.f32.mrf.mxu0
    %v8121 = vadd.f32 0.0, %v8120
    %v8122 = vpop.f32.mrf.mxu0
    %v8123 = vpop.f32.mrf.mxu0
    %8124 = vdwg.mxu0
    %8125 = vmatprep.subr.bf16.mxu0 %v7626
    %8126 = vmatpush1.bf16.msra.mxu0 %v7625
    %8127 = vmatprep.subr.bf16.mxu0 %v7618
    %8128 = vmatpush1.bf16.msra.mxu0 %v7617
    %8129 = vmatprep.subr.bf16.mxu0 %v7610
    %8130 = vmatpush1.bf16.msra.mxu0 %v7609
    %8131 = vmatprep.subr.bf16.mxu0 %v7602
    %8132 = vmatpush1.bf16.msra.mxu0 %v7601
    %8133 = vmatprep.subr.bf16.mxu0 %v7594
    %8134 = vmatpush1.bf16.msra.mxu0 %v7593
    %8135 = vmatprep.subr.bf16.mxu0 %v7586
    %8136 = vmatpush1.bf16.msra.mxu0 %v7585
    %8137 = vmatprep.subr.bf16.mxu0 %v7578
    %8138 = vmatpush1.bf16.msra.mxu0 %v7577
    %8139 = vmatprep.subr.bf16.mxu0 %v7570
    %8140 = vmatpush1.bf16.msra.mxu0 %v7569
    %8141 = vmatprep.subr.bf16.mxu0 %v7690
    %8142 = vmatpush2.bf16.msra.mxu0 %v7689
    %8143 = vmatprep.subr.bf16.mxu0 %v7682
    %8144 = vmatpush2.bf16.msra.mxu0 %v7681
    %8145 = vmatprep.subr.bf16.mxu0 %v7674
    %8146 = vmatpush2.bf16.msra.mxu0 %v7673
    %8147 = vmatprep.subr.bf16.mxu0 %v7666
    %8148 = vmatpush2.bf16.msra.mxu0 %v7665
    %8149 = vmatprep.subr.bf16.mxu0 %v7658
    %8150 = vmatpush2.bf16.msra.mxu0 %v7657
    %8151 = vmatprep.subr.bf16.mxu0 %v7650
    %8152 = vmatpush2.bf16.msra.mxu0 %v7649
    %8153 = vmatprep.subr.bf16.mxu0 %v7642
    %8154 = vmatpush2.bf16.msra.mxu0 %v7641
    %8155 = vmatprep.subr.bf16.mxu0 %v7634
    %8156 = vmatpush2.bf16.msra.mxu0 %v7633
    %8157 = vmatprep.mubr.bf16.mxu0 %v8042
    %8158 = vmatmul.mubr.bf16.gmra.mxu0 %v8041
    %v8159 = vpop.f32.mrf.mxu0
    %v8160 = vadd.f32 0.0, %v8159
    %v8161 = vpop.f32.mrf.mxu0
    %v8162 = vadd.f32 0.0, %v8161
    %v8163 = vpop.f32.mrf.mxu0
    %v8164 = vpop.f32.mrf.mxu0
    %8165 = vdwg.mxu0
    %8166 = vmatprep.subr.bf16.mxu0 %v7628
    %8167 = vmatpush1.bf16.msra.mxu0 %v7627
    %8168 = vmatprep.subr.bf16.mxu0 %v7620
    %8169 = vmatpush1.bf16.msra.mxu0 %v7619
    %8170 = vmatprep.subr.bf16.mxu0 %v7612
    %8171 = vmatpush1.bf16.msra.mxu0 %v7611
    %8172 = vmatprep.subr.bf16.mxu0 %v7604
    %8173 = vmatpush1.bf16.msra.mxu0 %v7603
    %8174 = vmatprep.subr.bf16.mxu0 %v7596
    %8175 = vmatpush1.bf16.msra.mxu0 %v7595
    %8176 = vmatprep.subr.bf16.mxu0 %v7588
    %8177 = vmatpush1.bf16.msra.mxu0 %v7587
    %8178 = vmatprep.subr.bf16.mxu0 %v7580
    %8179 = vmatpush1.bf16.msra.mxu0 %v7579
    %8180 = vmatprep.subr.bf16.mxu0 %v7572
    %8181 = vmatpush1.bf16.msra.mxu0 %v7571
    %8182 = vmatprep.subr.bf16.mxu0 %v7692
    %8183 = vmatpush2.bf16.msra.mxu0 %v7691
    %8184 = vmatprep.subr.bf16.mxu0 %v7684
    %8185 = vmatpush2.bf16.msra.mxu0 %v7683
    %8186 = vmatprep.subr.bf16.mxu0 %v7676
    %8187 = vmatpush2.bf16.msra.mxu0 %v7675
    %8188 = vmatprep.subr.bf16.mxu0 %v7668
    %8189 = vmatpush2.bf16.msra.mxu0 %v7667
    %8190 = vmatprep.subr.bf16.mxu0 %v7660
    %8191 = vmatpush2.bf16.msra.mxu0 %v7659
    %8192 = vmatprep.subr.bf16.mxu0 %v7652
    %8193 = vmatpush2.bf16.msra.mxu0 %v7651
    %8194 = vmatprep.subr.bf16.mxu0 %v7644
    %8195 = vmatpush2.bf16.msra.mxu0 %v7643
    %8196 = vmatprep.subr.bf16.mxu0 %v7636
    %8197 = vmatpush2.bf16.msra.mxu0 %v7635
    %8198 = vmatprep.mubr.bf16.mxu0 %v8042
    %8199 = vmatmul.mubr.bf16.gmra.mxu0 %v8041
    %v8200 = vpop.f32.mrf.mxu0
    %v8201 = vadd.f32 0.0, %v8200
    %v8202 = vpop.f32.mrf.mxu0
    %v8203 = vadd.f32 0.0, %v8202
    %v8204 = vpop.f32.mrf.mxu0
    %v8205 = vpop.f32.mrf.mxu0
    %8206 = vdwg.mxu0
    %v8215 = vrot.slane %v8078, 6
    %v8216 = vrot.slane %v8080, 6
    %v8217 = vrot.slane %v8119, 6
    %v8218 = vrot.slane %v8121, 6
    %v8219 = vrot.slane %v8160, 6
    %v8220 = vrot.slane %v8162, 6
    %v8221 = vrot.slane %v8201, 6
    %v8222 = vrot.slane %v8203, 6
    %v8231 = vadd.f32 %v6924, %v8215
    %v8232 = vadd.f32 %v6926, %v8216
    %v8233 = vadd.f32 %v6965, %v8217
    %v8234 = vadd.f32 %v6967, %v8218
    %v8235 = vadd.f32 %v7006, %v8219
    %v8236 = vadd.f32 %v7008, %v8220
    %v8237 = vadd.f32 %v7047, %v8221
    %v8238 = vadd.f32 %v7049, %v8222
    %v8239 = vxor.u32 %v8231, 2147483648
    %v8240 = vxor.u32 %v8232, 2147483648
    %v8241 = vmul.f32 %v8239, 1.442695
    %v8242 = vpow.pop %v8241
    %v8243 = vmul.f32 %v8240, 1.442695
    %v8244 = vpow.pop %v8243
    %v8245 = vadd.f32 %v8242, 1.0
    %v8246 = vadd.f32 %v8244, 1.0
    %v8247 = vrcp.pop %v8245
    %v8248 = vmul.f32 1.0, %v8247
    %v8249 = vrcp.pop %v8246
    %v8250 = vmul.f32 1.0, %v8249
    %v8251 = vxor.u32 %v8233, 2147483648
    %v8252 = vxor.u32 %v8234, 2147483648
    %v8253 = vmul.f32 %v8251, 1.442695
    %v8254 = vpow.pop %v8253
    %v8255 = vmul.f32 %v8252, 1.442695
    %v8256 = vpow.pop %v8255
    %v8257 = vadd.f32 %v8254, 1.0
    %v8258 = vadd.f32 %v8256, 1.0
    %v8259 = vrcp.pop %v8257
    %v8260 = vmul.f32 1.0, %v8259
    %v8261 = vrcp.pop %v8258
    %v8262 = vmul.f32 1.0, %v8261
    %v8263 = vtanh.pop %v8235
    %v8264 = vtanh.pop %v8236
    %v8265 = vxor.u32 %v8237, 2147483648
    %v8266 = vxor.u32 %v8238, 2147483648
    %v8267 = vmul.f32 %v8265, 1.442695
    %v8268 = vpow.pop %v8267
    %v8269 = vmul.f32 %v8266, 1.442695
    %v8270 = vpow.pop %v8269
    %v8271 = vadd.f32 %v8268, 1.0
    %v8272 = vadd.f32 %v8270, 1.0
    %v8273 = vrcp.pop %v8271
    %v8274 = vmul.f32 1.0, %v8273
    %v8275 = vrcp.pop %v8272
    %v8276 = vmul.f32 1.0, %v8275
    %v8279 = vrot.slane %v8035, 6
    %v8280 = vrot.slane %v8036, 6
    %v8283 = vmul.f32 %v8260, %v8279
    %v8284 = vmul.f32 %v8262, %v8280
    %v8285 = vmul.f32 %v8248, %v8263
    %v8286 = vmul.f32 %v8250, %v8264
    %v8287 = vadd.f32 %v8283, %v8285
    %v8288 = vadd.f32 %v8284, %v8286
    %v8289 = vtanh.pop %v8287
    %v8290 = vtanh.pop %v8288
    %v8291 = vmul.f32 %v8274, %v8289
    %v8292 = vmul.f32 %v8276, %v8290
    %v8293 = vpack.c.bf16 %v8291, %v8291
    %v8294 = vpack.c.bf16 %v8292, %v8292
    %v8297 = vrot.slane %v8293, 1
    %v8298 = vrot.slane %v8294, 1
    %8301 = vmatprep.subr.bf16.mxu0 %v7622
    %8302 = vmatpush1.bf16.msra.mxu0 %v7621
    %8303 = vmatprep.subr.bf16.mxu0 %v7614
    %8304 = vmatpush1.bf16.msra.mxu0 %v7613
    %8305 = vmatprep.subr.bf16.mxu0 %v7606
    %8306 = vmatpush1.bf16.msra.mxu0 %v7605
    %8307 = vmatprep.subr.bf16.mxu0 %v7598
    %8308 = vmatpush1.bf16.msra.mxu0 %v7597
    %8309 = vmatprep.subr.bf16.mxu0 %v7590
    %8310 = vmatpush1.bf16.msra.mxu0 %v7589
    %8311 = vmatprep.subr.bf16.mxu0 %v7582
    %8312 = vmatpush1.bf16.msra.mxu0 %v7581
    %8313 = vmatprep.subr.bf16.mxu0 %v7574
    %8314 = vmatpush1.bf16.msra.mxu0 %v7573
    %8315 = vmatprep.subr.bf16.mxu0 %v7566
    %8316 = vmatpush1.bf16.msra.mxu0 %v7565
    %8317 = vmatprep.subr.bf16.mxu0 %v7686
    %8318 = vmatpush2.bf16.msra.mxu0 %v7685
    %8319 = vmatprep.subr.bf16.mxu0 %v7678
    %8320 = vmatpush2.bf16.msra.mxu0 %v7677
    %8321 = vmatprep.subr.bf16.mxu0 %v7670
    %8322 = vmatpush2.bf16.msra.mxu0 %v7669
    %8323 = vmatprep.subr.bf16.mxu0 %v7662
    %8324 = vmatpush2.bf16.msra.mxu0 %v7661
    %8325 = vmatprep.subr.bf16.mxu0 %v7654
    %8326 = vmatpush2.bf16.msra.mxu0 %v7653
    %8327 = vmatprep.subr.bf16.mxu0 %v7646
    %8328 = vmatpush2.bf16.msra.mxu0 %v7645
    %8329 = vmatprep.subr.bf16.mxu0 %v7638
    %8330 = vmatpush2.bf16.msra.mxu0 %v7637
    %8331 = vmatprep.subr.bf16.mxu0 %v7630
    %8332 = vmatpush2.bf16.msra.mxu0 %v7629
    %8333 = vmatprep.mubr.bf16.mxu0 %v8298
    %8334 = vmatmul.mubr.bf16.gmra.mxu0 %v8297
    %v8335 = vpop.f32.mrf.mxu0
    %v8336 = vadd.f32 0.0, %v8335
    %v8337 = vpop.f32.mrf.mxu0
    %v8338 = vadd.f32 0.0, %v8337
    %v8339 = vpop.f32.mrf.mxu0
    %v8340 = vpop.f32.mrf.mxu0
    %8341 = vdwg.mxu0
    %8342 = vmatprep.subr.bf16.mxu0 %v7624
    %8343 = vmatpush1.bf16.msra.mxu0 %v7623
    %8344 = vmatprep.subr.bf16.mxu0 %v7616
    %8345 = vmatpush1.bf16.msra.mxu0 %v7615
    %8346 = vmatprep.subr.bf16.mxu0 %v7608
    %8347 = vmatpush1.bf16.msra.mxu0 %v7607
    %8348 = vmatprep.subr.bf16.mxu0 %v7600
    %8349 = vmatpush1.bf16.msra.mxu0 %v7599
    %8350 = vmatprep.subr.bf16.mxu0 %v7592
    %8351 = vmatpush1.bf16.msra.mxu0 %v7591
    %8352 = vmatprep.subr.bf16.mxu0 %v7584
    %8353 = vmatpush1.bf16.msra.mxu0 %v7583
    %8354 = vmatprep.subr.bf16.mxu0 %v7576
    %8355 = vmatpush1.bf16.msra.mxu0 %v7575
    %8356 = vmatprep.subr.bf16.mxu0 %v7568
    %8357 = vmatpush1.bf16.msra.mxu0 %v7567
    %8358 = vmatprep.subr.bf16.mxu0 %v7688
    %8359 = vmatpush2.bf16.msra.mxu0 %v7687
    %8360 = vmatprep.subr.bf16.mxu0 %v7680
    %8361 = vmatpush2.bf16.msra.mxu0 %v7679
    %8362 = vmatprep.subr.bf16.mxu0 %v7672
    %8363 = vmatpush2.bf16.msra.mxu0 %v7671
    %8364 = vmatprep.subr.bf16.mxu0 %v7664
    %8365 = vmatpush2.bf16.msra.mxu0 %v7663
    %8366 = vmatprep.subr.bf16.mxu0 %v7656
    %8367 = vmatpush2.bf16.msra.mxu0 %v7655
    %8368 = vmatprep.subr.bf16.mxu0 %v7648
    %8369 = vmatpush2.bf16.msra.mxu0 %v7647
    %8370 = vmatprep.subr.bf16.mxu0 %v7640
    %8371 = vmatpush2.bf16.msra.mxu0 %v7639
    %8372 = vmatprep.subr.bf16.mxu0 %v7632
    %8373 = vmatpush2.bf16.msra.mxu0 %v7631
    %8374 = vmatprep.mubr.bf16.mxu0 %v8298
    %8375 = vmatmul.mubr.bf16.gmra.mxu0 %v8297
    %v8376 = vpop.f32.mrf.mxu0
    %v8377 = vadd.f32 0.0, %v8376
    %v8378 = vpop.f32.mrf.mxu0
    %v8379 = vadd.f32 0.0, %v8378
    %v8380 = vpop.f32.mrf.mxu0
    %v8381 = vpop.f32.mrf.mxu0
    %8382 = vdwg.mxu0
    %8383 = vmatprep.subr.bf16.mxu0 %v7626
    %8384 = vmatpush1.bf16.msra.mxu0 %v7625
    %8385 = vmatprep.subr.bf16.mxu0 %v7618
    %8386 = vmatpush1.bf16.msra.mxu0 %v7617
    %8387 = vmatprep.subr.bf16.mxu0 %v7610
    %8388 = vmatpush1.bf16.msra.mxu0 %v7609
    %8389 = vmatprep.subr.bf16.mxu0 %v7602
    %8390 = vmatpush1.bf16.msra.mxu0 %v7601
    %8391 = vmatprep.subr.bf16.mxu0 %v7594
    %8392 = vmatpush1.bf16.msra.mxu0 %v7593
    %8393 = vmatprep.subr.bf16.mxu0 %v7586
    %8394 = vmatpush1.bf16.msra.mxu0 %v7585
    %8395 = vmatprep.subr.bf16.mxu0 %v7578
    %8396 = vmatpush1.bf16.msra.mxu0 %v7577
    %8397 = vmatprep.subr.bf16.mxu0 %v7570
    %8398 = vmatpush1.bf16.msra.mxu0 %v7569
    %8399 = vmatprep.subr.bf16.mxu0 %v7690
    %8400 = vmatpush2.bf16.msra.mxu0 %v7689
    %8401 = vmatprep.subr.bf16.mxu0 %v7682
    %8402 = vmatpush2.bf16.msra.mxu0 %v7681
    %8403 = vmatprep.subr.bf16.mxu0 %v7674
    %8404 = vmatpush2.bf16.msra.mxu0 %v7673
    %8405 = vmatprep.subr.bf16.mxu0 %v7666
    %8406 = vmatpush2.bf16.msra.mxu0 %v7665
    %8407 = vmatprep.subr.bf16.mxu0 %v7658
    %8408 = vmatpush2.bf16.msra.mxu0 %v7657
    %8409 = vmatprep.subr.bf16.mxu0 %v7650
    %8410 = vmatpush2.bf16.msra.mxu0 %v7649
    %8411 = vmatprep.subr.bf16.mxu0 %v7642
    %8412 = vmatpush2.bf16.msra.mxu0 %v7641
    %8413 = vmatprep.subr.bf16.mxu0 %v7634
    %8414 = vmatpush2.bf16.msra.mxu0 %v7633
    %8415 = vmatprep.mubr.bf16.mxu0 %v8298
    %8416 = vmatmul.mubr.bf16.gmra.mxu0 %v8297
    %v8417 = vpop.f32.mrf.mxu0
    %v8418 = vadd.f32 0.0, %v8417
    %v8419 = vpop.f32.mrf.mxu0
    %v8420 = vadd.f32 0.0, %v8419
    %v8421 = vpop.f32.mrf.mxu0
    %v8422 = vpop.f32.mrf.mxu0
    %8423 = vdwg.mxu0
    %8424 = vmatprep.subr.bf16.mxu0 %v7628
    %8425 = vmatpush1.bf16.msra.mxu0 %v7627
    %8426 = vmatprep.subr.bf16.mxu0 %v7620
    %8427 = vmatpush1.bf16.msra.mxu0 %v7619
    %8428 = vmatprep.subr.bf16.mxu0 %v7612
    %8429 = vmatpush1.bf16.msra.mxu0 %v7611
    %8430 = vmatprep.subr.bf16.mxu0 %v7604
    %8431 = vmatpush1.bf16.msra.mxu0 %v7603
    %8432 = vmatprep.subr.bf16.mxu0 %v7596
    %8433 = vmatpush1.bf16.msra.mxu0 %v7595
    %8434 = vmatprep.subr.bf16.mxu0 %v7588
    %8435 = vmatpush1.bf16.msra.mxu0 %v7587
    %8436 = vmatprep.subr.bf16.mxu0 %v7580
    %8437 = vmatpush1.bf16.msra.mxu0 %v7579
    %8438 = vmatprep.subr.bf16.mxu0 %v7572
    %8439 = vmatpush1.bf16.msra.mxu0 %v7571
    %8440 = vmatprep.subr.bf16.mxu0 %v7692
    %8441 = vmatpush2.bf16.msra.mxu0 %v7691
    %8442 = vmatprep.subr.bf16.mxu0 %v7684
    %8443 = vmatpush2.bf16.msra.mxu0 %v7683
    %8444 = vmatprep.subr.bf16.mxu0 %v7676
    %8445 = vmatpush2.bf16.msra.mxu0 %v7675
    %8446 = vmatprep.subr.bf16.mxu0 %v7668
    %8447 = vmatpush2.bf16.msra.mxu0 %v7667
    %8448 = vmatprep.subr.bf16.mxu0 %v7660
    %8449 = vmatpush2.bf16.msra.mxu0 %v7659
    %8450 = vmatprep.subr.bf16.mxu0 %v7652
    %8451 = vmatpush2.bf16.msra.mxu0 %v7651
    %8452 = vmatprep.subr.bf16.mxu0 %v7644
    %8453 = vmatpush2.bf16.msra.mxu0 %v7643
    %8454 = vmatprep.subr.bf16.mxu0 %v7636
    %8455 = vmatpush2.bf16.msra.mxu0 %v7635
    %8456 = vmatprep.mubr.bf16.mxu0 %v8298
    %8457 = vmatmul.mubr.bf16.gmra.mxu0 %v8297
    %v8458 = vpop.f32.mrf.mxu0
    %v8459 = vadd.f32 0.0, %v8458
    %v8460 = vpop.f32.mrf.mxu0
    %v8461 = vadd.f32 0.0, %v8460
    %v8462 = vpop.f32.mrf.mxu0
    %v8463 = vpop.f32.mrf.mxu0
    %8464 = vdwg.mxu0
    %v8473 = vrot.slane %v8336, 4
    %v8474 = vrot.slane %v8338, 4
    %v8475 = vrot.slane %v8377, 4
    %v8476 = vrot.slane %v8379, 4
    %v8477 = vrot.slane %v8418, 4
    %v8478 = vrot.slane %v8420, 4
    %v8479 = vrot.slane %v8459, 4
    %v8480 = vrot.slane %v8461, 4
    %v8489 = vadd.f32 %v6924, %v8473
    %v8490 = vadd.f32 %v6926, %v8474
    %v8491 = vadd.f32 %v6965, %v8475
    %v8492 = vadd.f32 %v6967, %v8476
    %v8493 = vadd.f32 %v7006, %v8477
    %v8494 = vadd.f32 %v7008, %v8478
    %v8495 = vadd.f32 %v7047, %v8479
    %v8496 = vadd.f32 %v7049, %v8480
    %v8497 = vxor.u32 %v8489, 2147483648
    %v8498 = vxor.u32 %v8490, 2147483648
    %v8499 = vmul.f32 %v8497, 1.442695
    %v8500 = vpow.pop %v8499
    %v8501 = vmul.f32 %v8498, 1.442695
    %v8502 = vpow.pop %v8501
    %v8503 = vadd.f32 %v8500, 1.0
    %v8504 = vadd.f32 %v8502, 1.0
    %v8505 = vrcp.pop %v8503
    %v8506 = vmul.f32 1.0, %v8505
    %v8507 = vrcp.pop %v8504
    %v8508 = vmul.f32 1.0, %v8507
    %v8509 = vxor.u32 %v8491, 2147483648
    %v8510 = vxor.u32 %v8492, 2147483648
    %v8511 = vmul.f32 %v8509, 1.442695
    %v8512 = vpow.pop %v8511
    %v8513 = vmul.f32 %v8510, 1.442695
    %v8514 = vpow.pop %v8513
    %v8515 = vadd.f32 %v8512, 1.0
    %v8516 = vadd.f32 %v8514, 1.0
    %v8517 = vrcp.pop %v8515
    %v8518 = vmul.f32 1.0, %v8517
    %v8519 = vrcp.pop %v8516
    %v8520 = vmul.f32 1.0, %v8519
    %v8521 = vtanh.pop %v8493
    %v8522 = vtanh.pop %v8494
    %v8523 = vxor.u32 %v8495, 2147483648
    %v8524 = vxor.u32 %v8496, 2147483648
    %v8525 = vmul.f32 %v8523, 1.442695
    %v8526 = vpow.pop %v8525
    %v8527 = vmul.f32 %v8524, 1.442695
    %v8528 = vpow.pop %v8527
    %v8529 = vadd.f32 %v8526, 1.0
    %v8530 = vadd.f32 %v8528, 1.0
    %v8531 = vrcp.pop %v8529
    %v8532 = vmul.f32 1.0, %v8531
    %v8533 = vrcp.pop %v8530
    %v8534 = vmul.f32 1.0, %v8533
    %v8537 = vrot.slane %v8287, 6
    %v8538 = vrot.slane %v8288, 6
    %v8541 = vmul.f32 %v8518, %v8537
    %v8542 = vmul.f32 %v8520, %v8538
    %v8543 = vmul.f32 %v8506, %v8521
    %v8544 = vmul.f32 %v8508, %v8522
    %v8545 = vadd.f32 %v8541, %v8543
    %v8546 = vadd.f32 %v8542, %v8544
    %v8547 = vtanh.pop %v8545
    %v8548 = vtanh.pop %v8546
    %v8549 = vmul.f32 %v8532, %v8547
    %v8550 = vmul.f32 %v8534, %v8548
    %v8551 = vpack.c.bf16 %v8549, %v8549
    %v8552 = vpack.c.bf16 %v8550, %v8550
    %v8555 = vrot.slane %v8551, 2
    %v8556 = vrot.slane %v8552, 2
    %8559 = vmatprep.subr.bf16.mxu0 %v7622
    %8560 = vmatpush1.bf16.msra.mxu0 %v7621
    %8561 = vmatprep.subr.bf16.mxu0 %v7614
    %8562 = vmatpush1.bf16.msra.mxu0 %v7613
    %8563 = vmatprep.subr.bf16.mxu0 %v7606
    %8564 = vmatpush1.bf16.msra.mxu0 %v7605
    %8565 = vmatprep.subr.bf16.mxu0 %v7598
    %8566 = vmatpush1.bf16.msra.mxu0 %v7597
    %8567 = vmatprep.subr.bf16.mxu0 %v7590
    %8568 = vmatpush1.bf16.msra.mxu0 %v7589
    %8569 = vmatprep.subr.bf16.mxu0 %v7582
    %8570 = vmatpush1.bf16.msra.mxu0 %v7581
    %8571 = vmatprep.subr.bf16.mxu0 %v7574
    %8572 = vmatpush1.bf16.msra.mxu0 %v7573
    %8573 = vmatprep.subr.bf16.mxu0 %v7566
    %8574 = vmatpush1.bf16.msra.mxu0 %v7565
    %8575 = vmatprep.subr.bf16.mxu0 %v7686
    %8576 = vmatpush2.bf16.msra.mxu0 %v7685
    %8577 = vmatprep.subr.bf16.mxu0 %v7678
    %8578 = vmatpush2.bf16.msra.mxu0 %v7677
    %8579 = vmatprep.subr.bf16.mxu0 %v7670
    %8580 = vmatpush2.bf16.msra.mxu0 %v7669
    %8581 = vmatprep.subr.bf16.mxu0 %v7662
    %8582 = vmatpush2.bf16.msra.mxu0 %v7661
    %8583 = vmatprep.subr.bf16.mxu0 %v7654
    %8584 = vmatpush2.bf16.msra.mxu0 %v7653
    %8585 = vmatprep.subr.bf16.mxu0 %v7646
    %8586 = vmatpush2.bf16.msra.mxu0 %v7645
    %8587 = vmatprep.subr.bf16.mxu0 %v7638
    %8588 = vmatpush2.bf16.msra.mxu0 %v7637
    %8589 = vmatprep.subr.bf16.mxu0 %v7630
    %8590 = vmatpush2.bf16.msra.mxu0 %v7629
    %8591 = vmatprep.mubr.bf16.mxu0 %v8556
    %8592 = vmatmul.mubr.bf16.gmra.mxu0 %v8555
    %v8593 = vpop.f32.mrf.mxu0
    %v8594 = vadd.f32 0.0, %v8593
    %v8595 = vpop.f32.mrf.mxu0
    %v8596 = vadd.f32 0.0, %v8595
    %v8597 = vpop.f32.mrf.mxu0
    %v8598 = vpop.f32.mrf.mxu0
    %8599 = vdwg.mxu0
    %8600 = vmatprep.subr.bf16.mxu0 %v7624
    %8601 = vmatpush1.bf16.msra.mxu0 %v7623
    %8602 = vmatprep.subr.bf16.mxu0 %v7616
    %8603 = vmatpush1.bf16.msra.mxu0 %v7615
    %8604 = vmatprep.subr.bf16.mxu0 %v7608
    %8605 = vmatpush1.bf16.msra.mxu0 %v7607
    %8606 = vmatprep.subr.bf16.mxu0 %v7600
    %8607 = vmatpush1.bf16.msra.mxu0 %v7599
    %8608 = vmatprep.subr.bf16.mxu0 %v7592
    %8609 = vmatpush1.bf16.msra.mxu0 %v7591
    %8610 = vmatprep.subr.bf16.mxu0 %v7584
    %8611 = vmatpush1.bf16.msra.mxu0 %v7583
    %8612 = vmatprep.subr.bf16.mxu0 %v7576
    %8613 = vmatpush1.bf16.msra.mxu0 %v7575
    %8614 = vmatprep.subr.bf16.mxu0 %v7568
    %8615 = vmatpush1.bf16.msra.mxu0 %v7567
    %8616 = vmatprep.subr.bf16.mxu0 %v7688
    %8617 = vmatpush2.bf16.msra.mxu0 %v7687
    %8618 = vmatprep.subr.bf16.mxu0 %v7680
    %8619 = vmatpush2.bf16.msra.mxu0 %v7679
    %8620 = vmatprep.subr.bf16.mxu0 %v7672
    %8621 = vmatpush2.bf16.msra.mxu0 %v7671
    %8622 = vmatprep.subr.bf16.mxu0 %v7664
    %8623 = vmatpush2.bf16.msra.mxu0 %v7663
    %8624 = vmatprep.subr.bf16.mxu0 %v7656
    %8625 = vmatpush2.bf16.msra.mxu0 %v7655
    %8626 = vmatprep.subr.bf16.mxu0 %v7648
    %8627 = vmatpush2.bf16.msra.mxu0 %v7647
    %8628 = vmatprep.subr.bf16.mxu0 %v7640
    %8629 = vmatpush2.bf16.msra.mxu0 %v7639
    %8630 = vmatprep.subr.bf16.mxu0 %v7632
    %8631 = vmatpush2.bf16.msra.mxu0 %v7631
    %8632 = vmatprep.mubr.bf16.mxu0 %v8556
    %8633 = vmatmul.mubr.bf16.gmra.mxu0 %v8555
    %v8634 = vpop.f32.mrf.mxu0
    %v8635 = vadd.f32 0.0, %v8634
    %v8636 = vpop.f32.mrf.mxu0
    %v8637 = vadd.f32 0.0, %v8636
    %v8638 = vpop.f32.mrf.mxu0
    %v8639 = vpop.f32.mrf.mxu0
    %8640 = vdwg.mxu0
    %8641 = vmatprep.subr.bf16.mxu0 %v7626
    %8642 = vmatpush1.bf16.msra.mxu0 %v7625
    %8643 = vmatprep.subr.bf16.mxu0 %v7618
    %8644 = vmatpush1.bf16.msra.mxu0 %v7617
    %8645 = vmatprep.subr.bf16.mxu0 %v7610
    %8646 = vmatpush1.bf16.msra.mxu0 %v7609
    %8647 = vmatprep.subr.bf16.mxu0 %v7602
    %8648 = vmatpush1.bf16.msra.mxu0 %v7601
    %8649 = vmatprep.subr.bf16.mxu0 %v7594
    %8650 = vmatpush1.bf16.msra.mxu0 %v7593
    %8651 = vmatprep.subr.bf16.mxu0 %v7586
    %8652 = vmatpush1.bf16.msra.mxu0 %v7585
    %8653 = vmatprep.subr.bf16.mxu0 %v7578
    %8654 = vmatpush1.bf16.msra.mxu0 %v7577
    %8655 = vmatprep.subr.bf16.mxu0 %v7570
    %8656 = vmatpush1.bf16.msra.mxu0 %v7569
    %8657 = vmatprep.subr.bf16.mxu0 %v7690
    %8658 = vmatpush2.bf16.msra.mxu0 %v7689
    %8659 = vmatprep.subr.bf16.mxu0 %v7682
    %8660 = vmatpush2.bf16.msra.mxu0 %v7681
    %8661 = vmatprep.subr.bf16.mxu0 %v7674
    %8662 = vmatpush2.bf16.msra.mxu0 %v7673
    %8663 = vmatprep.subr.bf16.mxu0 %v7666
    %8664 = vmatpush2.bf16.msra.mxu0 %v7665
    %8665 = vmatprep.subr.bf16.mxu0 %v7658
    %8666 = vmatpush2.bf16.msra.mxu0 %v7657
    %8667 = vmatprep.subr.bf16.mxu0 %v7650
    %8668 = vmatpush2.bf16.msra.mxu0 %v7649
    %8669 = vmatprep.subr.bf16.mxu0 %v7642
    %8670 = vmatpush2.bf16.msra.mxu0 %v7641
    %8671 = vmatprep.subr.bf16.mxu0 %v7634
    %8672 = vmatpush2.bf16.msra.mxu0 %v7633
    %8673 = vmatprep.mubr.bf16.mxu0 %v8556
    %8674 = vmatmul.mubr.bf16.gmra.mxu0 %v8555
    %v8675 = vpop.f32.mrf.mxu0
    %v8676 = vadd.f32 0.0, %v8675
    %v8677 = vpop.f32.mrf.mxu0
    %v8678 = vadd.f32 0.0, %v8677
    %v8679 = vpop.f32.mrf.mxu0
    %v8680 = vpop.f32.mrf.mxu0
    %8681 = vdwg.mxu0
    %8682 = vmatprep.subr.bf16.mxu0 %v7628
    %8683 = vmatpush1.bf16.msra.mxu0 %v7627
    %8684 = vmatprep.subr.bf16.mxu0 %v7620
    %8685 = vmatpush1.bf16.msra.mxu0 %v7619
    %8686 = vmatprep.subr.bf16.mxu0 %v7612
    %8687 = vmatpush1.bf16.msra.mxu0 %v7611
    %8688 = vmatprep.subr.bf16.mxu0 %v7604
    %8689 = vmatpush1.bf16.msra.mxu0 %v7603
    %8690 = vmatprep.subr.bf16.mxu0 %v7596
    %8691 = vmatpush1.bf16.msra.mxu0 %v7595
    %8692 = vmatprep.subr.bf16.mxu0 %v7588
    %8693 = vmatpush1.bf16.msra.mxu0 %v7587
    %8694 = vmatprep.subr.bf16.mxu0 %v7580
    %8695 = vmatpush1.bf16.msra.mxu0 %v7579
    %8696 = vmatprep.subr.bf16.mxu0 %v7572
    %8697 = vmatpush1.bf16.msra.mxu0 %v7571
    %8698 = vmatprep.subr.bf16.mxu0 %v7692
    %8699 = vmatpush2.bf16.msra.mxu0 %v7691
    %8700 = vmatprep.subr.bf16.mxu0 %v7684
    %8701 = vmatpush2.bf16.msra.mxu0 %v7683
    %8702 = vmatprep.subr.bf16.mxu0 %v7676
    %8703 = vmatpush2.bf16.msra.mxu0 %v7675
    %8704 = vmatprep.subr.bf16.mxu0 %v7668
    %8705 = vmatpush2.bf16.msra.mxu0 %v7667
    %8706 = vmatprep.subr.bf16.mxu0 %v7660
    %8707 = vmatpush2.bf16.msra.mxu0 %v7659
    %8708 = vmatprep.subr.bf16.mxu0 %v7652
    %8709 = vmatpush2.bf16.msra.mxu0 %v7651
    %8710 = vmatprep.subr.bf16.mxu0 %v7644
    %8711 = vmatpush2.bf16.msra.mxu0 %v7643
    %8712 = vmatprep.subr.bf16.mxu0 %v7636
    %8713 = vmatpush2.bf16.msra.mxu0 %v7635
    %8714 = vmatprep.mubr.bf16.mxu0 %v8556
    %8715 = vmatmul.mubr.bf16.gmra.mxu0 %v8555
    %v8716 = vpop.f32.mrf.mxu0
    %v8717 = vadd.f32 0.0, %v8716
    %v8718 = vpop.f32.mrf.mxu0
    %v8719 = vadd.f32 0.0, %v8718
    %v8720 = vpop.f32.mrf.mxu0
    %v8721 = vpop.f32.mrf.mxu0
    %8722 = vdwg.mxu0
    %v8731 = vrot.slane %v8594, 2
    %v8732 = vrot.slane %v8596, 2
    %v8733 = vrot.slane %v8635, 2
    %v8734 = vrot.slane %v8637, 2
    %v8735 = vrot.slane %v8676, 2
    %v8736 = vrot.slane %v8678, 2
    %v8737 = vrot.slane %v8717, 2
    %v8738 = vrot.slane %v8719, 2
    %v8747 = vadd.f32 %v6924, %v8731
    %v8748 = vadd.f32 %v6926, %v8732
    %v8749 = vadd.f32 %v6965, %v8733
    %v8750 = vadd.f32 %v6967, %v8734
    %v8751 = vadd.f32 %v7006, %v8735
    %v8752 = vadd.f32 %v7008, %v8736
    %v8753 = vadd.f32 %v7047, %v8737
    %v8754 = vadd.f32 %v7049, %v8738
    %v8755 = vxor.u32 %v8747, 2147483648
    %v8756 = vxor.u32 %v8748, 2147483648
    %v8757 = vmul.f32 %v8755, 1.442695
    %v8758 = vpow.pop %v8757
    %v8759 = vmul.f32 %v8756, 1.442695
    %v8760 = vpow.pop %v8759
    %v8761 = vadd.f32 %v8758, 1.0
    %v8762 = vadd.f32 %v8760, 1.0
    %v8763 = vrcp.pop %v8761
    %v8764 = vmul.f32 1.0, %v8763
    %v8765 = vrcp.pop %v8762
    %v8766 = vmul.f32 1.0, %v8765
    %v8767 = vxor.u32 %v8749, 2147483648
    %v8768 = vxor.u32 %v8750, 2147483648
    %v8769 = vmul.f32 %v8767, 1.442695
    %v8770 = vpow.pop %v8769
    %v8771 = vmul.f32 %v8768, 1.442695
    %v8772 = vpow.pop %v8771
    %v8773 = vadd.f32 %v8770, 1.0
    %v8774 = vadd.f32 %v8772, 1.0
    %v8775 = vrcp.pop %v8773
    %v8776 = vmul.f32 1.0, %v8775
    %v8777 = vrcp.pop %v8774
    %v8778 = vmul.f32 1.0, %v8777
    %v8779 = vtanh.pop %v8751
    %v8780 = vtanh.pop %v8752
    %v8781 = vxor.u32 %v8753, 2147483648
    %v8782 = vxor.u32 %v8754, 2147483648
    %v8783 = vmul.f32 %v8781, 1.442695
    %v8784 = vpow.pop %v8783
    %v8785 = vmul.f32 %v8782, 1.442695
    %v8786 = vpow.pop %v8785
    %v8787 = vadd.f32 %v8784, 1.0
    %v8788 = vadd.f32 %v8786, 1.0
    %v8789 = vrcp.pop %v8787
    %v8790 = vmul.f32 1.0, %v8789
    %v8791 = vrcp.pop %v8788
    %v8792 = vmul.f32 1.0, %v8791
    %v8795 = vrot.slane %v8545, 6
    %v8796 = vrot.slane %v8546, 6
    %v8799 = vmul.f32 %v8776, %v8795
    %v8800 = vmul.f32 %v8778, %v8796
    %v8801 = vmul.f32 %v8764, %v8779
    %v8802 = vmul.f32 %v8766, %v8780
    %v8803 = vadd.f32 %v8799, %v8801
    %v8804 = vadd.f32 %v8800, %v8802
    %v8805 = vtanh.pop %v8803
    %v8806 = vtanh.pop %v8804
    %v8807 = vmul.f32 %v8790, %v8805
    %v8808 = vmul.f32 %v8792, %v8806
    %v8810 = vrot.slane %v8808, 6
    %v8812 = vadd.f32 %v8039, %v8810
    %v8813 = vmul.f32 %v8812, 0.5
    %v8815 = vrot.slane %v8550, 2
    %v8817 = vadd.f32 %v8291, %v8815
    %v8818 = vmul.f32 %v8817, 0.5
    %v8820 = vrot.slane %v8292, 6
    %v8822 = vadd.f32 %v8549, %v8820
    %v8823 = vmul.f32 %v8822, 0.5
    %v8825 = vrot.slane %v8040, 2
    %v8827 = vadd.f32 %v8807, %v8825
    %v8828 = vmul.f32 %v8827, 0.5
    %v8830 = vrot.slane %v8818, 2
    %v8833 = vrot.slane %v8823, 4
    %v8836 = vrot.slane %v8828, 6
    %v8838 = vpack.c.bf16 %v8813, %v8813
    %v8839 = vpack.c.bf16 %v8830, %v8830
    %v8840 = vpack.c.bf16 %v8833, %v8833
    %v8841 = vpack.c.bf16 %v8836, %v8836
    %v8842 = vld [vmem:[#allocation14] sm:$0xff]
    %v8843 = vld [vmem:[#allocation14 + $0x8] sm:$0xff]
    %v8844 = vld [vmem:[#allocation14 + $0x10] sm:$0xff]
    %v8845 = vld [vmem:[#allocation14 + $0x18] sm:$0xff]
    %v8846 = vld [vmem:[#allocation14 + $0x20] sm:$0xff]
    %v8847 = vld [vmem:[#allocation14 + $0x28] sm:$0xff]
    %v8848 = vld [vmem:[#allocation14 + $0x30] sm:$0xff]
    %v8849 = vld [vmem:[#allocation14 + $0x38] sm:$0xff]
    %v8850 = vld [vmem:[#allocation14 + $0x40] sm:$0xff]
    %v8851 = vld [vmem:[#allocation14 + $0x48] sm:$0xff]
    %v8852 = vld [vmem:[#allocation14 + $0x50] sm:$0xff]
    %v8853 = vld [vmem:[#allocation14 + $0x58] sm:$0xff]
    %v8854 = vld [vmem:[#allocation14 + $0x60] sm:$0xff]
    %v8855 = vld [vmem:[#allocation14 + $0x68] sm:$0xff]
    %v8856 = vld [vmem:[#allocation14 + $0x70] sm:$0xff]
    %v8857 = vld [vmem:[#allocation14 + $0x78] sm:$0xff]
    %v8858 = vld [vmem:[#allocation14 + $0x80] sm:$0xff]
    %v8859 = vld [vmem:[#allocation14 + $0x88] sm:$0xff]
    %v8860 = vld [vmem:[#allocation14 + $0x90] sm:$0xff]
    %v8861 = vld [vmem:[#allocation14 + $0x98] sm:$0xff]
    %v8862 = vld [vmem:[#allocation14 + $0xa0] sm:$0xff]
    %v8863 = vld [vmem:[#allocation14 + $0xa8] sm:$0xff]
    %v8864 = vld [vmem:[#allocation14 + $0xb0] sm:$0xff]
    %v8865 = vld [vmem:[#allocation14 + $0xb8] sm:$0xff]
    %v8866 = vld [vmem:[#allocation14 + $0xc0] sm:$0xff]
    %v8867 = vld [vmem:[#allocation14 + $0xc8] sm:$0xff]
    %v8868 = vld [vmem:[#allocation14 + $0xd0] sm:$0xff]
    %v8869 = vld [vmem:[#allocation14 + $0xd8] sm:$0xff]
    %v8870 = vld [vmem:[#allocation14 + $0xe0] sm:$0xff]
    %v8871 = vld [vmem:[#allocation14 + $0xe8] sm:$0xff]
    %v8872 = vld [vmem:[#allocation14 + $0xf0] sm:$0xff]
    %v8873 = vld [vmem:[#allocation14 + $0xf8] sm:$0xff]
    %v8874 = vld [vmem:[#allocation14 + $0x100] sm:$0xff]
    %v8875 = vld [vmem:[#allocation14 + $0x108] sm:$0xff]
    %v8876 = vld [vmem:[#allocation14 + $0x110] sm:$0xff]
    %v8877 = vld [vmem:[#allocation14 + $0x118] sm:$0xff]
    %v8878 = vld [vmem:[#allocation14 + $0x120] sm:$0xff]
    %v8879 = vld [vmem:[#allocation14 + $0x128] sm:$0xff]
    %v8880 = vld [vmem:[#allocation14 + $0x130] sm:$0xff]
    %v8881 = vld [vmem:[#allocation14 + $0x138] sm:$0xff]
    %v8882 = vld [vmem:[#allocation14 + $0x140] sm:$0xff]
    %v8883 = vld [vmem:[#allocation14 + $0x148] sm:$0xff]
    %v8884 = vld [vmem:[#allocation14 + $0x150] sm:$0xff]
    %v8885 = vld [vmem:[#allocation14 + $0x158] sm:$0xff]
    %v8886 = vld [vmem:[#allocation14 + $0x160] sm:$0xff]
    %v8887 = vld [vmem:[#allocation14 + $0x168] sm:$0xff]
    %v8888 = vld [vmem:[#allocation14 + $0x170] sm:$0xff]
    %v8889 = vld [vmem:[#allocation14 + $0x178] sm:$0xff]
    %v8890 = vld [vmem:[#allocation14 + $0x180] sm:$0xff]
    %v8891 = vld [vmem:[#allocation14 + $0x188] sm:$0xff]
    %v8892 = vld [vmem:[#allocation14 + $0x190] sm:$0xff]
    %v8893 = vld [vmem:[#allocation14 + $0x198] sm:$0xff]
    %v8894 = vld [vmem:[#allocation14 + $0x1a0] sm:$0xff]
    %v8895 = vld [vmem:[#allocation14 + $0x1a8] sm:$0xff]
    %v8896 = vld [vmem:[#allocation14 + $0x1b0] sm:$0xff]
    %v8897 = vld [vmem:[#allocation14 + $0x1b8] sm:$0xff]
    %v8898 = vld [vmem:[#allocation14 + $0x1c0] sm:$0xff]
    %v8899 = vld [vmem:[#allocation14 + $0x1c8] sm:$0xff]
    %v8900 = vld [vmem:[#allocation14 + $0x1d0] sm:$0xff]
    %v8901 = vld [vmem:[#allocation14 + $0x1d8] sm:$0xff]
    %v8902 = vld [vmem:[#allocation14 + $0x1e0] sm:$0xff]
    %v8903 = vld [vmem:[#allocation14 + $0x1e8] sm:$0xff]
    %v8904 = vld [vmem:[#allocation14 + $0x1f0] sm:$0xff]
    %v8905 = vld [vmem:[#allocation14 + $0x1f8] sm:$0xff]
    %s8906 = scalar_lea.vmem [#allocation15], 1
    %v8907 = vld [vmem:[%s8906] ss:$4 sm:$0x3]
    %v8909 = vlaneseq
    %v8910 = vshrl.u32 %v8909, 7
    %v8911 = vsub.s32 0, %v8910
    %v8912 = vrot.slane %v8907, %v8911
    %v8913 = vlaneseq
    %v8914 = vshrl.u32 %v8913, 7
    %v8915 = vsub.s32 1, %v8914
    %v8916 = vrot.slane %v8907, %v8915
    %v8983 = vunpack.c.l.b16 %v8842
    %v8984 = vunpack.c.h.b16 %v8842
    %v8985 = vunpack.c.l.b16 %v8843
    %v8986 = vunpack.c.h.b16 %v8843
    %v8987 = vunpack.c.l.b16 %v8844
    %v8988 = vunpack.c.h.b16 %v8844
    %v8989 = vunpack.c.l.b16 %v8845
    %v8990 = vunpack.c.h.b16 %v8845
    %v8991 = vunpack.c.l.b16 %v8846
    %v8992 = vunpack.c.h.b16 %v8846
    %v8993 = vunpack.c.l.b16 %v8847
    %v8994 = vunpack.c.h.b16 %v8847
    %v8995 = vunpack.c.l.b16 %v8848
    %v8996 = vunpack.c.h.b16 %v8848
    %v8997 = vunpack.c.l.b16 %v8849
    %v8998 = vunpack.c.h.b16 %v8849
    %v8999 = vunpack.c.l.b16 %v8850
    %v9000 = vunpack.c.h.b16 %v8850
    %v9001 = vunpack.c.l.b16 %v8851
    %v9002 = vunpack.c.h.b16 %v8851
    %v9003 = vunpack.c.l.b16 %v8852
    %v9004 = vunpack.c.h.b16 %v8852
    %v9005 = vunpack.c.l.b16 %v8853
    %v9006 = vunpack.c.h.b16 %v8853
    %v9007 = vunpack.c.l.b16 %v8854
    %v9008 = vunpack.c.h.b16 %v8854
    %v9009 = vunpack.c.l.b16 %v8855
    %v9010 = vunpack.c.h.b16 %v8855
    %v9011 = vunpack.c.l.b16 %v8856
    %v9012 = vunpack.c.h.b16 %v8856
    %v9013 = vunpack.c.l.b16 %v8857
    %v9014 = vunpack.c.h.b16 %v8857
    %v9015 = vunpack.c.l.b16 %v8858
    %v9016 = vunpack.c.h.b16 %v8858
    %v9017 = vunpack.c.l.b16 %v8859
    %v9018 = vunpack.c.h.b16 %v8859
    %v9019 = vunpack.c.l.b16 %v8860
    %v9020 = vunpack.c.h.b16 %v8860
    %v9021 = vunpack.c.l.b16 %v8861
    %v9022 = vunpack.c.h.b16 %v8861
    %v9023 = vunpack.c.l.b16 %v8862
    %v9024 = vunpack.c.h.b16 %v8862
    %v9025 = vunpack.c.l.b16 %v8863
    %v9026 = vunpack.c.h.b16 %v8863
    %v9027 = vunpack.c.l.b16 %v8864
    %v9028 = vunpack.c.h.b16 %v8864
    %v9029 = vunpack.c.l.b16 %v8865
    %v9030 = vunpack.c.h.b16 %v8865
    %v9031 = vunpack.c.l.b16 %v8866
    %v9032 = vunpack.c.h.b16 %v8866
    %v9033 = vunpack.c.l.b16 %v8867
    %v9034 = vunpack.c.h.b16 %v8867
    %v9035 = vunpack.c.l.b16 %v8868
    %v9036 = vunpack.c.h.b16 %v8868
    %v9037 = vunpack.c.l.b16 %v8869
    %v9038 = vunpack.c.h.b16 %v8869
    %v9039 = vunpack.c.l.b16 %v8870
    %v9040 = vunpack.c.h.b16 %v8870
    %v9041 = vunpack.c.l.b16 %v8871
    %v9042 = vunpack.c.h.b16 %v8871
    %v9043 = vunpack.c.l.b16 %v8872
    %v9044 = vunpack.c.h.b16 %v8872
    %v9045 = vunpack.c.l.b16 %v8873
    %v9046 = vunpack.c.h.b16 %v8873
    %v9047 = vunpack.c.l.b16 %v8874
    %v9048 = vunpack.c.h.b16 %v8874
    %v9049 = vunpack.c.l.b16 %v8875
    %v9050 = vunpack.c.h.b16 %v8875
    %v9051 = vunpack.c.l.b16 %v8876
    %v9052 = vunpack.c.h.b16 %v8876
    %v9053 = vunpack.c.l.b16 %v8877
    %v9054 = vunpack.c.h.b16 %v8877
    %v9055 = vunpack.c.l.b16 %v8878
    %v9056 = vunpack.c.h.b16 %v8878
    %v9057 = vunpack.c.l.b16 %v8879
    %v9058 = vunpack.c.h.b16 %v8879
    %v9059 = vunpack.c.l.b16 %v8880
    %v9060 = vunpack.c.h.b16 %v8880
    %v9061 = vunpack.c.l.b16 %v8881
    %v9062 = vunpack.c.h.b16 %v8881
    %v9063 = vunpack.c.l.b16 %v8882
    %v9064 = vunpack.c.h.b16 %v8882
    %v9065 = vunpack.c.l.b16 %v8883
    %v9066 = vunpack.c.h.b16 %v8883
    %v9067 = vunpack.c.l.b16 %v8884
    %v9068 = vunpack.c.h.b16 %v8884
    %v9069 = vunpack.c.l.b16 %v8885
    %v9070 = vunpack.c.h.b16 %v8885
    %v9071 = vunpack.c.l.b16 %v8886
    %v9072 = vunpack.c.h.b16 %v8886
    %v9073 = vunpack.c.l.b16 %v8887
    %v9074 = vunpack.c.h.b16 %v8887
    %v9075 = vunpack.c.l.b16 %v8888
    %v9076 = vunpack.c.h.b16 %v8888
    %v9077 = vunpack.c.l.b16 %v8889
    %v9078 = vunpack.c.h.b16 %v8889
    %v9079 = vunpack.c.l.b16 %v8890
    %v9080 = vunpack.c.h.b16 %v8890
    %v9081 = vunpack.c.l.b16 %v8891
    %v9082 = vunpack.c.h.b16 %v8891
    %v9083 = vunpack.c.l.b16 %v8892
    %v9084 = vunpack.c.h.b16 %v8892
    %v9085 = vunpack.c.l.b16 %v8893
    %v9086 = vunpack.c.h.b16 %v8893
    %v9087 = vunpack.c.l.b16 %v8894
    %v9088 = vunpack.c.h.b16 %v8894
    %v9089 = vunpack.c.l.b16 %v8895
    %v9090 = vunpack.c.h.b16 %v8895
    %v9091 = vunpack.c.l.b16 %v8896
    %v9092 = vunpack.c.h.b16 %v8896
    %v9093 = vunpack.c.l.b16 %v8897
    %v9094 = vunpack.c.h.b16 %v8897
    %v9095 = vunpack.c.l.b16 %v8898
    %v9096 = vunpack.c.h.b16 %v8898
    %v9097 = vunpack.c.l.b16 %v8899
    %v9098 = vunpack.c.h.b16 %v8899
    %v9099 = vunpack.c.l.b16 %v8900
    %v9100 = vunpack.c.h.b16 %v8900
    %v9101 = vunpack.c.l.b16 %v8901
    %v9102 = vunpack.c.h.b16 %v8901
    %v9103 = vunpack.c.l.b16 %v8902
    %v9104 = vunpack.c.h.b16 %v8902
    %v9105 = vunpack.c.l.b16 %v8903
    %v9106 = vunpack.c.h.b16 %v8903
    %v9107 = vunpack.c.l.b16 %v8904
    %v9108 = vunpack.c.h.b16 %v8904
    %v9109 = vunpack.c.l.b16 %v8905
    %v9110 = vunpack.c.h.b16 %v8905
    %v9111 = vpack.c.b16 %v8985, %v8983
    %v9112 = vpack.c.b16 %v8986, %v8984
    %v9113 = vpack.c.b16 %v8989, %v8987
    %v9114 = vpack.c.b16 %v8990, %v8988
    %v9115 = vpack.c.b16 %v8993, %v8991
    %v9116 = vpack.c.b16 %v8994, %v8992
    %v9117 = vpack.c.b16 %v8997, %v8995
    %v9118 = vpack.c.b16 %v8998, %v8996
    %v9119 = vpack.c.b16 %v9001, %v8999
    %v9120 = vpack.c.b16 %v9002, %v9000
    %v9121 = vpack.c.b16 %v9005, %v9003
    %v9122 = vpack.c.b16 %v9006, %v9004
    %v9123 = vpack.c.b16 %v9009, %v9007
    %v9124 = vpack.c.b16 %v9010, %v9008
    %v9125 = vpack.c.b16 %v9013, %v9011
    %v9126 = vpack.c.b16 %v9014, %v9012
    %v9127 = vpack.c.b16 %v9017, %v9015
    %v9128 = vpack.c.b16 %v9018, %v9016
    %v9129 = vpack.c.b16 %v9021, %v9019
    %v9130 = vpack.c.b16 %v9022, %v9020
    %v9131 = vpack.c.b16 %v9025, %v9023
    %v9132 = vpack.c.b16 %v9026, %v9024
    %v9133 = vpack.c.b16 %v9029, %v9027
    %v9134 = vpack.c.b16 %v9030, %v9028
    %v9135 = vpack.c.b16 %v9033, %v9031
    %v9136 = vpack.c.b16 %v9034, %v9032
    %v9137 = vpack.c.b16 %v9037, %v9035
    %v9138 = vpack.c.b16 %v9038, %v9036
    %v9139 = vpack.c.b16 %v9041, %v9039
    %v9140 = vpack.c.b16 %v9042, %v9040
    %v9141 = vpack.c.b16 %v9045, %v9043
    %v9142 = vpack.c.b16 %v9046, %v9044
    %v9143 = vpack.c.b16 %v9049, %v9047
    %v9144 = vpack.c.b16 %v9050, %v9048
    %v9145 = vpack.c.b16 %v9053, %v9051
    %v9146 = vpack.c.b16 %v9054, %v9052
    %v9147 = vpack.c.b16 %v9057, %v9055
    %v9148 = vpack.c.b16 %v9058, %v9056
    %v9149 = vpack.c.b16 %v9061, %v9059
    %v9150 = vpack.c.b16 %v9062, %v9060
    %v9151 = vpack.c.b16 %v9065, %v9063
    %v9152 = vpack.c.b16 %v9066, %v9064
    %v9153 = vpack.c.b16 %v9069, %v9067
    %v9154 = vpack.c.b16 %v9070, %v9068
    %v9155 = vpack.c.b16 %v9073, %v9071
    %v9156 = vpack.c.b16 %v9074, %v9072
    %v9157 = vpack.c.b16 %v9077, %v9075
    %v9158 = vpack.c.b16 %v9078, %v9076
    %v9159 = vpack.c.b16 %v9081, %v9079
    %v9160 = vpack.c.b16 %v9082, %v9080
    %v9161 = vpack.c.b16 %v9085, %v9083
    %v9162 = vpack.c.b16 %v9086, %v9084
    %v9163 = vpack.c.b16 %v9089, %v9087
    %v9164 = vpack.c.b16 %v9090, %v9088
    %v9165 = vpack.c.b16 %v9093, %v9091
    %v9166 = vpack.c.b16 %v9094, %v9092
    %v9167 = vpack.c.b16 %v9097, %v9095
    %v9168 = vpack.c.b16 %v9098, %v9096
    %v9169 = vpack.c.b16 %v9101, %v9099
    %v9170 = vpack.c.b16 %v9102, %v9100
    %v9171 = vpack.c.b16 %v9105, %v9103
    %v9172 = vpack.c.b16 %v9106, %v9104
    %v9173 = vpack.c.b16 %v9109, %v9107
    %v9174 = vpack.c.b16 %v9110, %v9108
    %9239 = vmatprep.subr.bf16.mxu0 %v9126
    %9240 = vmatpush1.bf16.msra.mxu0 %v9125
    %9241 = vmatprep.subr.bf16.mxu0 %v9124
    %9242 = vmatpush1.bf16.msra.mxu0 %v9123
    %9243 = vmatprep.subr.bf16.mxu0 %v9122
    %9244 = vmatpush1.bf16.msra.mxu0 %v9121
    %9245 = vmatprep.subr.bf16.mxu0 %v9120
    %9246 = vmatpush1.bf16.msra.mxu0 %v9119
    %9247 = vmatprep.subr.bf16.mxu0 %v9118
    %9248 = vmatpush1.bf16.msra.mxu0 %v9117
    %9249 = vmatprep.subr.bf16.mxu0 %v9116
    %9250 = vmatpush1.bf16.msra.mxu0 %v9115
    %9251 = vmatprep.subr.bf16.mxu0 %v9114
    %9252 = vmatpush1.bf16.msra.mxu0 %v9113
    %9253 = vmatprep.subr.bf16.mxu0 %v9112
    %9254 = vmatpush1.bf16.msra.mxu0 %v9111
    %9255 = vmatprep.subr.bf16.mxu0 %v9142
    %9256 = vmatpush2.bf16.msra.mxu0 %v9141
    %9257 = vmatprep.subr.bf16.mxu0 %v9140
    %9258 = vmatpush2.bf16.msra.mxu0 %v9139
    %9259 = vmatprep.subr.bf16.mxu0 %v9138
    %9260 = vmatpush2.bf16.msra.mxu0 %v9137
    %9261 = vmatprep.subr.bf16.mxu0 %v9136
    %9262 = vmatpush2.bf16.msra.mxu0 %v9135
    %9263 = vmatprep.subr.bf16.mxu0 %v9134
    %9264 = vmatpush2.bf16.msra.mxu0 %v9133
    %9265 = vmatprep.subr.bf16.mxu0 %v9132
    %9266 = vmatpush2.bf16.msra.mxu0 %v9131
    %9267 = vmatprep.subr.bf16.mxu0 %v9130
    %9268 = vmatpush2.bf16.msra.mxu0 %v9129
    %9269 = vmatprep.subr.bf16.mxu0 %v9128
    %9270 = vmatpush2.bf16.msra.mxu0 %v9127
    %9271 = vmatprep.mubr.bf16.mxu0 %v8839
    %9272 = vmatmul.mubr.bf16.gmra.mxu0 %v8838
    %v9273 = vpop.f32.mrf.mxu0
    %v9274 = vadd.f32 %v8912, %v9273
    %v9275 = vpop.f32.mrf.mxu0
    %v9276 = vadd.f32 %v8916, %v9275
    %v9277 = vpop.f32.mrf.mxu0
    %v9278 = vpop.f32.mrf.mxu0
    %9279 = vdwg.mxu0
    %9280 = vmatprep.subr.bf16.mxu0 %v9158
    %9281 = vmatpush1.bf16.msra.mxu0 %v9157
    %9282 = vmatprep.subr.bf16.mxu0 %v9156
    %9283 = vmatpush1.bf16.msra.mxu0 %v9155
    %9284 = vmatprep.subr.bf16.mxu0 %v9154
    %9285 = vmatpush1.bf16.msra.mxu0 %v9153
    %9286 = vmatprep.subr.bf16.mxu0 %v9152
    %9287 = vmatpush1.bf16.msra.mxu0 %v9151
    %9288 = vmatprep.subr.bf16.mxu0 %v9150
    %9289 = vmatpush1.bf16.msra.mxu0 %v9149
    %9290 = vmatprep.subr.bf16.mxu0 %v9148
    %9291 = vmatpush1.bf16.msra.mxu0 %v9147
    %9292 = vmatprep.subr.bf16.mxu0 %v9146
    %9293 = vmatpush1.bf16.msra.mxu0 %v9145
    %9294 = vmatprep.subr.bf16.mxu0 %v9144
    %9295 = vmatpush1.bf16.msra.mxu0 %v9143
    %9296 = vmatprep.subr.bf16.mxu0 %v9174
    %9297 = vmatpush2.bf16.msra.mxu0 %v9173
    %9298 = vmatprep.subr.bf16.mxu0 %v9172
    %9299 = vmatpush2.bf16.msra.mxu0 %v9171
    %9300 = vmatprep.subr.bf16.mxu0 %v9170
    %9301 = vmatpush2.bf16.msra.mxu0 %v9169
    %9302 = vmatprep.subr.bf16.mxu0 %v9168
    %9303 = vmatpush2.bf16.msra.mxu0 %v9167
    %9304 = vmatprep.subr.bf16.mxu0 %v9166
    %9305 = vmatpush2.bf16.msra.mxu0 %v9165
    %9306 = vmatprep.subr.bf16.mxu0 %v9164
    %9307 = vmatpush2.bf16.msra.mxu0 %v9163
    %9308 = vmatprep.subr.bf16.mxu0 %v9162
    %9309 = vmatpush2.bf16.msra.mxu0 %v9161
    %9310 = vmatprep.subr.bf16.mxu0 %v9160
    %9311 = vmatpush2.bf16.msra.mxu0 %v9159
    %9312 = vmatprep.mubr.bf16.mxu0 %v8841
    %9313 = vmatmul.mubr.bf16.gmra.mxu0 %v8840
    %v9314 = vpop.f32.mrf.mxu0
    %v9315 = vadd.f32 %v9274, %v9314
    %v9316 = vpop.f32.mrf.mxu0
    %v9317 = vadd.f32 %v9276, %v9316
    %v9318 = vpop.f32.mrf.mxu0
    %v9319 = vpop.f32.mrf.mxu0
    %9320 = vdwg.mxu0
    %v9321 = vmax.f32 %v9315, 0.0
    %v9322 = vmax.f32 %v9317, 0.0
    %v9323 = vpack.c.bf16 %v9321, %v9321
    %v9324 = vpack.c.bf16 %v9322, %v9322
    %v9325 = vld [vmem:[#allocation14 + $0x200] sm:$0xf]
    %v9326 = vld [vmem:[#allocation14 + $0x208] sm:$0xf]
    %v9327 = vld [vmem:[#allocation14 + $0x210] sm:$0xf]
    %v9328 = vld [vmem:[#allocation14 + $0x218] sm:$0xf]
    %v9329 = vld [vmem:[#allocation14 + $0x220] sm:$0xf]
    %v9330 = vld [vmem:[#allocation14 + $0x228] sm:$0xf]
    %v9331 = vld [vmem:[#allocation14 + $0x230] sm:$0xf]
    %v9332 = vld [vmem:[#allocation14 + $0x238] sm:$0xf]
    %v9333 = vld [vmem:[#allocation14 + $0x240] sm:$0xf]
    %v9334 = vld [vmem:[#allocation14 + $0x248] sm:$0xf]
    %v9335 = vld [vmem:[#allocation14 + $0x250] sm:$0xf]
    %v9336 = vld [vmem:[#allocation14 + $0x258] sm:$0xf]
    %v9337 = vld [vmem:[#allocation14 + $0x260] sm:$0xf]
    %v9338 = vld [vmem:[#allocation14 + $0x268] sm:$0xf]
    %v9339 = vld [vmem:[#allocation14 + $0x270] sm:$0xf]
    %v9340 = vld [vmem:[#allocation14 + $0x278] sm:$0xf]
    %v9341 = vld [vmem:[#allocation14 + $0x280] sm:$0xf]
    %v9342 = vld [vmem:[#allocation14 + $0x288] sm:$0xf]
    %v9343 = vld [vmem:[#allocation14 + $0x290] sm:$0xf]
    %v9344 = vld [vmem:[#allocation14 + $0x298] sm:$0xf]
    %v9345 = vld [vmem:[#allocation14 + $0x2a0] sm:$0xf]
    %v9346 = vld [vmem:[#allocation14 + $0x2a8] sm:$0xf]
    %v9347 = vld [vmem:[#allocation14 + $0x2b0] sm:$0xf]
    %v9348 = vld [vmem:[#allocation14 + $0x2b8] sm:$0xf]
    %v9349 = vld [vmem:[#allocation14 + $0x2c0] sm:$0xf]
    %v9350 = vld [vmem:[#allocation14 + $0x2c8] sm:$0xf]
    %v9351 = vld [vmem:[#allocation14 + $0x2d0] sm:$0xf]
    %v9352 = vld [vmem:[#allocation14 + $0x2d8] sm:$0xf]
    %v9353 = vld [vmem:[#allocation14 + $0x2e0] sm:$0xf]
    %v9354 = vld [vmem:[#allocation14 + $0x2e8] sm:$0xf]
    %v9355 = vld [vmem:[#allocation14 + $0x2f0] sm:$0xf]
    %v9356 = vld [vmem:[#allocation14 + $0x2f8] sm:$0xf]
    %v9357 = vld [vmem:[#allocation15 + $0x2] sm:$0x1]
    %v9358 = vlaneseq
    %v9359 = vshrl.u32 %v9358, 7
    %v9360 = vsub.s32 0, %v9359
    %v9361 = vrot.slane %v9357, %v9360
    %v9394 = vunpack.c.l.b16 %v9325
    %v9395 = vunpack.c.l.b16 %v9326
    %v9396 = vunpack.c.l.b16 %v9327
    %v9397 = vunpack.c.l.b16 %v9328
    %v9398 = vunpack.c.l.b16 %v9329
    %v9399 = vunpack.c.l.b16 %v9330
    %v9400 = vunpack.c.l.b16 %v9331
    %v9401 = vunpack.c.l.b16 %v9332
    %v9402 = vunpack.c.l.b16 %v9333
    %v9403 = vunpack.c.l.b16 %v9334
    %v9404 = vunpack.c.l.b16 %v9335
    %v9405 = vunpack.c.l.b16 %v9336
    %v9406 = vunpack.c.l.b16 %v9337
    %v9407 = vunpack.c.l.b16 %v9338
    %v9408 = vunpack.c.l.b16 %v9339
    %v9409 = vunpack.c.l.b16 %v9340
    %v9410 = vunpack.c.l.b16 %v9341
    %v9411 = vunpack.c.l.b16 %v9342
    %v9412 = vunpack.c.l.b16 %v9343
    %v9413 = vunpack.c.l.b16 %v9344
    %v9414 = vunpack.c.l.b16 %v9345
    %v9415 = vunpack.c.l.b16 %v9346
    %v9416 = vunpack.c.l.b16 %v9347
    %v9417 = vunpack.c.l.b16 %v9348
    %v9418 = vunpack.c.l.b16 %v9349
    %v9419 = vunpack.c.l.b16 %v9350
    %v9420 = vunpack.c.l.b16 %v9351
    %v9421 = vunpack.c.l.b16 %v9352
    %v9422 = vunpack.c.l.b16 %v9353
    %v9423 = vunpack.c.l.b16 %v9354
    %v9424 = vunpack.c.l.b16 %v9355
    %v9425 = vunpack.c.l.b16 %v9356
    %v9426 = vpack.c.b16 %v9395, %v9394
    %v9427 = vpack.c.b16 %v9397, %v9396
    %v9428 = vpack.c.b16 %v9399, %v9398
    %v9429 = vpack.c.b16 %v9401, %v9400
    %v9430 = vpack.c.b16 %v9403, %v9402
    %v9431 = vpack.c.b16 %v9405, %v9404
    %v9432 = vpack.c.b16 %v9407, %v9406
    %v9433 = vpack.c.b16 %v9409, %v9408
    %v9434 = vpack.c.b16 %v9411, %v9410
    %v9435 = vpack.c.b16 %v9413, %v9412
    %v9436 = vpack.c.b16 %v9415, %v9414
    %v9437 = vpack.c.b16 %v9417, %v9416
    %v9438 = vpack.c.b16 %v9419, %v9418
    %v9439 = vpack.c.b16 %v9421, %v9420
    %v9440 = vpack.c.b16 %v9423, %v9422
    %v9441 = vpack.c.b16 %v9425, %v9424
    %9458 = vmatprep.subr.bf16.mxu0 0
    %9459 = vmatpush1.bf16.msra.mxu0 %v9433
    %9460 = vmatprep.subr.bf16.mxu0 0
    %9461 = vmatpush1.bf16.msra.mxu0 %v9432
    %9462 = vmatprep.subr.bf16.mxu0 0
    %9463 = vmatpush1.bf16.msra.mxu0 %v9431
    %9464 = vmatprep.subr.bf16.mxu0 0
    %9465 = vmatpush1.bf16.msra.mxu0 %v9430
    %9466 = vmatprep.subr.bf16.mxu0 0
    %9467 = vmatpush1.bf16.msra.mxu0 %v9429
    %9468 = vmatprep.subr.bf16.mxu0 0
    %9469 = vmatpush1.bf16.msra.mxu0 %v9428
    %9470 = vmatprep.subr.bf16.mxu0 0
    %9471 = vmatpush1.bf16.msra.mxu0 %v9427
    %9472 = vmatprep.subr.bf16.mxu0 0
    %9473 = vmatpush1.bf16.msra.mxu0 %v9426
    %9474 = vmatprep.subr.bf16.mxu0 0
    %9475 = vmatpush2.bf16.msra.mxu0 %v9441
    %9476 = vmatprep.subr.bf16.mxu0 0
    %9477 = vmatpush2.bf16.msra.mxu0 %v9440
    %9478 = vmatprep.subr.bf16.mxu0 0
    %9479 = vmatpush2.bf16.msra.mxu0 %v9439
    %9480 = vmatprep.subr.bf16.mxu0 0
    %9481 = vmatpush2.bf16.msra.mxu0 %v9438
    %9482 = vmatprep.subr.bf16.mxu0 0
    %9483 = vmatpush2.bf16.msra.mxu0 %v9437
    %9484 = vmatprep.subr.bf16.mxu0 0
    %9485 = vmatpush2.bf16.msra.mxu0 %v9436
    %9486 = vmatprep.subr.bf16.mxu0 0
    %9487 = vmatpush2.bf16.msra.mxu0 %v9435
    %9488 = vmatprep.subr.bf16.mxu0 0
    %9489 = vmatpush2.bf16.msra.mxu0 %v9434
    %9490 = vmatprep.mubr.bf16.mxu0 %v9324
    %9491 = vmatmul.mubr.bf16.gmra.mxu0 %v9323
    %v9492 = vpop.f32.mrf.mxu0
    %v9493 = vadd.f32 %v9361, %v9492
    %v9494 = vpop.f32.mrf.mxu0
    %v9495 = vpop.f32.mrf.mxu0
    %v9496 = vpop.f32.mrf.mxu0
    %9497 = vdwg.mxu0
    %v9498 = vmax.f32 %v9493, 0.0
    %v9499 = vpack.c.bf16 %v9498, %v9498
    %v9500 = vld [vmem:[#allocation14 + $0x300] sm:$0xf]
    %v9501 = vld [vmem:[#allocation14 + $0x308] sm:$0xf]
    %v9502 = vld [vmem:[#allocation14 + $0x310] sm:$0xf]
    %v9503 = vld [vmem:[#allocation14 + $0x318] sm:$0xf]
    %v9504 = vld [vmem:[#allocation14 + $0x320] sm:$0xf]
    %v9505 = vld [vmem:[#allocation14 + $0x328] sm:$0xf]
    %v9506 = vld [vmem:[#allocation14 + $0x330] sm:$0xf]
    %v9507 = vld [vmem:[#allocation14 + $0x338] sm:$0xf]
    %v9508 = vld [vmem:[#allocation14 + $0x340] sm:$0xf]
    %v9509 = vld [vmem:[#allocation14 + $0x348] sm:$0xf]
    %v9510 = vld [vmem:[#allocation14 + $0x350] sm:$0xf]
    %v9511 = vld [vmem:[#allocation14 + $0x358] sm:$0xf]
    %v9512 = vld [vmem:[#allocation14 + $0x360] sm:$0xf]
    %v9513 = vld [vmem:[#allocation14 + $0x368] sm:$0xf]
    %v9514 = vld [vmem:[#allocation14 + $0x370] sm:$0xf]
    %v9515 = vld [vmem:[#allocation14 + $0x378] sm:$0xf]
    %v9516 = vld [vmem:[#allocation15 + $0x3] sm:$0x1]
    %v9517 = vlaneseq
    %v9518 = vshrl.u32 %v9517, 7
    %v9519 = vsub.s32 0, %v9518
    %v9520 = vrot.slane %v9516, %v9519
    %v9537 = vunpack.c.l.b16 %v9500
    %v9538 = vunpack.c.l.b16 %v9501
    %v9539 = vunpack.c.l.b16 %v9502
    %v9540 = vunpack.c.l.b16 %v9503
    %v9541 = vunpack.c.l.b16 %v9504
    %v9542 = vunpack.c.l.b16 %v9505
    %v9543 = vunpack.c.l.b16 %v9506
    %v9544 = vunpack.c.l.b16 %v9507
    %v9545 = vunpack.c.l.b16 %v9508
    %v9546 = vunpack.c.l.b16 %v9509
    %v9547 = vunpack.c.l.b16 %v9510
    %v9548 = vunpack.c.l.b16 %v9511
    %v9549 = vunpack.c.l.b16 %v9512
    %v9550 = vunpack.c.l.b16 %v9513
    %v9551 = vunpack.c.l.b16 %v9514
    %v9552 = vunpack.c.l.b16 %v9515
    %v9553 = vpack.c.b16 %v9538, %v9537
    %v9554 = vpack.c.b16 %v9540, %v9539
    %v9555 = vpack.c.b16 %v9542, %v9541
    %v9556 = vpack.c.b16 %v9544, %v9543
    %v9557 = vpack.c.b16 %v9546, %v9545
    %v9558 = vpack.c.b16 %v9548, %v9547
    %v9559 = vpack.c.b16 %v9550, %v9549
    %v9560 = vpack.c.b16 %v9552, %v9551
    %9569 = vmatprep.subr.bf16.mxu0 0
    %9570 = vmatpush1.bf16.msra.mxu0 %v9560
    %9571 = vmatprep.subr.bf16.mxu0 0
    %9572 = vmatpush1.bf16.msra.mxu0 %v9559
    %9573 = vmatprep.subr.bf16.mxu0 0
    %9574 = vmatpush1.bf16.msra.mxu0 %v9558
    %9575 = vmatprep.subr.bf16.mxu0 0
    %9576 = vmatpush1.bf16.msra.mxu0 %v9557
    %9577 = vmatprep.subr.bf16.mxu0 0
    %9578 = vmatpush1.bf16.msra.mxu0 %v9556
    %9579 = vmatprep.subr.bf16.mxu0 0
    %9580 = vmatpush1.bf16.msra.mxu0 %v9555
    %9581 = vmatprep.subr.bf16.mxu0 0
    %9582 = vmatpush1.bf16.msra.mxu0 %v9554
    %9583 = vmatprep.subr.bf16.mxu0 0
    %9584 = vmatpush1.bf16.msra.mxu0 %v9553
    %9585 = vmatprep.subr.bf16.mxu0 0
    %9586 = vmatpush2.bf16.msra.mxu0 0
    %9587 = vmatprep.subr.bf16.mxu0 0
    %9588 = vmatpush2.bf16.msra.mxu0 0
    %9589 = vmatprep.subr.bf16.mxu0 0
    %9590 = vmatpush2.bf16.msra.mxu0 0
    %9591 = vmatprep.subr.bf16.mxu0 0
    %9592 = vmatpush2.bf16.msra.mxu0 0
    %9593 = vmatprep.subr.bf16.mxu0 0
    %9594 = vmatpush2.bf16.msra.mxu0 0
    %9595 = vmatprep.subr.bf16.mxu0 0
    %9596 = vmatpush2.bf16.msra.mxu0 0
    %9597 = vmatprep.subr.bf16.mxu0 0
    %9598 = vmatpush2.bf16.msra.mxu0 0
    %9599 = vmatprep.subr.bf16.mxu0 0
    %9600 = vmatpush2.bf16.msra.mxu0 0
    %9601 = vmatprep.mubr.bf16.mxu0 0
    %9602 = vmatmul.mubr.bf16.gmra.mxu0 %v9499
    %v9603 = vpop.f32.mrf.mxu0
    %v9604 = vadd.f32 %v9520, %v9603
    %v9605 = vpop.f32.mrf.mxu0
    %v9606 = vpop.f32.mrf.mxu0
    %v9607 = vpop.f32.mrf.mxu0
    %9608 = vdwg.mxu0
    %vm9609 = vcmask 17408
    %9610 = vst.msk [vmem:[#allocation17] sm:$0x3] %vm9609, %v9604
    // Predicated region
    $region66: #{tpu_custom_call.1} parent=1 // pred_check
      _
    $region67: #{tpu_custom_call.1} parent=1 // pred_check_branch
      %9612 = sbr.rel (0) target = $region69
    $region68: #{tpu_custom_call.1} parent=1 // pred_region
      %s9614 = ssub.s32 32, 32
      %9615 = vsyncadd [#allocation5], %s9614
      %s9617 = sshll.u32 [#allocation17], 4
      %s9618 = int_to_ptr.vmem [resolvable:$true] %s9617
      %9620 = dma.vmem_to_hbm [thread:$0]  %s9618, 32, %s8, [#allocation5]
    $region69: #{tpu_custom_call.1} parent=1 // pred_fallthru
      _
    // Predicated region
    $region70: #{tpu_custom_call.1} parent=1 // pred_check
      _
    $region71: #{tpu_custom_call.1} parent=1 // pred_check_branch
      %9622 = sbr.rel (0) target = $region73
    $region72: #{tpu_custom_call.1} parent=1 // pred_region
      %9623 = dma.done [#allocation5], 32
    $region73: #{tpu_custom_call.1} parent=1 // pred_fallthru
      _
    %9624 = vsyncpa [#allocation4], 1
    %9625 = vsyncpa [#allocation7], 1
    %9626 = vsyncpa [#allocation10], 1
    %9627 = vsyncpa [#allocation13], 1
    %9628 = vsyncpa [#allocation16], 1
    %9629 = vsyncpa [#allocation5], 1

</llo_original>
